<compile_context>
chip_gen: v6e
topology: v6e:2x2x1
jax: 0.10.0
libtpu: 0.0.40
codegen_flags: <defaults>
</compile_context>

<pallas_src>
import numpy as np
import jax
import jax.numpy as jnp
from jax.experimental import pallas as pl
from jax.experimental.pallas import tpu as pltpu


def _cdiv(a, b):
    return (a + b - 1) // b


# ------------------------------ Pallas kernel ------------------------------ #
def _build_kernel(num_scales, t_oh, ow, scale_meta):
    """scale_meta: per-scale static tuple (q_lo, qh, qw, d_sc, col_off)."""

    def kernel(*refs):
        y_ref = refs[0]                      # (1, hq, wq, Cp)    bf16 s2d image
        w_refs = refs[1:1 + num_scales]      # (qh*qw, Cp, d_sc)  bf16, resident
        b_ref = refs[1 + num_scales]         # (1, dim_out)       f32
        o_ref = refs[2 + num_scales]         # (1, t_oh, ow, dim_out)

        i = pl.program_id(1)                 # output-row block inside the image
        row0 = i * t_oh
        cp = y_ref.shape[-1]

        # Each scale only visits its own taps / output channels, so the fused
        # weight's structural zeros are never loaded or multiplied.
        for (q_lo, qh, qw, d_sc, c0), w_ref in zip(scale_meta, w_refs):
            acc = jnp.zeros((t_oh * ow, d_sc), jnp.float32)
            for dq in range(qh):
                for dp in range(qw):
                    # In-kernel patch formation: shifted unit-stride window.
                    x_tap = y_ref[0, pl.ds(row0 + q_lo + dq, t_oh),
                                  q_lo + dp:q_lo + dp + ow, :]    # (t_oh, ow, Cp)
                    x2 = x_tap.reshape(t_oh * ow, cp)
                    acc = acc + jnp.dot(x2, w_ref[dq * qw + dp],
                                        preferred_element_type=jnp.float32)
            out_sc = acc + b_ref[:, c0:c0 + d_sc]        # f32 bias epilogue, once
            o_ref[0, :, :, c0:c0 + d_sc] = (
                out_sc.astype(o_ref.dtype).reshape(t_oh, ow, d_sc))

    return kernel


def _cross_embed_conv(y, w_list, bias, *, oh, ow, t_oh, dim_out, scale_meta,
                      out_dtype):
    B, hq, wq, cp = y.shape
    n_blk = _cdiv(oh, t_oh)
    kernel = _build_kernel(len(w_list), t_oh, ow, tuple(scale_meta))

    # Input image: one batch's full s2d image, re-fetched only when b changes.
    in_specs = [pl.BlockSpec((1, hq, wq, cp), lambda b, i: (b, 0, 0, 0))]
    # Per-scale weights + bias: constant index_map -> VMEM-resident.
    for w in w_list:
        in_specs.append(pl.BlockSpec(tuple(w.shape), lambda b, i: (0, 0, 0)))
    in_specs.append(pl.BlockSpec((1, dim_out), lambda b, i: (0, 0)))

    out_spec = pl.BlockSpec((1, t_oh, ow, dim_out), lambda b, i: (b, i, 0, 0))

    flops = 2 * B * n_blk * t_oh * ow * cp * sum(
        qh * qw * d for (_, qh, qw, d, _) in scale_meta)
    bytes_accessed = (
        int(y.size) * y.dtype.itemsize
        + sum(int(w.size) * w.dtype.itemsize for w in w_list)
        + int(bias.size) * bias.dtype.itemsize
        + B * oh * ow * dim_out * jnp.dtype(out_dtype).itemsize)

    return pl.pallas_call(
        kernel,
        out_shape=jax.ShapeDtypeStruct((B, oh, ow, dim_out), out_dtype),
        grid_spec=pltpu.PrefetchScalarGridSpec(
            num_scalar_prefetch=0,
            grid=(B, n_blk),
            in_specs=in_specs,
            out_specs=out_spec,
        ),
        compiler_params=pltpu.CompilerParams(
            dimension_semantics=("parallel", "parallel"),
            vmem_limit_bytes=32 * 1024 * 1024,
        ),
        cost_estimate=pl.CostEstimate(
            flops=int(flops), transcendentals=0,
            bytes_accessed=int(bytes_accessed)),
    )(y, *w_list, bias)


# ----------------------------- CrossEmbedLayer ----------------------------- #
class CrossEmbedLayer:
    """Multi-scale strided Conv2d stack, outputs concatenated on channels.

    Matches the PyTorch reference: each kernel k uses stride `stride`, padding
    (k - stride) // 2 (same spatial output for every scale), channel order is
    smallest kernel first.
    """

    def __init__(self, dim_in, dim_out, kernel_size, stride=2, key=None,
                 out_dtype=jnp.float32):
        kernel_size = sorted(kernel_size)
        num_scales = len(kernel_size)
        dim_scales = [int(dim_out / 2 ** i) for i in range(1, num_scales)]
        dim_scales = [*dim_scales, dim_out - sum(dim_scales)]

        assert all(k >= stride for k in kernel_size), "kernel < stride unsupported"
        assert len({(k - stride) % 2 for k in kernel_size}) == 1, \
            "mixed kernel parity would give mismatched output spatial dims"

        self.stride = stride
        self.dim_in = dim_in
        self.dim_out = dim_out
        self.out_dtype = out_dtype
        self.k_max = kernel_size[-1]
        self.pad_max = (self.k_max - stride) // 2
        self.kq = (self.k_max - 1) // stride + 1   # taps/axis after space-to-depth

        s = stride
        self.convs = []        # (k, pad, w_f32, b_f32): PyTorch-layout reference params
        self.w_s2d = []        # per-scale bf16 (qh*qw, s*s*Cin, d_sc) s2d weights
        self.scale_meta = []   # per-scale static (q_lo, qh, qw, d_sc, col_off)
        biases = []
        col = 0
        keys = jax.random.split(key, 2 * num_scales)
        for idx, (k, d_sc) in enumerate(zip(kernel_size, dim_scales)):
            fan_in = dim_in * k * k
            bound = 1.0 / np.sqrt(fan_in)          # PyTorch default Conv2d init range
            w = jax.random.uniform(keys[2 * idx], (d_sc, dim_in, k, k),
                                   minval=-bound, maxval=bound, dtype=jnp.float32)
            b = jax.random.uniform(keys[2 * idx + 1], (d_sc,),
                                   minval=-bound, maxval=bound, dtype=jnp.float32)
            pad = (k - s) // 2
            self.convs.append((k, pad, w, b))

            # Re-express this scale in space-to-depth (stride-1) coordinates:
            # tap (dq, dp), channel (rh*s + rw)*Cin + ci.  Smaller kernels are
            # centered inside the k_max receptive field (offset pad_max - pad).
            off = self.pad_max - pad
            q_lo = off // s
            q_hi = (off + k - 1) // s
            qh = q_hi - q_lo + 1
            big = np.zeros((qh, qh, s, s, dim_in, d_sc), np.float32)
            w_t = np.asarray(jnp.transpose(w, (2, 3, 1, 0)))   # (k, k, Cin, d_sc)
            for a in range(k):
                for bb in range(k):
                    gh, gw = off + a, off + bb
                    big[gh // s - q_lo, gw // s - q_lo, gh % s, gw % s] = w_t[a, bb]
            self.w_s2d.append(jnp.asarray(
                big.reshape(qh * qh, s * s * dim_in, d_sc), dtype=jnp.bfloat16))
            self.scale_meta.append((q_lo, qh, qh, d_sc, col))
            biases.append(b)
            col += d_sc

        self.bias_vec = jnp.concatenate(biases).reshape(1, dim_out)   # f32

    def __call__(self, x_nchw, channels_last=False):
        B, C, H, W = x_nchw.shape
        assert C == self.dim_in
        s, P, K = self.stride, self.pad_max, self.k_max
        OH = (H + 2 * P - K) // s + 1
        OW = (W + 2 * P - K) // s + 1

        # Output-row block size: whole image when small, ~2K output rows/step otherwise.
        t_oh = OH if OH * OW <= 2048 else max(1, 2048 // OW)
        n_blk = _cdiv(OH, t_oh)

        # Space-to-depth geometry; pad so every in-kernel tap read stays in bounds.
        hq = n_blk * t_oh + self.kq - 1
        wq = OW + self.kq - 1
        hs, ws = hq * s, wq * s

        # Single O(input) prep pass: layout + precision boundary, pad once,
        # fold the stride into channels.  (No k^2-inflated im2col matrix.)
        xh = jnp.transpose(x_nchw, (0, 2, 3, 1)).astype(jnp.bfloat16)
        pad_b = max(hs - H - P, 0)
        pad_r = max(ws - W - P, 0)
        xh = jnp.pad(xh, ((0, 0), (P, pad_b), (P, pad_r), (0, 0)))
        xh = xh[:, :hs, :ws, :]
        y = xh.reshape(B, hq, s, wq, s, C)
        y = jnp.transpose(y, (0, 1, 3, 2, 4, 5)).reshape(B, hq, wq, s * s * C)

        out = _cross_embed_conv(
            y, self.w_s2d, self.bias_vec,
            oh=OH, ow=OW, t_oh=t_oh, dim_out=self.dim_out,
            scale_meta=self.scale_meta, out_dtype=self.out_dtype)

        if channels_last:
            return out                               # NHWC, skips a full HBM pass
        return jnp.transpose(out, (0, 3, 1, 2))      # NCHW (PyTorch layout boundary)


# ------------------------------ reference check ---------------------------- #
def _ref_conv(x, w, b, stride, pad):
    out = jax.lax.conv_general_dilated(
        x, w, (stride, stride), [(pad, pad), (pad, pad)],
        dimension_numbers=("NCHW", "OIHW", "NCHW"))
    return out + b[None, :, None, None]


if __name__ == "__main__":
    key = jax.random.PRNGKey(0)
    k_x, k_params = jax.random.split(key)

    B, C_in, H, W = 2, 4, 16, 16
    dim_out = 8
    kernel_size = (3, 5)
    stride = 2

    x = jax.random.normal(k_x, (B, C_in, H, W), dtype=jnp.float32)

    layer = CrossEmbedLayer(C_in, dim_out, kernel_size, stride=stride, key=k_params)
    out = jax.block_until_ready(layer(x))

    # Reference: per-scale XLA f32 conv + channel concat.  Tolerances cover the
    # bf16 MXU inputs (accumulation and epilogue are f32).
    ref = jnp.concatenate(
        [_ref_conv(x, w, b, stride, pad) for (_, pad, w, b) in layer.convs],
        axis=1)
    ref = jax.block_until_ready(ref)

    assert out.shape == ref.shape, (out.shape, ref.shape)
    np.testing.assert_allclose(np.asarray(out), np.asarray(ref),
                               rtol=2e-2, atol=2e-2)
    print("KERNEL_OK")
</pallas_src>

<mosaic_0001>
module attributes {stable_mosaic.version = 11 : i64} {
  func.func @kernel(%arg0: i32, %arg1: i32, %arg2: memref<1x9x9x16xbf16, #tpu.memory_space<vmem>>, %arg3: memref<4x16x4xbf16, #tpu.memory_space<vmem>>, %arg4: memref<9x16x4xbf16, #tpu.memory_space<vmem>>, %arg5: memref<1x8xf32, #tpu.memory_space<vmem>>, %arg6: memref<1x7x7x8xf32, #tpu.memory_space<vmem>>) attributes {dimension_semantics = [#tpu.dimension_semantics<parallel>, #tpu.dimension_semantics<parallel>], iteration_bounds = array<i64: 2, 1>, scalar_prefetch = 0 : i64, scratch_operands = 0 : i64, tpu.core_type = #tpu.core_type<tc>, window_params = [{transform_indices = @transform_0, window_bounds = array<i64: 1, 9, 9, 16>}, {pipeline_mode = #tpu.pipeline_mode<synchronous>, transform_indices = @transform_1, window_bounds = array<i64: 4, 16, 4>}, {pipeline_mode = #tpu.pipeline_mode<synchronous>, transform_indices = @transform_2, window_bounds = array<i64: 9, 16, 4>}, {pipeline_mode = #tpu.pipeline_mode<synchronous>, transform_indices = @transform_3, window_bounds = array<i64: 1, 8>}, {transform_indices = @transform_4, window_bounds = array<i64: 1, 7, 7, 8>}]} {
    %c7_i32 = arith.constant 7 : i32
    %0 = arith.muli %arg1, %c7_i32 : i32
    %cst = arith.constant 0.000000e+00 : f32
    %1 = vector.broadcast %cst : f32 to vector<49x4xf32>
    %c0_i32 = arith.constant 0 : i32
    %2 = arith.addi %0, %c0_i32 : i32
    %c0_i32_0 = arith.constant 0 : i32
    %3 = arith.addi %2, %c0_i32_0 : i32
    %c0 = arith.constant 0 : index
    %4 = arith.index_cast %3 : i32 to index
    %c0_1 = arith.constant 0 : index
    %c0_2 = arith.constant 0 : index
    %5 = vector.load %arg2[%c0, %4, %c0_1, %c0_2] : memref<1x9x9x16xbf16, #tpu.memory_space<vmem>>, vector<1x7x7x16xbf16>
    %6 = vector.shape_cast %5 : vector<1x7x7x16xbf16> to vector<7x7x16xbf16>
    %7 = vector.shape_cast %6 : vector<7x7x16xbf16> to vector<49x16xbf16>
    %c0_3 = arith.constant 0 : index
    %c0_4 = arith.constant 0 : index
    %c0_5 = arith.constant 0 : index
    %8 = vector.load %arg3[%c0_3, %c0_4, %c0_5] : memref<4x16x4xbf16, #tpu.memory_space<vmem>>, vector<1x16x4xbf16>
    %9 = vector.shape_cast %8 : vector<1x16x4xbf16> to vector<16x4xbf16>
    %cst_6 = arith.constant dense<0.000000e+00> : vector<49x4xf32>
    %10 = tpu.matmul %7, %9, %cst_6 {dimension_numbers = #tpu.dot_dimension_numbers<[1], [0], [0], [1], [0, 0, 1, 1], [], []>} : vector<49x16xbf16>, vector<16x4xbf16>, vector<49x4xf32> -> vector<49x4xf32>
    %11 = arith.addf %1, %10 : vector<49x4xf32>
    %c0_i32_7 = arith.constant 0 : i32
    %12 = arith.addi %0, %c0_i32_7 : i32
    %c0_i32_8 = arith.constant 0 : i32
    %13 = arith.addi %12, %c0_i32_8 : i32
    %c0_9 = arith.constant 0 : index
    %14 = arith.index_cast %13 : i32 to index
    %c1 = arith.constant 1 : index
    %c0_10 = arith.constant 0 : index
    %15 = vector.load %arg2[%c0_9, %14, %c1, %c0_10] : memref<1x9x9x16xbf16, #tpu.memory_space<vmem>>, vector<1x7x7x16xbf16>
    %16 = vector.shape_cast %15 : vector<1x7x7x16xbf16> to vector<7x7x16xbf16>
    %17 = vector.shape_cast %16 : vector<7x7x16xbf16> to vector<49x16xbf16>
    %c1_11 = arith.constant 1 : index
    %c0_12 = arith.constant 0 : index
    %c0_13 = arith.constant 0 : index
    %18 = vector.load %arg3[%c1_11, %c0_12, %c0_13] : memref<4x16x4xbf16, #tpu.memory_space<vmem>>, vector<1x16x4xbf16>
    %19 = vector.shape_cast %18 : vector<1x16x4xbf16> to vector<16x4xbf16>
    %cst_14 = arith.constant dense<0.000000e+00> : vector<49x4xf32>
    %20 = tpu.matmul %17, %19, %cst_14 {dimension_numbers = #tpu.dot_dimension_numbers<[1], [0], [0], [1], [0, 0, 1, 1], [], []>} : vector<49x16xbf16>, vector<16x4xbf16>, vector<49x4xf32> -> vector<49x4xf32>
    %21 = arith.addf %11, %20 : vector<49x4xf32>
    %c0_i32_15 = arith.constant 0 : i32
    %22 = arith.addi %0, %c0_i32_15 : i32
    %c1_i32 = arith.constant 1 : i32
    %23 = arith.addi %22, %c1_i32 : i32
    %c0_16 = arith.constant 0 : index
    %24 = arith.index_cast %23 : i32 to index
    %c0_17 = arith.constant 0 : index
    %c0_18 = arith.constant 0 : index
    %25 = vector.load %arg2[%c0_16, %24, %c0_17, %c0_18] : memref<1x9x9x16xbf16, #tpu.memory_space<vmem>>, vector<1x7x7x16xbf16>
    %26 = vector.shape_cast %25 : vector<1x7x7x16xbf16> to vector<7x7x16xbf16>
    %27 = vector.shape_cast %26 : vector<7x7x16xbf16> to vector<49x16xbf16>
    %c2 = arith.constant 2 : index
    %c0_19 = arith.constant 0 : index
    %c0_20 = arith.constant 0 : index
    %28 = vector.load %arg3[%c2, %c0_19, %c0_20] : memref<4x16x4xbf16, #tpu.memory_space<vmem>>, vector<1x16x4xbf16>
    %29 = vector.shape_cast %28 : vector<1x16x4xbf16> to vector<16x4xbf16>
    %cst_21 = arith.constant dense<0.000000e+00> : vector<49x4xf32>
    %30 = tpu.matmul %27, %29, %cst_21 {dimension_numbers = #tpu.dot_dimension_numbers<[1], [0], [0], [1], [0, 0, 1, 1], [], []>} : vector<49x16xbf16>, vector<16x4xbf16>, vector<49x4xf32> -> vector<49x4xf32>
    %31 = arith.addf %21, %30 : vector<49x4xf32>
    %c0_i32_22 = arith.constant 0 : i32
    %32 = arith.addi %0, %c0_i32_22 : i32
    %c1_i32_23 = arith.constant 1 : i32
    %33 = arith.addi %32, %c1_i32_23 : i32
    %c0_24 = arith.constant 0 : index
    %34 = arith.index_cast %33 : i32 to index
    %c1_25 = arith.constant 1 : index
    %c0_26 = arith.constant 0 : index
    %35 = vector.load %arg2[%c0_24, %34, %c1_25, %c0_26] : memref<1x9x9x16xbf16, #tpu.memory_space<vmem>>, vector<1x7x7x16xbf16>
    %36 = vector.shape_cast %35 : vector<1x7x7x16xbf16> to vector<7x7x16xbf16>
    %37 = vector.shape_cast %36 : vector<7x7x16xbf16> to vector<49x16xbf16>
    %c3 = arith.constant 3 : index
    %c0_27 = arith.constant 0 : index
    %c0_28 = arith.constant 0 : index
    %38 = vector.load %arg3[%c3, %c0_27, %c0_28] : memref<4x16x4xbf16, #tpu.memory_space<vmem>>, vector<1x16x4xbf16>
    %39 = vector.shape_cast %38 : vector<1x16x4xbf16> to vector<16x4xbf16>
    %cst_29 = arith.constant dense<0.000000e+00> : vector<49x4xf32>
    %40 = tpu.matmul %37, %39, %cst_29 {dimension_numbers = #tpu.dot_dimension_numbers<[1], [0], [0], [1], [0, 0, 1, 1], [], []>} : vector<49x16xbf16>, vector<16x4xbf16>, vector<49x4xf32> -> vector<49x4xf32>
    %41 = arith.addf %31, %40 : vector<49x4xf32>
    %c0_30 = arith.constant 0 : index
    %c0_31 = arith.constant 0 : index
    %42 = vector.load %arg5[%c0_30, %c0_31] : memref<1x8xf32, #tpu.memory_space<vmem>>, vector<1x4xf32>
    %43 = vector.broadcast %42 : vector<1x4xf32> to vector<49x4xf32>
    %44 = arith.addf %41, %43 : vector<49x4xf32>
    %45 = vector.shape_cast %44 : vector<49x4xf32> to vector<7x7x4xf32>
    %c0_32 = arith.constant 0 : index
    %c0_33 = arith.constant 0 : index
    %c0_34 = arith.constant 0 : index
    %c0_35 = arith.constant 0 : index
    %46 = vector.load %arg6[%c0_32, %c0_33, %c0_34, %c0_35] : memref<1x7x7x8xf32, #tpu.memory_space<vmem>>, vector<1x7x7x4xf32>
    %47 = vector.shape_cast %46 : vector<1x7x7x4xf32> to vector<7x7x4xf32>
    %48 = vector.shape_cast %45 : vector<7x7x4xf32> to vector<1x7x7x4xf32>
    tpu.vector_store %arg6[%c0_32, %c0_33, %c0_34, %c0_35], %48 {strides = array<i32>} : memref<1x7x7x8xf32, #tpu.memory_space<vmem>>, vector<1x7x7x4xf32>,
    %cst_36 = arith.constant 0.000000e+00 : f32
    %49 = vector.broadcast %cst_36 : f32 to vector<49x4xf32>
    %c0_i32_37 = arith.constant 0 : i32
    %50 = arith.addi %0, %c0_i32_37 : i32
    %c0_i32_38 = arith.constant 0 : i32
    %51 = arith.addi %50, %c0_i32_38 : i32
    %c0_39 = arith.constant 0 : index
    %52 = arith.index_cast %51 : i32 to index
    %c0_40 = arith.constant 0 : index
    %c0_41 = arith.constant 0 : index
    %53 = vector.load %arg2[%c0_39, %52, %c0_40, %c0_41] : memref<1x9x9x16xbf16, #tpu.memory_space<vmem>>, vector<1x7x7x16xbf16>
    %54 = vector.shape_cast %53 : vector<1x7x7x16xbf16> to vector<7x7x16xbf16>
    %55 = vector.shape_cast %54 : vector<7x7x16xbf16> to vector<49x16xbf16>
    %c0_42 = arith.constant 0 : index
    %c0_43 = arith.constant 0 : index
    %c0_44 = arith.constant 0 : index
    %56 = vector.load %arg4[%c0_42, %c0_43, %c0_44] : memref<9x16x4xbf16, #tpu.memory_space<vmem>>, vector<1x16x4xbf16>
    %57 = vector.shape_cast %56 : vector<1x16x4xbf16> to vector<16x4xbf16>
    %cst_45 = arith.constant dense<0.000000e+00> : vector<49x4xf32>
    %58 = tpu.matmul %55, %57, %cst_45 {dimension_numbers = #tpu.dot_dimension_numbers<[1], [0], [0], [1], [0, 0, 1, 1], [], []>} : vector<49x16xbf16>, vector<16x4xbf16>, vector<49x4xf32> -> vector<49x4xf32>
    %59 = arith.addf %49, %58 : vector<49x4xf32>
    %c0_i32_46 = arith.constant 0 : i32
    %60 = arith.addi %0, %c0_i32_46 : i32
    %c0_i32_47 = arith.constant 0 : i32
    %61 = arith.addi %60, %c0_i32_47 : i32
    %c0_48 = arith.constant 0 : index
    %62 = arith.index_cast %61 : i32 to index
    %c1_49 = arith.constant 1 : index
    %c0_50 = arith.constant 0 : index
    %63 = vector.load %arg2[%c0_48, %62, %c1_49, %c0_50] : memref<1x9x9x16xbf16, #tpu.memory_space<vmem>>, vector<1x7x7x16xbf16>
    %64 = vector.shape_cast %63 : vector<1x7x7x16xbf16> to vector<7x7x16xbf16>
    %65 = vector.shape_cast %64 : vector<7x7x16xbf16> to vector<49x16xbf16>
    %c1_51 = arith.constant 1 : index
    %c0_52 = arith.constant 0 : index
    %c0_53 = arith.constant 0 : index
    %66 = vector.load %arg4[%c1_51, %c0_52, %c0_53] : memref<9x16x4xbf16, #tpu.memory_space<vmem>>, vector<1x16x4xbf16>
    %67 = vector.shape_cast %66 : vector<1x16x4xbf16> to vector<16x4xbf16>
    %cst_54 = arith.constant dense<0.000000e+00> : vector<49x4xf32>
    %68 = tpu.matmul %65, %67, %cst_54 {dimension_numbers = #tpu.dot_dimension_numbers<[1], [0], [0], [1], [0, 0, 1, 1], [], []>} : vector<49x16xbf16>, vector<16x4xbf16>, vector<49x4xf32> -> vector<49x4xf32>
    %69 = arith.addf %59, %68 : vector<49x4xf32>
    %c0_i32_55 = arith.constant 0 : i32
    %70 = arith.addi %0, %c0_i32_55 : i32
    %c0_i32_56 = arith.constant 0 : i32
    %71 = arith.addi %70, %c0_i32_56 : i32
    %c0_57 = arith.constant 0 : index
    %72 = arith.index_cast %71 : i32 to index
    %c2_58 = arith.constant 2 : index
    %c0_59 = arith.constant 0 : index
    %73 = vector.load %arg2[%c0_57, %72, %c2_58, %c0_59] : memref<1x9x9x16xbf16, #tpu.memory_space<vmem>>, vector<1x7x7x16xbf16>
    %74 = vector.shape_cast %73 : vector<1x7x7x16xbf16> to vector<7x7x16xbf16>
    %75 = vector.shape_cast %74 : vector<7x7x16xbf16> to vector<49x16xbf16>
    %c2_60 = arith.constant 2 : index
    %c0_61 = arith.constant 0 : index
    %c0_62 = arith.constant 0 : index
    %76 = vector.load %arg4[%c2_60, %c0_61, %c0_62] : memref<9x16x4xbf16, #tpu.memory_space<vmem>>, vector<1x16x4xbf16>
    %77 = vector.shape_cast %76 : vector<1x16x4xbf16> to vector<16x4xbf16>
    %cst_63 = arith.constant dense<0.000000e+00> : vector<49x4xf32>
    %78 = tpu.matmul %75, %77, %cst_63 {dimension_numbers = #tpu.dot_dimension_numbers<[1], [0], [0], [1], [0, 0, 1, 1], [], []>} : vector<49x16xbf16>, vector<16x4xbf16>, vector<49x4xf32> -> vector<49x4xf32>
    %79 = arith.addf %69, %78 : vector<49x4xf32>
    %c0_i32_64 = arith.constant 0 : i32
    %80 = arith.addi %0, %c0_i32_64 : i32
    %c1_i32_65 = arith.constant 1 : i32
    %81 = arith.addi %80, %c1_i32_65 : i32
    %c0_66 = arith.constant 0 : index
    %82 = arith.index_cast %81 : i32 to index
    %c0_67 = arith.constant 0 : index
    %c0_68 = arith.constant 0 : index
    %83 = vector.load %arg2[%c0_66, %82, %c0_67, %c0_68] : memref<1x9x9x16xbf16, #tpu.memory_space<vmem>>, vector<1x7x7x16xbf16>
    %84 = vector.shape_cast %83 : vector<1x7x7x16xbf16> to vector<7x7x16xbf16>
    %85 = vector.shape_cast %84 : vector<7x7x16xbf16> to vector<49x16xbf16>
    %c3_69 = arith.constant 3 : index
    %c0_70 = arith.constant 0 : index
    %c0_71 = arith.constant 0 : index
    %86 = vector.load %arg4[%c3_69, %c0_70, %c0_71] : memref<9x16x4xbf16, #tpu.memory_space<vmem>>, vector<1x16x4xbf16>
    %87 = vector.shape_cast %86 : vector<1x16x4xbf16> to vector<16x4xbf16>
    %cst_72 = arith.constant dense<0.000000e+00> : vector<49x4xf32>
    %88 = tpu.matmul %85, %87, %cst_72 {dimension_numbers = #tpu.dot_dimension_numbers<[1], [0], [0], [1], [0, 0, 1, 1], [], []>} : vector<49x16xbf16>, vector<16x4xbf16>, vector<49x4xf32> -> vector<49x4xf32>
    %89 = arith.addf %79, %88 : vector<49x4xf32>
    %c0_i32_73 = arith.constant 0 : i32
    %90 = arith.addi %0, %c0_i32_73 : i32
    %c1_i32_74 = arith.constant 1 : i32
    %91 = arith.addi %90, %c1_i32_74 : i32
    %c0_75 = arith.constant 0 : index
    %92 = arith.index_cast %91 : i32 to index
    %c1_76 = arith.constant 1 : index
    %c0_77 = arith.constant 0 : index
    %93 = vector.load %arg2[%c0_75, %92, %c1_76, %c0_77] : memref<1x9x9x16xbf16, #tpu.memory_space<vmem>>, vector<1x7x7x16xbf16>
    %94 = vector.shape_cast %93 : vector<1x7x7x16xbf16> to vector<7x7x16xbf16>
    %95 = vector.shape_cast %94 : vector<7x7x16xbf16> to vector<49x16xbf16>
    %c4 = arith.constant 4 : index
    %c0_78 = arith.constant 0 : index
    %c0_79 = arith.constant 0 : index
    %96 = vector.load %arg4[%c4, %c0_78, %c0_79] : memref<9x16x4xbf16, #tpu.memory_space<vmem>>, vector<1x16x4xbf16>
    %97 = vector.shape_cast %96 : vector<1x16x4xbf16> to vector<16x4xbf16>
    %cst_80 = arith.constant dense<0.000000e+00> : vector<49x4xf32>
    %98 = tpu.matmul %95, %97, %cst_80 {dimension_numbers = #tpu.dot_dimension_numbers<[1], [0], [0], [1], [0, 0, 1, 1], [], []>} : vector<49x16xbf16>, vector<16x4xbf16>, vector<49x4xf32> -> vector<49x4xf32>
    %99 = arith.addf %89, %98 : vector<49x4xf32>
    %c0_i32_81 = arith.constant 0 : i32
    %100 = arith.addi %0, %c0_i32_81 : i32
    %c1_i32_82 = arith.constant 1 : i32
    %101 = arith.addi %100, %c1_i32_82 : i32
    %c0_83 = arith.constant 0 : index
    %102 = arith.index_cast %101 : i32 to index
    %c2_84 = arith.constant 2 : index
    %c0_85 = arith.constant 0 : index
    %103 = vector.load %arg2[%c0_83, %102, %c2_84, %c0_85] : memref<1x9x9x16xbf16, #tpu.memory_space<vmem>>, vector<1x7x7x16xbf16>
    %104 = vector.shape_cast %103 : vector<1x7x7x16xbf16> to vector<7x7x16xbf16>
    %105 = vector.shape_cast %104 : vector<7x7x16xbf16> to vector<49x16xbf16>
    %c5 = arith.constant 5 : index
    %c0_86 = arith.constant 0 : index
    %c0_87 = arith.constant 0 : index
    %106 = vector.load %arg4[%c5, %c0_86, %c0_87] : memref<9x16x4xbf16, #tpu.memory_space<vmem>>, vector<1x16x4xbf16>
    %107 = vector.shape_cast %106 : vector<1x16x4xbf16> to vector<16x4xbf16>
    %cst_88 = arith.constant dense<0.000000e+00> : vector<49x4xf32>
    %108 = tpu.matmul %105, %107, %cst_88 {dimension_numbers = #tpu.dot_dimension_numbers<[1], [0], [0], [1], [0, 0, 1, 1], [], []>} : vector<49x16xbf16>, vector<16x4xbf16>, vector<49x4xf32> -> vector<49x4xf32>
    %109 = arith.addf %99, %108 : vector<49x4xf32>
    %c0_i32_89 = arith.constant 0 : i32
    %110 = arith.addi %0, %c0_i32_89 : i32
    %c2_i32 = arith.constant 2 : i32
    %111 = arith.addi %110, %c2_i32 : i32
    %c0_90 = arith.constant 0 : index
    %112 = arith.index_cast %111 : i32 to index
    %c0_91 = arith.constant 0 : index
    %c0_92 = arith.constant 0 : index
    %113 = vector.load %arg2[%c0_90, %112, %c0_91, %c0_92] : memref<1x9x9x16xbf16, #tpu.memory_space<vmem>>, vector<1x7x7x16xbf16>
    %114 = vector.shape_cast %113 : vector<1x7x7x16xbf16> to vector<7x7x16xbf16>
    %115 = vector.shape_cast %114 : vector<7x7x16xbf16> to vector<49x16xbf16>
    %c6 = arith.constant 6 : index
    %c0_93 = arith.constant 0 : index
    %c0_94 = arith.constant 0 : index
    %116 = vector.load %arg4[%c6, %c0_93, %c0_94] : memref<9x16x4xbf16, #tpu.memory_space<vmem>>, vector<1x16x4xbf16>
    %117 = vector.shape_cast %116 : vector<1x16x4xbf16> to vector<16x4xbf16>
    %cst_95 = arith.constant dense<0.000000e+00> : vector<49x4xf32>
    %118 = tpu.matmul %115, %117, %cst_95 {dimension_numbers = #tpu.dot_dimension_numbers<[1], [0], [0], [1], [0, 0, 1, 1], [], []>} : vector<49x16xbf16>, vector<16x4xbf16>, vector<49x4xf32> -> vector<49x4xf32>
    %119 = arith.addf %109, %118 : vector<49x4xf32>
    %c0_i32_96 = arith.constant 0 : i32
    %120 = arith.addi %0, %c0_i32_96 : i32
    %c2_i32_97 = arith.constant 2 : i32
    %121 = arith.addi %120, %c2_i32_97 : i32
    %c0_98 = arith.constant 0 : index
    %122 = arith.index_cast %121 : i32 to index
    %c1_99 = arith.constant 1 : index
    %c0_100 = arith.constant 0 : index
    %123 = vector.load %arg2[%c0_98, %122, %c1_99, %c0_100] : memref<1x9x9x16xbf16, #tpu.memory_space<vmem>>, vector<1x7x7x16xbf16>
    %124 = vector.shape_cast %123 : vector<1x7x7x16xbf16> to vector<7x7x16xbf16>
    %125 = vector.shape_cast %124 : vector<7x7x16xbf16> to vector<49x16xbf16>
    %c7 = arith.constant 7 : index
    %c0_101 = arith.constant 0 : index
    %c0_102 = arith.constant 0 : index
    %126 = vector.load %arg4[%c7, %c0_101, %c0_102] : memref<9x16x4xbf16, #tpu.memory_space<vmem>>, vector<1x16x4xbf16>
    %127 = vector.shape_cast %126 : vector<1x16x4xbf16> to vector<16x4xbf16>
    %cst_103 = arith.constant dense<0.000000e+00> : vector<49x4xf32>
    %128 = tpu.matmul %125, %127, %cst_103 {dimension_numbers = #tpu.dot_dimension_numbers<[1], [0], [0], [1], [0, 0, 1, 1], [], []>} : vector<49x16xbf16>, vector<16x4xbf16>, vector<49x4xf32> -> vector<49x4xf32>
    %129 = arith.addf %119, %128 : vector<49x4xf32>
    %c0_i32_104 = arith.constant 0 : i32
    %130 = arith.addi %0, %c0_i32_104 : i32
    %c2_i32_105 = arith.constant 2 : i32
    %131 = arith.addi %130, %c2_i32_105 : i32
    %c0_106 = arith.constant 0 : index
    %132 = arith.index_cast %131 : i32 to index
    %c2_107 = arith.constant 2 : index
    %c0_108 = arith.constant 0 : index
    %133 = vector.load %arg2[%c0_106, %132, %c2_107, %c0_108] : memref<1x9x9x16xbf16, #tpu.memory_space<vmem>>, vector<1x7x7x16xbf16>
    %134 = vector.shape_cast %133 : vector<1x7x7x16xbf16> to vector<7x7x16xbf16>
    %135 = vector.shape_cast %134 : vector<7x7x16xbf16> to vector<49x16xbf16>
    %c8 = arith.constant 8 : index
    %c0_109 = arith.constant 0 : index
    %c0_110 = arith.constant 0 : index
    %136 = vector.load %arg4[%c8, %c0_109, %c0_110] : memref<9x16x4xbf16, #tpu.memory_space<vmem>>, vector<1x16x4xbf16>
    %137 = vector.shape_cast %136 : vector<1x16x4xbf16> to vector<16x4xbf16>
    %cst_111 = arith.constant dense<0.000000e+00> : vector<49x4xf32>
    %138 = tpu.matmul %135, %137, %cst_111 {dimension_numbers = #tpu.dot_dimension_numbers<[1], [0], [0], [1], [0, 0, 1, 1], [], []>} : vector<49x16xbf16>, vector<16x4xbf16>, vector<49x4xf32> -> vector<49x4xf32>
    %139 = arith.addf %129, %138 : vector<49x4xf32>
    %c0_112 = arith.constant 0 : index
    %c4_113 = arith.constant 4 : index
    %140 = vector.load %arg5[%c0_112, %c4_113] : memref<1x8xf32, #tpu.memory_space<vmem>>, vector<1x4xf32>
    %141 = vector.broadcast %140 : vector<1x4xf32> to vector<49x4xf32>
    %142 = arith.addf %139, %141 : vector<49x4xf32>
    %143 = vector.shape_cast %142 : vector<49x4xf32> to vector<7x7x4xf32>
    %c0_114 = arith.constant 0 : index
    %c0_115 = arith.constant 0 : index
    %c0_116 = arith.constant 0 : index
    %c4_117 = arith.constant 4 : index
    %144 = vector.load %arg6[%c0_114, %c0_115, %c0_116, %c4_117] : memref<1x7x7x8xf32, #tpu.memory_space<vmem>>, vector<1x7x7x4xf32>
    %145 = vector.shape_cast %144 : vector<1x7x7x4xf32> to vector<7x7x4xf32>
    %146 = vector.shape_cast %143 : vector<7x7x4xf32> to vector<1x7x7x4xf32>
    tpu.vector_store %arg6[%c0_114, %c0_115, %c0_116, %c4_117], %146 {strides = array<i32>} : memref<1x7x7x8xf32, #tpu.memory_space<vmem>>, vector<1x7x7x4xf32>,
    return
  }
  func.func @transform_0(%arg0: i32, %arg1: i32) -> (i32, i32, i32, i32) {
    %c0_i32 = arith.constant 0 : i32
    %c0_i32_0 = arith.constant 0 : i32
    %c0_i32_1 = arith.constant 0 : i32
    %c0_i32_2 = arith.constant 0 : i32
    return %arg0, %c0_i32, %c0_i32_0, %c0_i32_1 : i32, i32, i32, i32
  }
  func.func @transform_1(%arg0: i32, %arg1: i32) -> (i32, i32, i32) {
    %c0_i32 = arith.constant 0 : i32
    %c0_i32_0 = arith.constant 0 : i32
    %c0_i32_1 = arith.constant 0 : i32
    %c0_i32_2 = arith.constant 0 : i32
    return %c0_i32, %c0_i32_0, %c0_i32_1 : i32, i32, i32
  }
  func.func @transform_2(%arg0: i32, %arg1: i32) -> (i32, i32, i32) {
    %c0_i32 = arith.constant 0 : i32
    %c0_i32_0 = arith.constant 0 : i32
    %c0_i32_1 = arith.constant 0 : i32
    %c0_i32_2 = arith.constant 0 : i32
    return %c0_i32, %c0_i32_0, %c0_i32_1 : i32, i32, i32
  }
  func.func @transform_3(%arg0: i32, %arg1: i32) -> (i32, i32) {
    %c0_i32 = arith.constant 0 : i32
    %c0_i32_0 = arith.constant 0 : i32
    %c0_i32_1 = arith.constant 0 : i32
    return %c0_i32, %c0_i32_0 : i32, i32
  }
  func.func @transform_4(%arg0: i32, %arg1: i32) -> (i32, i32, i32, i32) {
    %c0_i32 = arith.constant 0 : i32
    %c0_i32_0 = arith.constant 0 : i32
    %c0_i32_1 = arith.constant 0 : i32
    return %arg0, %arg1, %c0_i32, %c0_i32_0 : i32, i32, i32, i32
  }
}

</mosaic_0001>

<llo_original>
// kernel: tpu_custom_call.1
$region0: #{tpu_custom_call.1}
  #allocation0 [shape = 'u32[]', space=smem, size = 0x4, offset = 0x4, fixed_abs, tag = 'smem constant byte address 0x4 - core index']
  #allocation1 [shape = 'u32[144,128]{1,0:T(1,128)}', space=vmem, size = 0x12000, scoped, tag = 'internal scratch']
  %s0 = inlined_call_operand.vmem [shape: bf16[2,9,9,16], index: 0, kind: input, shape index: {}]
  %s1 = inlined_call_operand.vmem [shape: bf16[4,16,4], index: 1, kind: input, shape index: {}]
  %s2 = inlined_call_operand.vmem [shape: bf16[9,16,4], index: 2, kind: input, shape index: {}]
  %s3 = inlined_call_operand.vmem [shape: f32[1,8], index: 3, kind: input, shape index: {}]
  %s4 = inlined_call_operand.vmem [shape: f32[2,7,7,8], index: 4, kind: output, shape index: {}]
  %s5 = sld [smem:[#allocation0]]
  $region49: #{tpu_custom_call.1} parent=0
    _
  %s7 = ssub.s32 1, %s5
  %s8 = scalar_select 0, %s7, %s5
  loop: start=0, step=1, limit=4
  $region2: #{tpu_custom_call.1} parent=0 // loop_pre_header
    _
  $region3: #{tpu_custom_call.1} parent=0 // loop_header
    %s10 = sphi 0, %s14
    %p11 = scmp.ge.s32.totalorder %s10, 4
    %s17 = sphi 0, %s29
    %s18 = sphi 0, %s25
    %s19 = sphi 0, %s17
    %s20 = sphi 0, %s18
    %s21 = sphi 0, %s19
    %s22 = sphi 0, %s20
    %s32 = sphi 0, %s34
    %s35 = sphi 0, %s32
    %s36 = sphi 0, %s35
    %s52 = sphi 0, %s36
    %s56 = sphi 0, %s56
    %s58 = sphi 0, %s56
    %s59 = sphi 0, %s58
    %s73 = sphi 0, %s59
    %s77 = sphi 0, %s77
    %s79 = sphi 0, %s77
    %s80 = sphi 0, %s79
    %s94 = sphi 0, %s80
    %s98 = sphi 0, %s98
    %s100 = sphi 0, %s98
    %s101 = sphi 0, %s100
    %s115 = sphi 0, %s101
    %s123 = sphi 0, %s125
    %s126 = sphi 0, %s123
    %s127 = sphi 0, %s126
    %s143 = sphi 0, %s127
  $region4: #{tpu_custom_call.1} parent=0 // loop_header_branch
    %13 = sbr.rel (%p11) target = $region8
  $region5: #{tpu_custom_call.1} parent=0 // loop_body
    %s15 = ssub.s32 %s10, 1
    %s16 = ssub.s32 %s10, 2
    %s23 = sadd.s32 1, %s18
    %p24 = scmp.ge.s32.totalorder %s23, 1
    %s25 = scalar_select %p24, 0, %s23
    %s26 = sadd.s32 1, %s17
    %s27 = scalar_select %p24, %s26, %s17
    %p28 = scmp.ge.s32.totalorder %s27, 2
    %s29 = scalar_select %p28, 0, %s27
    %s30 = ssub.s32 %s17, %s29
    %p31 = scmp.eq.s32.totalorder %s30, 0
    %s33 = sadd.s32 %s32, 1
    %s34 = scalar_select %p31, %s32, %s33
    %p37 = pneg %p31
    %p38 = scmp.eq.s32.totalorder %s10, 1
    %p39 = por %p37, %p38
    %p40 = scmp.ne.s32.totalorder %s32, %s35
    %p41 = scmp.eq.s32.totalorder %s10, 0
    %p42 = por %p40, %p41
    %p43 = scmp.ne.s32.totalorder %s32, %s35
    %p44 = scmp.eq.s32.totalorder %s15, 1
    %p45 = por %p43, %p44
    %p46 = scmp.ne.s32.totalorder %s35, %s36
    %p47 = scmp.eq.s32.totalorder %s15, 0
    %p48 = por %p46, %p47
    %p49 = scmp.ne.s32.totalorder %s35, %s36
    %p50 = scmp.eq.s32.totalorder %s16, 1
    %p51 = por %p49, %p50
    %p53 = scmp.ne.s32.totalorder %s36, %s52
    %p54 = scmp.eq.s32.totalorder %s16, 0
    %p55 = por %p53, %p54
    %s57 = sadd.s32 %s56, 1
    %p60 = scmp.eq.s32.totalorder %s10, 1
    %p61 = scmp.ne.s32.totalorder %s56, %s58
    %p62 = scmp.eq.s32.totalorder %s10, 0
    %p63 = por %p61, %p62
    %p64 = scmp.ne.s32.totalorder %s56, %s58
    %p65 = scmp.eq.s32.totalorder %s15, 1
    %p66 = por %p64, %p65
    %p67 = scmp.ne.s32.totalorder %s58, %s59
    %p68 = scmp.eq.s32.totalorder %s15, 0
    %p69 = por %p67, %p68
    %p70 = scmp.ne.s32.totalorder %s58, %s59
    %p71 = scmp.eq.s32.totalorder %s16, 1
    %p72 = por %p70, %p71
    %p74 = scmp.ne.s32.totalorder %s59, %s73
    %p75 = scmp.eq.s32.totalorder %s16, 0
    %p76 = por %p74, %p75
    %s78 = sadd.s32 %s77, 1
    %p81 = scmp.eq.s32.totalorder %s10, 1
    %p82 = scmp.ne.s32.totalorder %s77, %s79
    %p83 = scmp.eq.s32.totalorder %s10, 0
    %p84 = por %p82, %p83
    %p85 = scmp.ne.s32.totalorder %s77, %s79
    %p86 = scmp.eq.s32.totalorder %s15, 1
    %p87 = por %p85, %p86
    %p88 = scmp.ne.s32.totalorder %s79, %s80
    %p89 = scmp.eq.s32.totalorder %s15, 0
    %p90 = por %p88, %p89
    %p91 = scmp.ne.s32.totalorder %s79, %s80
    %p92 = scmp.eq.s32.totalorder %s16, 1
    %p93 = por %p91, %p92
    %p95 = scmp.ne.s32.totalorder %s80, %s94
    %p96 = scmp.eq.s32.totalorder %s16, 0
    %p97 = por %p95, %p96
    %s99 = sadd.s32 %s98, 1
    %p102 = scmp.eq.s32.totalorder %s10, 1
    %p103 = scmp.ne.s32.totalorder %s98, %s100
    %p104 = scmp.eq.s32.totalorder %s10, 0
    %p105 = por %p103, %p104
    %p106 = scmp.ne.s32.totalorder %s98, %s100
    %p107 = scmp.eq.s32.totalorder %s15, 1
    %p108 = por %p106, %p107
    %p109 = scmp.ne.s32.totalorder %s100, %s101
    %p110 = scmp.eq.s32.totalorder %s15, 0
    %p111 = por %p109, %p110
    %p112 = scmp.ne.s32.totalorder %s100, %s101
    %p113 = scmp.eq.s32.totalorder %s16, 1
    %p114 = por %p112, %p113
    %p116 = scmp.ne.s32.totalorder %s101, %s115
    %p117 = scmp.eq.s32.totalorder %s16, 0
    %p118 = por %p116, %p117
    %s119 = ssub.s32 %s17, %s29
    %s120 = ssub.s32 %s18, %s25
    %s121 = sor.u32 %s119, %s120
    %p122 = scmp.eq.s32.totalorder %s121, 0
    %s124 = sadd.s32 %s123, 1
    %s125 = scalar_select %p122, %s123, %s124
    %p128 = pneg %p122
    %p129 = scmp.eq.s32.totalorder %s10, 1
    %p130 = por %p128, %p129
    %p131 = scmp.ne.s32.totalorder %s123, %s126
    %p132 = scmp.eq.s32.totalorder %s10, 0
    %p133 = por %p131, %p132
    %p134 = scmp.ne.s32.totalorder %s123, %s126
    %p135 = scmp.eq.s32.totalorder %s15, 1
    %p136 = por %p134, %p135
    %p137 = scmp.ne.s32.totalorder %s126, %s127
    %p138 = scmp.eq.s32.totalorder %s15, 0
    %p139 = por %p137, %p138
    %p140 = scmp.ne.s32.totalorder %s126, %s127
    %p141 = scmp.eq.s32.totalorder %s16, 1
    %p142 = por %p140, %p141
    %p144 = scmp.ne.s32.totalorder %s127, %s143
    %p145 = scmp.eq.s32.totalorder %s16, 0
    %p146 = por %p144, %p145
    %p147 = scmp.le.s32.totalorder 1, %s10
    %p148 = scmp.lt.s32.totalorder %s10, 3
    %p149 = pnand %p147, %p148
    %p150 = pneg %p149
    // Predicated region
    $region9: #{tpu_custom_call.1} parent=5 // pred_check
      _
    $region10: #{tpu_custom_call.1} parent=5 // pred_check_branch
      %152 = sbr.rel (%p149) target = $region12
    $region11: #{tpu_custom_call.1} parent=5 // pred_region
      %s153 = ssub.s32 %s10, 1
      // Predicated region
      $region13: #{tpu_custom_call.1} parent=11 // pred_check
        %p154 = pneg %p69
      $region14: #{tpu_custom_call.1} parent=11 // pred_check_branch
        %156 = sbr.rel (%p154) target = $region16
      $region15: #{tpu_custom_call.1} parent=11 // pred_region
        _
      $region16: #{tpu_custom_call.1} parent=11 // pred_fallthru
        _
      // Predicated region
      $region17: #{tpu_custom_call.1} parent=11 // pred_check
        %p157 = pneg %p90
      $region18: #{tpu_custom_call.1} parent=11 // pred_check_branch
        %159 = sbr.rel (%p157) target = $region20
      $region19: #{tpu_custom_call.1} parent=11 // pred_region
        _
      $region20: #{tpu_custom_call.1} parent=11 // pred_fallthru
        _
      // Predicated region
      $region21: #{tpu_custom_call.1} parent=11 // pred_check
        %p160 = pneg %p111
      $region22: #{tpu_custom_call.1} parent=11 // pred_check_branch
        %162 = sbr.rel (%p160) target = $region24
      $region23: #{tpu_custom_call.1} parent=11 // pred_region
        _
      $region24: #{tpu_custom_call.1} parent=11 // pred_fallthru
        _
    $region12: #{tpu_custom_call.1} parent=5 // pred_fallthru
      _
    %p163 = scmp.lt.s32.totalorder %s10, 2
    // Predicated region
    $region25: #{tpu_custom_call.1} parent=5 // pred_check
      %p164 = pneg %p163
    $region26: #{tpu_custom_call.1} parent=5 // pred_check_branch
      %166 = sbr.rel (%p164) target = $region28
    $region27: #{tpu_custom_call.1} parent=5 // pred_region
      // Predicated region
      $region29: #{tpu_custom_call.1} parent=27 // pred_check
        %p167 = pneg %p42
      $region30: #{tpu_custom_call.1} parent=27 // pred_check_branch
        %169 = sbr.rel (%p167) target = $region32
      $region31: #{tpu_custom_call.1} parent=27 // pred_region
        %p170 = scmp.lt.s32.totalorder %s17, 1
        %s171 = scalar_select %p170, %s17, 1
        %s172 = smul.addr %s171, 18
        %s173 = smul.addr %s172, 4
        %s174 = scalar_lea.vmem %s0, %s173
      $region32: #{tpu_custom_call.1} parent=27 // pred_fallthru
        _
    $region28: #{tpu_custom_call.1} parent=5 // pred_fallthru
      _
    %p175 = scmp.le.s32.totalorder 1, %s10
    %p176 = scmp.lt.s32.totalorder %s10, 3
    %p177 = pnand %p175, %p176
    %p178 = pneg %p177
    // Predicated region
    $region33: #{tpu_custom_call.1} parent=5 // pred_check
      _
    $region34: #{tpu_custom_call.1} parent=5 // pred_check_branch
      %180 = sbr.rel (%p177) target = $region36
    $region35: #{tpu_custom_call.1} parent=5 // pred_region
      %s181 = ssub.s32 %s10, 1
      %p182 = scmp.lt.s32.totalorder %s19, 1
      %s183 = scalar_select %p182, %s19, 1
      %s184 = smul.addr %s183, 18
      %s185 = smul.addr %s184, 4
      %s186 = scalar_lea.vmem %s0, %s185
      %p187 = pneg %p48
      %p188 = pneg %p45
      %p189 = pneg %p69
      %p190 = pneg %p66
      %p191 = pneg %p90
      %p192 = pneg %p87
      %p193 = pneg %p111
      %p194 = pneg %p108
      %p195 = pneg %p139
      %p196 = pneg %p136
      %s197 = smul.u32 7, %s20
      %p198 = scmp.lt.s32.totalorder %s19, 1
      %s199 = scalar_select %p198, %s19, 1
      %p200 = scmp.lt.s32.totalorder %s197, 6
      %s201 = scalar_select %p200, %s197, 6
      %s202 = smul.addr %s199, 7
      %s203 = sadd.s32 %s201, %s202
      %s204 = smul.addr %s203, 8
      %s205 = scalar_lea.vmem %s4, %s204
      %p206 = scmp.lt.s32.totalorder %s19, 1
      %s207 = scalar_select %p206, %s19, 1
      %s208 = smul.addr %s207, 18
      %s209 = smul.addr %s208, 4
      %s210 = scalar_lea.vmem %s0, %s209
      %s211 = smul.u32 7, %s20
      %p212 = scmp.lt.s32.totalorder %s19, 1
      %s213 = scalar_select %p212, %s19, 1
      %p214 = scmp.lt.s32.totalorder %s211, 6
      %s215 = scalar_select %p214, %s211, 6
      %s216 = smul.addr %s213, 7
      %s217 = sadd.s32 %s215, %s216
      %s218 = smul.addr %s217, 8
      %s219 = scalar_lea.vmem %s4, %s218
      %s220 = smul.u32 7, %s20
      %s222 = smul.u32 %s20, 7
      %s223 = smul.u32 %s222, 2
      %s224 = smul.addr %s223, 4
      %s225 = scalar_lea.vmem %s210, %s224
      %v226 = vld [vmem:[%s225] sm:$0xf]
      %v227 = vld [vmem:[%s225 + $0x8] sm:$0xf]
      %v228 = vld [vmem:[%s225 + $0x10] sm:$0xf]
      %v229 = vld [vmem:[%s225 + $0x18] sm:$0xf]
      %v230 = vld [vmem:[%s225 + $0x20] sm:$0xf]
      %v231 = vld [vmem:[%s225 + $0x28] sm:$0xf]
      %v232 = vld [vmem:[%s225 + $0x30] sm:$0xf]
      %v241 = vunpack.c.l.s4 1966171168
      %v242 = vunpack.c.0.s8 %v241
      %v243 = vlaneseq
      %v244 = vshrl.u32 %v243, 7
      %v245 = vsub.s32 %v242, %v244
      %v246 = vrot.slane %v226, %v245
      %v247 = vcombine.high %v246, %v246
      %v249 = vunpack.c.l.s4 1966171168
      %v250 = vunpack.c.0.s8 %v249
      %v251 = vlaneseq
      %v252 = vshrl.u32 %v251, 7
      %v253 = vsub.s32 %v250, %v252
      %v254 = vrot.slane %v246, %v253
      %v256 = vunpack.c.l.s4 1966171168
      %v257 = vunpack.c.0.s8 %v256
      %v258 = vlaneseq
      %v259 = vshrl.u32 %v258, 7
      %v260 = vsub.s32 %v257, %v259
      %v261 = vrot.slane %v247, %v260
      %v262 = vcombine.high %v254, %v254
      %v263 = vcombine.high %v261, %v261
      %v265 = vunpack.c.l.s4 1966171168
      %v266 = vunpack.c.0.s8 %v265
      %v267 = vlaneseq
      %v268 = vshrl.u32 %v267, 7
      %v269 = vsub.s32 %v266, %v268
      %v270 = vrot.slane %v227, %v269
      %v271 = vcombine.high %v270, %v270
      %v273 = vunpack.c.l.s4 1966171168
      %v274 = vunpack.c.0.s8 %v273
      %v275 = vlaneseq
      %v276 = vshrl.u32 %v275, 7
      %v277 = vsub.s32 %v274, %v276
      %v278 = vrot.slane %v270, %v277
      %v280 = vunpack.c.l.s4 1966171168
      %v281 = vunpack.c.0.s8 %v280
      %v282 = vlaneseq
      %v283 = vshrl.u32 %v282, 7
      %v284 = vsub.s32 %v281, %v283
      %v285 = vrot.slane %v271, %v284
      %v286 = vcombine.high %v278, %v278
      %v287 = vcombine.high %v285, %v285
      %v289 = vunpack.c.l.s4 1966171168
      %v290 = vunpack.c.0.s8 %v289
      %v291 = vlaneseq
      %v292 = vshrl.u32 %v291, 7
      %v293 = vsub.s32 %v290, %v292
      %v294 = vrot.slane %v228, %v293
      %v295 = vcombine.high %v294, %v294
      %v297 = vunpack.c.l.s4 1966171168
      %v298 = vunpack.c.0.s8 %v297
      %v299 = vlaneseq
      %v300 = vshrl.u32 %v299, 7
      %v301 = vsub.s32 %v298, %v300
      %v302 = vrot.slane %v294, %v301
      %v304 = vunpack.c.l.s4 1966171168
      %v305 = vunpack.c.0.s8 %v304
      %v306 = vlaneseq
      %v307 = vshrl.u32 %v306, 7
      %v308 = vsub.s32 %v305, %v307
      %v309 = vrot.slane %v295, %v308
      %v310 = vcombine.high %v302, %v302
      %v311 = vcombine.high %v309, %v309
      %v313 = vunpack.c.l.s4 1966171168
      %v314 = vunpack.c.0.s8 %v313
      %v315 = vlaneseq
      %v316 = vshrl.u32 %v315, 7
      %v317 = vsub.s32 %v314, %v316
      %v318 = vrot.slane %v229, %v317
      %v319 = vcombine.high %v318, %v318
      %v321 = vunpack.c.l.s4 1966171168
      %v322 = vunpack.c.0.s8 %v321
      %v323 = vlaneseq
      %v324 = vshrl.u32 %v323, 7
      %v325 = vsub.s32 %v322, %v324
      %v326 = vrot.slane %v318, %v325
      %v328 = vunpack.c.l.s4 1966171168
      %v329 = vunpack.c.0.s8 %v328
      %v330 = vlaneseq
      %v331 = vshrl.u32 %v330, 7
      %v332 = vsub.s32 %v329, %v331
      %v333 = vrot.slane %v319, %v332
      %v334 = vcombine.high %v326, %v326
      %v335 = vcombine.high %v333, %v333
      %v337 = vunpack.c.l.s4 1966171168
      %v338 = vunpack.c.0.s8 %v337
      %v339 = vlaneseq
      %v340 = vshrl.u32 %v339, 7
      %v341 = vsub.s32 %v338, %v340
      %v342 = vrot.slane %v230, %v341
      %v343 = vcombine.high %v342, %v342
      %v345 = vunpack.c.l.s4 1966171168
      %v346 = vunpack.c.0.s8 %v345
      %v347 = vlaneseq
      %v348 = vshrl.u32 %v347, 7
      %v349 = vsub.s32 %v346, %v348
      %v350 = vrot.slane %v342, %v349
      %v352 = vunpack.c.l.s4 1966171168
      %v353 = vunpack.c.0.s8 %v352
      %v354 = vlaneseq
      %v355 = vshrl.u32 %v354, 7
      %v356 = vsub.s32 %v353, %v355
      %v357 = vrot.slane %v343, %v356
      %v358 = vcombine.high %v350, %v350
      %v359 = vcombine.high %v357, %v357
      %v361 = vunpack.c.l.s4 1966171168
      %v362 = vunpack.c.0.s8 %v361
      %v363 = vlaneseq
      %v364 = vshrl.u32 %v363, 7
      %v365 = vsub.s32 %v362, %v364
      %v366 = vrot.slane %v231, %v365
      %v367 = vcombine.high %v366, %v366
      %v369 = vunpack.c.l.s4 1966171168
      %v370 = vunpack.c.0.s8 %v369
      %v371 = vlaneseq
      %v372 = vshrl.u32 %v371, 7
      %v373 = vsub.s32 %v370, %v372
      %v374 = vrot.slane %v366, %v373
      %v376 = vunpack.c.l.s4 1966171168
      %v377 = vunpack.c.0.s8 %v376
      %v378 = vlaneseq
      %v379 = vshrl.u32 %v378, 7
      %v380 = vsub.s32 %v377, %v379
      %v381 = vrot.slane %v367, %v380
      %v382 = vcombine.high %v374, %v374
      %v383 = vcombine.high %v381, %v381
      %v385 = vunpack.c.l.s4 1966171168
      %v386 = vunpack.c.0.s8 %v385
      %v387 = vlaneseq
      %v388 = vshrl.u32 %v387, 7
      %v389 = vsub.s32 %v386, %v388
      %v390 = vrot.slane %v232, %v389
      %v391 = vcombine.high %v390, %v390
      %v393 = vunpack.c.l.s4 1966171168
      %v394 = vunpack.c.0.s8 %v393
      %v395 = vlaneseq
      %v396 = vshrl.u32 %v395, 7
      %v397 = vsub.s32 %v394, %v396
      %v398 = vrot.slane %v390, %v397
      %v400 = vunpack.c.l.s4 1966171168
      %v401 = vunpack.c.0.s8 %v400
      %v402 = vlaneseq
      %v403 = vshrl.u32 %v402, 7
      %v404 = vsub.s32 %v401, %v403
      %v405 = vrot.slane %v391, %v404
      %v406 = vcombine.high %v398, %v398
      %v407 = vcombine.high %v405, %v405
      %v408 = vunpack.i.l.s16 %v254
      %v409 = vunpack.i.h.s16 %v254
      %v410 = vunpack.i.l.s16 %v261
      %v411 = vunpack.i.h.s16 %v261
      %v412 = vunpack.i.l.s16 %v262
      %v413 = vunpack.i.h.s16 %v262
      %v414 = vunpack.i.l.s16 %v263
      %v415 = vunpack.i.l.s16 %v278
      %v416 = vunpack.i.h.s16 %v278
      %v417 = vunpack.i.l.s16 %v285
      %v418 = vunpack.i.h.s16 %v285
      %v419 = vunpack.i.l.s16 %v286
      %v420 = vunpack.i.h.s16 %v286
      %v421 = vunpack.i.l.s16 %v287
      %v422 = vunpack.i.l.s16 %v302
      %v423 = vunpack.i.h.s16 %v302
      %v424 = vunpack.i.l.s16 %v309
      %v425 = vunpack.i.h.s16 %v309
      %v426 = vunpack.i.l.s16 %v310
      %v427 = vunpack.i.h.s16 %v310
      %v428 = vunpack.i.l.s16 %v311
      %v429 = vunpack.i.l.s16 %v326
      %v430 = vunpack.i.h.s16 %v326
      %v431 = vunpack.i.l.s16 %v333
      %v432 = vunpack.i.h.s16 %v333
      %v433 = vunpack.i.l.s16 %v334
      %v434 = vunpack.i.h.s16 %v334
      %v435 = vunpack.i.l.s16 %v335
      %v436 = vunpack.i.l.s16 %v350
      %v437 = vunpack.i.h.s16 %v350
      %v438 = vunpack.i.l.s16 %v357
      %v439 = vunpack.i.h.s16 %v357
      %v440 = vunpack.i.l.s16 %v358
      %v441 = vunpack.i.h.s16 %v358
      %v442 = vunpack.i.l.s16 %v359
      %v443 = vunpack.i.l.s16 %v374
      %v444 = vunpack.i.h.s16 %v374
      %v445 = vunpack.i.l.s16 %v381
      %v446 = vunpack.i.h.s16 %v381
      %v447 = vunpack.i.l.s16 %v382
      %v448 = vunpack.i.h.s16 %v382
      %v449 = vunpack.i.l.s16 %v383
      %v450 = vunpack.i.l.s16 %v398
      %v451 = vunpack.i.h.s16 %v398
      %v452 = vunpack.i.l.s16 %v405
      %v453 = vunpack.i.h.s16 %v405
      %v454 = vunpack.i.l.s16 %v406
      %v455 = vunpack.i.h.s16 %v406
      %v456 = vunpack.i.l.s16 %v407
      %v457 = vld [vmem:[%s1] sm:$0xf]
      %v458 = vld [vmem:[%s1 + $0x4] sm:$0xf]
      %v459 = vunpack.i.h.s16 %v263
      %v460 = vunpack.i.h.s16 %v287
      %v461 = vunpack.i.h.s16 %v311
      %v462 = vunpack.i.h.s16 %v335
      %v463 = vunpack.i.h.s16 %v359
      %v464 = vunpack.i.h.s16 %v383
      %v465 = vunpack.i.h.s16 %v407
      %s466 = scalar_lea.vmem %s1, 8
      %v467 = vld [vmem:[%s466] sm:$0xf]
      %v468 = vld [vmem:[%s466 + $0x4] sm:$0xf]
      %v469 = vpack.i.b16 %v410, %v409
      %v470 = vpack.i.b16 %v412, %v411
      %v471 = vpack.i.b16 %v414, %v413
      %v472 = vpack.i.b16 %v416, %v459
      %v473 = vpack.i.b16 %v418, %v417
      %v474 = vpack.i.b16 %v420, %v419
      %v475 = vpack.i.b16 %v460, %v421
      %v476 = vpack.i.b16 %v424, %v423
      %v477 = vpack.i.b16 %v426, %v425
      %v478 = vpack.i.b16 %v428, %v427
      %v479 = vpack.i.b16 %v430, %v461
      %v480 = vpack.i.b16 %v432, %v431
      %v481 = vpack.i.b16 %v434, %v433
      %v482 = vpack.i.b16 %v462, %v435
      %v483 = vpack.i.b16 %v438, %v437
      %v484 = vpack.i.b16 %v440, %v439
      %v485 = vpack.i.b16 %v442, %v441
      %v486 = vpack.i.b16 %v444, %v463
      %v487 = vpack.i.b16 %v446, %v445
      %v488 = vpack.i.b16 %v448, %v447
      %v489 = vpack.i.b16 %v464, %v449
      %v490 = vpack.i.b16 %v452, %v451
      %v491 = vpack.i.b16 %v454, %v453
      %v492 = vpack.i.b16 %v456, %v455
      %v494 = vcombine.low %v469, %v470
      %v495 = vcombine.low %v471, %v472
      %v496 = vcombine.low %v473, %v474
      %v497 = vcombine.low %v475, %v476
      %v499 = vunpack.c.l.s4 1966171168
      %v500 = vunpack.c.0.s8 %v499
      %v501 = vlaneseq
      %v502 = vshrl.u32 %v501, 7
      %v503 = vsub.s32 %v500, %v502
      %v504 = vrot.slane %v494, %v503
      %v506 = vunpack.c.l.s4 1966171168
      %v507 = vunpack.c.0.s8 %v506
      %v508 = vlaneseq
      %v509 = vshrl.u32 %v508, 7
      %v510 = vsub.s32 %v507, %v509
      %v511 = vrot.slane %v495, %v510
      %v513 = vunpack.c.l.s4 1966171168
      %v514 = vunpack.c.0.s8 %v513
      %v515 = vlaneseq
      %v516 = vshrl.u32 %v515, 7
      %v517 = vsub.s32 %v514, %v516
      %v518 = vrot.slane %v496, %v517
      %v520 = vunpack.c.l.s4 1966171168
      %v521 = vunpack.c.0.s8 %v520
      %v522 = vlaneseq
      %v523 = vshrl.u32 %v522, 7
      %v524 = vsub.s32 %v521, %v523
      %v525 = vrot.slane %v497, %v524
      %v526 = vcombine.low %v504, %v511
      %v527 = vcombine.low %v518, %v525
      %v529 = vunpack.c.l.s4 1966171168
      %v530 = vunpack.c.0.s8 %v529
      %v531 = vlaneseq
      %v532 = vshrl.u32 %v531, 7
      %v533 = vsub.s32 %v530, %v532
      %v534 = vrot.slane %v526, %v533
      %v536 = vunpack.c.l.s4 1966171168
      %v537 = vunpack.c.0.s8 %v536
      %v538 = vlaneseq
      %v539 = vshrl.u32 %v538, 7
      %v540 = vsub.s32 %v537, %v539
      %v541 = vrot.slane %v527, %v540
      %v542 = vcombine.low %v534, %v541
      %v543 = vcombine.low %v477, %v478
      %v544 = vcombine.low %v479, %v480
      %v545 = vcombine.low %v481, %v482
      %v546 = vcombine.low %v483, %v484
      %v548 = vunpack.c.l.s4 1966171168
      %v549 = vunpack.c.0.s8 %v548
      %v550 = vlaneseq
      %v551 = vshrl.u32 %v550, 7
      %v552 = vsub.s32 %v549, %v551
      %v553 = vrot.slane %v543, %v552
      %v555 = vunpack.c.l.s4 1966171168
      %v556 = vunpack.c.0.s8 %v555
      %v557 = vlaneseq
      %v558 = vshrl.u32 %v557, 7
      %v559 = vsub.s32 %v556, %v558
      %v560 = vrot.slane %v544, %v559
      %v562 = vunpack.c.l.s4 1966171168
      %v563 = vunpack.c.0.s8 %v562
      %v564 = vlaneseq
      %v565 = vshrl.u32 %v564, 7
      %v566 = vsub.s32 %v563, %v565
      %v567 = vrot.slane %v545, %v566
      %v569 = vunpack.c.l.s4 1966171168
      %v570 = vunpack.c.0.s8 %v569
      %v571 = vlaneseq
      %v572 = vshrl.u32 %v571, 7
      %v573 = vsub.s32 %v570, %v572
      %v574 = vrot.slane %v546, %v573
      %v575 = vcombine.low %v553, %v560
      %v576 = vcombine.low %v567, %v574
      %v578 = vunpack.c.l.s4 1966171168
      %v579 = vunpack.c.0.s8 %v578
      %v580 = vlaneseq
      %v581 = vshrl.u32 %v580, 7
      %v582 = vsub.s32 %v579, %v581
      %v583 = vrot.slane %v575, %v582
      %v585 = vunpack.c.l.s4 1966171168
      %v586 = vunpack.c.0.s8 %v585
      %v587 = vlaneseq
      %v588 = vshrl.u32 %v587, 7
      %v589 = vsub.s32 %v586, %v588
      %v590 = vrot.slane %v576, %v589
      %v591 = vcombine.low %v583, %v590
      %v592 = vcombine.low %v485, %v486
      %v593 = vcombine.low %v487, %v488
      %v594 = vcombine.low %v489, %v490
      %v595 = vcombine.low %v491, %v492
      %v597 = vunpack.c.l.s4 1966171168
      %v598 = vunpack.c.0.s8 %v597
      %v599 = vlaneseq
      %v600 = vshrl.u32 %v599, 7
      %v601 = vsub.s32 %v598, %v600
      %v602 = vrot.slane %v592, %v601
      %v604 = vunpack.c.l.s4 1966171168
      %v605 = vunpack.c.0.s8 %v604
      %v606 = vlaneseq
      %v607 = vshrl.u32 %v606, 7
      %v608 = vsub.s32 %v605, %v607
      %v609 = vrot.slane %v593, %v608
      %v611 = vunpack.c.l.s4 1966171168
      %v612 = vunpack.c.0.s8 %v611
      %v613 = vlaneseq
      %v614 = vshrl.u32 %v613, 7
      %v615 = vsub.s32 %v612, %v614
      %v616 = vrot.slane %v594, %v615
      %v618 = vunpack.c.l.s4 1966171168
      %v619 = vunpack.c.0.s8 %v618
      %v620 = vlaneseq
      %v621 = vshrl.u32 %v620, 7
      %v622 = vsub.s32 %v619, %v621
      %v623 = vrot.slane %v595, %v622
      %v624 = vcombine.low %v602, %v609
      %v625 = vcombine.low %v616, %v623
      %v627 = vunpack.c.l.s4 1966171168
      %v628 = vunpack.c.0.s8 %v627
      %v629 = vlaneseq
      %v630 = vshrl.u32 %v629, 7
      %v631 = vsub.s32 %v628, %v630
      %v632 = vrot.slane %v624, %v631
      %v634 = vunpack.c.l.s4 1966171168
      %v635 = vunpack.c.0.s8 %v634
      %v636 = vlaneseq
      %v637 = vshrl.u32 %v636, 7
      %v638 = vsub.s32 %v635, %v637
      %v639 = vrot.slane %v625, %v638
      %v640 = vcombine.low %v632, %v639
      %v642 = vunpack.c.l.s4 1966171168
      %v643 = vunpack.c.0.s8 %v642
      %v644 = vlaneseq
      %v645 = vshrl.u32 %v644, 7
      %v646 = vsub.s32 %v643, %v645
      %v647 = vrot.slane %v465, %v646
      %v649 = vunpack.c.l.s4 1966171168
      %v650 = vunpack.c.0.s8 %v649
      %v651 = vlaneseq
      %v652 = vshrl.u32 %v651, 7
      %v653 = vsub.s32 %v650, %v652
      %v654 = vrot.slane %v647, %v653
      %v657 = vunpack.c.l.b16 %v467
      %v658 = vunpack.c.l.b16 %v468
      %v659 = vpack.c.b16 %v658, %v657
      %vm661 = vcmask 130048
      %v663 = vsel %vm661, %v542, 0
      %v666 = vsel %vm661, %v591, 0
      %v669 = vsel %vm661, %v640, 0
      %v672 = vsel %vm661, %v654, 0
      %674 = vmatprep.subr.bf16.mxu0 0
      %675 = vmatpush1.bf16.msra.mxu0 0
      %676 = vmatprep.subr.bf16.mxu0 0
      %677 = vmatpush1.bf16.msra.mxu0 0
      %678 = vmatprep.subr.bf16.mxu0 0
      %679 = vmatpush1.bf16.msra.mxu0 0
      %680 = vmatprep.subr.bf16.mxu0 0
      %681 = vmatpush1.bf16.msra.mxu0 0
      %682 = vmatprep.subr.bf16.mxu0 0
      %683 = vmatpush1.bf16.msra.mxu0 0
      %684 = vmatprep.subr.bf16.mxu0 0
      %685 = vmatpush1.bf16.msra.mxu0 0
      %686 = vmatprep.subr.bf16.mxu0 0
      %687 = vmatpush1.bf16.msra.mxu0 0
      %688 = vmatprep.subr.bf16.mxu0 0
      %689 = vmatpush1.bf16.msra.mxu0 %v659
      %690 = vmatprep.subr.bf16.mxu0 0
      %691 = vmatpush2.bf16.msra.mxu0 0
      %692 = vmatprep.subr.bf16.mxu0 0
      %693 = vmatpush2.bf16.msra.mxu0 0
      %694 = vmatprep.subr.bf16.mxu0 0
      %695 = vmatpush2.bf16.msra.mxu0 0
      %696 = vmatprep.subr.bf16.mxu0 0
      %697 = vmatpush2.bf16.msra.mxu0 0
      %698 = vmatprep.subr.bf16.mxu0 0
      %699 = vmatpush2.bf16.msra.mxu0 0
      %700 = vmatprep.subr.bf16.mxu0 0
      %701 = vmatpush2.bf16.msra.mxu0 0
      %702 = vmatprep.subr.bf16.mxu0 0
      %703 = vmatpush2.bf16.msra.mxu0 0
      %704 = vmatprep.subr.bf16.mxu0 0
      %705 = vmatpush2.bf16.msra.mxu0 0
      %706 = vmatprep.mubr.bf16.mxu0 0
      %707 = vmatmul.mubr.bf16.gmra.mxu0 %v663
      %v708 = vpop.f32.mrf.mxu0
      %v709 = vadd.f32 0.0, %v708
      %v710 = vpop.f32.mrf.mxu0
      %v711 = vpop.f32.mrf.mxu0
      %v712 = vadd.f32 0.0, %v711
      %v713 = vpop.f32.mrf.mxu0
      %714 = vmatprep.mubr.bf16.mxu0 0
      %715 = vmatmul.mubr.bf16.gmra.mxu0 %v666
      %v716 = vpop.f32.mrf.mxu0
      %v717 = vadd.f32 0.0, %v716
      %v718 = vpop.f32.mrf.mxu0
      %v719 = vpop.f32.mrf.mxu0
      %v720 = vadd.f32 0.0, %v719
      %v721 = vpop.f32.mrf.mxu0
      %722 = vmatprep.mubr.bf16.mxu0 0
      %723 = vmatmul.mubr.bf16.gmra.mxu0 %v669
      %v724 = vpop.f32.mrf.mxu0
      %v725 = vadd.f32 0.0, %v724
      %v726 = vpop.f32.mrf.mxu0
      %v727 = vpop.f32.mrf.mxu0
      %v728 = vadd.f32 0.0, %v727
      %v729 = vpop.f32.mrf.mxu0
      %730 = vmatprep.mubr.bf16.mxu0 0
      %731 = vmatmul.mubr.bf16.gmra.mxu0 %v672
      %v732 = vpop.f32.mrf.mxu0
      %v733 = vadd.f32 0.0, %v732
      %v734 = vpop.f32.mrf.mxu0
      %v735 = vpop.f32.mrf.mxu0
      %v736 = vpop.f32.mrf.mxu0
      %737 = vdwg.mxu0
      %v738 = vpack.i.b16 %v409, %v408
      %v739 = vpack.i.b16 %v411, %v410
      %v740 = vpack.i.b16 %v413, %v412
      %v741 = vpack.i.b16 %v415, %v414
      %v742 = vpack.i.b16 %v417, %v416
      %v743 = vpack.i.b16 %v419, %v418
      %v744 = vpack.i.b16 %v421, %v420
      %v745 = vpack.i.b16 %v423, %v422
      %v746 = vpack.i.b16 %v425, %v424
      %v747 = vpack.i.b16 %v427, %v426
      %v748 = vpack.i.b16 %v429, %v428
      %v749 = vpack.i.b16 %v431, %v430
      %v750 = vpack.i.b16 %v433, %v432
      %v751 = vpack.i.b16 %v435, %v434
      %v752 = vpack.i.b16 %v437, %v436
      %v753 = vpack.i.b16 %v439, %v438
      %v754 = vpack.i.b16 %v441, %v440
      %v755 = vpack.i.b16 %v443, %v442
      %v756 = vpack.i.b16 %v445, %v444
      %v757 = vpack.i.b16 %v447, %v446
      %v758 = vpack.i.b16 %v449, %v448
      %v759 = vpack.i.b16 %v451, %v450
      %v760 = vpack.i.b16 %v453, %v452
      %v761 = vpack.i.b16 %v455, %v454
      %v763 = vcombine.low %v738, %v739
      %v764 = vcombine.low %v740, %v741
      %v765 = vcombine.low %v742, %v743
      %v766 = vcombine.low %v744, %v745
      %v768 = vunpack.c.l.s4 1966171168
      %v769 = vunpack.c.0.s8 %v768
      %v770 = vlaneseq
      %v771 = vshrl.u32 %v770, 7
      %v772 = vsub.s32 %v769, %v771
      %v773 = vrot.slane %v763, %v772
      %v775 = vunpack.c.l.s4 1966171168
      %v776 = vunpack.c.0.s8 %v775
      %v777 = vlaneseq
      %v778 = vshrl.u32 %v777, 7
      %v779 = vsub.s32 %v776, %v778
      %v780 = vrot.slane %v764, %v779
      %v782 = vunpack.c.l.s4 1966171168
      %v783 = vunpack.c.0.s8 %v782
      %v784 = vlaneseq
      %v785 = vshrl.u32 %v784, 7
      %v786 = vsub.s32 %v783, %v785
      %v787 = vrot.slane %v765, %v786
      %v789 = vunpack.c.l.s4 1966171168
      %v790 = vunpack.c.0.s8 %v789
      %v791 = vlaneseq
      %v792 = vshrl.u32 %v791, 7
      %v793 = vsub.s32 %v790, %v792
      %v794 = vrot.slane %v766, %v793
      %v795 = vcombine.low %v773, %v780
      %v796 = vcombine.low %v787, %v794
      %v798 = vunpack.c.l.s4 1966171168
      %v799 = vunpack.c.0.s8 %v798
      %v800 = vlaneseq
      %v801 = vshrl.u32 %v800, 7
      %v802 = vsub.s32 %v799, %v801
      %v803 = vrot.slane %v795, %v802
      %v805 = vunpack.c.l.s4 1966171168
      %v806 = vunpack.c.0.s8 %v805
      %v807 = vlaneseq
      %v808 = vshrl.u32 %v807, 7
      %v809 = vsub.s32 %v806, %v808
      %v810 = vrot.slane %v796, %v809
      %v811 = vcombine.low %v803, %v810
      %v812 = vcombine.low %v746, %v747
      %v813 = vcombine.low %v748, %v749
      %v814 = vcombine.low %v750, %v751
      %v815 = vcombine.low %v752, %v753
      %v817 = vunpack.c.l.s4 1966171168
      %v818 = vunpack.c.0.s8 %v817
      %v819 = vlaneseq
      %v820 = vshrl.u32 %v819, 7
      %v821 = vsub.s32 %v818, %v820
      %v822 = vrot.slane %v812, %v821
      %v824 = vunpack.c.l.s4 1966171168
      %v825 = vunpack.c.0.s8 %v824
      %v826 = vlaneseq
      %v827 = vshrl.u32 %v826, 7
      %v828 = vsub.s32 %v825, %v827
      %v829 = vrot.slane %v813, %v828
      %v831 = vunpack.c.l.s4 1966171168
      %v832 = vunpack.c.0.s8 %v831
      %v833 = vlaneseq
      %v834 = vshrl.u32 %v833, 7
      %v835 = vsub.s32 %v832, %v834
      %v836 = vrot.slane %v814, %v835
      %v838 = vunpack.c.l.s4 1966171168
      %v839 = vunpack.c.0.s8 %v838
      %v840 = vlaneseq
      %v841 = vshrl.u32 %v840, 7
      %v842 = vsub.s32 %v839, %v841
      %v843 = vrot.slane %v815, %v842
      %v844 = vcombine.low %v822, %v829
      %v845 = vcombine.low %v836, %v843
      %v847 = vunpack.c.l.s4 1966171168
      %v848 = vunpack.c.0.s8 %v847
      %v849 = vlaneseq
      %v850 = vshrl.u32 %v849, 7
      %v851 = vsub.s32 %v848, %v850
      %v852 = vrot.slane %v844, %v851
      %v854 = vunpack.c.l.s4 1966171168
      %v855 = vunpack.c.0.s8 %v854
      %v856 = vlaneseq
      %v857 = vshrl.u32 %v856, 7
      %v858 = vsub.s32 %v855, %v857
      %v859 = vrot.slane %v845, %v858
      %v860 = vcombine.low %v852, %v859
      %v861 = vcombine.low %v754, %v755
      %v862 = vcombine.low %v756, %v757
      %v863 = vcombine.low %v758, %v759
      %v864 = vcombine.low %v760, %v761
      %v866 = vunpack.c.l.s4 1966171168
      %v867 = vunpack.c.0.s8 %v866
      %v868 = vlaneseq
      %v869 = vshrl.u32 %v868, 7
      %v870 = vsub.s32 %v867, %v869
      %v871 = vrot.slane %v861, %v870
      %v873 = vunpack.c.l.s4 1966171168
      %v874 = vunpack.c.0.s8 %v873
      %v875 = vlaneseq
      %v876 = vshrl.u32 %v875, 7
      %v877 = vsub.s32 %v874, %v876
      %v878 = vrot.slane %v862, %v877
      %v880 = vunpack.c.l.s4 1966171168
      %v881 = vunpack.c.0.s8 %v880
      %v882 = vlaneseq
      %v883 = vshrl.u32 %v882, 7
      %v884 = vsub.s32 %v881, %v883
      %v885 = vrot.slane %v863, %v884
      %v887 = vunpack.c.l.s4 1966171168
      %v888 = vunpack.c.0.s8 %v887
      %v889 = vlaneseq
      %v890 = vshrl.u32 %v889, 7
      %v891 = vsub.s32 %v888, %v890
      %v892 = vrot.slane %v864, %v891
      %v893 = vcombine.low %v871, %v878
      %v894 = vcombine.low %v885, %v892
      %v896 = vunpack.c.l.s4 1966171168
      %v897 = vunpack.c.0.s8 %v896
      %v898 = vlaneseq
      %v899 = vshrl.u32 %v898, 7
      %v900 = vsub.s32 %v897, %v899
      %v901 = vrot.slane %v893, %v900
      %v903 = vunpack.c.l.s4 1966171168
      %v904 = vunpack.c.0.s8 %v903
      %v905 = vlaneseq
      %v906 = vshrl.u32 %v905, 7
      %v907 = vsub.s32 %v904, %v906
      %v908 = vrot.slane %v894, %v907
      %v909 = vcombine.low %v901, %v908
      %v911 = vunpack.c.l.s4 1966171168
      %v912 = vunpack.c.0.s8 %v911
      %v913 = vlaneseq
      %v914 = vshrl.u32 %v913, 7
      %v915 = vsub.s32 %v912, %v914
      %v916 = vrot.slane %v456, %v915
      %v918 = vunpack.c.l.s4 1966171168
      %v919 = vunpack.c.0.s8 %v918
      %v920 = vlaneseq
      %v921 = vshrl.u32 %v920, 7
      %v922 = vsub.s32 %v919, %v921
      %v923 = vrot.slane %v916, %v922
      %v926 = vunpack.c.l.b16 %v457
      %v927 = vunpack.c.l.b16 %v458
      %v928 = vpack.c.b16 %v927, %v926
      %v931 = vsel %vm661, %v811, 0
      %v934 = vsel %vm661, %v860, 0
      %v937 = vsel %vm661, %v909, 0
      %v940 = vsel %vm661, %v923, 0
      %942 = vmatprep.subr.bf16.mxu0 0
      %943 = vmatpush1.bf16.msra.mxu0 0
      %944 = vmatprep.subr.bf16.mxu0 0
      %945 = vmatpush1.bf16.msra.mxu0 0
      %946 = vmatprep.subr.bf16.mxu0 0
      %947 = vmatpush1.bf16.msra.mxu0 0
      %948 = vmatprep.subr.bf16.mxu0 0
      %949 = vmatpush1.bf16.msra.mxu0 0
      %950 = vmatprep.subr.bf16.mxu0 0
      %951 = vmatpush1.bf16.msra.mxu0 0
      %952 = vmatprep.subr.bf16.mxu0 0
      %953 = vmatpush1.bf16.msra.mxu0 0
      %954 = vmatprep.subr.bf16.mxu0 0
      %955 = vmatpush1.bf16.msra.mxu0 0
      %956 = vmatprep.subr.bf16.mxu0 0
      %957 = vmatpush1.bf16.msra.mxu0 %v928
      %958 = vmatprep.subr.bf16.mxu0 0
      %959 = vmatpush2.bf16.msra.mxu0 0
      %960 = vmatprep.subr.bf16.mxu0 0
      %961 = vmatpush2.bf16.msra.mxu0 0
      %962 = vmatprep.subr.bf16.mxu0 0
      %963 = vmatpush2.bf16.msra.mxu0 0
      %964 = vmatprep.subr.bf16.mxu0 0
      %965 = vmatpush2.bf16.msra.mxu0 0
      %966 = vmatprep.subr.bf16.mxu0 0
      %967 = vmatpush2.bf16.msra.mxu0 0
      %968 = vmatprep.subr.bf16.mxu0 0
      %969 = vmatpush2.bf16.msra.mxu0 0
      %970 = vmatprep.subr.bf16.mxu0 0
      %971 = vmatpush2.bf16.msra.mxu0 0
      %972 = vmatprep.subr.bf16.mxu0 0
      %973 = vmatpush2.bf16.msra.mxu0 0
      %974 = vmatprep.mubr.bf16.mxu0 0
      %975 = vmatmul.mubr.bf16.gmra.mxu0 %v931
      %v976 = vpop.f32.mrf.mxu0
      %v977 = vadd.f32 %v709, %v976
      %v978 = vpop.f32.mrf.mxu0
      %v979 = vpop.f32.mrf.mxu0
      %v980 = vadd.f32 %v712, %v979
      %v981 = vpop.f32.mrf.mxu0
      %982 = vmatprep.mubr.bf16.mxu0 0
      %983 = vmatmul.mubr.bf16.gmra.mxu0 %v934
      %v984 = vpop.f32.mrf.mxu0
      %v985 = vadd.f32 %v717, %v984
      %v986 = vpop.f32.mrf.mxu0
      %v987 = vpop.f32.mrf.mxu0
      %v988 = vadd.f32 %v720, %v987
      %v989 = vpop.f32.mrf.mxu0
      %990 = vmatprep.mubr.bf16.mxu0 0
      %991 = vmatmul.mubr.bf16.gmra.mxu0 %v937
      %v992 = vpop.f32.mrf.mxu0
      %v993 = vadd.f32 %v725, %v992
      %v994 = vpop.f32.mrf.mxu0
      %v995 = vpop.f32.mrf.mxu0
      %v996 = vadd.f32 %v728, %v995
      %v997 = vpop.f32.mrf.mxu0
      %998 = vmatprep.mubr.bf16.mxu0 0
      %999 = vmatmul.mubr.bf16.gmra.mxu0 %v940
      %v1000 = vpop.f32.mrf.mxu0
      %v1001 = vadd.f32 %v733, %v1000
      %v1002 = vpop.f32.mrf.mxu0
      %v1003 = vpop.f32.mrf.mxu0
      %v1004 = vpop.f32.mrf.mxu0
      %1005 = vdwg.mxu0
      %s1006 = sadd.s32 %s222, 1
      %s1007 = smul.u32 %s1006, 2
      %s1008 = smul.addr %s1007, 4
      %s1009 = scalar_lea.vmem %s210, %s1008
      %v1010 = vld [vmem:[%s1009] sm:$0xf]
      %v1011 = vld [vmem:[%s1009 + $0x8] sm:$0xf]
      %v1012 = vld [vmem:[%s1009 + $0x10] sm:$0xf]
      %v1013 = vld [vmem:[%s1009 + $0x18] sm:$0xf]
      %v1014 = vld [vmem:[%s1009 + $0x20] sm:$0xf]
      %v1015 = vld [vmem:[%s1009 + $0x28] sm:$0xf]
      %v1016 = vld [vmem:[%s1009 + $0x30] sm:$0xf]
      %v1025 = vunpack.c.l.s4 1966171168
      %v1026 = vunpack.c.0.s8 %v1025
      %v1027 = vlaneseq
      %v1028 = vshrl.u32 %v1027, 7
      %v1029 = vsub.s32 %v1026, %v1028
      %v1030 = vrot.slane %v1010, %v1029
      %v1031 = vcombine.high %v1030, %v1030
      %v1033 = vunpack.c.l.s4 1966171168
      %v1034 = vunpack.c.0.s8 %v1033
      %v1035 = vlaneseq
      %v1036 = vshrl.u32 %v1035, 7
      %v1037 = vsub.s32 %v1034, %v1036
      %v1038 = vrot.slane %v1030, %v1037
      %v1040 = vunpack.c.l.s4 1966171168
      %v1041 = vunpack.c.0.s8 %v1040
      %v1042 = vlaneseq
      %v1043 = vshrl.u32 %v1042, 7
      %v1044 = vsub.s32 %v1041, %v1043
      %v1045 = vrot.slane %v1031, %v1044
      %v1046 = vcombine.high %v1038, %v1038
      %v1047 = vcombine.high %v1045, %v1045
      %v1049 = vunpack.c.l.s4 1966171168
      %v1050 = vunpack.c.0.s8 %v1049
      %v1051 = vlaneseq
      %v1052 = vshrl.u32 %v1051, 7
      %v1053 = vsub.s32 %v1050, %v1052
      %v1054 = vrot.slane %v1011, %v1053
      %v1055 = vcombine.high %v1054, %v1054
      %v1057 = vunpack.c.l.s4 1966171168
      %v1058 = vunpack.c.0.s8 %v1057
      %v1059 = vlaneseq
      %v1060 = vshrl.u32 %v1059, 7
      %v1061 = vsub.s32 %v1058, %v1060
      %v1062 = vrot.slane %v1054, %v1061
      %v1064 = vunpack.c.l.s4 1966171168
      %v1065 = vunpack.c.0.s8 %v1064
      %v1066 = vlaneseq
      %v1067 = vshrl.u32 %v1066, 7
      %v1068 = vsub.s32 %v1065, %v1067
      %v1069 = vrot.slane %v1055, %v1068
      %v1070 = vcombine.high %v1062, %v1062
      %v1071 = vcombine.high %v1069, %v1069
      %v1073 = vunpack.c.l.s4 1966171168
      %v1074 = vunpack.c.0.s8 %v1073
      %v1075 = vlaneseq
      %v1076 = vshrl.u32 %v1075, 7
      %v1077 = vsub.s32 %v1074, %v1076
      %v1078 = vrot.slane %v1012, %v1077
      %v1079 = vcombine.high %v1078, %v1078
      %v1081 = vunpack.c.l.s4 1966171168
      %v1082 = vunpack.c.0.s8 %v1081
      %v1083 = vlaneseq
      %v1084 = vshrl.u32 %v1083, 7
      %v1085 = vsub.s32 %v1082, %v1084
      %v1086 = vrot.slane %v1078, %v1085
      %v1088 = vunpack.c.l.s4 1966171168
      %v1089 = vunpack.c.0.s8 %v1088
      %v1090 = vlaneseq
      %v1091 = vshrl.u32 %v1090, 7
      %v1092 = vsub.s32 %v1089, %v1091
      %v1093 = vrot.slane %v1079, %v1092
      %v1094 = vcombine.high %v1086, %v1086
      %v1095 = vcombine.high %v1093, %v1093
      %v1097 = vunpack.c.l.s4 1966171168
      %v1098 = vunpack.c.0.s8 %v1097
      %v1099 = vlaneseq
      %v1100 = vshrl.u32 %v1099, 7
      %v1101 = vsub.s32 %v1098, %v1100
      %v1102 = vrot.slane %v1013, %v1101
      %v1103 = vcombine.high %v1102, %v1102
      %v1105 = vunpack.c.l.s4 1966171168
      %v1106 = vunpack.c.0.s8 %v1105
      %v1107 = vlaneseq
      %v1108 = vshrl.u32 %v1107, 7
      %v1109 = vsub.s32 %v1106, %v1108
      %v1110 = vrot.slane %v1102, %v1109
      %v1112 = vunpack.c.l.s4 1966171168
      %v1113 = vunpack.c.0.s8 %v1112
      %v1114 = vlaneseq
      %v1115 = vshrl.u32 %v1114, 7
      %v1116 = vsub.s32 %v1113, %v1115
      %v1117 = vrot.slane %v1103, %v1116
      %v1118 = vcombine.high %v1110, %v1110
      %v1119 = vcombine.high %v1117, %v1117
      %v1121 = vunpack.c.l.s4 1966171168
      %v1122 = vunpack.c.0.s8 %v1121
      %v1123 = vlaneseq
      %v1124 = vshrl.u32 %v1123, 7
      %v1125 = vsub.s32 %v1122, %v1124
      %v1126 = vrot.slane %v1014, %v1125
      %v1127 = vcombine.high %v1126, %v1126
      %v1129 = vunpack.c.l.s4 1966171168
      %v1130 = vunpack.c.0.s8 %v1129
      %v1131 = vlaneseq
      %v1132 = vshrl.u32 %v1131, 7
      %v1133 = vsub.s32 %v1130, %v1132
      %v1134 = vrot.slane %v1126, %v1133
      %v1136 = vunpack.c.l.s4 1966171168
      %v1137 = vunpack.c.0.s8 %v1136
      %v1138 = vlaneseq
      %v1139 = vshrl.u32 %v1138, 7
      %v1140 = vsub.s32 %v1137, %v1139
      %v1141 = vrot.slane %v1127, %v1140
      %v1142 = vcombine.high %v1134, %v1134
      %v1143 = vcombine.high %v1141, %v1141
      %v1145 = vunpack.c.l.s4 1966171168
      %v1146 = vunpack.c.0.s8 %v1145
      %v1147 = vlaneseq
      %v1148 = vshrl.u32 %v1147, 7
      %v1149 = vsub.s32 %v1146, %v1148
      %v1150 = vrot.slane %v1015, %v1149
      %v1151 = vcombine.high %v1150, %v1150
      %v1153 = vunpack.c.l.s4 1966171168
      %v1154 = vunpack.c.0.s8 %v1153
      %v1155 = vlaneseq
      %v1156 = vshrl.u32 %v1155, 7
      %v1157 = vsub.s32 %v1154, %v1156
      %v1158 = vrot.slane %v1150, %v1157
      %v1160 = vunpack.c.l.s4 1966171168
      %v1161 = vunpack.c.0.s8 %v1160
      %v1162 = vlaneseq
      %v1163 = vshrl.u32 %v1162, 7
      %v1164 = vsub.s32 %v1161, %v1163
      %v1165 = vrot.slane %v1151, %v1164
      %v1166 = vcombine.high %v1158, %v1158
      %v1167 = vcombine.high %v1165, %v1165
      %v1169 = vunpack.c.l.s4 1966171168
      %v1170 = vunpack.c.0.s8 %v1169
      %v1171 = vlaneseq
      %v1172 = vshrl.u32 %v1171, 7
      %v1173 = vsub.s32 %v1170, %v1172
      %v1174 = vrot.slane %v1016, %v1173
      %v1175 = vcombine.high %v1174, %v1174
      %v1177 = vunpack.c.l.s4 1966171168
      %v1178 = vunpack.c.0.s8 %v1177
      %v1179 = vlaneseq
      %v1180 = vshrl.u32 %v1179, 7
      %v1181 = vsub.s32 %v1178, %v1180
      %v1182 = vrot.slane %v1174, %v1181
      %v1184 = vunpack.c.l.s4 1966171168
      %v1185 = vunpack.c.0.s8 %v1184
      %v1186 = vlaneseq
      %v1187 = vshrl.u32 %v1186, 7
      %v1188 = vsub.s32 %v1185, %v1187
      %v1189 = vrot.slane %v1175, %v1188
      %v1190 = vcombine.high %v1182, %v1182
      %v1191 = vcombine.high %v1189, %v1189
      %v1192 = vunpack.i.l.s16 %v1038
      %v1193 = vunpack.i.h.s16 %v1038
      %v1194 = vunpack.i.l.s16 %v1045
      %v1195 = vunpack.i.h.s16 %v1045
      %v1196 = vunpack.i.l.s16 %v1046
      %v1197 = vunpack.i.h.s16 %v1046
      %v1198 = vunpack.i.l.s16 %v1047
      %v1199 = vunpack.i.l.s16 %v1062
      %v1200 = vunpack.i.h.s16 %v1062
      %v1201 = vunpack.i.l.s16 %v1069
      %v1202 = vunpack.i.h.s16 %v1069
      %v1203 = vunpack.i.l.s16 %v1070
      %v1204 = vunpack.i.h.s16 %v1070
      %v1205 = vunpack.i.l.s16 %v1071
      %v1206 = vunpack.i.l.s16 %v1086
      %v1207 = vunpack.i.h.s16 %v1086
      %v1208 = vunpack.i.l.s16 %v1093
      %v1209 = vunpack.i.h.s16 %v1093
      %v1210 = vunpack.i.l.s16 %v1094
      %v1211 = vunpack.i.h.s16 %v1094
      %v1212 = vunpack.i.l.s16 %v1095
      %v1213 = vunpack.i.l.s16 %v1110
      %v1214 = vunpack.i.h.s16 %v1110
      %v1215 = vunpack.i.l.s16 %v1117
      %v1216 = vunpack.i.h.s16 %v1117
      %v1217 = vunpack.i.l.s16 %v1118
      %v1218 = vunpack.i.h.s16 %v1118
      %v1219 = vunpack.i.l.s16 %v1119
      %v1220 = vunpack.i.l.s16 %v1134
      %v1221 = vunpack.i.h.s16 %v1134
      %v1222 = vunpack.i.l.s16 %v1141
      %v1223 = vunpack.i.h.s16 %v1141
      %v1224 = vunpack.i.l.s16 %v1142
      %v1225 = vunpack.i.h.s16 %v1142
      %v1226 = vunpack.i.l.s16 %v1143
      %v1227 = vunpack.i.l.s16 %v1158
      %v1228 = vunpack.i.h.s16 %v1158
      %v1229 = vunpack.i.l.s16 %v1165
      %v1230 = vunpack.i.h.s16 %v1165
      %v1231 = vunpack.i.l.s16 %v1166
      %v1232 = vunpack.i.h.s16 %v1166
      %v1233 = vunpack.i.l.s16 %v1167
      %v1234 = vunpack.i.l.s16 %v1182
      %v1235 = vunpack.i.h.s16 %v1182
      %v1236 = vunpack.i.l.s16 %v1189
      %v1237 = vunpack.i.h.s16 %v1189
      %v1238 = vunpack.i.l.s16 %v1190
      %v1239 = vunpack.i.h.s16 %v1190
      %v1240 = vunpack.i.l.s16 %v1191
      %s1241 = scalar_lea.vmem %s1, 16
      %v1242 = vld [vmem:[%s1241] sm:$0xf]
      %v1243 = vld [vmem:[%s1241 + $0x4] sm:$0xf]
      %v1244 = vpack.i.b16 %v1193, %v1192
      %v1245 = vpack.i.b16 %v1195, %v1194
      %v1246 = vpack.i.b16 %v1197, %v1196
      %v1247 = vpack.i.b16 %v1199, %v1198
      %v1248 = vpack.i.b16 %v1201, %v1200
      %v1249 = vpack.i.b16 %v1203, %v1202
      %v1250 = vpack.i.b16 %v1205, %v1204
      %v1251 = vpack.i.b16 %v1207, %v1206
      %v1252 = vpack.i.b16 %v1209, %v1208
      %v1253 = vpack.i.b16 %v1211, %v1210
      %v1254 = vpack.i.b16 %v1213, %v1212
      %v1255 = vpack.i.b16 %v1215, %v1214
      %v1256 = vpack.i.b16 %v1217, %v1216
      %v1257 = vpack.i.b16 %v1219, %v1218
      %v1258 = vpack.i.b16 %v1221, %v1220
      %v1259 = vpack.i.b16 %v1223, %v1222
      %v1260 = vpack.i.b16 %v1225, %v1224
      %v1261 = vpack.i.b16 %v1227, %v1226
      %v1262 = vpack.i.b16 %v1229, %v1228
      %v1263 = vpack.i.b16 %v1231, %v1230
      %v1264 = vpack.i.b16 %v1233, %v1232
      %v1265 = vpack.i.b16 %v1235, %v1234
      %v1266 = vpack.i.b16 %v1237, %v1236
      %v1267 = vpack.i.b16 %v1239, %v1238
      %v1269 = vcombine.low %v1244, %v1245
      %v1270 = vcombine.low %v1246, %v1247
      %v1271 = vcombine.low %v1248, %v1249
      %v1272 = vcombine.low %v1250, %v1251
      %v1274 = vunpack.c.l.s4 1966171168
      %v1275 = vunpack.c.0.s8 %v1274
      %v1276 = vlaneseq
      %v1277 = vshrl.u32 %v1276, 7
      %v1278 = vsub.s32 %v1275, %v1277
      %v1279 = vrot.slane %v1269, %v1278
      %v1281 = vunpack.c.l.s4 1966171168
      %v1282 = vunpack.c.0.s8 %v1281
      %v1283 = vlaneseq
      %v1284 = vshrl.u32 %v1283, 7
      %v1285 = vsub.s32 %v1282, %v1284
      %v1286 = vrot.slane %v1270, %v1285
      %v1288 = vunpack.c.l.s4 1966171168
      %v1289 = vunpack.c.0.s8 %v1288
      %v1290 = vlaneseq
      %v1291 = vshrl.u32 %v1290, 7
      %v1292 = vsub.s32 %v1289, %v1291
      %v1293 = vrot.slane %v1271, %v1292
      %v1295 = vunpack.c.l.s4 1966171168
      %v1296 = vunpack.c.0.s8 %v1295
      %v1297 = vlaneseq
      %v1298 = vshrl.u32 %v1297, 7
      %v1299 = vsub.s32 %v1296, %v1298
      %v1300 = vrot.slane %v1272, %v1299
      %v1301 = vcombine.low %v1279, %v1286
      %v1302 = vcombine.low %v1293, %v1300
      %v1304 = vunpack.c.l.s4 1966171168
      %v1305 = vunpack.c.0.s8 %v1304
      %v1306 = vlaneseq
      %v1307 = vshrl.u32 %v1306, 7
      %v1308 = vsub.s32 %v1305, %v1307
      %v1309 = vrot.slane %v1301, %v1308
      %v1311 = vunpack.c.l.s4 1966171168
      %v1312 = vunpack.c.0.s8 %v1311
      %v1313 = vlaneseq
      %v1314 = vshrl.u32 %v1313, 7
      %v1315 = vsub.s32 %v1312, %v1314
      %v1316 = vrot.slane %v1302, %v1315
      %v1317 = vcombine.low %v1309, %v1316
      %v1318 = vcombine.low %v1252, %v1253
      %v1319 = vcombine.low %v1254, %v1255
      %v1320 = vcombine.low %v1256, %v1257
      %v1321 = vcombine.low %v1258, %v1259
      %v1323 = vunpack.c.l.s4 1966171168
      %v1324 = vunpack.c.0.s8 %v1323
      %v1325 = vlaneseq
      %v1326 = vshrl.u32 %v1325, 7
      %v1327 = vsub.s32 %v1324, %v1326
      %v1328 = vrot.slane %v1318, %v1327
      %v1330 = vunpack.c.l.s4 1966171168
      %v1331 = vunpack.c.0.s8 %v1330
      %v1332 = vlaneseq
      %v1333 = vshrl.u32 %v1332, 7
      %v1334 = vsub.s32 %v1331, %v1333
      %v1335 = vrot.slane %v1319, %v1334
      %v1337 = vunpack.c.l.s4 1966171168
      %v1338 = vunpack.c.0.s8 %v1337
      %v1339 = vlaneseq
      %v1340 = vshrl.u32 %v1339, 7
      %v1341 = vsub.s32 %v1338, %v1340
      %v1342 = vrot.slane %v1320, %v1341
      %v1344 = vunpack.c.l.s4 1966171168
      %v1345 = vunpack.c.0.s8 %v1344
      %v1346 = vlaneseq
      %v1347 = vshrl.u32 %v1346, 7
      %v1348 = vsub.s32 %v1345, %v1347
      %v1349 = vrot.slane %v1321, %v1348
      %v1350 = vcombine.low %v1328, %v1335
      %v1351 = vcombine.low %v1342, %v1349
      %v1353 = vunpack.c.l.s4 1966171168
      %v1354 = vunpack.c.0.s8 %v1353
      %v1355 = vlaneseq
      %v1356 = vshrl.u32 %v1355, 7
      %v1357 = vsub.s32 %v1354, %v1356
      %v1358 = vrot.slane %v1350, %v1357
      %v1360 = vunpack.c.l.s4 1966171168
      %v1361 = vunpack.c.0.s8 %v1360
      %v1362 = vlaneseq
      %v1363 = vshrl.u32 %v1362, 7
      %v1364 = vsub.s32 %v1361, %v1363
      %v1365 = vrot.slane %v1351, %v1364
      %v1366 = vcombine.low %v1358, %v1365
      %v1367 = vcombine.low %v1260, %v1261
      %v1368 = vcombine.low %v1262, %v1263
      %v1369 = vcombine.low %v1264, %v1265
      %v1370 = vcombine.low %v1266, %v1267
      %v1372 = vunpack.c.l.s4 1966171168
      %v1373 = vunpack.c.0.s8 %v1372
      %v1374 = vlaneseq
      %v1375 = vshrl.u32 %v1374, 7
      %v1376 = vsub.s32 %v1373, %v1375
      %v1377 = vrot.slane %v1367, %v1376
      %v1379 = vunpack.c.l.s4 1966171168
      %v1380 = vunpack.c.0.s8 %v1379
      %v1381 = vlaneseq
      %v1382 = vshrl.u32 %v1381, 7
      %v1383 = vsub.s32 %v1380, %v1382
      %v1384 = vrot.slane %v1368, %v1383
      %v1386 = vunpack.c.l.s4 1966171168
      %v1387 = vunpack.c.0.s8 %v1386
      %v1388 = vlaneseq
      %v1389 = vshrl.u32 %v1388, 7
      %v1390 = vsub.s32 %v1387, %v1389
      %v1391 = vrot.slane %v1369, %v1390
      %v1393 = vunpack.c.l.s4 1966171168
      %v1394 = vunpack.c.0.s8 %v1393
      %v1395 = vlaneseq
      %v1396 = vshrl.u32 %v1395, 7
      %v1397 = vsub.s32 %v1394, %v1396
      %v1398 = vrot.slane %v1370, %v1397
      %v1399 = vcombine.low %v1377, %v1384
      %v1400 = vcombine.low %v1391, %v1398
      %v1402 = vunpack.c.l.s4 1966171168
      %v1403 = vunpack.c.0.s8 %v1402
      %v1404 = vlaneseq
      %v1405 = vshrl.u32 %v1404, 7
      %v1406 = vsub.s32 %v1403, %v1405
      %v1407 = vrot.slane %v1399, %v1406
      %v1409 = vunpack.c.l.s4 1966171168
      %v1410 = vunpack.c.0.s8 %v1409
      %v1411 = vlaneseq
      %v1412 = vshrl.u32 %v1411, 7
      %v1413 = vsub.s32 %v1410, %v1412
      %v1414 = vrot.slane %v1400, %v1413
      %v1415 = vcombine.low %v1407, %v1414
      %v1417 = vunpack.c.l.s4 1966171168
      %v1418 = vunpack.c.0.s8 %v1417
      %v1419 = vlaneseq
      %v1420 = vshrl.u32 %v1419, 7
      %v1421 = vsub.s32 %v1418, %v1420
      %v1422 = vrot.slane %v1240, %v1421
      %v1424 = vunpack.c.l.s4 1966171168
      %v1425 = vunpack.c.0.s8 %v1424
      %v1426 = vlaneseq
      %v1427 = vshrl.u32 %v1426, 7
      %v1428 = vsub.s32 %v1425, %v1427
      %v1429 = vrot.slane %v1422, %v1428
      %v1432 = vunpack.c.l.b16 %v1242
      %v1433 = vunpack.c.l.b16 %v1243
      %v1434 = vpack.c.b16 %v1433, %v1432
      %v1437 = vsel %vm661, %v1317, 0
      %v1440 = vsel %vm661, %v1366, 0
      %v1443 = vsel %vm661, %v1415, 0
      %v1446 = vsel %vm661, %v1429, 0
      %1448 = vmatprep.subr.bf16.mxu0 0
      %1449 = vmatpush1.bf16.msra.mxu0 0
      %1450 = vmatprep.subr.bf16.mxu0 0
      %1451 = vmatpush1.bf16.msra.mxu0 0
      %1452 = vmatprep.subr.bf16.mxu0 0
      %1453 = vmatpush1.bf16.msra.mxu0 0
      %1454 = vmatprep.subr.bf16.mxu0 0
      %1455 = vmatpush1.bf16.msra.mxu0 0
      %1456 = vmatprep.subr.bf16.mxu0 0
      %1457 = vmatpush1.bf16.msra.mxu0 0
      %1458 = vmatprep.subr.bf16.mxu0 0
      %1459 = vmatpush1.bf16.msra.mxu0 0
      %1460 = vmatprep.subr.bf16.mxu0 0
      %1461 = vmatpush1.bf16.msra.mxu0 0
      %1462 = vmatprep.subr.bf16.mxu0 0
      %1463 = vmatpush1.bf16.msra.mxu0 %v1434
      %1464 = vmatprep.subr.bf16.mxu0 0
      %1465 = vmatpush2.bf16.msra.mxu0 0
      %1466 = vmatprep.subr.bf16.mxu0 0
      %1467 = vmatpush2.bf16.msra.mxu0 0
      %1468 = vmatprep.subr.bf16.mxu0 0
      %1469 = vmatpush2.bf16.msra.mxu0 0
      %1470 = vmatprep.subr.bf16.mxu0 0
      %1471 = vmatpush2.bf16.msra.mxu0 0
      %1472 = vmatprep.subr.bf16.mxu0 0
      %1473 = vmatpush2.bf16.msra.mxu0 0
      %1474 = vmatprep.subr.bf16.mxu0 0
      %1475 = vmatpush2.bf16.msra.mxu0 0
      %1476 = vmatprep.subr.bf16.mxu0 0
      %1477 = vmatpush2.bf16.msra.mxu0 0
      %1478 = vmatprep.subr.bf16.mxu0 0
      %1479 = vmatpush2.bf16.msra.mxu0 0
      %1480 = vmatprep.mubr.bf16.mxu0 0
      %1481 = vmatmul.mubr.bf16.gmra.mxu0 %v1437
      %v1482 = vpop.f32.mrf.mxu0
      %v1483 = vadd.f32 0.0, %v1482
      %v1484 = vpop.f32.mrf.mxu0
      %v1485 = vpop.f32.mrf.mxu0
      %v1486 = vadd.f32 0.0, %v1485
      %v1487 = vpop.f32.mrf.mxu0
      %1488 = vmatprep.mubr.bf16.mxu0 0
      %1489 = vmatmul.mubr.bf16.gmra.mxu0 %v1440
      %v1490 = vpop.f32.mrf.mxu0
      %v1491 = vadd.f32 0.0, %v1490
      %v1492 = vpop.f32.mrf.mxu0
      %v1493 = vpop.f32.mrf.mxu0
      %v1494 = vadd.f32 0.0, %v1493
      %v1495 = vpop.f32.mrf.mxu0
      %1496 = vmatprep.mubr.bf16.mxu0 0
      %1497 = vmatmul.mubr.bf16.gmra.mxu0 %v1443
      %v1498 = vpop.f32.mrf.mxu0
      %v1499 = vadd.f32 0.0, %v1498
      %v1500 = vpop.f32.mrf.mxu0
      %v1501 = vpop.f32.mrf.mxu0
      %v1502 = vadd.f32 0.0, %v1501
      %v1503 = vpop.f32.mrf.mxu0
      %1504 = vmatprep.mubr.bf16.mxu0 0
      %1505 = vmatmul.mubr.bf16.gmra.mxu0 %v1446
      %v1506 = vpop.f32.mrf.mxu0
      %v1507 = vadd.f32 0.0, %v1506
      %v1508 = vpop.f32.mrf.mxu0
      %v1509 = vpop.f32.mrf.mxu0
      %v1510 = vpop.f32.mrf.mxu0
      %1511 = vdwg.mxu0
      %v1512 = vadd.f32 %v977, %v1483
      %v1513 = vadd.f32 %v980, %v1486
      %v1514 = vadd.f32 %v985, %v1491
      %v1515 = vadd.f32 %v988, %v1494
      %v1516 = vadd.f32 %v993, %v1499
      %v1517 = vadd.f32 %v996, %v1502
      %v1518 = vadd.f32 %v1001, %v1507
      %v1519 = vld [vmem:[%s1009] sm:$0xf]
      %v1520 = vld [vmem:[%s1009 + $0x8] sm:$0xf]
      %v1521 = vld [vmem:[%s1009 + $0x10] sm:$0xf]
      %v1522 = vld [vmem:[%s1009 + $0x18] sm:$0xf]
      %v1523 = vld [vmem:[%s1009 + $0x20] sm:$0xf]
      %v1524 = vld [vmem:[%s1009 + $0x28] sm:$0xf]
      %v1525 = vld [vmem:[%s1009 + $0x30] sm:$0xf]
      %v1534 = vunpack.c.l.s4 1966171168
      %v1535 = vunpack.c.0.s8 %v1534
      %v1536 = vlaneseq
      %v1537 = vshrl.u32 %v1536, 7
      %v1538 = vsub.s32 %v1535, %v1537
      %v1539 = vrot.slane %v1519, %v1538
      %v1540 = vcombine.high %v1539, %v1539
      %v1542 = vunpack.c.l.s4 1966171168
      %v1543 = vunpack.c.0.s8 %v1542
      %v1544 = vlaneseq
      %v1545 = vshrl.u32 %v1544, 7
      %v1546 = vsub.s32 %v1543, %v1545
      %v1547 = vrot.slane %v1539, %v1546
      %v1549 = vunpack.c.l.s4 1966171168
      %v1550 = vunpack.c.0.s8 %v1549
      %v1551 = vlaneseq
      %v1552 = vshrl.u32 %v1551, 7
      %v1553 = vsub.s32 %v1550, %v1552
      %v1554 = vrot.slane %v1540, %v1553
      %v1555 = vcombine.high %v1547, %v1547
      %v1556 = vcombine.high %v1554, %v1554
      %v1558 = vunpack.c.l.s4 1966171168
      %v1559 = vunpack.c.0.s8 %v1558
      %v1560 = vlaneseq
      %v1561 = vshrl.u32 %v1560, 7
      %v1562 = vsub.s32 %v1559, %v1561
      %v1563 = vrot.slane %v1520, %v1562
      %v1564 = vcombine.high %v1563, %v1563
      %v1566 = vunpack.c.l.s4 1966171168
      %v1567 = vunpack.c.0.s8 %v1566
      %v1568 = vlaneseq
      %v1569 = vshrl.u32 %v1568, 7
      %v1570 = vsub.s32 %v1567, %v1569
      %v1571 = vrot.slane %v1563, %v1570
      %v1573 = vunpack.c.l.s4 1966171168
      %v1574 = vunpack.c.0.s8 %v1573
      %v1575 = vlaneseq
      %v1576 = vshrl.u32 %v1575, 7
      %v1577 = vsub.s32 %v1574, %v1576
      %v1578 = vrot.slane %v1564, %v1577
      %v1579 = vcombine.high %v1571, %v1571
      %v1580 = vcombine.high %v1578, %v1578
      %v1582 = vunpack.c.l.s4 1966171168
      %v1583 = vunpack.c.0.s8 %v1582
      %v1584 = vlaneseq
      %v1585 = vshrl.u32 %v1584, 7
      %v1586 = vsub.s32 %v1583, %v1585
      %v1587 = vrot.slane %v1521, %v1586
      %v1588 = vcombine.high %v1587, %v1587
      %v1590 = vunpack.c.l.s4 1966171168
      %v1591 = vunpack.c.0.s8 %v1590
      %v1592 = vlaneseq
      %v1593 = vshrl.u32 %v1592, 7
      %v1594 = vsub.s32 %v1591, %v1593
      %v1595 = vrot.slane %v1587, %v1594
      %v1597 = vunpack.c.l.s4 1966171168
      %v1598 = vunpack.c.0.s8 %v1597
      %v1599 = vlaneseq
      %v1600 = vshrl.u32 %v1599, 7
      %v1601 = vsub.s32 %v1598, %v1600
      %v1602 = vrot.slane %v1588, %v1601
      %v1603 = vcombine.high %v1595, %v1595
      %v1604 = vcombine.high %v1602, %v1602
      %v1606 = vunpack.c.l.s4 1966171168
      %v1607 = vunpack.c.0.s8 %v1606
      %v1608 = vlaneseq
      %v1609 = vshrl.u32 %v1608, 7
      %v1610 = vsub.s32 %v1607, %v1609
      %v1611 = vrot.slane %v1522, %v1610
      %v1612 = vcombine.high %v1611, %v1611
      %v1614 = vunpack.c.l.s4 1966171168
      %v1615 = vunpack.c.0.s8 %v1614
      %v1616 = vlaneseq
      %v1617 = vshrl.u32 %v1616, 7
      %v1618 = vsub.s32 %v1615, %v1617
      %v1619 = vrot.slane %v1611, %v1618
      %v1621 = vunpack.c.l.s4 1966171168
      %v1622 = vunpack.c.0.s8 %v1621
      %v1623 = vlaneseq
      %v1624 = vshrl.u32 %v1623, 7
      %v1625 = vsub.s32 %v1622, %v1624
      %v1626 = vrot.slane %v1612, %v1625
      %v1627 = vcombine.high %v1619, %v1619
      %v1628 = vcombine.high %v1626, %v1626
      %v1630 = vunpack.c.l.s4 1966171168
      %v1631 = vunpack.c.0.s8 %v1630
      %v1632 = vlaneseq
      %v1633 = vshrl.u32 %v1632, 7
      %v1634 = vsub.s32 %v1631, %v1633
      %v1635 = vrot.slane %v1523, %v1634
      %v1636 = vcombine.high %v1635, %v1635
      %v1638 = vunpack.c.l.s4 1966171168
      %v1639 = vunpack.c.0.s8 %v1638
      %v1640 = vlaneseq
      %v1641 = vshrl.u32 %v1640, 7
      %v1642 = vsub.s32 %v1639, %v1641
      %v1643 = vrot.slane %v1635, %v1642
      %v1645 = vunpack.c.l.s4 1966171168
      %v1646 = vunpack.c.0.s8 %v1645
      %v1647 = vlaneseq
      %v1648 = vshrl.u32 %v1647, 7
      %v1649 = vsub.s32 %v1646, %v1648
      %v1650 = vrot.slane %v1636, %v1649
      %v1651 = vcombine.high %v1643, %v1643
      %v1652 = vcombine.high %v1650, %v1650
      %v1654 = vunpack.c.l.s4 1966171168
      %v1655 = vunpack.c.0.s8 %v1654
      %v1656 = vlaneseq
      %v1657 = vshrl.u32 %v1656, 7
      %v1658 = vsub.s32 %v1655, %v1657
      %v1659 = vrot.slane %v1524, %v1658
      %v1660 = vcombine.high %v1659, %v1659
      %v1662 = vunpack.c.l.s4 1966171168
      %v1663 = vunpack.c.0.s8 %v1662
      %v1664 = vlaneseq
      %v1665 = vshrl.u32 %v1664, 7
      %v1666 = vsub.s32 %v1663, %v1665
      %v1667 = vrot.slane %v1659, %v1666
      %v1669 = vunpack.c.l.s4 1966171168
      %v1670 = vunpack.c.0.s8 %v1669
      %v1671 = vlaneseq
      %v1672 = vshrl.u32 %v1671, 7
      %v1673 = vsub.s32 %v1670, %v1672
      %v1674 = vrot.slane %v1660, %v1673
      %v1675 = vcombine.high %v1667, %v1667
      %v1676 = vcombine.high %v1674, %v1674
      %v1678 = vunpack.c.l.s4 1966171168
      %v1679 = vunpack.c.0.s8 %v1678
      %v1680 = vlaneseq
      %v1681 = vshrl.u32 %v1680, 7
      %v1682 = vsub.s32 %v1679, %v1681
      %v1683 = vrot.slane %v1525, %v1682
      %v1684 = vcombine.high %v1683, %v1683
      %v1686 = vunpack.c.l.s4 1966171168
      %v1687 = vunpack.c.0.s8 %v1686
      %v1688 = vlaneseq
      %v1689 = vshrl.u32 %v1688, 7
      %v1690 = vsub.s32 %v1687, %v1689
      %v1691 = vrot.slane %v1683, %v1690
      %v1693 = vunpack.c.l.s4 1966171168
      %v1694 = vunpack.c.0.s8 %v1693
      %v1695 = vlaneseq
      %v1696 = vshrl.u32 %v1695, 7
      %v1697 = vsub.s32 %v1694, %v1696
      %v1698 = vrot.slane %v1684, %v1697
      %v1699 = vcombine.high %v1691, %v1691
      %v1700 = vcombine.high %v1698, %v1698
      %v1701 = vunpack.i.h.s16 %v1547
      %v1702 = vunpack.i.l.s16 %v1554
      %v1703 = vunpack.i.h.s16 %v1554
      %v1704 = vunpack.i.l.s16 %v1555
      %v1705 = vunpack.i.h.s16 %v1555
      %v1706 = vunpack.i.l.s16 %v1556
      %v1707 = vunpack.i.h.s16 %v1556
      %v1708 = vunpack.i.h.s16 %v1571
      %v1709 = vunpack.i.l.s16 %v1578
      %v1710 = vunpack.i.h.s16 %v1578
      %v1711 = vunpack.i.l.s16 %v1579
      %v1712 = vunpack.i.h.s16 %v1579
      %v1713 = vunpack.i.l.s16 %v1580
      %v1714 = vunpack.i.h.s16 %v1580
      %v1715 = vunpack.i.h.s16 %v1595
      %v1716 = vunpack.i.l.s16 %v1602
      %v1717 = vunpack.i.h.s16 %v1602
      %v1718 = vunpack.i.l.s16 %v1603
      %v1719 = vunpack.i.h.s16 %v1603
      %v1720 = vunpack.i.l.s16 %v1604
      %v1721 = vunpack.i.h.s16 %v1604
      %v1722 = vunpack.i.h.s16 %v1619
      %v1723 = vunpack.i.l.s16 %v1626
      %v1724 = vunpack.i.h.s16 %v1626
      %v1725 = vunpack.i.l.s16 %v1627
      %v1726 = vunpack.i.h.s16 %v1627
      %v1727 = vunpack.i.l.s16 %v1628
      %v1728 = vunpack.i.h.s16 %v1628
      %v1729 = vunpack.i.h.s16 %v1643
      %v1730 = vunpack.i.l.s16 %v1650
      %v1731 = vunpack.i.h.s16 %v1650
      %v1732 = vunpack.i.l.s16 %v1651
      %v1733 = vunpack.i.h.s16 %v1651
      %v1734 = vunpack.i.l.s16 %v1652
      %v1735 = vunpack.i.h.s16 %v1652
      %v1736 = vunpack.i.h.s16 %v1667
      %v1737 = vunpack.i.l.s16 %v1674
      %v1738 = vunpack.i.h.s16 %v1674
      %v1739 = vunpack.i.l.s16 %v1675
      %v1740 = vunpack.i.h.s16 %v1675
      %v1741 = vunpack.i.l.s16 %v1676
      %v1742 = vunpack.i.h.s16 %v1676
      %v1743 = vunpack.i.h.s16 %v1691
      %v1744 = vunpack.i.l.s16 %v1698
      %v1745 = vunpack.i.h.s16 %v1698
      %v1746 = vunpack.i.l.s16 %v1699
      %v1747 = vunpack.i.h.s16 %v1699
      %v1748 = vunpack.i.l.s16 %v1700
      %v1749 = vunpack.i.h.s16 %v1700
      %s1750 = scalar_lea.vmem %s1, 24
      %v1751 = vld [vmem:[%s1750] sm:$0xf]
      %v1752 = vld [vmem:[%s1750 + $0x4] sm:$0xf]
      %v1753 = vpack.i.b16 %v1702, %v1701
      %v1754 = vpack.i.b16 %v1704, %v1703
      %v1755 = vpack.i.b16 %v1706, %v1705
      %v1756 = vpack.i.b16 %v1708, %v1707
      %v1757 = vpack.i.b16 %v1710, %v1709
      %v1758 = vpack.i.b16 %v1712, %v1711
      %v1759 = vpack.i.b16 %v1714, %v1713
      %v1760 = vpack.i.b16 %v1716, %v1715
      %v1761 = vpack.i.b16 %v1718, %v1717
      %v1762 = vpack.i.b16 %v1720, %v1719
      %v1763 = vpack.i.b16 %v1722, %v1721
      %v1764 = vpack.i.b16 %v1724, %v1723
      %v1765 = vpack.i.b16 %v1726, %v1725
      %v1766 = vpack.i.b16 %v1728, %v1727
      %v1767 = vpack.i.b16 %v1730, %v1729
      %v1768 = vpack.i.b16 %v1732, %v1731
      %v1769 = vpack.i.b16 %v1734, %v1733
      %v1770 = vpack.i.b16 %v1736, %v1735
      %v1771 = vpack.i.b16 %v1738, %v1737
      %v1772 = vpack.i.b16 %v1740, %v1739
      %v1773 = vpack.i.b16 %v1742, %v1741
      %v1774 = vpack.i.b16 %v1744, %v1743
      %v1775 = vpack.i.b16 %v1746, %v1745
      %v1776 = vpack.i.b16 %v1748, %v1747
      %v1778 = vcombine.low %v1753, %v1754
      %v1779 = vcombine.low %v1755, %v1756
      %v1780 = vcombine.low %v1757, %v1758
      %v1781 = vcombine.low %v1759, %v1760
      %v1783 = vunpack.c.l.s4 1966171168
      %v1784 = vunpack.c.0.s8 %v1783
      %v1785 = vlaneseq
      %v1786 = vshrl.u32 %v1785, 7
      %v1787 = vsub.s32 %v1784, %v1786
      %v1788 = vrot.slane %v1778, %v1787
      %v1790 = vunpack.c.l.s4 1966171168
      %v1791 = vunpack.c.0.s8 %v1790
      %v1792 = vlaneseq
      %v1793 = vshrl.u32 %v1792, 7
      %v1794 = vsub.s32 %v1791, %v1793
      %v1795 = vrot.slane %v1779, %v1794
      %v1797 = vunpack.c.l.s4 1966171168
      %v1798 = vunpack.c.0.s8 %v1797
      %v1799 = vlaneseq
      %v1800 = vshrl.u32 %v1799, 7
      %v1801 = vsub.s32 %v1798, %v1800
      %v1802 = vrot.slane %v1780, %v1801
      %v1804 = vunpack.c.l.s4 1966171168
      %v1805 = vunpack.c.0.s8 %v1804
      %v1806 = vlaneseq
      %v1807 = vshrl.u32 %v1806, 7
      %v1808 = vsub.s32 %v1805, %v1807
      %v1809 = vrot.slane %v1781, %v1808
      %v1810 = vcombine.low %v1788, %v1795
      %v1811 = vcombine.low %v1802, %v1809
      %v1813 = vunpack.c.l.s4 1966171168
      %v1814 = vunpack.c.0.s8 %v1813
      %v1815 = vlaneseq
      %v1816 = vshrl.u32 %v1815, 7
      %v1817 = vsub.s32 %v1814, %v1816
      %v1818 = vrot.slane %v1810, %v1817
      %v1820 = vunpack.c.l.s4 1966171168
      %v1821 = vunpack.c.0.s8 %v1820
      %v1822 = vlaneseq
      %v1823 = vshrl.u32 %v1822, 7
      %v1824 = vsub.s32 %v1821, %v1823
      %v1825 = vrot.slane %v1811, %v1824
      %v1826 = vcombine.low %v1818, %v1825
      %v1827 = vcombine.low %v1761, %v1762
      %v1828 = vcombine.low %v1763, %v1764
      %v1829 = vcombine.low %v1765, %v1766
      %v1830 = vcombine.low %v1767, %v1768
      %v1832 = vunpack.c.l.s4 1966171168
      %v1833 = vunpack.c.0.s8 %v1832
      %v1834 = vlaneseq
      %v1835 = vshrl.u32 %v1834, 7
      %v1836 = vsub.s32 %v1833, %v1835
      %v1837 = vrot.slane %v1827, %v1836
      %v1839 = vunpack.c.l.s4 1966171168
      %v1840 = vunpack.c.0.s8 %v1839
      %v1841 = vlaneseq
      %v1842 = vshrl.u32 %v1841, 7
      %v1843 = vsub.s32 %v1840, %v1842
      %v1844 = vrot.slane %v1828, %v1843
      %v1846 = vunpack.c.l.s4 1966171168
      %v1847 = vunpack.c.0.s8 %v1846
      %v1848 = vlaneseq
      %v1849 = vshrl.u32 %v1848, 7
      %v1850 = vsub.s32 %v1847, %v1849
      %v1851 = vrot.slane %v1829, %v1850
      %v1853 = vunpack.c.l.s4 1966171168
      %v1854 = vunpack.c.0.s8 %v1853
      %v1855 = vlaneseq
      %v1856 = vshrl.u32 %v1855, 7
      %v1857 = vsub.s32 %v1854, %v1856
      %v1858 = vrot.slane %v1830, %v1857
      %v1859 = vcombine.low %v1837, %v1844
      %v1860 = vcombine.low %v1851, %v1858
      %v1862 = vunpack.c.l.s4 1966171168
      %v1863 = vunpack.c.0.s8 %v1862
      %v1864 = vlaneseq
      %v1865 = vshrl.u32 %v1864, 7
      %v1866 = vsub.s32 %v1863, %v1865
      %v1867 = vrot.slane %v1859, %v1866
      %v1869 = vunpack.c.l.s4 1966171168
      %v1870 = vunpack.c.0.s8 %v1869
      %v1871 = vlaneseq
      %v1872 = vshrl.u32 %v1871, 7
      %v1873 = vsub.s32 %v1870, %v1872
      %v1874 = vrot.slane %v1860, %v1873
      %v1875 = vcombine.low %v1867, %v1874
      %v1876 = vcombine.low %v1769, %v1770
      %v1877 = vcombine.low %v1771, %v1772
      %v1878 = vcombine.low %v1773, %v1774
      %v1879 = vcombine.low %v1775, %v1776
      %v1881 = vunpack.c.l.s4 1966171168
      %v1882 = vunpack.c.0.s8 %v1881
      %v1883 = vlaneseq
      %v1884 = vshrl.u32 %v1883, 7
      %v1885 = vsub.s32 %v1882, %v1884
      %v1886 = vrot.slane %v1876, %v1885
      %v1888 = vunpack.c.l.s4 1966171168
      %v1889 = vunpack.c.0.s8 %v1888
      %v1890 = vlaneseq
      %v1891 = vshrl.u32 %v1890, 7
      %v1892 = vsub.s32 %v1889, %v1891
      %v1893 = vrot.slane %v1877, %v1892
      %v1895 = vunpack.c.l.s4 1966171168
      %v1896 = vunpack.c.0.s8 %v1895
      %v1897 = vlaneseq
      %v1898 = vshrl.u32 %v1897, 7
      %v1899 = vsub.s32 %v1896, %v1898
      %v1900 = vrot.slane %v1878, %v1899
      %v1902 = vunpack.c.l.s4 1966171168
      %v1903 = vunpack.c.0.s8 %v1902
      %v1904 = vlaneseq
      %v1905 = vshrl.u32 %v1904, 7
      %v1906 = vsub.s32 %v1903, %v1905
      %v1907 = vrot.slane %v1879, %v1906
      %v1908 = vcombine.low %v1886, %v1893
      %v1909 = vcombine.low %v1900, %v1907
      %v1911 = vunpack.c.l.s4 1966171168
      %v1912 = vunpack.c.0.s8 %v1911
      %v1913 = vlaneseq
      %v1914 = vshrl.u32 %v1913, 7
      %v1915 = vsub.s32 %v1912, %v1914
      %v1916 = vrot.slane %v1908, %v1915
      %v1918 = vunpack.c.l.s4 1966171168
      %v1919 = vunpack.c.0.s8 %v1918
      %v1920 = vlaneseq
      %v1921 = vshrl.u32 %v1920, 7
      %v1922 = vsub.s32 %v1919, %v1921
      %v1923 = vrot.slane %v1909, %v1922
      %v1924 = vcombine.low %v1916, %v1923
      %v1926 = vunpack.c.l.s4 1966171168
      %v1927 = vunpack.c.0.s8 %v1926
      %v1928 = vlaneseq
      %v1929 = vshrl.u32 %v1928, 7
      %v1930 = vsub.s32 %v1927, %v1929
      %v1931 = vrot.slane %v1749, %v1930
      %v1933 = vunpack.c.l.s4 1966171168
      %v1934 = vunpack.c.0.s8 %v1933
      %v1935 = vlaneseq
      %v1936 = vshrl.u32 %v1935, 7
      %v1937 = vsub.s32 %v1934, %v1936
      %v1938 = vrot.slane %v1931, %v1937
      %v1941 = vunpack.c.l.b16 %v1751
      %v1942 = vunpack.c.l.b16 %v1752
      %v1943 = vpack.c.b16 %v1942, %v1941
      %v1946 = vsel %vm661, %v1826, 0
      %v1949 = vsel %vm661, %v1875, 0
      %v1952 = vsel %vm661, %v1924, 0
      %v1955 = vsel %vm661, %v1938, 0
      %1957 = vmatprep.subr.bf16.mxu0 0
      %1958 = vmatpush1.bf16.msra.mxu0 0
      %1959 = vmatprep.subr.bf16.mxu0 0
      %1960 = vmatpush1.bf16.msra.mxu0 0
      %1961 = vmatprep.subr.bf16.mxu0 0
      %1962 = vmatpush1.bf16.msra.mxu0 0
      %1963 = vmatprep.subr.bf16.mxu0 0
      %1964 = vmatpush1.bf16.msra.mxu0 0
      %1965 = vmatprep.subr.bf16.mxu0 0
      %1966 = vmatpush1.bf16.msra.mxu0 0
      %1967 = vmatprep.subr.bf16.mxu0 0
      %1968 = vmatpush1.bf16.msra.mxu0 0
      %1969 = vmatprep.subr.bf16.mxu0 0
      %1970 = vmatpush1.bf16.msra.mxu0 0
      %1971 = vmatprep.subr.bf16.mxu0 0
      %1972 = vmatpush1.bf16.msra.mxu0 %v1943
      %1973 = vmatprep.subr.bf16.mxu0 0
      %1974 = vmatpush2.bf16.msra.mxu0 0
      %1975 = vmatprep.subr.bf16.mxu0 0
      %1976 = vmatpush2.bf16.msra.mxu0 0
      %1977 = vmatprep.subr.bf16.mxu0 0
      %1978 = vmatpush2.bf16.msra.mxu0 0
      %1979 = vmatprep.subr.bf16.mxu0 0
      %1980 = vmatpush2.bf16.msra.mxu0 0
      %1981 = vmatprep.subr.bf16.mxu0 0
      %1982 = vmatpush2.bf16.msra.mxu0 0
      %1983 = vmatprep.subr.bf16.mxu0 0
      %1984 = vmatpush2.bf16.msra.mxu0 0
      %1985 = vmatprep.subr.bf16.mxu0 0
      %1986 = vmatpush2.bf16.msra.mxu0 0
      %1987 = vmatprep.subr.bf16.mxu0 0
      %1988 = vmatpush2.bf16.msra.mxu0 0
      %1989 = vmatprep.mubr.bf16.mxu0 0
      %1990 = vmatmul.mubr.bf16.gmra.mxu0 %v1946
      %v1991 = vpop.f32.mrf.mxu0
      %v1992 = vadd.f32 0.0, %v1991
      %v1993 = vpop.f32.mrf.mxu0
      %v1994 = vpop.f32.mrf.mxu0
      %v1995 = vadd.f32 0.0, %v1994
      %v1996 = vpop.f32.mrf.mxu0
      %1997 = vmatprep.mubr.bf16.mxu0 0
      %1998 = vmatmul.mubr.bf16.gmra.mxu0 %v1949
      %v1999 = vpop.f32.mrf.mxu0
      %v2000 = vadd.f32 0.0, %v1999
      %v2001 = vpop.f32.mrf.mxu0
      %v2002 = vpop.f32.mrf.mxu0
      %v2003 = vadd.f32 0.0, %v2002
      %v2004 = vpop.f32.mrf.mxu0
      %2005 = vmatprep.mubr.bf16.mxu0 0
      %2006 = vmatmul.mubr.bf16.gmra.mxu0 %v1952
      %v2007 = vpop.f32.mrf.mxu0
      %v2008 = vadd.f32 0.0, %v2007
      %v2009 = vpop.f32.mrf.mxu0
      %v2010 = vpop.f32.mrf.mxu0
      %v2011 = vadd.f32 0.0, %v2010
      %v2012 = vpop.f32.mrf.mxu0
      %2013 = vmatprep.mubr.bf16.mxu0 0
      %2014 = vmatmul.mubr.bf16.gmra.mxu0 %v1955
      %v2015 = vpop.f32.mrf.mxu0
      %v2016 = vadd.f32 0.0, %v2015
      %v2017 = vpop.f32.mrf.mxu0
      %v2018 = vpop.f32.mrf.mxu0
      %v2019 = vpop.f32.mrf.mxu0
      %2020 = vdwg.mxu0
      %v2021 = vadd.f32 %v1512, %v1992
      %v2022 = vadd.f32 %v1513, %v1995
      %v2023 = vadd.f32 %v1514, %v2000
      %v2024 = vadd.f32 %v1515, %v2003
      %v2025 = vadd.f32 %v1516, %v2008
      %v2026 = vadd.f32 %v1517, %v2011
      %v2027 = vadd.f32 %v1518, %v2016
      %v2028 = vld [vmem:[%s3] sm:$0x1]
      %v2030 = vlaneseq
      %v2031 = vshrl.u32 %v2030, 7
      %v2032 = vsub.s32 0, %v2031
      %v2033 = vrot.slane %v2028, %v2032
      %v2035 = vadd.f32 %v2021, %v2033
      %v2036 = vadd.f32 %v2022, %v2033
      %v2037 = vadd.f32 %v2023, %v2033
      %v2038 = vadd.f32 %v2024, %v2033
      %v2039 = vadd.f32 %v2025, %v2033
      %v2040 = vadd.f32 %v2026, %v2033
      %v2041 = vadd.f32 %v2027, %v2033
      %v2049 = vcombine.high %v2035, %v2035
      %v2051 = vunpack.c.l.s4 1966171168
      %v2052 = vunpack.c.0.s8 %v2051
      %v2053 = vlaneseq
      %v2054 = vshrl.u32 %v2053, 7
      %v2055 = vsub.s32 %v2052, %v2054
      %v2056 = vrot.slane %v2035, %v2055
      %v2058 = vunpack.c.l.s4 1966171168
      %v2059 = vunpack.c.0.s8 %v2058
      %v2060 = vlaneseq
      %v2061 = vshrl.u32 %v2060, 7
      %v2062 = vsub.s32 %v2059, %v2061
      %v2063 = vrot.slane %v2049, %v2062
      %v2064 = vcombine.high %v2056, %v2056
      %v2065 = vcombine.high %v2063, %v2063
      %v2067 = vunpack.c.l.s4 1966171168
      %v2068 = vunpack.c.0.s8 %v2067
      %v2069 = vlaneseq
      %v2070 = vshrl.u32 %v2069, 7
      %v2071 = vsub.s32 %v2068, %v2070
      %v2072 = vrot.slane %v2056, %v2071
      %v2074 = vunpack.c.l.s4 1966171168
      %v2075 = vunpack.c.0.s8 %v2074
      %v2076 = vlaneseq
      %v2077 = vshrl.u32 %v2076, 7
      %v2078 = vsub.s32 %v2075, %v2077
      %v2079 = vrot.slane %v2063, %v2078
      %v2081 = vunpack.c.l.s4 1966171168
      %v2082 = vunpack.c.0.s8 %v2081
      %v2083 = vlaneseq
      %v2084 = vshrl.u32 %v2083, 7
      %v2085 = vsub.s32 %v2082, %v2084
      %v2086 = vrot.slane %v2064, %v2085
      %v2088 = vunpack.c.l.s4 1966171168
      %v2089 = vunpack.c.0.s8 %v2088
      %v2090 = vlaneseq
      %v2091 = vshrl.u32 %v2090, 7
      %v2092 = vsub.s32 %v2089, %v2091
      %v2093 = vrot.slane %v2065, %v2092
      %v2094 = vcombine.high %v2072, %v2072
      %v2095 = vcombine.high %v2079, %v2079
      %v2096 = vcombine.high %v2086, %v2086
      %v2097 = vcombine.high %v2093, %v2093
      %v2098 = vcombine.high %v2036, %v2036
      %v2100 = vunpack.c.l.s4 1966171168
      %v2101 = vunpack.c.0.s8 %v2100
      %v2102 = vlaneseq
      %v2103 = vshrl.u32 %v2102, 7
      %v2104 = vsub.s32 %v2101, %v2103
      %v2105 = vrot.slane %v2036, %v2104
      %v2107 = vunpack.c.l.s4 1966171168
      %v2108 = vunpack.c.0.s8 %v2107
      %v2109 = vlaneseq
      %v2110 = vshrl.u32 %v2109, 7
      %v2111 = vsub.s32 %v2108, %v2110
      %v2112 = vrot.slane %v2098, %v2111
      %v2113 = vcombine.high %v2105, %v2105
      %v2114 = vcombine.high %v2112, %v2112
      %v2116 = vunpack.c.l.s4 1966171168
      %v2117 = vunpack.c.0.s8 %v2116
      %v2118 = vlaneseq
      %v2119 = vshrl.u32 %v2118, 7
      %v2120 = vsub.s32 %v2117, %v2119
      %v2121 = vrot.slane %v2105, %v2120
      %v2123 = vunpack.c.l.s4 1966171168
      %v2124 = vunpack.c.0.s8 %v2123
      %v2125 = vlaneseq
      %v2126 = vshrl.u32 %v2125, 7
      %v2127 = vsub.s32 %v2124, %v2126
      %v2128 = vrot.slane %v2112, %v2127
      %v2130 = vunpack.c.l.s4 1966171168
      %v2131 = vunpack.c.0.s8 %v2130
      %v2132 = vlaneseq
      %v2133 = vshrl.u32 %v2132, 7
      %v2134 = vsub.s32 %v2131, %v2133
      %v2135 = vrot.slane %v2113, %v2134
      %v2137 = vunpack.c.l.s4 1966171168
      %v2138 = vunpack.c.0.s8 %v2137
      %v2139 = vlaneseq
      %v2140 = vshrl.u32 %v2139, 7
      %v2141 = vsub.s32 %v2138, %v2140
      %v2142 = vrot.slane %v2114, %v2141
      %v2143 = vcombine.high %v2121, %v2121
      %v2144 = vcombine.high %v2128, %v2128
      %v2145 = vcombine.high %v2135, %v2135
      %v2146 = vcombine.high %v2142, %v2142
      %v2147 = vcombine.high %v2037, %v2037
      %v2149 = vunpack.c.l.s4 1966171168
      %v2150 = vunpack.c.0.s8 %v2149
      %v2151 = vlaneseq
      %v2152 = vshrl.u32 %v2151, 7
      %v2153 = vsub.s32 %v2150, %v2152
      %v2154 = vrot.slane %v2037, %v2153
      %v2156 = vunpack.c.l.s4 1966171168
      %v2157 = vunpack.c.0.s8 %v2156
      %v2158 = vlaneseq
      %v2159 = vshrl.u32 %v2158, 7
      %v2160 = vsub.s32 %v2157, %v2159
      %v2161 = vrot.slane %v2147, %v2160
      %v2162 = vcombine.high %v2154, %v2154
      %v2163 = vcombine.high %v2161, %v2161
      %v2165 = vunpack.c.l.s4 1966171168
      %v2166 = vunpack.c.0.s8 %v2165
      %v2167 = vlaneseq
      %v2168 = vshrl.u32 %v2167, 7
      %v2169 = vsub.s32 %v2166, %v2168
      %v2170 = vrot.slane %v2154, %v2169
      %v2172 = vunpack.c.l.s4 1966171168
      %v2173 = vunpack.c.0.s8 %v2172
      %v2174 = vlaneseq
      %v2175 = vshrl.u32 %v2174, 7
      %v2176 = vsub.s32 %v2173, %v2175
      %v2177 = vrot.slane %v2161, %v2176
      %v2179 = vunpack.c.l.s4 1966171168
      %v2180 = vunpack.c.0.s8 %v2179
      %v2181 = vlaneseq
      %v2182 = vshrl.u32 %v2181, 7
      %v2183 = vsub.s32 %v2180, %v2182
      %v2184 = vrot.slane %v2162, %v2183
      %v2186 = vunpack.c.l.s4 1966171168
      %v2187 = vunpack.c.0.s8 %v2186
      %v2188 = vlaneseq
      %v2189 = vshrl.u32 %v2188, 7
      %v2190 = vsub.s32 %v2187, %v2189
      %v2191 = vrot.slane %v2163, %v2190
      %v2192 = vcombine.high %v2170, %v2170
      %v2193 = vcombine.high %v2177, %v2177
      %v2194 = vcombine.high %v2184, %v2184
      %v2195 = vcombine.high %v2191, %v2191
      %v2196 = vcombine.high %v2038, %v2038
      %v2198 = vunpack.c.l.s4 1966171168
      %v2199 = vunpack.c.0.s8 %v2198
      %v2200 = vlaneseq
      %v2201 = vshrl.u32 %v2200, 7
      %v2202 = vsub.s32 %v2199, %v2201
      %v2203 = vrot.slane %v2038, %v2202
      %v2205 = vunpack.c.l.s4 1966171168
      %v2206 = vunpack.c.0.s8 %v2205
      %v2207 = vlaneseq
      %v2208 = vshrl.u32 %v2207, 7
      %v2209 = vsub.s32 %v2206, %v2208
      %v2210 = vrot.slane %v2196, %v2209
      %v2211 = vcombine.high %v2203, %v2203
      %v2212 = vcombine.high %v2210, %v2210
      %v2214 = vunpack.c.l.s4 1966171168
      %v2215 = vunpack.c.0.s8 %v2214
      %v2216 = vlaneseq
      %v2217 = vshrl.u32 %v2216, 7
      %v2218 = vsub.s32 %v2215, %v2217
      %v2219 = vrot.slane %v2203, %v2218
      %v2221 = vunpack.c.l.s4 1966171168
      %v2222 = vunpack.c.0.s8 %v2221
      %v2223 = vlaneseq
      %v2224 = vshrl.u32 %v2223, 7
      %v2225 = vsub.s32 %v2222, %v2224
      %v2226 = vrot.slane %v2210, %v2225
      %v2228 = vunpack.c.l.s4 1966171168
      %v2229 = vunpack.c.0.s8 %v2228
      %v2230 = vlaneseq
      %v2231 = vshrl.u32 %v2230, 7
      %v2232 = vsub.s32 %v2229, %v2231
      %v2233 = vrot.slane %v2211, %v2232
      %v2235 = vunpack.c.l.s4 1966171168
      %v2236 = vunpack.c.0.s8 %v2235
      %v2237 = vlaneseq
      %v2238 = vshrl.u32 %v2237, 7
      %v2239 = vsub.s32 %v2236, %v2238
      %v2240 = vrot.slane %v2212, %v2239
      %v2241 = vcombine.high %v2219, %v2219
      %v2242 = vcombine.high %v2226, %v2226
      %v2243 = vcombine.high %v2233, %v2233
      %v2244 = vcombine.high %v2240, %v2240
      %v2245 = vcombine.high %v2039, %v2039
      %v2247 = vunpack.c.l.s4 1966171168
      %v2248 = vunpack.c.0.s8 %v2247
      %v2249 = vlaneseq
      %v2250 = vshrl.u32 %v2249, 7
      %v2251 = vsub.s32 %v2248, %v2250
      %v2252 = vrot.slane %v2039, %v2251
      %v2254 = vunpack.c.l.s4 1966171168
      %v2255 = vunpack.c.0.s8 %v2254
      %v2256 = vlaneseq
      %v2257 = vshrl.u32 %v2256, 7
      %v2258 = vsub.s32 %v2255, %v2257
      %v2259 = vrot.slane %v2245, %v2258
      %v2260 = vcombine.high %v2252, %v2252
      %v2261 = vcombine.high %v2259, %v2259
      %v2263 = vunpack.c.l.s4 1966171168
      %v2264 = vunpack.c.0.s8 %v2263
      %v2265 = vlaneseq
      %v2266 = vshrl.u32 %v2265, 7
      %v2267 = vsub.s32 %v2264, %v2266
      %v2268 = vrot.slane %v2252, %v2267
      %v2270 = vunpack.c.l.s4 1966171168
      %v2271 = vunpack.c.0.s8 %v2270
      %v2272 = vlaneseq
      %v2273 = vshrl.u32 %v2272, 7
      %v2274 = vsub.s32 %v2271, %v2273
      %v2275 = vrot.slane %v2259, %v2274
      %v2277 = vunpack.c.l.s4 1966171168
      %v2278 = vunpack.c.0.s8 %v2277
      %v2279 = vlaneseq
      %v2280 = vshrl.u32 %v2279, 7
      %v2281 = vsub.s32 %v2278, %v2280
      %v2282 = vrot.slane %v2260, %v2281
      %v2284 = vunpack.c.l.s4 1966171168
      %v2285 = vunpack.c.0.s8 %v2284
      %v2286 = vlaneseq
      %v2287 = vshrl.u32 %v2286, 7
      %v2288 = vsub.s32 %v2285, %v2287
      %v2289 = vrot.slane %v2261, %v2288
      %v2290 = vcombine.high %v2268, %v2268
      %v2291 = vcombine.high %v2275, %v2275
      %v2292 = vcombine.high %v2282, %v2282
      %v2293 = vcombine.high %v2289, %v2289
      %v2294 = vcombine.high %v2040, %v2040
      %v2296 = vunpack.c.l.s4 1966171168
      %v2297 = vunpack.c.0.s8 %v2296
      %v2298 = vlaneseq
      %v2299 = vshrl.u32 %v2298, 7
      %v2300 = vsub.s32 %v2297, %v2299
      %v2301 = vrot.slane %v2040, %v2300
      %v2303 = vunpack.c.l.s4 1966171168
      %v2304 = vunpack.c.0.s8 %v2303
      %v2305 = vlaneseq
      %v2306 = vshrl.u32 %v2305, 7
      %v2307 = vsub.s32 %v2304, %v2306
      %v2308 = vrot.slane %v2294, %v2307
      %v2309 = vcombine.high %v2301, %v2301
      %v2310 = vcombine.high %v2308, %v2308
      %v2312 = vunpack.c.l.s4 1966171168
      %v2313 = vunpack.c.0.s8 %v2312
      %v2314 = vlaneseq
      %v2315 = vshrl.u32 %v2314, 7
      %v2316 = vsub.s32 %v2313, %v2315
      %v2317 = vrot.slane %v2301, %v2316
      %v2319 = vunpack.c.l.s4 1966171168
      %v2320 = vunpack.c.0.s8 %v2319
      %v2321 = vlaneseq
      %v2322 = vshrl.u32 %v2321, 7
      %v2323 = vsub.s32 %v2320, %v2322
      %v2324 = vrot.slane %v2308, %v2323
      %v2326 = vunpack.c.l.s4 1966171168
      %v2327 = vunpack.c.0.s8 %v2326
      %v2328 = vlaneseq
      %v2329 = vshrl.u32 %v2328, 7
      %v2330 = vsub.s32 %v2327, %v2329
      %v2331 = vrot.slane %v2309, %v2330
      %v2333 = vunpack.c.l.s4 1966171168
      %v2334 = vunpack.c.0.s8 %v2333
      %v2335 = vlaneseq
      %v2336 = vshrl.u32 %v2335, 7
      %v2337 = vsub.s32 %v2334, %v2336
      %v2338 = vrot.slane %v2310, %v2337
      %v2339 = vcombine.high %v2317, %v2317
      %v2340 = vcombine.high %v2324, %v2324
      %v2341 = vcombine.high %v2331, %v2331
      %v2342 = vcombine.high %v2338, %v2338
      %v2344 = vunpack.c.l.s4 1966171168
      %v2345 = vunpack.c.0.s8 %v2344
      %v2346 = vlaneseq
      %v2347 = vshrl.u32 %v2346, 7
      %v2348 = vsub.s32 %v2345, %v2347
      %v2349 = vrot.slane %v2041, %v2348
      %v2351 = vunpack.c.l.s4 1966171168
      %v2352 = vunpack.c.0.s8 %v2351
      %v2353 = vlaneseq
      %v2354 = vshrl.u32 %v2353, 7
      %v2355 = vsub.s32 %v2352, %v2354
      %v2356 = vrot.slane %v2349, %v2355
      %v2357 = vcombine.low %v2072, %v2086
      %v2358 = vcombine.low %v2094, %v2096
      %v2359 = vcombine.low %v2079, %v2093
      %v2361 = vunpack.c.l.s4 1966171168
      %v2362 = vunpack.c.0.s8 %v2361
      %v2363 = vlaneseq
      %v2364 = vshrl.u32 %v2363, 7
      %v2365 = vsub.s32 %v2362, %v2364
      %v2366 = vrot.slane %v2357, %v2365
      %v2368 = vunpack.c.l.s4 1966171168
      %v2369 = vunpack.c.0.s8 %v2368
      %v2370 = vlaneseq
      %v2371 = vshrl.u32 %v2370, 7
      %v2372 = vsub.s32 %v2369, %v2371
      %v2373 = vrot.slane %v2358, %v2372
      %v2375 = vunpack.c.l.s4 1966171168
      %v2376 = vunpack.c.0.s8 %v2375
      %v2377 = vlaneseq
      %v2378 = vshrl.u32 %v2377, 7
      %v2379 = vsub.s32 %v2376, %v2378
      %v2380 = vrot.slane %v2359, %v2379
      %v2382 = vunpack.c.l.s4 1966171168
      %v2383 = vunpack.c.0.s8 %v2382
      %v2384 = vlaneseq
      %v2385 = vshrl.u32 %v2384, 7
      %v2386 = vsub.s32 %v2383, %v2385
      %v2387 = vrot.slane %v2095, %v2386
      %v2388 = vcombine.low %v2366, %v2373
      %v2389 = vcombine.low %v2380, %v2387
      %v2391 = vunpack.c.l.s4 1966171168
      %v2392 = vunpack.c.0.s8 %v2391
      %v2393 = vlaneseq
      %v2394 = vshrl.u32 %v2393, 7
      %v2395 = vsub.s32 %v2392, %v2394
      %v2396 = vrot.slane %v2388, %v2395
      %v2398 = vunpack.c.l.s4 1966171168
      %v2399 = vunpack.c.0.s8 %v2398
      %v2400 = vlaneseq
      %v2401 = vshrl.u32 %v2400, 7
      %v2402 = vsub.s32 %v2399, %v2401
      %v2403 = vrot.slane %v2389, %v2402
      %v2404 = vcombine.low %v2396, %v2403
      %v2405 = vcombine.low %v2097, %v2121
      %v2406 = vcombine.low %v2135, %v2143
      %v2407 = vcombine.low %v2145, %v2128
      %v2409 = vunpack.c.l.s4 1966171168
      %v2410 = vunpack.c.0.s8 %v2409
      %v2411 = vlaneseq
      %v2412 = vshrl.u32 %v2411, 7
      %v2413 = vsub.s32 %v2410, %v2412
      %v2414 = vrot.slane %v2405, %v2413
      %v2416 = vunpack.c.l.s4 1966171168
      %v2417 = vunpack.c.0.s8 %v2416
      %v2418 = vlaneseq
      %v2419 = vshrl.u32 %v2418, 7
      %v2420 = vsub.s32 %v2417, %v2419
      %v2421 = vrot.slane %v2406, %v2420
      %v2423 = vunpack.c.l.s4 1966171168
      %v2424 = vunpack.c.0.s8 %v2423
      %v2425 = vlaneseq
      %v2426 = vshrl.u32 %v2425, 7
      %v2427 = vsub.s32 %v2424, %v2426
      %v2428 = vrot.slane %v2407, %v2427
      %v2430 = vunpack.c.l.s4 1966171168
      %v2431 = vunpack.c.0.s8 %v2430
      %v2432 = vlaneseq
      %v2433 = vshrl.u32 %v2432, 7
      %v2434 = vsub.s32 %v2431, %v2433
      %v2435 = vrot.slane %v2142, %v2434
      %v2436 = vcombine.low %v2414, %v2421
      %v2437 = vcombine.low %v2428, %v2435
      %v2439 = vunpack.c.l.s4 1966171168
      %v2440 = vunpack.c.0.s8 %v2439
      %v2441 = vlaneseq
      %v2442 = vshrl.u32 %v2441, 7
      %v2443 = vsub.s32 %v2440, %v2442
      %v2444 = vrot.slane %v2436, %v2443
      %v2446 = vunpack.c.l.s4 1966171168
      %v2447 = vunpack.c.0.s8 %v2446
      %v2448 = vlaneseq
      %v2449 = vshrl.u32 %v2448, 7
      %v2450 = vsub.s32 %v2447, %v2449
      %v2451 = vrot.slane %v2437, %v2450
      %v2452 = vcombine.low %v2444, %v2451
      %v2453 = vcombine.low %v2144, %v2146
      %v2454 = vcombine.low %v2170, %v2184
      %v2455 = vcombine.low %v2192, %v2194
      %v2457 = vunpack.c.l.s4 1966171168
      %v2458 = vunpack.c.0.s8 %v2457
      %v2459 = vlaneseq
      %v2460 = vshrl.u32 %v2459, 7
      %v2461 = vsub.s32 %v2458, %v2460
      %v2462 = vrot.slane %v2453, %v2461
      %v2464 = vunpack.c.l.s4 1966171168
      %v2465 = vunpack.c.0.s8 %v2464
      %v2466 = vlaneseq
      %v2467 = vshrl.u32 %v2466, 7
      %v2468 = vsub.s32 %v2465, %v2467
      %v2469 = vrot.slane %v2454, %v2468
      %v2471 = vunpack.c.l.s4 1966171168
      %v2472 = vunpack.c.0.s8 %v2471
      %v2473 = vlaneseq
      %v2474 = vshrl.u32 %v2473, 7
      %v2475 = vsub.s32 %v2472, %v2474
      %v2476 = vrot.slane %v2455, %v2475
      %v2478 = vunpack.c.l.s4 1966171168
      %v2479 = vunpack.c.0.s8 %v2478
      %v2480 = vlaneseq
      %v2481 = vshrl.u32 %v2480, 7
      %v2482 = vsub.s32 %v2479, %v2481
      %v2483 = vrot.slane %v2177, %v2482
      %v2484 = vcombine.low %v2462, %v2469
      %v2485 = vcombine.low %v2476, %v2483
      %v2487 = vunpack.c.l.s4 1966171168
      %v2488 = vunpack.c.0.s8 %v2487
      %v2489 = vlaneseq
      %v2490 = vshrl.u32 %v2489, 7
      %v2491 = vsub.s32 %v2488, %v2490
      %v2492 = vrot.slane %v2484, %v2491
      %v2494 = vunpack.c.l.s4 1966171168
      %v2495 = vunpack.c.0.s8 %v2494
      %v2496 = vlaneseq
      %v2497 = vshrl.u32 %v2496, 7
      %v2498 = vsub.s32 %v2495, %v2497
      %v2499 = vrot.slane %v2485, %v2498
      %v2500 = vcombine.low %v2492, %v2499
      %v2501 = vcombine.low %v2191, %v2193
      %v2502 = vcombine.low %v2195, %v2219
      %v2503 = vcombine.low %v2233, %v2241
      %v2505 = vunpack.c.l.s4 1966171168
      %v2506 = vunpack.c.0.s8 %v2505
      %v2507 = vlaneseq
      %v2508 = vshrl.u32 %v2507, 7
      %v2509 = vsub.s32 %v2506, %v2508
      %v2510 = vrot.slane %v2501, %v2509
      %v2512 = vunpack.c.l.s4 1966171168
      %v2513 = vunpack.c.0.s8 %v2512
      %v2514 = vlaneseq
      %v2515 = vshrl.u32 %v2514, 7
      %v2516 = vsub.s32 %v2513, %v2515
      %v2517 = vrot.slane %v2502, %v2516
      %v2519 = vunpack.c.l.s4 1966171168
      %v2520 = vunpack.c.0.s8 %v2519
      %v2521 = vlaneseq
      %v2522 = vshrl.u32 %v2521, 7
      %v2523 = vsub.s32 %v2520, %v2522
      %v2524 = vrot.slane %v2503, %v2523
      %v2526 = vunpack.c.l.s4 1966171168
      %v2527 = vunpack.c.0.s8 %v2526
      %v2528 = vlaneseq
      %v2529 = vshrl.u32 %v2528, 7
      %v2530 = vsub.s32 %v2527, %v2529
      %v2531 = vrot.slane %v2243, %v2530
      %v2532 = vcombine.low %v2510, %v2517
      %v2533 = vcombine.low %v2524, %v2531
      %v2535 = vunpack.c.l.s4 1966171168
      %v2536 = vunpack.c.0.s8 %v2535
      %v2537 = vlaneseq
      %v2538 = vshrl.u32 %v2537, 7
      %v2539 = vsub.s32 %v2536, %v2538
      %v2540 = vrot.slane %v2532, %v2539
      %v2542 = vunpack.c.l.s4 1966171168
      %v2543 = vunpack.c.0.s8 %v2542
      %v2544 = vlaneseq
      %v2545 = vshrl.u32 %v2544, 7
      %v2546 = vsub.s32 %v2543, %v2545
      %v2547 = vrot.slane %v2533, %v2546
      %v2548 = vcombine.low %v2540, %v2547
      %v2549 = vcombine.low %v2226, %v2240
      %v2550 = vcombine.low %v2242, %v2244
      %v2551 = vcombine.low %v2268, %v2282
      %v2553 = vunpack.c.l.s4 1966171168
      %v2554 = vunpack.c.0.s8 %v2553
      %v2555 = vlaneseq
      %v2556 = vshrl.u32 %v2555, 7
      %v2557 = vsub.s32 %v2554, %v2556
      %v2558 = vrot.slane %v2549, %v2557
      %v2560 = vunpack.c.l.s4 1966171168
      %v2561 = vunpack.c.0.s8 %v2560
      %v2562 = vlaneseq
      %v2563 = vshrl.u32 %v2562, 7
      %v2564 = vsub.s32 %v2561, %v2563
      %v2565 = vrot.slane %v2550, %v2564
      %v2567 = vunpack.c.l.s4 1966171168
      %v2568 = vunpack.c.0.s8 %v2567
      %v2569 = vlaneseq
      %v2570 = vshrl.u32 %v2569, 7
      %v2571 = vsub.s32 %v2568, %v2570
      %v2572 = vrot.slane %v2551, %v2571
      %v2574 = vunpack.c.l.s4 1966171168
      %v2575 = vunpack.c.0.s8 %v2574
      %v2576 = vlaneseq
      %v2577 = vshrl.u32 %v2576, 7
      %v2578 = vsub.s32 %v2575, %v2577
      %v2579 = vrot.slane %v2290, %v2578
      %v2580 = vcombine.low %v2558, %v2565
      %v2581 = vcombine.low %v2572, %v2579
      %v2583 = vunpack.c.l.s4 1966171168
      %v2584 = vunpack.c.0.s8 %v2583
      %v2585 = vlaneseq
      %v2586 = vshrl.u32 %v2585, 7
      %v2587 = vsub.s32 %v2584, %v2586
      %v2588 = vrot.slane %v2580, %v2587
      %v2590 = vunpack.c.l.s4 1966171168
      %v2591 = vunpack.c.0.s8 %v2590
      %v2592 = vlaneseq
      %v2593 = vshrl.u32 %v2592, 7
      %v2594 = vsub.s32 %v2591, %v2593
      %v2595 = vrot.slane %v2581, %v2594
      %v2596 = vcombine.low %v2588, %v2595
      %v2597 = vcombine.low %v2292, %v2275
      %v2598 = vcombine.low %v2289, %v2291
      %v2599 = vcombine.low %v2293, %v2317
      %v2601 = vunpack.c.l.s4 1966171168
      %v2602 = vunpack.c.0.s8 %v2601
      %v2603 = vlaneseq
      %v2604 = vshrl.u32 %v2603, 7
      %v2605 = vsub.s32 %v2602, %v2604
      %v2606 = vrot.slane %v2597, %v2605
      %v2608 = vunpack.c.l.s4 1966171168
      %v2609 = vunpack.c.0.s8 %v2608
      %v2610 = vlaneseq
      %v2611 = vshrl.u32 %v2610, 7
      %v2612 = vsub.s32 %v2609, %v2611
      %v2613 = vrot.slane %v2598, %v2612
      %v2615 = vunpack.c.l.s4 1966171168
      %v2616 = vunpack.c.0.s8 %v2615
      %v2617 = vlaneseq
      %v2618 = vshrl.u32 %v2617, 7
      %v2619 = vsub.s32 %v2616, %v2618
      %v2620 = vrot.slane %v2599, %v2619
      %v2622 = vunpack.c.l.s4 1966171168
      %v2623 = vunpack.c.0.s8 %v2622
      %v2624 = vlaneseq
      %v2625 = vshrl.u32 %v2624, 7
      %v2626 = vsub.s32 %v2623, %v2625
      %v2627 = vrot.slane %v2331, %v2626
      %v2628 = vcombine.low %v2606, %v2613
      %v2629 = vcombine.low %v2620, %v2627
      %v2631 = vunpack.c.l.s4 1966171168
      %v2632 = vunpack.c.0.s8 %v2631
      %v2633 = vlaneseq
      %v2634 = vshrl.u32 %v2633, 7
      %v2635 = vsub.s32 %v2632, %v2634
      %v2636 = vrot.slane %v2628, %v2635
      %v2638 = vunpack.c.l.s4 1966171168
      %v2639 = vunpack.c.0.s8 %v2638
      %v2640 = vlaneseq
      %v2641 = vshrl.u32 %v2640, 7
      %v2642 = vsub.s32 %v2639, %v2641
      %v2643 = vrot.slane %v2629, %v2642
      %v2644 = vcombine.low %v2636, %v2643
      %v2645 = vcombine.low %v2339, %v2341
      %v2646 = vcombine.low %v2324, %v2338
      %v2647 = vcombine.low %v2340, %v2342
      %v2649 = vunpack.c.l.s4 1966171168
      %v2650 = vunpack.c.0.s8 %v2649
      %v2651 = vlaneseq
      %v2652 = vshrl.u32 %v2651, 7
      %v2653 = vsub.s32 %v2650, %v2652
      %v2654 = vrot.slane %v2645, %v2653
      %v2656 = vunpack.c.l.s4 1966171168
      %v2657 = vunpack.c.0.s8 %v2656
      %v2658 = vlaneseq
      %v2659 = vshrl.u32 %v2658, 7
      %v2660 = vsub.s32 %v2657, %v2659
      %v2661 = vrot.slane %v2646, %v2660
      %v2663 = vunpack.c.l.s4 1966171168
      %v2664 = vunpack.c.0.s8 %v2663
      %v2665 = vlaneseq
      %v2666 = vshrl.u32 %v2665, 7
      %v2667 = vsub.s32 %v2664, %v2666
      %v2668 = vrot.slane %v2647, %v2667
      %v2670 = vunpack.c.l.s4 1966171168
      %v2671 = vunpack.c.0.s8 %v2670
      %v2672 = vlaneseq
      %v2673 = vshrl.u32 %v2672, 7
      %v2674 = vsub.s32 %v2671, %v2673
      %v2675 = vrot.slane %v2356, %v2674
      %v2676 = vcombine.low %v2654, %v2661
      %v2677 = vcombine.low %v2668, %v2675
      %v2679 = vunpack.c.l.s4 1966171168
      %v2680 = vunpack.c.0.s8 %v2679
      %v2681 = vlaneseq
      %v2682 = vshrl.u32 %v2681, 7
      %v2683 = vsub.s32 %v2680, %v2682
      %v2684 = vrot.slane %v2676, %v2683
      %v2686 = vunpack.c.l.s4 1966171168
      %v2687 = vunpack.c.0.s8 %v2686
      %v2688 = vlaneseq
      %v2689 = vshrl.u32 %v2688, 7
      %v2690 = vsub.s32 %v2687, %v2689
      %v2691 = vrot.slane %v2677, %v2690
      %v2692 = vcombine.low %v2684, %v2691
      %vm2700 = vcmask 30720
      %2701 = vst.msk [vmem:[%s219] sm:$0x7f] %vm2700, %v2404
      %2702 = vst.msk [vmem:[%s219 + $0x8] sm:$0x7f] %vm2700, %v2452
      %2703 = vst.msk [vmem:[%s219 + $0x10] sm:$0x7f] %vm2700, %v2500
      %2704 = vst.msk [vmem:[%s219 + $0x18] sm:$0x7f] %vm2700, %v2548
      %2705 = vst.msk [vmem:[%s219 + $0x20] sm:$0x7f] %vm2700, %v2596
      %2706 = vst.msk [vmem:[%s219 + $0x28] sm:$0x7f] %vm2700, %v2644
      %2707 = vst.msk [vmem:[%s219 + $0x30] sm:$0x7f] %vm2700, %v2692
      %v2708 = vld [vmem:[%s225] sm:$0xf]
      %v2709 = vld [vmem:[%s225 + $0x8] sm:$0xf]
      %v2710 = vld [vmem:[%s225 + $0x10] sm:$0xf]
      %v2711 = vld [vmem:[%s225 + $0x18] sm:$0xf]
      %v2712 = vld [vmem:[%s225 + $0x20] sm:$0xf]
      %v2713 = vld [vmem:[%s225 + $0x28] sm:$0xf]
      %v2714 = vld [vmem:[%s225 + $0x30] sm:$0xf]
      %v2723 = vunpack.c.l.s4 1966171168
      %v2724 = vunpack.c.0.s8 %v2723
      %v2725 = vlaneseq
      %v2726 = vshrl.u32 %v2725, 7
      %v2727 = vsub.s32 %v2724, %v2726
      %v2728 = vrot.slane %v2708, %v2727
      %v2729 = vcombine.high %v2728, %v2728
      %v2731 = vunpack.c.l.s4 1966171168
      %v2732 = vunpack.c.0.s8 %v2731
      %v2733 = vlaneseq
      %v2734 = vshrl.u32 %v2733, 7
      %v2735 = vsub.s32 %v2732, %v2734
      %v2736 = vrot.slane %v2728, %v2735
      %v2738 = vunpack.c.l.s4 1966171168
      %v2739 = vunpack.c.0.s8 %v2738
      %v2740 = vlaneseq
      %v2741 = vshrl.u32 %v2740, 7
      %v2742 = vsub.s32 %v2739, %v2741
      %v2743 = vrot.slane %v2729, %v2742
      %v2744 = vcombine.high %v2736, %v2736
      %v2745 = vcombine.high %v2743, %v2743
      %v2747 = vunpack.c.l.s4 1966171168
      %v2748 = vunpack.c.0.s8 %v2747
      %v2749 = vlaneseq
      %v2750 = vshrl.u32 %v2749, 7
      %v2751 = vsub.s32 %v2748, %v2750
      %v2752 = vrot.slane %v2709, %v2751
      %v2753 = vcombine.high %v2752, %v2752
      %v2755 = vunpack.c.l.s4 1966171168
      %v2756 = vunpack.c.0.s8 %v2755
      %v2757 = vlaneseq
      %v2758 = vshrl.u32 %v2757, 7
      %v2759 = vsub.s32 %v2756, %v2758
      %v2760 = vrot.slane %v2752, %v2759
      %v2762 = vunpack.c.l.s4 1966171168
      %v2763 = vunpack.c.0.s8 %v2762
      %v2764 = vlaneseq
      %v2765 = vshrl.u32 %v2764, 7
      %v2766 = vsub.s32 %v2763, %v2765
      %v2767 = vrot.slane %v2753, %v2766
      %v2768 = vcombine.high %v2760, %v2760
      %v2769 = vcombine.high %v2767, %v2767
      %v2771 = vunpack.c.l.s4 1966171168
      %v2772 = vunpack.c.0.s8 %v2771
      %v2773 = vlaneseq
      %v2774 = vshrl.u32 %v2773, 7
      %v2775 = vsub.s32 %v2772, %v2774
      %v2776 = vrot.slane %v2710, %v2775
      %v2777 = vcombine.high %v2776, %v2776
      %v2779 = vunpack.c.l.s4 1966171168
      %v2780 = vunpack.c.0.s8 %v2779
      %v2781 = vlaneseq
      %v2782 = vshrl.u32 %v2781, 7
      %v2783 = vsub.s32 %v2780, %v2782
      %v2784 = vrot.slane %v2776, %v2783
      %v2786 = vunpack.c.l.s4 1966171168
      %v2787 = vunpack.c.0.s8 %v2786
      %v2788 = vlaneseq
      %v2789 = vshrl.u32 %v2788, 7
      %v2790 = vsub.s32 %v2787, %v2789
      %v2791 = vrot.slane %v2777, %v2790
      %v2792 = vcombine.high %v2784, %v2784
      %v2793 = vcombine.high %v2791, %v2791
      %v2795 = vunpack.c.l.s4 1966171168
      %v2796 = vunpack.c.0.s8 %v2795
      %v2797 = vlaneseq
      %v2798 = vshrl.u32 %v2797, 7
      %v2799 = vsub.s32 %v2796, %v2798
      %v2800 = vrot.slane %v2711, %v2799
      %v2801 = vcombine.high %v2800, %v2800
      %v2803 = vunpack.c.l.s4 1966171168
      %v2804 = vunpack.c.0.s8 %v2803
      %v2805 = vlaneseq
      %v2806 = vshrl.u32 %v2805, 7
      %v2807 = vsub.s32 %v2804, %v2806
      %v2808 = vrot.slane %v2800, %v2807
      %v2810 = vunpack.c.l.s4 1966171168
      %v2811 = vunpack.c.0.s8 %v2810
      %v2812 = vlaneseq
      %v2813 = vshrl.u32 %v2812, 7
      %v2814 = vsub.s32 %v2811, %v2813
      %v2815 = vrot.slane %v2801, %v2814
      %v2816 = vcombine.high %v2808, %v2808
      %v2817 = vcombine.high %v2815, %v2815
      %v2819 = vunpack.c.l.s4 1966171168
      %v2820 = vunpack.c.0.s8 %v2819
      %v2821 = vlaneseq
      %v2822 = vshrl.u32 %v2821, 7
      %v2823 = vsub.s32 %v2820, %v2822
      %v2824 = vrot.slane %v2712, %v2823
      %v2825 = vcombine.high %v2824, %v2824
      %v2827 = vunpack.c.l.s4 1966171168
      %v2828 = vunpack.c.0.s8 %v2827
      %v2829 = vlaneseq
      %v2830 = vshrl.u32 %v2829, 7
      %v2831 = vsub.s32 %v2828, %v2830
      %v2832 = vrot.slane %v2824, %v2831
      %v2834 = vunpack.c.l.s4 1966171168
      %v2835 = vunpack.c.0.s8 %v2834
      %v2836 = vlaneseq
      %v2837 = vshrl.u32 %v2836, 7
      %v2838 = vsub.s32 %v2835, %v2837
      %v2839 = vrot.slane %v2825, %v2838
      %v2840 = vcombine.high %v2832, %v2832
      %v2841 = vcombine.high %v2839, %v2839
      %v2843 = vunpack.c.l.s4 1966171168
      %v2844 = vunpack.c.0.s8 %v2843
      %v2845 = vlaneseq
      %v2846 = vshrl.u32 %v2845, 7
      %v2847 = vsub.s32 %v2844, %v2846
      %v2848 = vrot.slane %v2713, %v2847
      %v2849 = vcombine.high %v2848, %v2848
      %v2851 = vunpack.c.l.s4 1966171168
      %v2852 = vunpack.c.0.s8 %v2851
      %v2853 = vlaneseq
      %v2854 = vshrl.u32 %v2853, 7
      %v2855 = vsub.s32 %v2852, %v2854
      %v2856 = vrot.slane %v2848, %v2855
      %v2858 = vunpack.c.l.s4 1966171168
      %v2859 = vunpack.c.0.s8 %v2858
      %v2860 = vlaneseq
      %v2861 = vshrl.u32 %v2860, 7
      %v2862 = vsub.s32 %v2859, %v2861
      %v2863 = vrot.slane %v2849, %v2862
      %v2864 = vcombine.high %v2856, %v2856
      %v2865 = vcombine.high %v2863, %v2863
      %v2867 = vunpack.c.l.s4 1966171168
      %v2868 = vunpack.c.0.s8 %v2867
      %v2869 = vlaneseq
      %v2870 = vshrl.u32 %v2869, 7
      %v2871 = vsub.s32 %v2868, %v2870
      %v2872 = vrot.slane %v2714, %v2871
      %v2873 = vcombine.high %v2872, %v2872
      %v2875 = vunpack.c.l.s4 1966171168
      %v2876 = vunpack.c.0.s8 %v2875
      %v2877 = vlaneseq
      %v2878 = vshrl.u32 %v2877, 7
      %v2879 = vsub.s32 %v2876, %v2878
      %v2880 = vrot.slane %v2872, %v2879
      %v2882 = vunpack.c.l.s4 1966171168
      %v2883 = vunpack.c.0.s8 %v2882
      %v2884 = vlaneseq
      %v2885 = vshrl.u32 %v2884, 7
      %v2886 = vsub.s32 %v2883, %v2885
      %v2887 = vrot.slane %v2873, %v2886
      %v2888 = vcombine.high %v2880, %v2880
      %v2889 = vcombine.high %v2887, %v2887
      %v2890 = vunpack.i.l.s16 %v2736
      %v2891 = vunpack.i.h.s16 %v2736
      %v2892 = vunpack.i.l.s16 %v2743
      %v2893 = vunpack.i.h.s16 %v2743
      %v2894 = vunpack.i.l.s16 %v2744
      %v2895 = vunpack.i.h.s16 %v2744
      %v2896 = vunpack.i.l.s16 %v2745
      %v2897 = vunpack.i.l.s16 %v2760
      %v2898 = vunpack.i.h.s16 %v2760
      %v2899 = vunpack.i.l.s16 %v2767
      %v2900 = vunpack.i.h.s16 %v2767
      %v2901 = vunpack.i.l.s16 %v2768
      %v2902 = vunpack.i.h.s16 %v2768
      %v2903 = vunpack.i.l.s16 %v2769
      %v2904 = vunpack.i.l.s16 %v2784
      %v2905 = vunpack.i.h.s16 %v2784
      %v2906 = vunpack.i.l.s16 %v2791
      %v2907 = vunpack.i.h.s16 %v2791
      %v2908 = vunpack.i.l.s16 %v2792
      %v2909 = vunpack.i.h.s16 %v2792
      %v2910 = vunpack.i.l.s16 %v2793
      %v2911 = vunpack.i.l.s16 %v2808
      %v2912 = vunpack.i.h.s16 %v2808
      %v2913 = vunpack.i.l.s16 %v2815
      %v2914 = vunpack.i.h.s16 %v2815
      %v2915 = vunpack.i.l.s16 %v2816
      %v2916 = vunpack.i.h.s16 %v2816
      %v2917 = vunpack.i.l.s16 %v2817
      %v2918 = vunpack.i.l.s16 %v2832
      %v2919 = vunpack.i.h.s16 %v2832
      %v2920 = vunpack.i.l.s16 %v2839
      %v2921 = vunpack.i.h.s16 %v2839
      %v2922 = vunpack.i.l.s16 %v2840
      %v2923 = vunpack.i.h.s16 %v2840
      %v2924 = vunpack.i.l.s16 %v2841
      %v2925 = vunpack.i.l.s16 %v2856
      %v2926 = vunpack.i.h.s16 %v2856
      %v2927 = vunpack.i.l.s16 %v2863
      %v2928 = vunpack.i.h.s16 %v2863
      %v2929 = vunpack.i.l.s16 %v2864
      %v2930 = vunpack.i.h.s16 %v2864
      %v2931 = vunpack.i.l.s16 %v2865
      %v2932 = vunpack.i.l.s16 %v2880
      %v2933 = vunpack.i.h.s16 %v2880
      %v2934 = vunpack.i.l.s16 %v2887
      %v2935 = vunpack.i.h.s16 %v2887
      %v2936 = vunpack.i.l.s16 %v2888
      %v2937 = vunpack.i.h.s16 %v2888
      %v2938 = vunpack.i.l.s16 %v2889
      %v2939 = vld [vmem:[%s2] sm:$0xf]
      %v2940 = vld [vmem:[%s2 + $0x4] sm:$0xf]
      %v2941 = vunpack.i.h.s16 %v2745
      %v2942 = vunpack.i.h.s16 %v2769
      %v2943 = vunpack.i.h.s16 %v2793
      %v2944 = vunpack.i.h.s16 %v2817
      %v2945 = vunpack.i.h.s16 %v2841
      %v2946 = vunpack.i.h.s16 %v2865
      %v2947 = vunpack.i.h.s16 %v2889
      %s2948 = scalar_lea.vmem %s2, 8
      %v2949 = vld [vmem:[%s2948] sm:$0xf]
      %v2950 = vld [vmem:[%s2948 + $0x4] sm:$0xf]
      %v2951 = vpack.i.b16 %v2892, %v2891
      %v2952 = vpack.i.b16 %v2894, %v2893
      %v2953 = vpack.i.b16 %v2896, %v2895
      %v2954 = vpack.i.b16 %v2898, %v2941
      %v2955 = vpack.i.b16 %v2900, %v2899
      %v2956 = vpack.i.b16 %v2902, %v2901
      %v2957 = vpack.i.b16 %v2942, %v2903
      %v2958 = vpack.i.b16 %v2906, %v2905
      %v2959 = vpack.i.b16 %v2908, %v2907
      %v2960 = vpack.i.b16 %v2910, %v2909
      %v2961 = vpack.i.b16 %v2912, %v2943
      %v2962 = vpack.i.b16 %v2914, %v2913
      %v2963 = vpack.i.b16 %v2916, %v2915
      %v2964 = vpack.i.b16 %v2944, %v2917
      %v2965 = vpack.i.b16 %v2920, %v2919
      %v2966 = vpack.i.b16 %v2922, %v2921
      %v2967 = vpack.i.b16 %v2924, %v2923
      %v2968 = vpack.i.b16 %v2926, %v2945
      %v2969 = vpack.i.b16 %v2928, %v2927
      %v2970 = vpack.i.b16 %v2930, %v2929
      %v2971 = vpack.i.b16 %v2946, %v2931
      %v2972 = vpack.i.b16 %v2934, %v2933
      %v2973 = vpack.i.b16 %v2936, %v2935
      %v2974 = vpack.i.b16 %v2938, %v2937
      %v2976 = vcombine.low %v2951, %v2952
      %v2977 = vcombine.low %v2953, %v2954
      %v2978 = vcombine.low %v2955, %v2956
      %v2979 = vcombine.low %v2957, %v2958
      %v2981 = vunpack.c.l.s4 1966171168
      %v2982 = vunpack.c.0.s8 %v2981
      %v2983 = vlaneseq
      %v2984 = vshrl.u32 %v2983, 7
      %v2985 = vsub.s32 %v2982, %v2984
      %v2986 = vrot.slane %v2976, %v2985
      %v2988 = vunpack.c.l.s4 1966171168
      %v2989 = vunpack.c.0.s8 %v2988
      %v2990 = vlaneseq
      %v2991 = vshrl.u32 %v2990, 7
      %v2992 = vsub.s32 %v2989, %v2991
      %v2993 = vrot.slane %v2977, %v2992
      %v2995 = vunpack.c.l.s4 1966171168
      %v2996 = vunpack.c.0.s8 %v2995
      %v2997 = vlaneseq
      %v2998 = vshrl.u32 %v2997, 7
      %v2999 = vsub.s32 %v2996, %v2998
      %v3000 = vrot.slane %v2978, %v2999
      %v3002 = vunpack.c.l.s4 1966171168
      %v3003 = vunpack.c.0.s8 %v3002
      %v3004 = vlaneseq
      %v3005 = vshrl.u32 %v3004, 7
      %v3006 = vsub.s32 %v3003, %v3005
      %v3007 = vrot.slane %v2979, %v3006
      %v3008 = vcombine.low %v2986, %v2993
      %v3009 = vcombine.low %v3000, %v3007
      %v3011 = vunpack.c.l.s4 1966171168
      %v3012 = vunpack.c.0.s8 %v3011
      %v3013 = vlaneseq
      %v3014 = vshrl.u32 %v3013, 7
      %v3015 = vsub.s32 %v3012, %v3014
      %v3016 = vrot.slane %v3008, %v3015
      %v3018 = vunpack.c.l.s4 1966171168
      %v3019 = vunpack.c.0.s8 %v3018
      %v3020 = vlaneseq
      %v3021 = vshrl.u32 %v3020, 7
      %v3022 = vsub.s32 %v3019, %v3021
      %v3023 = vrot.slane %v3009, %v3022
      %v3024 = vcombine.low %v3016, %v3023
      %v3025 = vcombine.low %v2959, %v2960
      %v3026 = vcombine.low %v2961, %v2962
      %v3027 = vcombine.low %v2963, %v2964
      %v3028 = vcombine.low %v2965, %v2966
      %v3030 = vunpack.c.l.s4 1966171168
      %v3031 = vunpack.c.0.s8 %v3030
      %v3032 = vlaneseq
      %v3033 = vshrl.u32 %v3032, 7
      %v3034 = vsub.s32 %v3031, %v3033
      %v3035 = vrot.slane %v3025, %v3034
      %v3037 = vunpack.c.l.s4 1966171168
      %v3038 = vunpack.c.0.s8 %v3037
      %v3039 = vlaneseq
      %v3040 = vshrl.u32 %v3039, 7
      %v3041 = vsub.s32 %v3038, %v3040
      %v3042 = vrot.slane %v3026, %v3041
      %v3044 = vunpack.c.l.s4 1966171168
      %v3045 = vunpack.c.0.s8 %v3044
      %v3046 = vlaneseq
      %v3047 = vshrl.u32 %v3046, 7
      %v3048 = vsub.s32 %v3045, %v3047
      %v3049 = vrot.slane %v3027, %v3048
      %v3051 = vunpack.c.l.s4 1966171168
      %v3052 = vunpack.c.0.s8 %v3051
      %v3053 = vlaneseq
      %v3054 = vshrl.u32 %v3053, 7
      %v3055 = vsub.s32 %v3052, %v3054
      %v3056 = vrot.slane %v3028, %v3055
      %v3057 = vcombine.low %v3035, %v3042
      %v3058 = vcombine.low %v3049, %v3056
      %v3060 = vunpack.c.l.s4 1966171168
      %v3061 = vunpack.c.0.s8 %v3060
      %v3062 = vlaneseq
      %v3063 = vshrl.u32 %v3062, 7
      %v3064 = vsub.s32 %v3061, %v3063
      %v3065 = vrot.slane %v3057, %v3064
      %v3067 = vunpack.c.l.s4 1966171168
      %v3068 = vunpack.c.0.s8 %v3067
      %v3069 = vlaneseq
      %v3070 = vshrl.u32 %v3069, 7
      %v3071 = vsub.s32 %v3068, %v3070
      %v3072 = vrot.slane %v3058, %v3071
      %v3073 = vcombine.low %v3065, %v3072
      %v3074 = vcombine.low %v2967, %v2968
      %v3075 = vcombine.low %v2969, %v2970
      %v3076 = vcombine.low %v2971, %v2972
      %v3077 = vcombine.low %v2973, %v2974
      %v3079 = vunpack.c.l.s4 1966171168
      %v3080 = vunpack.c.0.s8 %v3079
      %v3081 = vlaneseq
      %v3082 = vshrl.u32 %v3081, 7
      %v3083 = vsub.s32 %v3080, %v3082
      %v3084 = vrot.slane %v3074, %v3083
      %v3086 = vunpack.c.l.s4 1966171168
      %v3087 = vunpack.c.0.s8 %v3086
      %v3088 = vlaneseq
      %v3089 = vshrl.u32 %v3088, 7
      %v3090 = vsub.s32 %v3087, %v3089
      %v3091 = vrot.slane %v3075, %v3090
      %v3093 = vunpack.c.l.s4 1966171168
      %v3094 = vunpack.c.0.s8 %v3093
      %v3095 = vlaneseq
      %v3096 = vshrl.u32 %v3095, 7
      %v3097 = vsub.s32 %v3094, %v3096
      %v3098 = vrot.slane %v3076, %v3097
      %v3100 = vunpack.c.l.s4 1966171168
      %v3101 = vunpack.c.0.s8 %v3100
      %v3102 = vlaneseq
      %v3103 = vshrl.u32 %v3102, 7
      %v3104 = vsub.s32 %v3101, %v3103
      %v3105 = vrot.slane %v3077, %v3104
      %v3106 = vcombine.low %v3084, %v3091
      %v3107 = vcombine.low %v3098, %v3105
      %v3109 = vunpack.c.l.s4 1966171168
      %v3110 = vunpack.c.0.s8 %v3109
      %v3111 = vlaneseq
      %v3112 = vshrl.u32 %v3111, 7
      %v3113 = vsub.s32 %v3110, %v3112
      %v3114 = vrot.slane %v3106, %v3113
      %v3116 = vunpack.c.l.s4 1966171168
      %v3117 = vunpack.c.0.s8 %v3116
      %v3118 = vlaneseq
      %v3119 = vshrl.u32 %v3118, 7
      %v3120 = vsub.s32 %v3117, %v3119
      %v3121 = vrot.slane %v3107, %v3120
      %v3122 = vcombine.low %v3114, %v3121
      %v3124 = vunpack.c.l.s4 1966171168
      %v3125 = vunpack.c.0.s8 %v3124
      %v3126 = vlaneseq
      %v3127 = vshrl.u32 %v3126, 7
      %v3128 = vsub.s32 %v3125, %v3127
      %v3129 = vrot.slane %v2947, %v3128
      %v3131 = vunpack.c.l.s4 1966171168
      %v3132 = vunpack.c.0.s8 %v3131
      %v3133 = vlaneseq
      %v3134 = vshrl.u32 %v3133, 7
      %v3135 = vsub.s32 %v3132, %v3134
      %v3136 = vrot.slane %v3129, %v3135
      %v3139 = vunpack.c.l.b16 %v2949
      %v3140 = vunpack.c.l.b16 %v2950
      %v3141 = vpack.c.b16 %v3140, %v3139
      %v3144 = vsel %vm661, %v3024, 0
      %v3147 = vsel %vm661, %v3073, 0
      %v3150 = vsel %vm661, %v3122, 0
      %v3153 = vsel %vm661, %v3136, 0
      %3155 = vmatprep.subr.bf16.mxu0 0
      %3156 = vmatpush1.bf16.msra.mxu0 0
      %3157 = vmatprep.subr.bf16.mxu0 0
      %3158 = vmatpush1.bf16.msra.mxu0 0
      %3159 = vmatprep.subr.bf16.mxu0 0
      %3160 = vmatpush1.bf16.msra.mxu0 0
      %3161 = vmatprep.subr.bf16.mxu0 0
      %3162 = vmatpush1.bf16.msra.mxu0 0
      %3163 = vmatprep.subr.bf16.mxu0 0
      %3164 = vmatpush1.bf16.msra.mxu0 0
      %3165 = vmatprep.subr.bf16.mxu0 0
      %3166 = vmatpush1.bf16.msra.mxu0 0
      %3167 = vmatprep.subr.bf16.mxu0 0
      %3168 = vmatpush1.bf16.msra.mxu0 0
      %3169 = vmatprep.subr.bf16.mxu0 0
      %3170 = vmatpush1.bf16.msra.mxu0 %v3141
      %3171 = vmatprep.subr.bf16.mxu0 0
      %3172 = vmatpush2.bf16.msra.mxu0 0
      %3173 = vmatprep.subr.bf16.mxu0 0
      %3174 = vmatpush2.bf16.msra.mxu0 0
      %3175 = vmatprep.subr.bf16.mxu0 0
      %3176 = vmatpush2.bf16.msra.mxu0 0
      %3177 = vmatprep.subr.bf16.mxu0 0
      %3178 = vmatpush2.bf16.msra.mxu0 0
      %3179 = vmatprep.subr.bf16.mxu0 0
      %3180 = vmatpush2.bf16.msra.mxu0 0
      %3181 = vmatprep.subr.bf16.mxu0 0
      %3182 = vmatpush2.bf16.msra.mxu0 0
      %3183 = vmatprep.subr.bf16.mxu0 0
      %3184 = vmatpush2.bf16.msra.mxu0 0
      %3185 = vmatprep.subr.bf16.mxu0 0
      %3186 = vmatpush2.bf16.msra.mxu0 0
      %3187 = vmatprep.mubr.bf16.mxu0 0
      %3188 = vmatmul.mubr.bf16.gmra.mxu0 %v3144
      %v3189 = vpop.f32.mrf.mxu0
      %v3190 = vadd.f32 0.0, %v3189
      %v3191 = vpop.f32.mrf.mxu0
      %v3192 = vpop.f32.mrf.mxu0
      %v3193 = vadd.f32 0.0, %v3192
      %v3194 = vpop.f32.mrf.mxu0
      %3195 = vmatprep.mubr.bf16.mxu0 0
      %3196 = vmatmul.mubr.bf16.gmra.mxu0 %v3147
      %v3197 = vpop.f32.mrf.mxu0
      %v3198 = vadd.f32 0.0, %v3197
      %v3199 = vpop.f32.mrf.mxu0
      %v3200 = vpop.f32.mrf.mxu0
      %v3201 = vadd.f32 0.0, %v3200
      %v3202 = vpop.f32.mrf.mxu0
      %3203 = vmatprep.mubr.bf16.mxu0 0
      %3204 = vmatmul.mubr.bf16.gmra.mxu0 %v3150
      %v3205 = vpop.f32.mrf.mxu0
      %v3206 = vadd.f32 0.0, %v3205
      %v3207 = vpop.f32.mrf.mxu0
      %v3208 = vpop.f32.mrf.mxu0
      %v3209 = vadd.f32 0.0, %v3208
      %v3210 = vpop.f32.mrf.mxu0
      %3211 = vmatprep.mubr.bf16.mxu0 0
      %3212 = vmatmul.mubr.bf16.gmra.mxu0 %v3153
      %v3213 = vpop.f32.mrf.mxu0
      %v3214 = vadd.f32 0.0, %v3213
      %v3215 = vpop.f32.mrf.mxu0
      %v3216 = vpop.f32.mrf.mxu0
      %v3217 = vpop.f32.mrf.mxu0
      %3218 = vdwg.mxu0
      %v3219 = vpack.i.b16 %v2891, %v2890
      %v3220 = vpack.i.b16 %v2893, %v2892
      %v3221 = vpack.i.b16 %v2895, %v2894
      %v3222 = vpack.i.b16 %v2897, %v2896
      %v3223 = vpack.i.b16 %v2899, %v2898
      %v3224 = vpack.i.b16 %v2901, %v2900
      %v3225 = vpack.i.b16 %v2903, %v2902
      %v3226 = vpack.i.b16 %v2905, %v2904
      %v3227 = vpack.i.b16 %v2907, %v2906
      %v3228 = vpack.i.b16 %v2909, %v2908
      %v3229 = vpack.i.b16 %v2911, %v2910
      %v3230 = vpack.i.b16 %v2913, %v2912
      %v3231 = vpack.i.b16 %v2915, %v2914
      %v3232 = vpack.i.b16 %v2917, %v2916
      %v3233 = vpack.i.b16 %v2919, %v2918
      %v3234 = vpack.i.b16 %v2921, %v2920
      %v3235 = vpack.i.b16 %v2923, %v2922
      %v3236 = vpack.i.b16 %v2925, %v2924
      %v3237 = vpack.i.b16 %v2927, %v2926
      %v3238 = vpack.i.b16 %v2929, %v2928
      %v3239 = vpack.i.b16 %v2931, %v2930
      %v3240 = vpack.i.b16 %v2933, %v2932
      %v3241 = vpack.i.b16 %v2935, %v2934
      %v3242 = vpack.i.b16 %v2937, %v2936
      %v3244 = vcombine.low %v3219, %v3220
      %v3245 = vcombine.low %v3221, %v3222
      %v3246 = vcombine.low %v3223, %v3224
      %v3247 = vcombine.low %v3225, %v3226
      %v3249 = vunpack.c.l.s4 1966171168
      %v3250 = vunpack.c.0.s8 %v3249
      %v3251 = vlaneseq
      %v3252 = vshrl.u32 %v3251, 7
      %v3253 = vsub.s32 %v3250, %v3252
      %v3254 = vrot.slane %v3244, %v3253
      %v3256 = vunpack.c.l.s4 1966171168
      %v3257 = vunpack.c.0.s8 %v3256
      %v3258 = vlaneseq
      %v3259 = vshrl.u32 %v3258, 7
      %v3260 = vsub.s32 %v3257, %v3259
      %v3261 = vrot.slane %v3245, %v3260
      %v3263 = vunpack.c.l.s4 1966171168
      %v3264 = vunpack.c.0.s8 %v3263
      %v3265 = vlaneseq
      %v3266 = vshrl.u32 %v3265, 7
      %v3267 = vsub.s32 %v3264, %v3266
      %v3268 = vrot.slane %v3246, %v3267
      %v3270 = vunpack.c.l.s4 1966171168
      %v3271 = vunpack.c.0.s8 %v3270
      %v3272 = vlaneseq
      %v3273 = vshrl.u32 %v3272, 7
      %v3274 = vsub.s32 %v3271, %v3273
      %v3275 = vrot.slane %v3247, %v3274
      %v3276 = vcombine.low %v3254, %v3261
      %v3277 = vcombine.low %v3268, %v3275
      %v3279 = vunpack.c.l.s4 1966171168
      %v3280 = vunpack.c.0.s8 %v3279
      %v3281 = vlaneseq
      %v3282 = vshrl.u32 %v3281, 7
      %v3283 = vsub.s32 %v3280, %v3282
      %v3284 = vrot.slane %v3276, %v3283
      %v3286 = vunpack.c.l.s4 1966171168
      %v3287 = vunpack.c.0.s8 %v3286
      %v3288 = vlaneseq
      %v3289 = vshrl.u32 %v3288, 7
      %v3290 = vsub.s32 %v3287, %v3289
      %v3291 = vrot.slane %v3277, %v3290
      %v3292 = vcombine.low %v3284, %v3291
      %v3293 = vcombine.low %v3227, %v3228
      %v3294 = vcombine.low %v3229, %v3230
      %v3295 = vcombine.low %v3231, %v3232
      %v3296 = vcombine.low %v3233, %v3234
      %v3298 = vunpack.c.l.s4 1966171168
      %v3299 = vunpack.c.0.s8 %v3298
      %v3300 = vlaneseq
      %v3301 = vshrl.u32 %v3300, 7
      %v3302 = vsub.s32 %v3299, %v3301
      %v3303 = vrot.slane %v3293, %v3302
      %v3305 = vunpack.c.l.s4 1966171168
      %v3306 = vunpack.c.0.s8 %v3305
      %v3307 = vlaneseq
      %v3308 = vshrl.u32 %v3307, 7
      %v3309 = vsub.s32 %v3306, %v3308
      %v3310 = vrot.slane %v3294, %v3309
      %v3312 = vunpack.c.l.s4 1966171168
      %v3313 = vunpack.c.0.s8 %v3312
      %v3314 = vlaneseq
      %v3315 = vshrl.u32 %v3314, 7
      %v3316 = vsub.s32 %v3313, %v3315
      %v3317 = vrot.slane %v3295, %v3316
      %v3319 = vunpack.c.l.s4 1966171168
      %v3320 = vunpack.c.0.s8 %v3319
      %v3321 = vlaneseq
      %v3322 = vshrl.u32 %v3321, 7
      %v3323 = vsub.s32 %v3320, %v3322
      %v3324 = vrot.slane %v3296, %v3323
      %v3325 = vcombine.low %v3303, %v3310
      %v3326 = vcombine.low %v3317, %v3324
      %v3328 = vunpack.c.l.s4 1966171168
      %v3329 = vunpack.c.0.s8 %v3328
      %v3330 = vlaneseq
      %v3331 = vshrl.u32 %v3330, 7
      %v3332 = vsub.s32 %v3329, %v3331
      %v3333 = vrot.slane %v3325, %v3332
      %v3335 = vunpack.c.l.s4 1966171168
      %v3336 = vunpack.c.0.s8 %v3335
      %v3337 = vlaneseq
      %v3338 = vshrl.u32 %v3337, 7
      %v3339 = vsub.s32 %v3336, %v3338
      %v3340 = vrot.slane %v3326, %v3339
      %v3341 = vcombine.low %v3333, %v3340
      %v3342 = vcombine.low %v3235, %v3236
      %v3343 = vcombine.low %v3237, %v3238
      %v3344 = vcombine.low %v3239, %v3240
      %v3345 = vcombine.low %v3241, %v3242
      %v3347 = vunpack.c.l.s4 1966171168
      %v3348 = vunpack.c.0.s8 %v3347
      %v3349 = vlaneseq
      %v3350 = vshrl.u32 %v3349, 7
      %v3351 = vsub.s32 %v3348, %v3350
      %v3352 = vrot.slane %v3342, %v3351
      %v3354 = vunpack.c.l.s4 1966171168
      %v3355 = vunpack.c.0.s8 %v3354
      %v3356 = vlaneseq
      %v3357 = vshrl.u32 %v3356, 7
      %v3358 = vsub.s32 %v3355, %v3357
      %v3359 = vrot.slane %v3343, %v3358
      %v3361 = vunpack.c.l.s4 1966171168
      %v3362 = vunpack.c.0.s8 %v3361
      %v3363 = vlaneseq
      %v3364 = vshrl.u32 %v3363, 7
      %v3365 = vsub.s32 %v3362, %v3364
      %v3366 = vrot.slane %v3344, %v3365
      %v3368 = vunpack.c.l.s4 1966171168
      %v3369 = vunpack.c.0.s8 %v3368
      %v3370 = vlaneseq
      %v3371 = vshrl.u32 %v3370, 7
      %v3372 = vsub.s32 %v3369, %v3371
      %v3373 = vrot.slane %v3345, %v3372
      %v3374 = vcombine.low %v3352, %v3359
      %v3375 = vcombine.low %v3366, %v3373
      %v3377 = vunpack.c.l.s4 1966171168
      %v3378 = vunpack.c.0.s8 %v3377
      %v3379 = vlaneseq
      %v3380 = vshrl.u32 %v3379, 7
      %v3381 = vsub.s32 %v3378, %v3380
      %v3382 = vrot.slane %v3374, %v3381
      %v3384 = vunpack.c.l.s4 1966171168
      %v3385 = vunpack.c.0.s8 %v3384
      %v3386 = vlaneseq
      %v3387 = vshrl.u32 %v3386, 7
      %v3388 = vsub.s32 %v3385, %v3387
      %v3389 = vrot.slane %v3375, %v3388
      %v3390 = vcombine.low %v3382, %v3389
      %v3392 = vunpack.c.l.s4 1966171168
      %v3393 = vunpack.c.0.s8 %v3392
      %v3394 = vlaneseq
      %v3395 = vshrl.u32 %v3394, 7
      %v3396 = vsub.s32 %v3393, %v3395
      %v3397 = vrot.slane %v2938, %v3396
      %v3399 = vunpack.c.l.s4 1966171168
      %v3400 = vunpack.c.0.s8 %v3399
      %v3401 = vlaneseq
      %v3402 = vshrl.u32 %v3401, 7
      %v3403 = vsub.s32 %v3400, %v3402
      %v3404 = vrot.slane %v3397, %v3403
      %v3407 = vunpack.c.l.b16 %v2939
      %v3408 = vunpack.c.l.b16 %v2940
      %v3409 = vpack.c.b16 %v3408, %v3407
      %v3412 = vsel %vm661, %v3292, 0
      %v3415 = vsel %vm661, %v3341, 0
      %v3418 = vsel %vm661, %v3390, 0
      %v3421 = vsel %vm661, %v3404, 0
      %3423 = vmatprep.subr.bf16.mxu0 0
      %3424 = vmatpush1.bf16.msra.mxu0 0
      %3425 = vmatprep.subr.bf16.mxu0 0
      %3426 = vmatpush1.bf16.msra.mxu0 0
      %3427 = vmatprep.subr.bf16.mxu0 0
      %3428 = vmatpush1.bf16.msra.mxu0 0
      %3429 = vmatprep.subr.bf16.mxu0 0
      %3430 = vmatpush1.bf16.msra.mxu0 0
      %3431 = vmatprep.subr.bf16.mxu0 0
      %3432 = vmatpush1.bf16.msra.mxu0 0
      %3433 = vmatprep.subr.bf16.mxu0 0
      %3434 = vmatpush1.bf16.msra.mxu0 0
      %3435 = vmatprep.subr.bf16.mxu0 0
      %3436 = vmatpush1.bf16.msra.mxu0 0
      %3437 = vmatprep.subr.bf16.mxu0 0
      %3438 = vmatpush1.bf16.msra.mxu0 %v3409
      %3439 = vmatprep.subr.bf16.mxu0 0
      %3440 = vmatpush2.bf16.msra.mxu0 0
      %3441 = vmatprep.subr.bf16.mxu0 0
      %3442 = vmatpush2.bf16.msra.mxu0 0
      %3443 = vmatprep.subr.bf16.mxu0 0
      %3444 = vmatpush2.bf16.msra.mxu0 0
      %3445 = vmatprep.subr.bf16.mxu0 0
      %3446 = vmatpush2.bf16.msra.mxu0 0
      %3447 = vmatprep.subr.bf16.mxu0 0
      %3448 = vmatpush2.bf16.msra.mxu0 0
      %3449 = vmatprep.subr.bf16.mxu0 0
      %3450 = vmatpush2.bf16.msra.mxu0 0
      %3451 = vmatprep.subr.bf16.mxu0 0
      %3452 = vmatpush2.bf16.msra.mxu0 0
      %3453 = vmatprep.subr.bf16.mxu0 0
      %3454 = vmatpush2.bf16.msra.mxu0 0
      %3455 = vmatprep.mubr.bf16.mxu0 0
      %3456 = vmatmul.mubr.bf16.gmra.mxu0 %v3412
      %v3457 = vpop.f32.mrf.mxu0
      %v3458 = vadd.f32 %v3190, %v3457
      %v3459 = vpop.f32.mrf.mxu0
      %v3460 = vpop.f32.mrf.mxu0
      %v3461 = vadd.f32 %v3193, %v3460
      %v3462 = vpop.f32.mrf.mxu0
      %3463 = vmatprep.mubr.bf16.mxu0 0
      %3464 = vmatmul.mubr.bf16.gmra.mxu0 %v3415
      %v3465 = vpop.f32.mrf.mxu0
      %v3466 = vadd.f32 %v3198, %v3465
      %v3467 = vpop.f32.mrf.mxu0
      %v3468 = vpop.f32.mrf.mxu0
      %v3469 = vadd.f32 %v3201, %v3468
      %v3470 = vpop.f32.mrf.mxu0
      %3471 = vmatprep.mubr.bf16.mxu0 0
      %3472 = vmatmul.mubr.bf16.gmra.mxu0 %v3418
      %v3473 = vpop.f32.mrf.mxu0
      %v3474 = vadd.f32 %v3206, %v3473
      %v3475 = vpop.f32.mrf.mxu0
      %v3476 = vpop.f32.mrf.mxu0
      %v3477 = vadd.f32 %v3209, %v3476
      %v3478 = vpop.f32.mrf.mxu0
      %3479 = vmatprep.mubr.bf16.mxu0 0
      %3480 = vmatmul.mubr.bf16.gmra.mxu0 %v3421
      %v3481 = vpop.f32.mrf.mxu0
      %v3482 = vadd.f32 %v3214, %v3481
      %v3483 = vpop.f32.mrf.mxu0
      %v3484 = vpop.f32.mrf.mxu0
      %v3485 = vpop.f32.mrf.mxu0
      %3486 = vdwg.mxu0
      %v3487 = vld [vmem:[%s225] sm:$0xe]
      %v3488 = vld [vmem:[%s225 + $0x4] sm:$0x1]
      %v3489 = vld [vmem:[%s225 + $0x8] sm:$0xe]
      %v3490 = vld [vmem:[%s225 + $0xc] sm:$0x1]
      %v3491 = vld [vmem:[%s225 + $0x10] sm:$0xe]
      %v3492 = vld [vmem:[%s225 + $0x14] sm:$0x1]
      %v3493 = vld [vmem:[%s225 + $0x18] sm:$0xe]
      %v3494 = vld [vmem:[%s225 + $0x1c] sm:$0x1]
      %v3495 = vld [vmem:[%s225 + $0x20] sm:$0xe]
      %v3496 = vld [vmem:[%s225 + $0x24] sm:$0x1]
      %v3497 = vld [vmem:[%s225 + $0x28] sm:$0xe]
      %v3498 = vld [vmem:[%s225 + $0x2c] sm:$0x1]
      %v3499 = vld [vmem:[%s225 + $0x30] sm:$0xe]
      %v3500 = vld [vmem:[%s225 + $0x34] sm:$0x1]
      %v3516 = vunpack.c.l.s4 1966171168
      %v3517 = vunpack.c.0.s8 %v3516
      %v3518 = vlaneseq
      %v3519 = vshrl.u32 %v3518, 7
      %v3520 = vsub.s32 %v3517, %v3519
      %v3521 = vrot.slane %v3487, %v3520
      %v3522 = vcombine.high %v3521, %v3521
      %v3524 = vunpack.c.l.s4 1966171168
      %v3525 = vunpack.c.0.s8 %v3524
      %v3526 = vlaneseq
      %v3527 = vshrl.u32 %v3526, 7
      %v3528 = vsub.s32 %v3525, %v3527
      %v3529 = vrot.slane %v3521, %v3528
      %v3531 = vunpack.c.l.s4 1966171168
      %v3532 = vunpack.c.0.s8 %v3531
      %v3533 = vlaneseq
      %v3534 = vshrl.u32 %v3533, 7
      %v3535 = vsub.s32 %v3532, %v3534
      %v3536 = vrot.slane %v3522, %v3535
      %v3537 = vcombine.high %v3529, %v3529
      %v3538 = vcombine.high %v3536, %v3536
      %v3540 = vunpack.c.l.s4 1966171168
      %v3541 = vunpack.c.0.s8 %v3540
      %v3542 = vlaneseq
      %v3543 = vshrl.u32 %v3542, 7
      %v3544 = vsub.s32 %v3541, %v3543
      %v3545 = vrot.slane %v3488, %v3544
      %v3547 = vunpack.c.l.s4 1966171168
      %v3548 = vunpack.c.0.s8 %v3547
      %v3549 = vlaneseq
      %v3550 = vshrl.u32 %v3549, 7
      %v3551 = vsub.s32 %v3548, %v3550
      %v3552 = vrot.slane %v3545, %v3551
      %v3554 = vunpack.c.l.s4 1966171168
      %v3555 = vunpack.c.0.s8 %v3554
      %v3556 = vlaneseq
      %v3557 = vshrl.u32 %v3556, 7
      %v3558 = vsub.s32 %v3555, %v3557
      %v3559 = vrot.slane %v3489, %v3558
      %v3560 = vcombine.high %v3559, %v3559
      %v3562 = vunpack.c.l.s4 1966171168
      %v3563 = vunpack.c.0.s8 %v3562
      %v3564 = vlaneseq
      %v3565 = vshrl.u32 %v3564, 7
      %v3566 = vsub.s32 %v3563, %v3565
      %v3567 = vrot.slane %v3559, %v3566
      %v3569 = vunpack.c.l.s4 1966171168
      %v3570 = vunpack.c.0.s8 %v3569
      %v3571 = vlaneseq
      %v3572 = vshrl.u32 %v3571, 7
      %v3573 = vsub.s32 %v3570, %v3572
      %v3574 = vrot.slane %v3560, %v3573
      %v3575 = vcombine.high %v3567, %v3567
      %v3576 = vcombine.high %v3574, %v3574
      %v3578 = vunpack.c.l.s4 1966171168
      %v3579 = vunpack.c.0.s8 %v3578
      %v3580 = vlaneseq
      %v3581 = vshrl.u32 %v3580, 7
      %v3582 = vsub.s32 %v3579, %v3581
      %v3583 = vrot.slane %v3490, %v3582
      %v3585 = vunpack.c.l.s4 1966171168
      %v3586 = vunpack.c.0.s8 %v3585
      %v3587 = vlaneseq
      %v3588 = vshrl.u32 %v3587, 7
      %v3589 = vsub.s32 %v3586, %v3588
      %v3590 = vrot.slane %v3583, %v3589
      %v3592 = vunpack.c.l.s4 1966171168
      %v3593 = vunpack.c.0.s8 %v3592
      %v3594 = vlaneseq
      %v3595 = vshrl.u32 %v3594, 7
      %v3596 = vsub.s32 %v3593, %v3595
      %v3597 = vrot.slane %v3491, %v3596
      %v3598 = vcombine.high %v3597, %v3597
      %v3600 = vunpack.c.l.s4 1966171168
      %v3601 = vunpack.c.0.s8 %v3600
      %v3602 = vlaneseq
      %v3603 = vshrl.u32 %v3602, 7
      %v3604 = vsub.s32 %v3601, %v3603
      %v3605 = vrot.slane %v3597, %v3604
      %v3607 = vunpack.c.l.s4 1966171168
      %v3608 = vunpack.c.0.s8 %v3607
      %v3609 = vlaneseq
      %v3610 = vshrl.u32 %v3609, 7
      %v3611 = vsub.s32 %v3608, %v3610
      %v3612 = vrot.slane %v3598, %v3611
      %v3613 = vcombine.high %v3605, %v3605
      %v3614 = vcombine.high %v3612, %v3612
      %v3616 = vunpack.c.l.s4 1966171168
      %v3617 = vunpack.c.0.s8 %v3616
      %v3618 = vlaneseq
      %v3619 = vshrl.u32 %v3618, 7
      %v3620 = vsub.s32 %v3617, %v3619
      %v3621 = vrot.slane %v3492, %v3620
      %v3623 = vunpack.c.l.s4 1966171168
      %v3624 = vunpack.c.0.s8 %v3623
      %v3625 = vlaneseq
      %v3626 = vshrl.u32 %v3625, 7
      %v3627 = vsub.s32 %v3624, %v3626
      %v3628 = vrot.slane %v3621, %v3627
      %v3630 = vunpack.c.l.s4 1966171168
      %v3631 = vunpack.c.0.s8 %v3630
      %v3632 = vlaneseq
      %v3633 = vshrl.u32 %v3632, 7
      %v3634 = vsub.s32 %v3631, %v3633
      %v3635 = vrot.slane %v3493, %v3634
      %v3636 = vcombine.high %v3635, %v3635
      %v3638 = vunpack.c.l.s4 1966171168
      %v3639 = vunpack.c.0.s8 %v3638
      %v3640 = vlaneseq
      %v3641 = vshrl.u32 %v3640, 7
      %v3642 = vsub.s32 %v3639, %v3641
      %v3643 = vrot.slane %v3635, %v3642
      %v3645 = vunpack.c.l.s4 1966171168
      %v3646 = vunpack.c.0.s8 %v3645
      %v3647 = vlaneseq
      %v3648 = vshrl.u32 %v3647, 7
      %v3649 = vsub.s32 %v3646, %v3648
      %v3650 = vrot.slane %v3636, %v3649
      %v3651 = vcombine.high %v3643, %v3643
      %v3652 = vcombine.high %v3650, %v3650
      %v3654 = vunpack.c.l.s4 1966171168
      %v3655 = vunpack.c.0.s8 %v3654
      %v3656 = vlaneseq
      %v3657 = vshrl.u32 %v3656, 7
      %v3658 = vsub.s32 %v3655, %v3657
      %v3659 = vrot.slane %v3494, %v3658
      %v3661 = vunpack.c.l.s4 1966171168
      %v3662 = vunpack.c.0.s8 %v3661
      %v3663 = vlaneseq
      %v3664 = vshrl.u32 %v3663, 7
      %v3665 = vsub.s32 %v3662, %v3664
      %v3666 = vrot.slane %v3659, %v3665
      %v3668 = vunpack.c.l.s4 1966171168
      %v3669 = vunpack.c.0.s8 %v3668
      %v3670 = vlaneseq
      %v3671 = vshrl.u32 %v3670, 7
      %v3672 = vsub.s32 %v3669, %v3671
      %v3673 = vrot.slane %v3495, %v3672
      %v3674 = vcombine.high %v3673, %v3673
      %v3676 = vunpack.c.l.s4 1966171168
      %v3677 = vunpack.c.0.s8 %v3676
      %v3678 = vlaneseq
      %v3679 = vshrl.u32 %v3678, 7
      %v3680 = vsub.s32 %v3677, %v3679
      %v3681 = vrot.slane %v3673, %v3680
      %v3683 = vunpack.c.l.s4 1966171168
      %v3684 = vunpack.c.0.s8 %v3683
      %v3685 = vlaneseq
      %v3686 = vshrl.u32 %v3685, 7
      %v3687 = vsub.s32 %v3684, %v3686
      %v3688 = vrot.slane %v3674, %v3687
      %v3689 = vcombine.high %v3681, %v3681
      %v3690 = vcombine.high %v3688, %v3688
      %v3692 = vunpack.c.l.s4 1966171168
      %v3693 = vunpack.c.0.s8 %v3692
      %v3694 = vlaneseq
      %v3695 = vshrl.u32 %v3694, 7
      %v3696 = vsub.s32 %v3693, %v3695
      %v3697 = vrot.slane %v3496, %v3696
      %v3699 = vunpack.c.l.s4 1966171168
      %v3700 = vunpack.c.0.s8 %v3699
      %v3701 = vlaneseq
      %v3702 = vshrl.u32 %v3701, 7
      %v3703 = vsub.s32 %v3700, %v3702
      %v3704 = vrot.slane %v3697, %v3703
      %v3706 = vunpack.c.l.s4 1966171168
      %v3707 = vunpack.c.0.s8 %v3706
      %v3708 = vlaneseq
      %v3709 = vshrl.u32 %v3708, 7
      %v3710 = vsub.s32 %v3707, %v3709
      %v3711 = vrot.slane %v3497, %v3710
      %v3712 = vcombine.high %v3711, %v3711
      %v3714 = vunpack.c.l.s4 1966171168
      %v3715 = vunpack.c.0.s8 %v3714
      %v3716 = vlaneseq
      %v3717 = vshrl.u32 %v3716, 7
      %v3718 = vsub.s32 %v3715, %v3717
      %v3719 = vrot.slane %v3711, %v3718
      %v3721 = vunpack.c.l.s4 1966171168
      %v3722 = vunpack.c.0.s8 %v3721
      %v3723 = vlaneseq
      %v3724 = vshrl.u32 %v3723, 7
      %v3725 = vsub.s32 %v3722, %v3724
      %v3726 = vrot.slane %v3712, %v3725
      %v3727 = vcombine.high %v3719, %v3719
      %v3728 = vcombine.high %v3726, %v3726
      %v3730 = vunpack.c.l.s4 1966171168
      %v3731 = vunpack.c.0.s8 %v3730
      %v3732 = vlaneseq
      %v3733 = vshrl.u32 %v3732, 7
      %v3734 = vsub.s32 %v3731, %v3733
      %v3735 = vrot.slane %v3498, %v3734
      %v3737 = vunpack.c.l.s4 1966171168
      %v3738 = vunpack.c.0.s8 %v3737
      %v3739 = vlaneseq
      %v3740 = vshrl.u32 %v3739, 7
      %v3741 = vsub.s32 %v3738, %v3740
      %v3742 = vrot.slane %v3735, %v3741
      %v3744 = vunpack.c.l.s4 1966171168
      %v3745 = vunpack.c.0.s8 %v3744
      %v3746 = vlaneseq
      %v3747 = vshrl.u32 %v3746, 7
      %v3748 = vsub.s32 %v3745, %v3747
      %v3749 = vrot.slane %v3499, %v3748
      %v3750 = vcombine.high %v3749, %v3749
      %v3752 = vunpack.c.l.s4 1966171168
      %v3753 = vunpack.c.0.s8 %v3752
      %v3754 = vlaneseq
      %v3755 = vshrl.u32 %v3754, 7
      %v3756 = vsub.s32 %v3753, %v3755
      %v3757 = vrot.slane %v3749, %v3756
      %v3759 = vunpack.c.l.s4 1966171168
      %v3760 = vunpack.c.0.s8 %v3759
      %v3761 = vlaneseq
      %v3762 = vshrl.u32 %v3761, 7
      %v3763 = vsub.s32 %v3760, %v3762
      %v3764 = vrot.slane %v3750, %v3763
      %v3765 = vcombine.high %v3757, %v3757
      %v3766 = vcombine.high %v3764, %v3764
      %v3768 = vunpack.c.l.s4 1966171168
      %v3769 = vunpack.c.0.s8 %v3768
      %v3770 = vlaneseq
      %v3771 = vshrl.u32 %v3770, 7
      %v3772 = vsub.s32 %v3769, %v3771
      %v3773 = vrot.slane %v3500, %v3772
      %v3775 = vunpack.c.l.s4 1966171168
      %v3776 = vunpack.c.0.s8 %v3775
      %v3777 = vlaneseq
      %v3778 = vshrl.u32 %v3777, 7
      %v3779 = vsub.s32 %v3776, %v3778
      %v3780 = vrot.slane %v3773, %v3779
      %v3781 = vunpack.i.l.s16 %v3536
      %v3782 = vunpack.i.h.s16 %v3536
      %v3783 = vunpack.i.l.s16 %v3537
      %v3784 = vunpack.i.h.s16 %v3537
      %v3785 = vunpack.i.l.s16 %v3538
      %v3786 = vunpack.i.h.s16 %v3538
      %v3787 = vunpack.i.l.s16 %v3552
      %v3788 = vunpack.i.l.s16 %v3574
      %v3789 = vunpack.i.h.s16 %v3574
      %v3790 = vunpack.i.l.s16 %v3575
      %v3791 = vunpack.i.h.s16 %v3575
      %v3792 = vunpack.i.l.s16 %v3576
      %v3793 = vunpack.i.h.s16 %v3576
      %v3794 = vunpack.i.l.s16 %v3590
      %v3795 = vunpack.i.l.s16 %v3612
      %v3796 = vunpack.i.h.s16 %v3612
      %v3797 = vunpack.i.l.s16 %v3613
      %v3798 = vunpack.i.h.s16 %v3613
      %v3799 = vunpack.i.l.s16 %v3614
      %v3800 = vunpack.i.h.s16 %v3614
      %v3801 = vunpack.i.l.s16 %v3628
      %v3802 = vunpack.i.l.s16 %v3650
      %v3803 = vunpack.i.h.s16 %v3650
      %v3804 = vunpack.i.l.s16 %v3651
      %v3805 = vunpack.i.h.s16 %v3651
      %v3806 = vunpack.i.l.s16 %v3652
      %v3807 = vunpack.i.h.s16 %v3652
      %v3808 = vunpack.i.l.s16 %v3666
      %v3809 = vunpack.i.l.s16 %v3688
      %v3810 = vunpack.i.h.s16 %v3688
      %v3811 = vunpack.i.l.s16 %v3689
      %v3812 = vunpack.i.h.s16 %v3689
      %v3813 = vunpack.i.l.s16 %v3690
      %v3814 = vunpack.i.h.s16 %v3690
      %v3815 = vunpack.i.l.s16 %v3704
      %v3816 = vunpack.i.l.s16 %v3726
      %v3817 = vunpack.i.h.s16 %v3726
      %v3818 = vunpack.i.l.s16 %v3727
      %v3819 = vunpack.i.h.s16 %v3727
      %v3820 = vunpack.i.l.s16 %v3728
      %v3821 = vunpack.i.h.s16 %v3728
      %v3822 = vunpack.i.l.s16 %v3742
      %v3823 = vunpack.i.l.s16 %v3764
      %v3824 = vunpack.i.h.s16 %v3764
      %v3825 = vunpack.i.l.s16 %v3765
      %v3826 = vunpack.i.h.s16 %v3765
      %v3827 = vunpack.i.l.s16 %v3766
      %v3828 = vunpack.i.h.s16 %v3766
      %v3829 = vunpack.i.l.s16 %v3780
      %s3830 = scalar_lea.vmem %s2, 16
      %v3831 = vld [vmem:[%s3830] sm:$0xf]
      %v3832 = vld [vmem:[%s3830 + $0x4] sm:$0xf]
      %v3833 = vpack.i.b16 %v3782, %v3781
      %v3834 = vpack.i.b16 %v3784, %v3783
      %v3835 = vpack.i.b16 %v3786, %v3785
      %v3836 = vpack.i.b16 %v3788, %v3787
      %v3837 = vpack.i.b16 %v3790, %v3789
      %v3838 = vpack.i.b16 %v3792, %v3791
      %v3839 = vpack.i.b16 %v3794, %v3793
      %v3840 = vpack.i.b16 %v3796, %v3795
      %v3841 = vpack.i.b16 %v3798, %v3797
      %v3842 = vpack.i.b16 %v3800, %v3799
      %v3843 = vpack.i.b16 %v3802, %v3801
      %v3844 = vpack.i.b16 %v3804, %v3803
      %v3845 = vpack.i.b16 %v3806, %v3805
      %v3846 = vpack.i.b16 %v3808, %v3807
      %v3847 = vpack.i.b16 %v3810, %v3809
      %v3848 = vpack.i.b16 %v3812, %v3811
      %v3849 = vpack.i.b16 %v3814, %v3813
      %v3850 = vpack.i.b16 %v3816, %v3815
      %v3851 = vpack.i.b16 %v3818, %v3817
      %v3852 = vpack.i.b16 %v3820, %v3819
      %v3853 = vpack.i.b16 %v3822, %v3821
      %v3854 = vpack.i.b16 %v3824, %v3823
      %v3855 = vpack.i.b16 %v3826, %v3825
      %v3856 = vpack.i.b16 %v3828, %v3827
      %v3858 = vcombine.low %v3833, %v3834
      %v3859 = vcombine.low %v3835, %v3836
      %v3860 = vcombine.low %v3837, %v3838
      %v3861 = vcombine.low %v3839, %v3840
      %v3863 = vunpack.c.l.s4 1966171168
      %v3864 = vunpack.c.0.s8 %v3863
      %v3865 = vlaneseq
      %v3866 = vshrl.u32 %v3865, 7
      %v3867 = vsub.s32 %v3864, %v3866
      %v3868 = vrot.slane %v3858, %v3867
      %v3870 = vunpack.c.l.s4 1966171168
      %v3871 = vunpack.c.0.s8 %v3870
      %v3872 = vlaneseq
      %v3873 = vshrl.u32 %v3872, 7
      %v3874 = vsub.s32 %v3871, %v3873
      %v3875 = vrot.slane %v3859, %v3874
      %v3877 = vunpack.c.l.s4 1966171168
      %v3878 = vunpack.c.0.s8 %v3877
      %v3879 = vlaneseq
      %v3880 = vshrl.u32 %v3879, 7
      %v3881 = vsub.s32 %v3878, %v3880
      %v3882 = vrot.slane %v3860, %v3881
      %v3884 = vunpack.c.l.s4 1966171168
      %v3885 = vunpack.c.0.s8 %v3884
      %v3886 = vlaneseq
      %v3887 = vshrl.u32 %v3886, 7
      %v3888 = vsub.s32 %v3885, %v3887
      %v3889 = vrot.slane %v3861, %v3888
      %v3890 = vcombine.low %v3868, %v3875
      %v3891 = vcombine.low %v3882, %v3889
      %v3893 = vunpack.c.l.s4 1966171168
      %v3894 = vunpack.c.0.s8 %v3893
      %v3895 = vlaneseq
      %v3896 = vshrl.u32 %v3895, 7
      %v3897 = vsub.s32 %v3894, %v3896
      %v3898 = vrot.slane %v3890, %v3897
      %v3900 = vunpack.c.l.s4 1966171168
      %v3901 = vunpack.c.0.s8 %v3900
      %v3902 = vlaneseq
      %v3903 = vshrl.u32 %v3902, 7
      %v3904 = vsub.s32 %v3901, %v3903
      %v3905 = vrot.slane %v3891, %v3904
      %v3906 = vcombine.low %v3898, %v3905
      %v3907 = vcombine.low %v3841, %v3842
      %v3908 = vcombine.low %v3843, %v3844
      %v3909 = vcombine.low %v3845, %v3846
      %v3910 = vcombine.low %v3847, %v3848
      %v3912 = vunpack.c.l.s4 1966171168
      %v3913 = vunpack.c.0.s8 %v3912
      %v3914 = vlaneseq
      %v3915 = vshrl.u32 %v3914, 7
      %v3916 = vsub.s32 %v3913, %v3915
      %v3917 = vrot.slane %v3907, %v3916
      %v3919 = vunpack.c.l.s4 1966171168
      %v3920 = vunpack.c.0.s8 %v3919
      %v3921 = vlaneseq
      %v3922 = vshrl.u32 %v3921, 7
      %v3923 = vsub.s32 %v3920, %v3922
      %v3924 = vrot.slane %v3908, %v3923
      %v3926 = vunpack.c.l.s4 1966171168
      %v3927 = vunpack.c.0.s8 %v3926
      %v3928 = vlaneseq
      %v3929 = vshrl.u32 %v3928, 7
      %v3930 = vsub.s32 %v3927, %v3929
      %v3931 = vrot.slane %v3909, %v3930
      %v3933 = vunpack.c.l.s4 1966171168
      %v3934 = vunpack.c.0.s8 %v3933
      %v3935 = vlaneseq
      %v3936 = vshrl.u32 %v3935, 7
      %v3937 = vsub.s32 %v3934, %v3936
      %v3938 = vrot.slane %v3910, %v3937
      %v3939 = vcombine.low %v3917, %v3924
      %v3940 = vcombine.low %v3931, %v3938
      %v3942 = vunpack.c.l.s4 1966171168
      %v3943 = vunpack.c.0.s8 %v3942
      %v3944 = vlaneseq
      %v3945 = vshrl.u32 %v3944, 7
      %v3946 = vsub.s32 %v3943, %v3945
      %v3947 = vrot.slane %v3939, %v3946
      %v3949 = vunpack.c.l.s4 1966171168
      %v3950 = vunpack.c.0.s8 %v3949
      %v3951 = vlaneseq
      %v3952 = vshrl.u32 %v3951, 7
      %v3953 = vsub.s32 %v3950, %v3952
      %v3954 = vrot.slane %v3940, %v3953
      %v3955 = vcombine.low %v3947, %v3954
      %v3956 = vcombine.low %v3849, %v3850
      %v3957 = vcombine.low %v3851, %v3852
      %v3958 = vcombine.low %v3853, %v3854
      %v3959 = vcombine.low %v3855, %v3856
      %v3961 = vunpack.c.l.s4 1966171168
      %v3962 = vunpack.c.0.s8 %v3961
      %v3963 = vlaneseq
      %v3964 = vshrl.u32 %v3963, 7
      %v3965 = vsub.s32 %v3962, %v3964
      %v3966 = vrot.slane %v3956, %v3965
      %v3968 = vunpack.c.l.s4 1966171168
      %v3969 = vunpack.c.0.s8 %v3968
      %v3970 = vlaneseq
      %v3971 = vshrl.u32 %v3970, 7
      %v3972 = vsub.s32 %v3969, %v3971
      %v3973 = vrot.slane %v3957, %v3972
      %v3975 = vunpack.c.l.s4 1966171168
      %v3976 = vunpack.c.0.s8 %v3975
      %v3977 = vlaneseq
      %v3978 = vshrl.u32 %v3977, 7
      %v3979 = vsub.s32 %v3976, %v3978
      %v3980 = vrot.slane %v3958, %v3979
      %v3982 = vunpack.c.l.s4 1966171168
      %v3983 = vunpack.c.0.s8 %v3982
      %v3984 = vlaneseq
      %v3985 = vshrl.u32 %v3984, 7
      %v3986 = vsub.s32 %v3983, %v3985
      %v3987 = vrot.slane %v3959, %v3986
      %v3988 = vcombine.low %v3966, %v3973
      %v3989 = vcombine.low %v3980, %v3987
      %v3991 = vunpack.c.l.s4 1966171168
      %v3992 = vunpack.c.0.s8 %v3991
      %v3993 = vlaneseq
      %v3994 = vshrl.u32 %v3993, 7
      %v3995 = vsub.s32 %v3992, %v3994
      %v3996 = vrot.slane %v3988, %v3995
      %v3998 = vunpack.c.l.s4 1966171168
      %v3999 = vunpack.c.0.s8 %v3998
      %v4000 = vlaneseq
      %v4001 = vshrl.u32 %v4000, 7
      %v4002 = vsub.s32 %v3999, %v4001
      %v4003 = vrot.slane %v3989, %v4002
      %v4004 = vcombine.low %v3996, %v4003
      %v4006 = vunpack.c.l.s4 1966171168
      %v4007 = vunpack.c.0.s8 %v4006
      %v4008 = vlaneseq
      %v4009 = vshrl.u32 %v4008, 7
      %v4010 = vsub.s32 %v4007, %v4009
      %v4011 = vrot.slane %v3829, %v4010
      %v4013 = vunpack.c.l.s4 1966171168
      %v4014 = vunpack.c.0.s8 %v4013
      %v4015 = vlaneseq
      %v4016 = vshrl.u32 %v4015, 7
      %v4017 = vsub.s32 %v4014, %v4016
      %v4018 = vrot.slane %v4011, %v4017
      %v4021 = vunpack.c.l.b16 %v3831
      %v4022 = vunpack.c.l.b16 %v3832
      %v4023 = vpack.c.b16 %v4022, %v4021
      %v4026 = vsel %vm661, %v3906, 0
      %v4029 = vsel %vm661, %v3955, 0
      %v4032 = vsel %vm661, %v4004, 0
      %v4035 = vsel %vm661, %v4018, 0
      %4037 = vmatprep.subr.bf16.mxu0 0
      %4038 = vmatpush1.bf16.msra.mxu0 0
      %4039 = vmatprep.subr.bf16.mxu0 0
      %4040 = vmatpush1.bf16.msra.mxu0 0
      %4041 = vmatprep.subr.bf16.mxu0 0
      %4042 = vmatpush1.bf16.msra.mxu0 0
      %4043 = vmatprep.subr.bf16.mxu0 0
      %4044 = vmatpush1.bf16.msra.mxu0 0
      %4045 = vmatprep.subr.bf16.mxu0 0
      %4046 = vmatpush1.bf16.msra.mxu0 0
      %4047 = vmatprep.subr.bf16.mxu0 0
      %4048 = vmatpush1.bf16.msra.mxu0 0
      %4049 = vmatprep.subr.bf16.mxu0 0
      %4050 = vmatpush1.bf16.msra.mxu0 0
      %4051 = vmatprep.subr.bf16.mxu0 0
      %4052 = vmatpush1.bf16.msra.mxu0 %v4023
      %4053 = vmatprep.subr.bf16.mxu0 0
      %4054 = vmatpush2.bf16.msra.mxu0 0
      %4055 = vmatprep.subr.bf16.mxu0 0
      %4056 = vmatpush2.bf16.msra.mxu0 0
      %4057 = vmatprep.subr.bf16.mxu0 0
      %4058 = vmatpush2.bf16.msra.mxu0 0
      %4059 = vmatprep.subr.bf16.mxu0 0
      %4060 = vmatpush2.bf16.msra.mxu0 0
      %4061 = vmatprep.subr.bf16.mxu0 0
      %4062 = vmatpush2.bf16.msra.mxu0 0
      %4063 = vmatprep.subr.bf16.mxu0 0
      %4064 = vmatpush2.bf16.msra.mxu0 0
      %4065 = vmatprep.subr.bf16.mxu0 0
      %4066 = vmatpush2.bf16.msra.mxu0 0
      %4067 = vmatprep.subr.bf16.mxu0 0
      %4068 = vmatpush2.bf16.msra.mxu0 0
      %4069 = vmatprep.mubr.bf16.mxu0 0
      %4070 = vmatmul.mubr.bf16.gmra.mxu0 %v4026
      %v4071 = vpop.f32.mrf.mxu0
      %v4072 = vadd.f32 0.0, %v4071
      %v4073 = vpop.f32.mrf.mxu0
      %v4074 = vpop.f32.mrf.mxu0
      %v4075 = vadd.f32 0.0, %v4074
      %v4076 = vpop.f32.mrf.mxu0
      %4077 = vmatprep.mubr.bf16.mxu0 0
      %4078 = vmatmul.mubr.bf16.gmra.mxu0 %v4029
      %v4079 = vpop.f32.mrf.mxu0
      %v4080 = vadd.f32 0.0, %v4079
      %v4081 = vpop.f32.mrf.mxu0
      %v4082 = vpop.f32.mrf.mxu0
      %v4083 = vadd.f32 0.0, %v4082
      %v4084 = vpop.f32.mrf.mxu0
      %4085 = vmatprep.mubr.bf16.mxu0 0
      %4086 = vmatmul.mubr.bf16.gmra.mxu0 %v4032
      %v4087 = vpop.f32.mrf.mxu0
      %v4088 = vadd.f32 0.0, %v4087
      %v4089 = vpop.f32.mrf.mxu0
      %v4090 = vpop.f32.mrf.mxu0
      %v4091 = vadd.f32 0.0, %v4090
      %v4092 = vpop.f32.mrf.mxu0
      %4093 = vmatprep.mubr.bf16.mxu0 0
      %4094 = vmatmul.mubr.bf16.gmra.mxu0 %v4035
      %v4095 = vpop.f32.mrf.mxu0
      %v4096 = vadd.f32 0.0, %v4095
      %v4097 = vpop.f32.mrf.mxu0
      %v4098 = vpop.f32.mrf.mxu0
      %v4099 = vpop.f32.mrf.mxu0
      %4100 = vdwg.mxu0
      %v4101 = vadd.f32 %v3458, %v4072
      %v4102 = vadd.f32 %v3461, %v4075
      %v4103 = vadd.f32 %v3466, %v4080
      %v4104 = vadd.f32 %v3469, %v4083
      %v4105 = vadd.f32 %v3474, %v4088
      %v4106 = vadd.f32 %v3477, %v4091
      %v4107 = vadd.f32 %v3482, %v4096
      %v4108 = vld [vmem:[%s1009] sm:$0xf]
      %v4109 = vld [vmem:[%s1009 + $0x8] sm:$0xf]
      %v4110 = vld [vmem:[%s1009 + $0x10] sm:$0xf]
      %v4111 = vld [vmem:[%s1009 + $0x18] sm:$0xf]
      %v4112 = vld [vmem:[%s1009 + $0x20] sm:$0xf]
      %v4113 = vld [vmem:[%s1009 + $0x28] sm:$0xf]
      %v4114 = vld [vmem:[%s1009 + $0x30] sm:$0xf]
      %v4123 = vunpack.c.l.s4 1966171168
      %v4124 = vunpack.c.0.s8 %v4123
      %v4125 = vlaneseq
      %v4126 = vshrl.u32 %v4125, 7
      %v4127 = vsub.s32 %v4124, %v4126
      %v4128 = vrot.slane %v4108, %v4127
      %v4129 = vcombine.high %v4128, %v4128
      %v4131 = vunpack.c.l.s4 1966171168
      %v4132 = vunpack.c.0.s8 %v4131
      %v4133 = vlaneseq
      %v4134 = vshrl.u32 %v4133, 7
      %v4135 = vsub.s32 %v4132, %v4134
      %v4136 = vrot.slane %v4128, %v4135
      %v4138 = vunpack.c.l.s4 1966171168
      %v4139 = vunpack.c.0.s8 %v4138
      %v4140 = vlaneseq
      %v4141 = vshrl.u32 %v4140, 7
      %v4142 = vsub.s32 %v4139, %v4141
      %v4143 = vrot.slane %v4129, %v4142
      %v4144 = vcombine.high %v4136, %v4136
      %v4145 = vcombine.high %v4143, %v4143
      %v4147 = vunpack.c.l.s4 1966171168
      %v4148 = vunpack.c.0.s8 %v4147
      %v4149 = vlaneseq
      %v4150 = vshrl.u32 %v4149, 7
      %v4151 = vsub.s32 %v4148, %v4150
      %v4152 = vrot.slane %v4109, %v4151
      %v4153 = vcombine.high %v4152, %v4152
      %v4155 = vunpack.c.l.s4 1966171168
      %v4156 = vunpack.c.0.s8 %v4155
      %v4157 = vlaneseq
      %v4158 = vshrl.u32 %v4157, 7
      %v4159 = vsub.s32 %v4156, %v4158
      %v4160 = vrot.slane %v4152, %v4159
      %v4162 = vunpack.c.l.s4 1966171168
      %v4163 = vunpack.c.0.s8 %v4162
      %v4164 = vlaneseq
      %v4165 = vshrl.u32 %v4164, 7
      %v4166 = vsub.s32 %v4163, %v4165
      %v4167 = vrot.slane %v4153, %v4166
      %v4168 = vcombine.high %v4160, %v4160
      %v4169 = vcombine.high %v4167, %v4167
      %v4171 = vunpack.c.l.s4 1966171168
      %v4172 = vunpack.c.0.s8 %v4171
      %v4173 = vlaneseq
      %v4174 = vshrl.u32 %v4173, 7
      %v4175 = vsub.s32 %v4172, %v4174
      %v4176 = vrot.slane %v4110, %v4175
      %v4177 = vcombine.high %v4176, %v4176
      %v4179 = vunpack.c.l.s4 1966171168
      %v4180 = vunpack.c.0.s8 %v4179
      %v4181 = vlaneseq
      %v4182 = vshrl.u32 %v4181, 7
      %v4183 = vsub.s32 %v4180, %v4182
      %v4184 = vrot.slane %v4176, %v4183
      %v4186 = vunpack.c.l.s4 1966171168
      %v4187 = vunpack.c.0.s8 %v4186
      %v4188 = vlaneseq
      %v4189 = vshrl.u32 %v4188, 7
      %v4190 = vsub.s32 %v4187, %v4189
      %v4191 = vrot.slane %v4177, %v4190
      %v4192 = vcombine.high %v4184, %v4184
      %v4193 = vcombine.high %v4191, %v4191
      %v4195 = vunpack.c.l.s4 1966171168
      %v4196 = vunpack.c.0.s8 %v4195
      %v4197 = vlaneseq
      %v4198 = vshrl.u32 %v4197, 7
      %v4199 = vsub.s32 %v4196, %v4198
      %v4200 = vrot.slane %v4111, %v4199
      %v4201 = vcombine.high %v4200, %v4200
      %v4203 = vunpack.c.l.s4 1966171168
      %v4204 = vunpack.c.0.s8 %v4203
      %v4205 = vlaneseq
      %v4206 = vshrl.u32 %v4205, 7
      %v4207 = vsub.s32 %v4204, %v4206
      %v4208 = vrot.slane %v4200, %v4207
      %v4210 = vunpack.c.l.s4 1966171168
      %v4211 = vunpack.c.0.s8 %v4210
      %v4212 = vlaneseq
      %v4213 = vshrl.u32 %v4212, 7
      %v4214 = vsub.s32 %v4211, %v4213
      %v4215 = vrot.slane %v4201, %v4214
      %v4216 = vcombine.high %v4208, %v4208
      %v4217 = vcombine.high %v4215, %v4215
      %v4219 = vunpack.c.l.s4 1966171168
      %v4220 = vunpack.c.0.s8 %v4219
      %v4221 = vlaneseq
      %v4222 = vshrl.u32 %v4221, 7
      %v4223 = vsub.s32 %v4220, %v4222
      %v4224 = vrot.slane %v4112, %v4223
      %v4225 = vcombine.high %v4224, %v4224
      %v4227 = vunpack.c.l.s4 1966171168
      %v4228 = vunpack.c.0.s8 %v4227
      %v4229 = vlaneseq
      %v4230 = vshrl.u32 %v4229, 7
      %v4231 = vsub.s32 %v4228, %v4230
      %v4232 = vrot.slane %v4224, %v4231
      %v4234 = vunpack.c.l.s4 1966171168
      %v4235 = vunpack.c.0.s8 %v4234
      %v4236 = vlaneseq
      %v4237 = vshrl.u32 %v4236, 7
      %v4238 = vsub.s32 %v4235, %v4237
      %v4239 = vrot.slane %v4225, %v4238
      %v4240 = vcombine.high %v4232, %v4232
      %v4241 = vcombine.high %v4239, %v4239
      %v4243 = vunpack.c.l.s4 1966171168
      %v4244 = vunpack.c.0.s8 %v4243
      %v4245 = vlaneseq
      %v4246 = vshrl.u32 %v4245, 7
      %v4247 = vsub.s32 %v4244, %v4246
      %v4248 = vrot.slane %v4113, %v4247
      %v4249 = vcombine.high %v4248, %v4248
      %v4251 = vunpack.c.l.s4 1966171168
      %v4252 = vunpack.c.0.s8 %v4251
      %v4253 = vlaneseq
      %v4254 = vshrl.u32 %v4253, 7
      %v4255 = vsub.s32 %v4252, %v4254
      %v4256 = vrot.slane %v4248, %v4255
      %v4258 = vunpack.c.l.s4 1966171168
      %v4259 = vunpack.c.0.s8 %v4258
      %v4260 = vlaneseq
      %v4261 = vshrl.u32 %v4260, 7
      %v4262 = vsub.s32 %v4259, %v4261
      %v4263 = vrot.slane %v4249, %v4262
      %v4264 = vcombine.high %v4256, %v4256
      %v4265 = vcombine.high %v4263, %v4263
      %v4267 = vunpack.c.l.s4 1966171168
      %v4268 = vunpack.c.0.s8 %v4267
      %v4269 = vlaneseq
      %v4270 = vshrl.u32 %v4269, 7
      %v4271 = vsub.s32 %v4268, %v4270
      %v4272 = vrot.slane %v4114, %v4271
      %v4273 = vcombine.high %v4272, %v4272
      %v4275 = vunpack.c.l.s4 1966171168
      %v4276 = vunpack.c.0.s8 %v4275
      %v4277 = vlaneseq
      %v4278 = vshrl.u32 %v4277, 7
      %v4279 = vsub.s32 %v4276, %v4278
      %v4280 = vrot.slane %v4272, %v4279
      %v4282 = vunpack.c.l.s4 1966171168
      %v4283 = vunpack.c.0.s8 %v4282
      %v4284 = vlaneseq
      %v4285 = vshrl.u32 %v4284, 7
      %v4286 = vsub.s32 %v4283, %v4285
      %v4287 = vrot.slane %v4273, %v4286
      %v4288 = vcombine.high %v4280, %v4280
      %v4289 = vcombine.high %v4287, %v4287
      %v4290 = vunpack.i.l.s16 %v4136
      %v4291 = vunpack.i.h.s16 %v4136
      %v4292 = vunpack.i.l.s16 %v4143
      %v4293 = vunpack.i.h.s16 %v4143
      %v4294 = vunpack.i.l.s16 %v4144
      %v4295 = vunpack.i.h.s16 %v4144
      %v4296 = vunpack.i.l.s16 %v4145
      %v4297 = vunpack.i.l.s16 %v4160
      %v4298 = vunpack.i.h.s16 %v4160
      %v4299 = vunpack.i.l.s16 %v4167
      %v4300 = vunpack.i.h.s16 %v4167
      %v4301 = vunpack.i.l.s16 %v4168
      %v4302 = vunpack.i.h.s16 %v4168
      %v4303 = vunpack.i.l.s16 %v4169
      %v4304 = vunpack.i.l.s16 %v4184
      %v4305 = vunpack.i.h.s16 %v4184
      %v4306 = vunpack.i.l.s16 %v4191
      %v4307 = vunpack.i.h.s16 %v4191
      %v4308 = vunpack.i.l.s16 %v4192
      %v4309 = vunpack.i.h.s16 %v4192
      %v4310 = vunpack.i.l.s16 %v4193
      %v4311 = vunpack.i.l.s16 %v4208
      %v4312 = vunpack.i.h.s16 %v4208
      %v4313 = vunpack.i.l.s16 %v4215
      %v4314 = vunpack.i.h.s16 %v4215
      %v4315 = vunpack.i.l.s16 %v4216
      %v4316 = vunpack.i.h.s16 %v4216
      %v4317 = vunpack.i.l.s16 %v4217
      %v4318 = vunpack.i.l.s16 %v4232
      %v4319 = vunpack.i.h.s16 %v4232
      %v4320 = vunpack.i.l.s16 %v4239
      %v4321 = vunpack.i.h.s16 %v4239
      %v4322 = vunpack.i.l.s16 %v4240
      %v4323 = vunpack.i.h.s16 %v4240
      %v4324 = vunpack.i.l.s16 %v4241
      %v4325 = vunpack.i.l.s16 %v4256
      %v4326 = vunpack.i.h.s16 %v4256
      %v4327 = vunpack.i.l.s16 %v4263
      %v4328 = vunpack.i.h.s16 %v4263
      %v4329 = vunpack.i.l.s16 %v4264
      %v4330 = vunpack.i.h.s16 %v4264
      %v4331 = vunpack.i.l.s16 %v4265
      %v4332 = vunpack.i.l.s16 %v4280
      %v4333 = vunpack.i.h.s16 %v4280
      %v4334 = vunpack.i.l.s16 %v4287
      %v4335 = vunpack.i.h.s16 %v4287
      %v4336 = vunpack.i.l.s16 %v4288
      %v4337 = vunpack.i.h.s16 %v4288
      %v4338 = vunpack.i.l.s16 %v4289
      %s4339 = scalar_lea.vmem %s2, 24
      %v4340 = vld [vmem:[%s4339] sm:$0xf]
      %v4341 = vld [vmem:[%s4339 + $0x4] sm:$0xf]
      %v4342 = vpack.i.b16 %v4291, %v4290
      %v4343 = vpack.i.b16 %v4293, %v4292
      %v4344 = vpack.i.b16 %v4295, %v4294
      %v4345 = vpack.i.b16 %v4297, %v4296
      %v4346 = vpack.i.b16 %v4299, %v4298
      %v4347 = vpack.i.b16 %v4301, %v4300
      %v4348 = vpack.i.b16 %v4303, %v4302
      %v4349 = vpack.i.b16 %v4305, %v4304
      %v4350 = vpack.i.b16 %v4307, %v4306
      %v4351 = vpack.i.b16 %v4309, %v4308
      %v4352 = vpack.i.b16 %v4311, %v4310
      %v4353 = vpack.i.b16 %v4313, %v4312
      %v4354 = vpack.i.b16 %v4315, %v4314
      %v4355 = vpack.i.b16 %v4317, %v4316
      %v4356 = vpack.i.b16 %v4319, %v4318
      %v4357 = vpack.i.b16 %v4321, %v4320
      %v4358 = vpack.i.b16 %v4323, %v4322
      %v4359 = vpack.i.b16 %v4325, %v4324
      %v4360 = vpack.i.b16 %v4327, %v4326
      %v4361 = vpack.i.b16 %v4329, %v4328
      %v4362 = vpack.i.b16 %v4331, %v4330
      %v4363 = vpack.i.b16 %v4333, %v4332
      %v4364 = vpack.i.b16 %v4335, %v4334
      %v4365 = vpack.i.b16 %v4337, %v4336
      %v4367 = vcombine.low %v4342, %v4343
      %v4368 = vcombine.low %v4344, %v4345
      %v4369 = vcombine.low %v4346, %v4347
      %v4370 = vcombine.low %v4348, %v4349
      %v4372 = vunpack.c.l.s4 1966171168
      %v4373 = vunpack.c.0.s8 %v4372
      %v4374 = vlaneseq
      %v4375 = vshrl.u32 %v4374, 7
      %v4376 = vsub.s32 %v4373, %v4375
      %v4377 = vrot.slane %v4367, %v4376
      %v4379 = vunpack.c.l.s4 1966171168
      %v4380 = vunpack.c.0.s8 %v4379
      %v4381 = vlaneseq
      %v4382 = vshrl.u32 %v4381, 7
      %v4383 = vsub.s32 %v4380, %v4382
      %v4384 = vrot.slane %v4368, %v4383
      %v4386 = vunpack.c.l.s4 1966171168
      %v4387 = vunpack.c.0.s8 %v4386
      %v4388 = vlaneseq
      %v4389 = vshrl.u32 %v4388, 7
      %v4390 = vsub.s32 %v4387, %v4389
      %v4391 = vrot.slane %v4369, %v4390
      %v4393 = vunpack.c.l.s4 1966171168
      %v4394 = vunpack.c.0.s8 %v4393
      %v4395 = vlaneseq
      %v4396 = vshrl.u32 %v4395, 7
      %v4397 = vsub.s32 %v4394, %v4396
      %v4398 = vrot.slane %v4370, %v4397
      %v4399 = vcombine.low %v4377, %v4384
      %v4400 = vcombine.low %v4391, %v4398
      %v4402 = vunpack.c.l.s4 1966171168
      %v4403 = vunpack.c.0.s8 %v4402
      %v4404 = vlaneseq
      %v4405 = vshrl.u32 %v4404, 7
      %v4406 = vsub.s32 %v4403, %v4405
      %v4407 = vrot.slane %v4399, %v4406
      %v4409 = vunpack.c.l.s4 1966171168
      %v4410 = vunpack.c.0.s8 %v4409
      %v4411 = vlaneseq
      %v4412 = vshrl.u32 %v4411, 7
      %v4413 = vsub.s32 %v4410, %v4412
      %v4414 = vrot.slane %v4400, %v4413
      %v4415 = vcombine.low %v4407, %v4414
      %v4416 = vcombine.low %v4350, %v4351
      %v4417 = vcombine.low %v4352, %v4353
      %v4418 = vcombine.low %v4354, %v4355
      %v4419 = vcombine.low %v4356, %v4357
      %v4421 = vunpack.c.l.s4 1966171168
      %v4422 = vunpack.c.0.s8 %v4421
      %v4423 = vlaneseq
      %v4424 = vshrl.u32 %v4423, 7
      %v4425 = vsub.s32 %v4422, %v4424
      %v4426 = vrot.slane %v4416, %v4425
      %v4428 = vunpack.c.l.s4 1966171168
      %v4429 = vunpack.c.0.s8 %v4428
      %v4430 = vlaneseq
      %v4431 = vshrl.u32 %v4430, 7
      %v4432 = vsub.s32 %v4429, %v4431
      %v4433 = vrot.slane %v4417, %v4432
      %v4435 = vunpack.c.l.s4 1966171168
      %v4436 = vunpack.c.0.s8 %v4435
      %v4437 = vlaneseq
      %v4438 = vshrl.u32 %v4437, 7
      %v4439 = vsub.s32 %v4436, %v4438
      %v4440 = vrot.slane %v4418, %v4439
      %v4442 = vunpack.c.l.s4 1966171168
      %v4443 = vunpack.c.0.s8 %v4442
      %v4444 = vlaneseq
      %v4445 = vshrl.u32 %v4444, 7
      %v4446 = vsub.s32 %v4443, %v4445
      %v4447 = vrot.slane %v4419, %v4446
      %v4448 = vcombine.low %v4426, %v4433
      %v4449 = vcombine.low %v4440, %v4447
      %v4451 = vunpack.c.l.s4 1966171168
      %v4452 = vunpack.c.0.s8 %v4451
      %v4453 = vlaneseq
      %v4454 = vshrl.u32 %v4453, 7
      %v4455 = vsub.s32 %v4452, %v4454
      %v4456 = vrot.slane %v4448, %v4455
      %v4458 = vunpack.c.l.s4 1966171168
      %v4459 = vunpack.c.0.s8 %v4458
      %v4460 = vlaneseq
      %v4461 = vshrl.u32 %v4460, 7
      %v4462 = vsub.s32 %v4459, %v4461
      %v4463 = vrot.slane %v4449, %v4462
      %v4464 = vcombine.low %v4456, %v4463
      %v4465 = vcombine.low %v4358, %v4359
      %v4466 = vcombine.low %v4360, %v4361
      %v4467 = vcombine.low %v4362, %v4363
      %v4468 = vcombine.low %v4364, %v4365
      %v4470 = vunpack.c.l.s4 1966171168
      %v4471 = vunpack.c.0.s8 %v4470
      %v4472 = vlaneseq
      %v4473 = vshrl.u32 %v4472, 7
      %v4474 = vsub.s32 %v4471, %v4473
      %v4475 = vrot.slane %v4465, %v4474
      %v4477 = vunpack.c.l.s4 1966171168
      %v4478 = vunpack.c.0.s8 %v4477
      %v4479 = vlaneseq
      %v4480 = vshrl.u32 %v4479, 7
      %v4481 = vsub.s32 %v4478, %v4480
      %v4482 = vrot.slane %v4466, %v4481
      %v4484 = vunpack.c.l.s4 1966171168
      %v4485 = vunpack.c.0.s8 %v4484
      %v4486 = vlaneseq
      %v4487 = vshrl.u32 %v4486, 7
      %v4488 = vsub.s32 %v4485, %v4487
      %v4489 = vrot.slane %v4467, %v4488
      %v4491 = vunpack.c.l.s4 1966171168
      %v4492 = vunpack.c.0.s8 %v4491
      %v4493 = vlaneseq
      %v4494 = vshrl.u32 %v4493, 7
      %v4495 = vsub.s32 %v4492, %v4494
      %v4496 = vrot.slane %v4468, %v4495
      %v4497 = vcombine.low %v4475, %v4482
      %v4498 = vcombine.low %v4489, %v4496
      %v4500 = vunpack.c.l.s4 1966171168
      %v4501 = vunpack.c.0.s8 %v4500
      %v4502 = vlaneseq
      %v4503 = vshrl.u32 %v4502, 7
      %v4504 = vsub.s32 %v4501, %v4503
      %v4505 = vrot.slane %v4497, %v4504
      %v4507 = vunpack.c.l.s4 1966171168
      %v4508 = vunpack.c.0.s8 %v4507
      %v4509 = vlaneseq
      %v4510 = vshrl.u32 %v4509, 7
      %v4511 = vsub.s32 %v4508, %v4510
      %v4512 = vrot.slane %v4498, %v4511
      %v4513 = vcombine.low %v4505, %v4512
      %v4515 = vunpack.c.l.s4 1966171168
      %v4516 = vunpack.c.0.s8 %v4515
      %v4517 = vlaneseq
      %v4518 = vshrl.u32 %v4517, 7
      %v4519 = vsub.s32 %v4516, %v4518
      %v4520 = vrot.slane %v4338, %v4519
      %v4522 = vunpack.c.l.s4 1966171168
      %v4523 = vunpack.c.0.s8 %v4522
      %v4524 = vlaneseq
      %v4525 = vshrl.u32 %v4524, 7
      %v4526 = vsub.s32 %v4523, %v4525
      %v4527 = vrot.slane %v4520, %v4526
      %v4530 = vunpack.c.l.b16 %v4340
      %v4531 = vunpack.c.l.b16 %v4341
      %v4532 = vpack.c.b16 %v4531, %v4530
      %v4535 = vsel %vm661, %v4415, 0
      %v4538 = vsel %vm661, %v4464, 0
      %v4541 = vsel %vm661, %v4513, 0
      %v4544 = vsel %vm661, %v4527, 0
      %4546 = vmatprep.subr.bf16.mxu0 0
      %4547 = vmatpush1.bf16.msra.mxu0 0
      %4548 = vmatprep.subr.bf16.mxu0 0
      %4549 = vmatpush1.bf16.msra.mxu0 0
      %4550 = vmatprep.subr.bf16.mxu0 0
      %4551 = vmatpush1.bf16.msra.mxu0 0
      %4552 = vmatprep.subr.bf16.mxu0 0
      %4553 = vmatpush1.bf16.msra.mxu0 0
      %4554 = vmatprep.subr.bf16.mxu0 0
      %4555 = vmatpush1.bf16.msra.mxu0 0
      %4556 = vmatprep.subr.bf16.mxu0 0
      %4557 = vmatpush1.bf16.msra.mxu0 0
      %4558 = vmatprep.subr.bf16.mxu0 0
      %4559 = vmatpush1.bf16.msra.mxu0 0
      %4560 = vmatprep.subr.bf16.mxu0 0
      %4561 = vmatpush1.bf16.msra.mxu0 %v4532
      %4562 = vmatprep.subr.bf16.mxu0 0
      %4563 = vmatpush2.bf16.msra.mxu0 0
      %4564 = vmatprep.subr.bf16.mxu0 0
      %4565 = vmatpush2.bf16.msra.mxu0 0
      %4566 = vmatprep.subr.bf16.mxu0 0
      %4567 = vmatpush2.bf16.msra.mxu0 0
      %4568 = vmatprep.subr.bf16.mxu0 0
      %4569 = vmatpush2.bf16.msra.mxu0 0
      %4570 = vmatprep.subr.bf16.mxu0 0
      %4571 = vmatpush2.bf16.msra.mxu0 0
      %4572 = vmatprep.subr.bf16.mxu0 0
      %4573 = vmatpush2.bf16.msra.mxu0 0
      %4574 = vmatprep.subr.bf16.mxu0 0
      %4575 = vmatpush2.bf16.msra.mxu0 0
      %4576 = vmatprep.subr.bf16.mxu0 0
      %4577 = vmatpush2.bf16.msra.mxu0 0
      %4578 = vmatprep.mubr.bf16.mxu0 0
      %4579 = vmatmul.mubr.bf16.gmra.mxu0 %v4535
      %v4580 = vpop.f32.mrf.mxu0
      %v4581 = vadd.f32 0.0, %v4580
      %v4582 = vpop.f32.mrf.mxu0
      %v4583 = vpop.f32.mrf.mxu0
      %v4584 = vadd.f32 0.0, %v4583
      %v4585 = vpop.f32.mrf.mxu0
      %4586 = vmatprep.mubr.bf16.mxu0 0
      %4587 = vmatmul.mubr.bf16.gmra.mxu0 %v4538
      %v4588 = vpop.f32.mrf.mxu0
      %v4589 = vadd.f32 0.0, %v4588
      %v4590 = vpop.f32.mrf.mxu0
      %v4591 = vpop.f32.mrf.mxu0
      %v4592 = vadd.f32 0.0, %v4591
      %v4593 = vpop.f32.mrf.mxu0
      %4594 = vmatprep.mubr.bf16.mxu0 0
      %4595 = vmatmul.mubr.bf16.gmra.mxu0 %v4541
      %v4596 = vpop.f32.mrf.mxu0
      %v4597 = vadd.f32 0.0, %v4596
      %v4598 = vpop.f32.mrf.mxu0
      %v4599 = vpop.f32.mrf.mxu0
      %v4600 = vadd.f32 0.0, %v4599
      %v4601 = vpop.f32.mrf.mxu0
      %4602 = vmatprep.mubr.bf16.mxu0 0
      %4603 = vmatmul.mubr.bf16.gmra.mxu0 %v4544
      %v4604 = vpop.f32.mrf.mxu0
      %v4605 = vadd.f32 0.0, %v4604
      %v4606 = vpop.f32.mrf.mxu0
      %v4607 = vpop.f32.mrf.mxu0
      %v4608 = vpop.f32.mrf.mxu0
      %4609 = vdwg.mxu0
      %v4610 = vadd.f32 %v4101, %v4581
      %v4611 = vadd.f32 %v4102, %v4584
      %v4612 = vadd.f32 %v4103, %v4589
      %v4613 = vadd.f32 %v4104, %v4592
      %v4614 = vadd.f32 %v4105, %v4597
      %v4615 = vadd.f32 %v4106, %v4600
      %v4616 = vadd.f32 %v4107, %v4605
      %v4617 = vld [vmem:[%s1009] sm:$0xf]
      %v4618 = vld [vmem:[%s1009 + $0x8] sm:$0xf]
      %v4619 = vld [vmem:[%s1009 + $0x10] sm:$0xf]
      %v4620 = vld [vmem:[%s1009 + $0x18] sm:$0xf]
      %v4621 = vld [vmem:[%s1009 + $0x20] sm:$0xf]
      %v4622 = vld [vmem:[%s1009 + $0x28] sm:$0xf]
      %v4623 = vld [vmem:[%s1009 + $0x30] sm:$0xf]
      %v4632 = vunpack.c.l.s4 1966171168
      %v4633 = vunpack.c.0.s8 %v4632
      %v4634 = vlaneseq
      %v4635 = vshrl.u32 %v4634, 7
      %v4636 = vsub.s32 %v4633, %v4635
      %v4637 = vrot.slane %v4617, %v4636
      %v4638 = vcombine.high %v4637, %v4637
      %v4640 = vunpack.c.l.s4 1966171168
      %v4641 = vunpack.c.0.s8 %v4640
      %v4642 = vlaneseq
      %v4643 = vshrl.u32 %v4642, 7
      %v4644 = vsub.s32 %v4641, %v4643
      %v4645 = vrot.slane %v4637, %v4644
      %v4647 = vunpack.c.l.s4 1966171168
      %v4648 = vunpack.c.0.s8 %v4647
      %v4649 = vlaneseq
      %v4650 = vshrl.u32 %v4649, 7
      %v4651 = vsub.s32 %v4648, %v4650
      %v4652 = vrot.slane %v4638, %v4651
      %v4653 = vcombine.high %v4645, %v4645
      %v4654 = vcombine.high %v4652, %v4652
      %v4656 = vunpack.c.l.s4 1966171168
      %v4657 = vunpack.c.0.s8 %v4656
      %v4658 = vlaneseq
      %v4659 = vshrl.u32 %v4658, 7
      %v4660 = vsub.s32 %v4657, %v4659
      %v4661 = vrot.slane %v4618, %v4660
      %v4662 = vcombine.high %v4661, %v4661
      %v4664 = vunpack.c.l.s4 1966171168
      %v4665 = vunpack.c.0.s8 %v4664
      %v4666 = vlaneseq
      %v4667 = vshrl.u32 %v4666, 7
      %v4668 = vsub.s32 %v4665, %v4667
      %v4669 = vrot.slane %v4661, %v4668
      %v4671 = vunpack.c.l.s4 1966171168
      %v4672 = vunpack.c.0.s8 %v4671
      %v4673 = vlaneseq
      %v4674 = vshrl.u32 %v4673, 7
      %v4675 = vsub.s32 %v4672, %v4674
      %v4676 = vrot.slane %v4662, %v4675
      %v4677 = vcombine.high %v4669, %v4669
      %v4678 = vcombine.high %v4676, %v4676
      %v4680 = vunpack.c.l.s4 1966171168
      %v4681 = vunpack.c.0.s8 %v4680
      %v4682 = vlaneseq
      %v4683 = vshrl.u32 %v4682, 7
      %v4684 = vsub.s32 %v4681, %v4683
      %v4685 = vrot.slane %v4619, %v4684
      %v4686 = vcombine.high %v4685, %v4685
      %v4688 = vunpack.c.l.s4 1966171168
      %v4689 = vunpack.c.0.s8 %v4688
      %v4690 = vlaneseq
      %v4691 = vshrl.u32 %v4690, 7
      %v4692 = vsub.s32 %v4689, %v4691
      %v4693 = vrot.slane %v4685, %v4692
      %v4695 = vunpack.c.l.s4 1966171168
      %v4696 = vunpack.c.0.s8 %v4695
      %v4697 = vlaneseq
      %v4698 = vshrl.u32 %v4697, 7
      %v4699 = vsub.s32 %v4696, %v4698
      %v4700 = vrot.slane %v4686, %v4699
      %v4701 = vcombine.high %v4693, %v4693
      %v4702 = vcombine.high %v4700, %v4700
      %v4704 = vunpack.c.l.s4 1966171168
      %v4705 = vunpack.c.0.s8 %v4704
      %v4706 = vlaneseq
      %v4707 = vshrl.u32 %v4706, 7
      %v4708 = vsub.s32 %v4705, %v4707
      %v4709 = vrot.slane %v4620, %v4708
      %v4710 = vcombine.high %v4709, %v4709
      %v4712 = vunpack.c.l.s4 1966171168
      %v4713 = vunpack.c.0.s8 %v4712
      %v4714 = vlaneseq
      %v4715 = vshrl.u32 %v4714, 7
      %v4716 = vsub.s32 %v4713, %v4715
      %v4717 = vrot.slane %v4709, %v4716
      %v4719 = vunpack.c.l.s4 1966171168
      %v4720 = vunpack.c.0.s8 %v4719
      %v4721 = vlaneseq
      %v4722 = vshrl.u32 %v4721, 7
      %v4723 = vsub.s32 %v4720, %v4722
      %v4724 = vrot.slane %v4710, %v4723
      %v4725 = vcombine.high %v4717, %v4717
      %v4726 = vcombine.high %v4724, %v4724
      %v4728 = vunpack.c.l.s4 1966171168
      %v4729 = vunpack.c.0.s8 %v4728
      %v4730 = vlaneseq
      %v4731 = vshrl.u32 %v4730, 7
      %v4732 = vsub.s32 %v4729, %v4731
      %v4733 = vrot.slane %v4621, %v4732
      %v4734 = vcombine.high %v4733, %v4733
      %v4736 = vunpack.c.l.s4 1966171168
      %v4737 = vunpack.c.0.s8 %v4736
      %v4738 = vlaneseq
      %v4739 = vshrl.u32 %v4738, 7
      %v4740 = vsub.s32 %v4737, %v4739
      %v4741 = vrot.slane %v4733, %v4740
      %v4743 = vunpack.c.l.s4 1966171168
      %v4744 = vunpack.c.0.s8 %v4743
      %v4745 = vlaneseq
      %v4746 = vshrl.u32 %v4745, 7
      %v4747 = vsub.s32 %v4744, %v4746
      %v4748 = vrot.slane %v4734, %v4747
      %v4749 = vcombine.high %v4741, %v4741
      %v4750 = vcombine.high %v4748, %v4748
      %v4752 = vunpack.c.l.s4 1966171168
      %v4753 = vunpack.c.0.s8 %v4752
      %v4754 = vlaneseq
      %v4755 = vshrl.u32 %v4754, 7
      %v4756 = vsub.s32 %v4753, %v4755
      %v4757 = vrot.slane %v4622, %v4756
      %v4758 = vcombine.high %v4757, %v4757
      %v4760 = vunpack.c.l.s4 1966171168
      %v4761 = vunpack.c.0.s8 %v4760
      %v4762 = vlaneseq
      %v4763 = vshrl.u32 %v4762, 7
      %v4764 = vsub.s32 %v4761, %v4763
      %v4765 = vrot.slane %v4757, %v4764
      %v4767 = vunpack.c.l.s4 1966171168
      %v4768 = vunpack.c.0.s8 %v4767
      %v4769 = vlaneseq
      %v4770 = vshrl.u32 %v4769, 7
      %v4771 = vsub.s32 %v4768, %v4770
      %v4772 = vrot.slane %v4758, %v4771
      %v4773 = vcombine.high %v4765, %v4765
      %v4774 = vcombine.high %v4772, %v4772
      %v4776 = vunpack.c.l.s4 1966171168
      %v4777 = vunpack.c.0.s8 %v4776
      %v4778 = vlaneseq
      %v4779 = vshrl.u32 %v4778, 7
      %v4780 = vsub.s32 %v4777, %v4779
      %v4781 = vrot.slane %v4623, %v4780
      %v4782 = vcombine.high %v4781, %v4781
      %v4784 = vunpack.c.l.s4 1966171168
      %v4785 = vunpack.c.0.s8 %v4784
      %v4786 = vlaneseq
      %v4787 = vshrl.u32 %v4786, 7
      %v4788 = vsub.s32 %v4785, %v4787
      %v4789 = vrot.slane %v4781, %v4788
      %v4791 = vunpack.c.l.s4 1966171168
      %v4792 = vunpack.c.0.s8 %v4791
      %v4793 = vlaneseq
      %v4794 = vshrl.u32 %v4793, 7
      %v4795 = vsub.s32 %v4792, %v4794
      %v4796 = vrot.slane %v4782, %v4795
      %v4797 = vcombine.high %v4789, %v4789
      %v4798 = vcombine.high %v4796, %v4796
      %v4799 = vunpack.i.h.s16 %v4645
      %v4800 = vunpack.i.l.s16 %v4652
      %v4801 = vunpack.i.h.s16 %v4652
      %v4802 = vunpack.i.l.s16 %v4653
      %v4803 = vunpack.i.h.s16 %v4653
      %v4804 = vunpack.i.l.s16 %v4654
      %v4805 = vunpack.i.h.s16 %v4654
      %v4806 = vunpack.i.h.s16 %v4669
      %v4807 = vunpack.i.l.s16 %v4676
      %v4808 = vunpack.i.h.s16 %v4676
      %v4809 = vunpack.i.l.s16 %v4677
      %v4810 = vunpack.i.h.s16 %v4677
      %v4811 = vunpack.i.l.s16 %v4678
      %v4812 = vunpack.i.h.s16 %v4678
      %v4813 = vunpack.i.h.s16 %v4693
      %v4814 = vunpack.i.l.s16 %v4700
      %v4815 = vunpack.i.h.s16 %v4700
      %v4816 = vunpack.i.l.s16 %v4701
      %v4817 = vunpack.i.h.s16 %v4701
      %v4818 = vunpack.i.l.s16 %v4702
      %v4819 = vunpack.i.h.s16 %v4702
      %v4820 = vunpack.i.h.s16 %v4717
      %v4821 = vunpack.i.l.s16 %v4724
      %v4822 = vunpack.i.h.s16 %v4724
      %v4823 = vunpack.i.l.s16 %v4725
      %v4824 = vunpack.i.h.s16 %v4725
      %v4825 = vunpack.i.l.s16 %v4726
      %v4826 = vunpack.i.h.s16 %v4726
      %v4827 = vunpack.i.h.s16 %v4741
      %v4828 = vunpack.i.l.s16 %v4748
      %v4829 = vunpack.i.h.s16 %v4748
      %v4830 = vunpack.i.l.s16 %v4749
      %v4831 = vunpack.i.h.s16 %v4749
      %v4832 = vunpack.i.l.s16 %v4750
      %v4833 = vunpack.i.h.s16 %v4750
      %v4834 = vunpack.i.h.s16 %v4765
      %v4835 = vunpack.i.l.s16 %v4772
      %v4836 = vunpack.i.h.s16 %v4772
      %v4837 = vunpack.i.l.s16 %v4773
      %v4838 = vunpack.i.h.s16 %v4773
      %v4839 = vunpack.i.l.s16 %v4774
      %v4840 = vunpack.i.h.s16 %v4774
      %v4841 = vunpack.i.h.s16 %v4789
      %v4842 = vunpack.i.l.s16 %v4796
      %v4843 = vunpack.i.h.s16 %v4796
      %v4844 = vunpack.i.l.s16 %v4797
      %v4845 = vunpack.i.h.s16 %v4797
      %v4846 = vunpack.i.l.s16 %v4798
      %v4847 = vunpack.i.h.s16 %v4798
      %s4848 = scalar_lea.vmem %s2, 32
      %v4849 = vld [vmem:[%s4848] sm:$0xf]
      %v4850 = vld [vmem:[%s4848 + $0x4] sm:$0xf]
      %v4851 = vpack.i.b16 %v4800, %v4799
      %v4852 = vpack.i.b16 %v4802, %v4801
      %v4853 = vpack.i.b16 %v4804, %v4803
      %v4854 = vpack.i.b16 %v4806, %v4805
      %v4855 = vpack.i.b16 %v4808, %v4807
      %v4856 = vpack.i.b16 %v4810, %v4809
      %v4857 = vpack.i.b16 %v4812, %v4811
      %v4858 = vpack.i.b16 %v4814, %v4813
      %v4859 = vpack.i.b16 %v4816, %v4815
      %v4860 = vpack.i.b16 %v4818, %v4817
      %v4861 = vpack.i.b16 %v4820, %v4819
      %v4862 = vpack.i.b16 %v4822, %v4821
      %v4863 = vpack.i.b16 %v4824, %v4823
      %v4864 = vpack.i.b16 %v4826, %v4825
      %v4865 = vpack.i.b16 %v4828, %v4827
      %v4866 = vpack.i.b16 %v4830, %v4829
      %v4867 = vpack.i.b16 %v4832, %v4831
      %v4868 = vpack.i.b16 %v4834, %v4833
      %v4869 = vpack.i.b16 %v4836, %v4835
      %v4870 = vpack.i.b16 %v4838, %v4837
      %v4871 = vpack.i.b16 %v4840, %v4839
      %v4872 = vpack.i.b16 %v4842, %v4841
      %v4873 = vpack.i.b16 %v4844, %v4843
      %v4874 = vpack.i.b16 %v4846, %v4845
      %v4876 = vcombine.low %v4851, %v4852
      %v4877 = vcombine.low %v4853, %v4854
      %v4878 = vcombine.low %v4855, %v4856
      %v4879 = vcombine.low %v4857, %v4858
      %v4881 = vunpack.c.l.s4 1966171168
      %v4882 = vunpack.c.0.s8 %v4881
      %v4883 = vlaneseq
      %v4884 = vshrl.u32 %v4883, 7
      %v4885 = vsub.s32 %v4882, %v4884
      %v4886 = vrot.slane %v4876, %v4885
      %v4888 = vunpack.c.l.s4 1966171168
      %v4889 = vunpack.c.0.s8 %v4888
      %v4890 = vlaneseq
      %v4891 = vshrl.u32 %v4890, 7
      %v4892 = vsub.s32 %v4889, %v4891
      %v4893 = vrot.slane %v4877, %v4892
      %v4895 = vunpack.c.l.s4 1966171168
      %v4896 = vunpack.c.0.s8 %v4895
      %v4897 = vlaneseq
      %v4898 = vshrl.u32 %v4897, 7
      %v4899 = vsub.s32 %v4896, %v4898
      %v4900 = vrot.slane %v4878, %v4899
      %v4902 = vunpack.c.l.s4 1966171168
      %v4903 = vunpack.c.0.s8 %v4902
      %v4904 = vlaneseq
      %v4905 = vshrl.u32 %v4904, 7
      %v4906 = vsub.s32 %v4903, %v4905
      %v4907 = vrot.slane %v4879, %v4906
      %v4908 = vcombine.low %v4886, %v4893
      %v4909 = vcombine.low %v4900, %v4907
      %v4911 = vunpack.c.l.s4 1966171168
      %v4912 = vunpack.c.0.s8 %v4911
      %v4913 = vlaneseq
      %v4914 = vshrl.u32 %v4913, 7
      %v4915 = vsub.s32 %v4912, %v4914
      %v4916 = vrot.slane %v4908, %v4915
      %v4918 = vunpack.c.l.s4 1966171168
      %v4919 = vunpack.c.0.s8 %v4918
      %v4920 = vlaneseq
      %v4921 = vshrl.u32 %v4920, 7
      %v4922 = vsub.s32 %v4919, %v4921
      %v4923 = vrot.slane %v4909, %v4922
      %v4924 = vcombine.low %v4916, %v4923
      %v4925 = vcombine.low %v4859, %v4860
      %v4926 = vcombine.low %v4861, %v4862
      %v4927 = vcombine.low %v4863, %v4864
      %v4928 = vcombine.low %v4865, %v4866
      %v4930 = vunpack.c.l.s4 1966171168
      %v4931 = vunpack.c.0.s8 %v4930
      %v4932 = vlaneseq
      %v4933 = vshrl.u32 %v4932, 7
      %v4934 = vsub.s32 %v4931, %v4933
      %v4935 = vrot.slane %v4925, %v4934
      %v4937 = vunpack.c.l.s4 1966171168
      %v4938 = vunpack.c.0.s8 %v4937
      %v4939 = vlaneseq
      %v4940 = vshrl.u32 %v4939, 7
      %v4941 = vsub.s32 %v4938, %v4940
      %v4942 = vrot.slane %v4926, %v4941
      %v4944 = vunpack.c.l.s4 1966171168
      %v4945 = vunpack.c.0.s8 %v4944
      %v4946 = vlaneseq
      %v4947 = vshrl.u32 %v4946, 7
      %v4948 = vsub.s32 %v4945, %v4947
      %v4949 = vrot.slane %v4927, %v4948
      %v4951 = vunpack.c.l.s4 1966171168
      %v4952 = vunpack.c.0.s8 %v4951
      %v4953 = vlaneseq
      %v4954 = vshrl.u32 %v4953, 7
      %v4955 = vsub.s32 %v4952, %v4954
      %v4956 = vrot.slane %v4928, %v4955
      %v4957 = vcombine.low %v4935, %v4942
      %v4958 = vcombine.low %v4949, %v4956
      %v4960 = vunpack.c.l.s4 1966171168
      %v4961 = vunpack.c.0.s8 %v4960
      %v4962 = vlaneseq
      %v4963 = vshrl.u32 %v4962, 7
      %v4964 = vsub.s32 %v4961, %v4963
      %v4965 = vrot.slane %v4957, %v4964
      %v4967 = vunpack.c.l.s4 1966171168
      %v4968 = vunpack.c.0.s8 %v4967
      %v4969 = vlaneseq
      %v4970 = vshrl.u32 %v4969, 7
      %v4971 = vsub.s32 %v4968, %v4970
      %v4972 = vrot.slane %v4958, %v4971
      %v4973 = vcombine.low %v4965, %v4972
      %v4974 = vcombine.low %v4867, %v4868
      %v4975 = vcombine.low %v4869, %v4870
      %v4976 = vcombine.low %v4871, %v4872
      %v4977 = vcombine.low %v4873, %v4874
      %v4979 = vunpack.c.l.s4 1966171168
      %v4980 = vunpack.c.0.s8 %v4979
      %v4981 = vlaneseq
      %v4982 = vshrl.u32 %v4981, 7
      %v4983 = vsub.s32 %v4980, %v4982
      %v4984 = vrot.slane %v4974, %v4983
      %v4986 = vunpack.c.l.s4 1966171168
      %v4987 = vunpack.c.0.s8 %v4986
      %v4988 = vlaneseq
      %v4989 = vshrl.u32 %v4988, 7
      %v4990 = vsub.s32 %v4987, %v4989
      %v4991 = vrot.slane %v4975, %v4990
      %v4993 = vunpack.c.l.s4 1966171168
      %v4994 = vunpack.c.0.s8 %v4993
      %v4995 = vlaneseq
      %v4996 = vshrl.u32 %v4995, 7
      %v4997 = vsub.s32 %v4994, %v4996
      %v4998 = vrot.slane %v4976, %v4997
      %v5000 = vunpack.c.l.s4 1966171168
      %v5001 = vunpack.c.0.s8 %v5000
      %v5002 = vlaneseq
      %v5003 = vshrl.u32 %v5002, 7
      %v5004 = vsub.s32 %v5001, %v5003
      %v5005 = vrot.slane %v4977, %v5004
      %v5006 = vcombine.low %v4984, %v4991
      %v5007 = vcombine.low %v4998, %v5005
      %v5009 = vunpack.c.l.s4 1966171168
      %v5010 = vunpack.c.0.s8 %v5009
      %v5011 = vlaneseq
      %v5012 = vshrl.u32 %v5011, 7
      %v5013 = vsub.s32 %v5010, %v5012
      %v5014 = vrot.slane %v5006, %v5013
      %v5016 = vunpack.c.l.s4 1966171168
      %v5017 = vunpack.c.0.s8 %v5016
      %v5018 = vlaneseq
      %v5019 = vshrl.u32 %v5018, 7
      %v5020 = vsub.s32 %v5017, %v5019
      %v5021 = vrot.slane %v5007, %v5020
      %v5022 = vcombine.low %v5014, %v5021
      %v5024 = vunpack.c.l.s4 1966171168
      %v5025 = vunpack.c.0.s8 %v5024
      %v5026 = vlaneseq
      %v5027 = vshrl.u32 %v5026, 7
      %v5028 = vsub.s32 %v5025, %v5027
      %v5029 = vrot.slane %v4847, %v5028
      %v5031 = vunpack.c.l.s4 1966171168
      %v5032 = vunpack.c.0.s8 %v5031
      %v5033 = vlaneseq
      %v5034 = vshrl.u32 %v5033, 7
      %v5035 = vsub.s32 %v5032, %v5034
      %v5036 = vrot.slane %v5029, %v5035
      %v5039 = vunpack.c.l.b16 %v4849
      %v5040 = vunpack.c.l.b16 %v4850
      %v5041 = vpack.c.b16 %v5040, %v5039
      %v5044 = vsel %vm661, %v4924, 0
      %v5047 = vsel %vm661, %v4973, 0
      %v5050 = vsel %vm661, %v5022, 0
      %v5053 = vsel %vm661, %v5036, 0
      %5055 = vmatprep.subr.bf16.mxu0 0
      %5056 = vmatpush1.bf16.msra.mxu0 0
      %5057 = vmatprep.subr.bf16.mxu0 0
      %5058 = vmatpush1.bf16.msra.mxu0 0
      %5059 = vmatprep.subr.bf16.mxu0 0
      %5060 = vmatpush1.bf16.msra.mxu0 0
      %5061 = vmatprep.subr.bf16.mxu0 0
      %5062 = vmatpush1.bf16.msra.mxu0 0
      %5063 = vmatprep.subr.bf16.mxu0 0
      %5064 = vmatpush1.bf16.msra.mxu0 0
      %5065 = vmatprep.subr.bf16.mxu0 0
      %5066 = vmatpush1.bf16.msra.mxu0 0
      %5067 = vmatprep.subr.bf16.mxu0 0
      %5068 = vmatpush1.bf16.msra.mxu0 0
      %5069 = vmatprep.subr.bf16.mxu0 0
      %5070 = vmatpush1.bf16.msra.mxu0 %v5041
      %5071 = vmatprep.subr.bf16.mxu0 0
      %5072 = vmatpush2.bf16.msra.mxu0 0
      %5073 = vmatprep.subr.bf16.mxu0 0
      %5074 = vmatpush2.bf16.msra.mxu0 0
      %5075 = vmatprep.subr.bf16.mxu0 0
      %5076 = vmatpush2.bf16.msra.mxu0 0
      %5077 = vmatprep.subr.bf16.mxu0 0
      %5078 = vmatpush2.bf16.msra.mxu0 0
      %5079 = vmatprep.subr.bf16.mxu0 0
      %5080 = vmatpush2.bf16.msra.mxu0 0
      %5081 = vmatprep.subr.bf16.mxu0 0
      %5082 = vmatpush2.bf16.msra.mxu0 0
      %5083 = vmatprep.subr.bf16.mxu0 0
      %5084 = vmatpush2.bf16.msra.mxu0 0
      %5085 = vmatprep.subr.bf16.mxu0 0
      %5086 = vmatpush2.bf16.msra.mxu0 0
      %5087 = vmatprep.mubr.bf16.mxu0 0
      %5088 = vmatmul.mubr.bf16.gmra.mxu0 %v5044
      %v5089 = vpop.f32.mrf.mxu0
      %v5090 = vadd.f32 0.0, %v5089
      %v5091 = vpop.f32.mrf.mxu0
      %v5092 = vpop.f32.mrf.mxu0
      %v5093 = vadd.f32 0.0, %v5092
      %v5094 = vpop.f32.mrf.mxu0
      %5095 = vmatprep.mubr.bf16.mxu0 0
      %5096 = vmatmul.mubr.bf16.gmra.mxu0 %v5047
      %v5097 = vpop.f32.mrf.mxu0
      %v5098 = vadd.f32 0.0, %v5097
      %v5099 = vpop.f32.mrf.mxu0
      %v5100 = vpop.f32.mrf.mxu0
      %v5101 = vadd.f32 0.0, %v5100
      %v5102 = vpop.f32.mrf.mxu0
      %5103 = vmatprep.mubr.bf16.mxu0 0
      %5104 = vmatmul.mubr.bf16.gmra.mxu0 %v5050
      %v5105 = vpop.f32.mrf.mxu0
      %v5106 = vadd.f32 0.0, %v5105
      %v5107 = vpop.f32.mrf.mxu0
      %v5108 = vpop.f32.mrf.mxu0
      %v5109 = vadd.f32 0.0, %v5108
      %v5110 = vpop.f32.mrf.mxu0
      %5111 = vmatprep.mubr.bf16.mxu0 0
      %5112 = vmatmul.mubr.bf16.gmra.mxu0 %v5053
      %v5113 = vpop.f32.mrf.mxu0
      %v5114 = vadd.f32 0.0, %v5113
      %v5115 = vpop.f32.mrf.mxu0
      %v5116 = vpop.f32.mrf.mxu0
      %v5117 = vpop.f32.mrf.mxu0
      %5118 = vdwg.mxu0
      %v5119 = vadd.f32 %v4610, %v5090
      %v5120 = vadd.f32 %v4611, %v5093
      %v5121 = vadd.f32 %v4612, %v5098
      %v5122 = vadd.f32 %v4613, %v5101
      %v5123 = vadd.f32 %v4614, %v5106
      %v5124 = vadd.f32 %v4615, %v5109
      %v5125 = vadd.f32 %v4616, %v5114
      %v5126 = vld [vmem:[%s1009] sm:$0xe]
      %v5127 = vld [vmem:[%s1009 + $0x4] sm:$0x1]
      %v5128 = vld [vmem:[%s1009 + $0x8] sm:$0xe]
      %v5129 = vld [vmem:[%s1009 + $0xc] sm:$0x1]
      %v5130 = vld [vmem:[%s1009 + $0x10] sm:$0xe]
      %v5131 = vld [vmem:[%s1009 + $0x14] sm:$0x1]
      %v5132 = vld [vmem:[%s1009 + $0x18] sm:$0xe]
      %v5133 = vld [vmem:[%s1009 + $0x1c] sm:$0x1]
      %v5134 = vld [vmem:[%s1009 + $0x20] sm:$0xe]
      %v5135 = vld [vmem:[%s1009 + $0x24] sm:$0x1]
      %v5136 = vld [vmem:[%s1009 + $0x28] sm:$0xe]
      %v5137 = vld [vmem:[%s1009 + $0x2c] sm:$0x1]
      %v5138 = vld [vmem:[%s1009 + $0x30] sm:$0xe]
      %v5139 = vld [vmem:[%s1009 + $0x34] sm:$0x1]
      %v5155 = vunpack.c.l.s4 1966171168
      %v5156 = vunpack.c.0.s8 %v5155
      %v5157 = vlaneseq
      %v5158 = vshrl.u32 %v5157, 7
      %v5159 = vsub.s32 %v5156, %v5158
      %v5160 = vrot.slane %v5126, %v5159
      %v5161 = vcombine.high %v5160, %v5160
      %v5163 = vunpack.c.l.s4 1966171168
      %v5164 = vunpack.c.0.s8 %v5163
      %v5165 = vlaneseq
      %v5166 = vshrl.u32 %v5165, 7
      %v5167 = vsub.s32 %v5164, %v5166
      %v5168 = vrot.slane %v5160, %v5167
      %v5170 = vunpack.c.l.s4 1966171168
      %v5171 = vunpack.c.0.s8 %v5170
      %v5172 = vlaneseq
      %v5173 = vshrl.u32 %v5172, 7
      %v5174 = vsub.s32 %v5171, %v5173
      %v5175 = vrot.slane %v5161, %v5174
      %v5176 = vcombine.high %v5168, %v5168
      %v5177 = vcombine.high %v5175, %v5175
      %v5179 = vunpack.c.l.s4 1966171168
      %v5180 = vunpack.c.0.s8 %v5179
      %v5181 = vlaneseq
      %v5182 = vshrl.u32 %v5181, 7
      %v5183 = vsub.s32 %v5180, %v5182
      %v5184 = vrot.slane %v5127, %v5183
      %v5186 = vunpack.c.l.s4 1966171168
      %v5187 = vunpack.c.0.s8 %v5186
      %v5188 = vlaneseq
      %v5189 = vshrl.u32 %v5188, 7
      %v5190 = vsub.s32 %v5187, %v5189
      %v5191 = vrot.slane %v5184, %v5190
      %v5193 = vunpack.c.l.s4 1966171168
      %v5194 = vunpack.c.0.s8 %v5193
      %v5195 = vlaneseq
      %v5196 = vshrl.u32 %v5195, 7
      %v5197 = vsub.s32 %v5194, %v5196
      %v5198 = vrot.slane %v5128, %v5197
      %v5199 = vcombine.high %v5198, %v5198
      %v5201 = vunpack.c.l.s4 1966171168
      %v5202 = vunpack.c.0.s8 %v5201
      %v5203 = vlaneseq
      %v5204 = vshrl.u32 %v5203, 7
      %v5205 = vsub.s32 %v5202, %v5204
      %v5206 = vrot.slane %v5198, %v5205
      %v5208 = vunpack.c.l.s4 1966171168
      %v5209 = vunpack.c.0.s8 %v5208
      %v5210 = vlaneseq
      %v5211 = vshrl.u32 %v5210, 7
      %v5212 = vsub.s32 %v5209, %v5211
      %v5213 = vrot.slane %v5199, %v5212
      %v5214 = vcombine.high %v5206, %v5206
      %v5215 = vcombine.high %v5213, %v5213
      %v5217 = vunpack.c.l.s4 1966171168
      %v5218 = vunpack.c.0.s8 %v5217
      %v5219 = vlaneseq
      %v5220 = vshrl.u32 %v5219, 7
      %v5221 = vsub.s32 %v5218, %v5220
      %v5222 = vrot.slane %v5129, %v5221
      %v5224 = vunpack.c.l.s4 1966171168
      %v5225 = vunpack.c.0.s8 %v5224
      %v5226 = vlaneseq
      %v5227 = vshrl.u32 %v5226, 7
      %v5228 = vsub.s32 %v5225, %v5227
      %v5229 = vrot.slane %v5222, %v5228
      %v5231 = vunpack.c.l.s4 1966171168
      %v5232 = vunpack.c.0.s8 %v5231
      %v5233 = vlaneseq
      %v5234 = vshrl.u32 %v5233, 7
      %v5235 = vsub.s32 %v5232, %v5234
      %v5236 = vrot.slane %v5130, %v5235
      %v5237 = vcombine.high %v5236, %v5236
      %v5239 = vunpack.c.l.s4 1966171168
      %v5240 = vunpack.c.0.s8 %v5239
      %v5241 = vlaneseq
      %v5242 = vshrl.u32 %v5241, 7
      %v5243 = vsub.s32 %v5240, %v5242
      %v5244 = vrot.slane %v5236, %v5243
      %v5246 = vunpack.c.l.s4 1966171168
      %v5247 = vunpack.c.0.s8 %v5246
      %v5248 = vlaneseq
      %v5249 = vshrl.u32 %v5248, 7
      %v5250 = vsub.s32 %v5247, %v5249
      %v5251 = vrot.slane %v5237, %v5250
      %v5252 = vcombine.high %v5244, %v5244
      %v5253 = vcombine.high %v5251, %v5251
      %v5255 = vunpack.c.l.s4 1966171168
      %v5256 = vunpack.c.0.s8 %v5255
      %v5257 = vlaneseq
      %v5258 = vshrl.u32 %v5257, 7
      %v5259 = vsub.s32 %v5256, %v5258
      %v5260 = vrot.slane %v5131, %v5259
      %v5262 = vunpack.c.l.s4 1966171168
      %v5263 = vunpack.c.0.s8 %v5262
      %v5264 = vlaneseq
      %v5265 = vshrl.u32 %v5264, 7
      %v5266 = vsub.s32 %v5263, %v5265
      %v5267 = vrot.slane %v5260, %v5266
      %v5269 = vunpack.c.l.s4 1966171168
      %v5270 = vunpack.c.0.s8 %v5269
      %v5271 = vlaneseq
      %v5272 = vshrl.u32 %v5271, 7
      %v5273 = vsub.s32 %v5270, %v5272
      %v5274 = vrot.slane %v5132, %v5273
      %v5275 = vcombine.high %v5274, %v5274
      %v5277 = vunpack.c.l.s4 1966171168
      %v5278 = vunpack.c.0.s8 %v5277
      %v5279 = vlaneseq
      %v5280 = vshrl.u32 %v5279, 7
      %v5281 = vsub.s32 %v5278, %v5280
      %v5282 = vrot.slane %v5274, %v5281
      %v5284 = vunpack.c.l.s4 1966171168
      %v5285 = vunpack.c.0.s8 %v5284
      %v5286 = vlaneseq
      %v5287 = vshrl.u32 %v5286, 7
      %v5288 = vsub.s32 %v5285, %v5287
      %v5289 = vrot.slane %v5275, %v5288
      %v5290 = vcombine.high %v5282, %v5282
      %v5291 = vcombine.high %v5289, %v5289
      %v5293 = vunpack.c.l.s4 1966171168
      %v5294 = vunpack.c.0.s8 %v5293
      %v5295 = vlaneseq
      %v5296 = vshrl.u32 %v5295, 7
      %v5297 = vsub.s32 %v5294, %v5296
      %v5298 = vrot.slane %v5133, %v5297
      %v5300 = vunpack.c.l.s4 1966171168
      %v5301 = vunpack.c.0.s8 %v5300
      %v5302 = vlaneseq
      %v5303 = vshrl.u32 %v5302, 7
      %v5304 = vsub.s32 %v5301, %v5303
      %v5305 = vrot.slane %v5298, %v5304
      %v5307 = vunpack.c.l.s4 1966171168
      %v5308 = vunpack.c.0.s8 %v5307
      %v5309 = vlaneseq
      %v5310 = vshrl.u32 %v5309, 7
      %v5311 = vsub.s32 %v5308, %v5310
      %v5312 = vrot.slane %v5134, %v5311
      %v5313 = vcombine.high %v5312, %v5312
      %v5315 = vunpack.c.l.s4 1966171168
      %v5316 = vunpack.c.0.s8 %v5315
      %v5317 = vlaneseq
      %v5318 = vshrl.u32 %v5317, 7
      %v5319 = vsub.s32 %v5316, %v5318
      %v5320 = vrot.slane %v5312, %v5319
      %v5322 = vunpack.c.l.s4 1966171168
      %v5323 = vunpack.c.0.s8 %v5322
      %v5324 = vlaneseq
      %v5325 = vshrl.u32 %v5324, 7
      %v5326 = vsub.s32 %v5323, %v5325
      %v5327 = vrot.slane %v5313, %v5326
      %v5328 = vcombine.high %v5320, %v5320
      %v5329 = vcombine.high %v5327, %v5327
      %v5331 = vunpack.c.l.s4 1966171168
      %v5332 = vunpack.c.0.s8 %v5331
      %v5333 = vlaneseq
      %v5334 = vshrl.u32 %v5333, 7
      %v5335 = vsub.s32 %v5332, %v5334
      %v5336 = vrot.slane %v5135, %v5335
      %v5338 = vunpack.c.l.s4 1966171168
      %v5339 = vunpack.c.0.s8 %v5338
      %v5340 = vlaneseq
      %v5341 = vshrl.u32 %v5340, 7
      %v5342 = vsub.s32 %v5339, %v5341
      %v5343 = vrot.slane %v5336, %v5342
      %v5345 = vunpack.c.l.s4 1966171168
      %v5346 = vunpack.c.0.s8 %v5345
      %v5347 = vlaneseq
      %v5348 = vshrl.u32 %v5347, 7
      %v5349 = vsub.s32 %v5346, %v5348
      %v5350 = vrot.slane %v5136, %v5349
      %v5351 = vcombine.high %v5350, %v5350
      %v5353 = vunpack.c.l.s4 1966171168
      %v5354 = vunpack.c.0.s8 %v5353
      %v5355 = vlaneseq
      %v5356 = vshrl.u32 %v5355, 7
      %v5357 = vsub.s32 %v5354, %v5356
      %v5358 = vrot.slane %v5350, %v5357
      %v5360 = vunpack.c.l.s4 1966171168
      %v5361 = vunpack.c.0.s8 %v5360
      %v5362 = vlaneseq
      %v5363 = vshrl.u32 %v5362, 7
      %v5364 = vsub.s32 %v5361, %v5363
      %v5365 = vrot.slane %v5351, %v5364
      %v5366 = vcombine.high %v5358, %v5358
      %v5367 = vcombine.high %v5365, %v5365
      %v5369 = vunpack.c.l.s4 1966171168
      %v5370 = vunpack.c.0.s8 %v5369
      %v5371 = vlaneseq
      %v5372 = vshrl.u32 %v5371, 7
      %v5373 = vsub.s32 %v5370, %v5372
      %v5374 = vrot.slane %v5137, %v5373
      %v5376 = vunpack.c.l.s4 1966171168
      %v5377 = vunpack.c.0.s8 %v5376
      %v5378 = vlaneseq
      %v5379 = vshrl.u32 %v5378, 7
      %v5380 = vsub.s32 %v5377, %v5379
      %v5381 = vrot.slane %v5374, %v5380
      %v5383 = vunpack.c.l.s4 1966171168
      %v5384 = vunpack.c.0.s8 %v5383
      %v5385 = vlaneseq
      %v5386 = vshrl.u32 %v5385, 7
      %v5387 = vsub.s32 %v5384, %v5386
      %v5388 = vrot.slane %v5138, %v5387
      %v5389 = vcombine.high %v5388, %v5388
      %v5391 = vunpack.c.l.s4 1966171168
      %v5392 = vunpack.c.0.s8 %v5391
      %v5393 = vlaneseq
      %v5394 = vshrl.u32 %v5393, 7
      %v5395 = vsub.s32 %v5392, %v5394
      %v5396 = vrot.slane %v5388, %v5395
      %v5398 = vunpack.c.l.s4 1966171168
      %v5399 = vunpack.c.0.s8 %v5398
      %v5400 = vlaneseq
      %v5401 = vshrl.u32 %v5400, 7
      %v5402 = vsub.s32 %v5399, %v5401
      %v5403 = vrot.slane %v5389, %v5402
      %v5404 = vcombine.high %v5396, %v5396
      %v5405 = vcombine.high %v5403, %v5403
      %v5407 = vunpack.c.l.s4 1966171168
      %v5408 = vunpack.c.0.s8 %v5407
      %v5409 = vlaneseq
      %v5410 = vshrl.u32 %v5409, 7
      %v5411 = vsub.s32 %v5408, %v5410
      %v5412 = vrot.slane %v5139, %v5411
      %v5414 = vunpack.c.l.s4 1966171168
      %v5415 = vunpack.c.0.s8 %v5414
      %v5416 = vlaneseq
      %v5417 = vshrl.u32 %v5416, 7
      %v5418 = vsub.s32 %v5415, %v5417
      %v5419 = vrot.slane %v5412, %v5418
      %v5420 = vunpack.i.l.s16 %v5175
      %v5421 = vunpack.i.h.s16 %v5175
      %v5422 = vunpack.i.l.s16 %v5176
      %v5423 = vunpack.i.h.s16 %v5176
      %v5424 = vunpack.i.l.s16 %v5177
      %v5425 = vunpack.i.h.s16 %v5177
      %v5426 = vunpack.i.l.s16 %v5191
      %v5427 = vunpack.i.l.s16 %v5213
      %v5428 = vunpack.i.h.s16 %v5213
      %v5429 = vunpack.i.l.s16 %v5214
      %v5430 = vunpack.i.h.s16 %v5214
      %v5431 = vunpack.i.l.s16 %v5215
      %v5432 = vunpack.i.h.s16 %v5215
      %v5433 = vunpack.i.l.s16 %v5229
      %v5434 = vunpack.i.l.s16 %v5251
      %v5435 = vunpack.i.h.s16 %v5251
      %v5436 = vunpack.i.l.s16 %v5252
      %v5437 = vunpack.i.h.s16 %v5252
      %v5438 = vunpack.i.l.s16 %v5253
      %v5439 = vunpack.i.h.s16 %v5253
      %v5440 = vunpack.i.l.s16 %v5267
      %v5441 = vunpack.i.l.s16 %v5289
      %v5442 = vunpack.i.h.s16 %v5289
      %v5443 = vunpack.i.l.s16 %v5290
      %v5444 = vunpack.i.h.s16 %v5290
      %v5445 = vunpack.i.l.s16 %v5291
      %v5446 = vunpack.i.h.s16 %v5291
      %v5447 = vunpack.i.l.s16 %v5305
      %v5448 = vunpack.i.l.s16 %v5327
      %v5449 = vunpack.i.h.s16 %v5327
      %v5450 = vunpack.i.l.s16 %v5328
      %v5451 = vunpack.i.h.s16 %v5328
      %v5452 = vunpack.i.l.s16 %v5329
      %v5453 = vunpack.i.h.s16 %v5329
      %v5454 = vunpack.i.l.s16 %v5343
      %v5455 = vunpack.i.l.s16 %v5365
      %v5456 = vunpack.i.h.s16 %v5365
      %v5457 = vunpack.i.l.s16 %v5366
      %v5458 = vunpack.i.h.s16 %v5366
      %v5459 = vunpack.i.l.s16 %v5367
      %v5460 = vunpack.i.h.s16 %v5367
      %v5461 = vunpack.i.l.s16 %v5381
      %v5462 = vunpack.i.l.s16 %v5403
      %v5463 = vunpack.i.h.s16 %v5403
      %v5464 = vunpack.i.l.s16 %v5404
      %v5465 = vunpack.i.h.s16 %v5404
      %v5466 = vunpack.i.l.s16 %v5405
      %v5467 = vunpack.i.h.s16 %v5405
      %v5468 = vunpack.i.l.s16 %v5419
      %s5469 = scalar_lea.vmem %s2, 40
      %v5470 = vld [vmem:[%s5469] sm:$0xf]
      %v5471 = vld [vmem:[%s5469 + $0x4] sm:$0xf]
      %v5472 = vpack.i.b16 %v5421, %v5420
      %v5473 = vpack.i.b16 %v5423, %v5422
      %v5474 = vpack.i.b16 %v5425, %v5424
      %v5475 = vpack.i.b16 %v5427, %v5426
      %v5476 = vpack.i.b16 %v5429, %v5428
      %v5477 = vpack.i.b16 %v5431, %v5430
      %v5478 = vpack.i.b16 %v5433, %v5432
      %v5479 = vpack.i.b16 %v5435, %v5434
      %v5480 = vpack.i.b16 %v5437, %v5436
      %v5481 = vpack.i.b16 %v5439, %v5438
      %v5482 = vpack.i.b16 %v5441, %v5440
      %v5483 = vpack.i.b16 %v5443, %v5442
      %v5484 = vpack.i.b16 %v5445, %v5444
      %v5485 = vpack.i.b16 %v5447, %v5446
      %v5486 = vpack.i.b16 %v5449, %v5448
      %v5487 = vpack.i.b16 %v5451, %v5450
      %v5488 = vpack.i.b16 %v5453, %v5452
      %v5489 = vpack.i.b16 %v5455, %v5454
      %v5490 = vpack.i.b16 %v5457, %v5456
      %v5491 = vpack.i.b16 %v5459, %v5458
      %v5492 = vpack.i.b16 %v5461, %v5460
      %v5493 = vpack.i.b16 %v5463, %v5462
      %v5494 = vpack.i.b16 %v5465, %v5464
      %v5495 = vpack.i.b16 %v5467, %v5466
      %v5497 = vcombine.low %v5472, %v5473
      %v5498 = vcombine.low %v5474, %v5475
      %v5499 = vcombine.low %v5476, %v5477
      %v5500 = vcombine.low %v5478, %v5479
      %v5502 = vunpack.c.l.s4 1966171168
      %v5503 = vunpack.c.0.s8 %v5502
      %v5504 = vlaneseq
      %v5505 = vshrl.u32 %v5504, 7
      %v5506 = vsub.s32 %v5503, %v5505
      %v5507 = vrot.slane %v5497, %v5506
      %v5509 = vunpack.c.l.s4 1966171168
      %v5510 = vunpack.c.0.s8 %v5509
      %v5511 = vlaneseq
      %v5512 = vshrl.u32 %v5511, 7
      %v5513 = vsub.s32 %v5510, %v5512
      %v5514 = vrot.slane %v5498, %v5513
      %v5516 = vunpack.c.l.s4 1966171168
      %v5517 = vunpack.c.0.s8 %v5516
      %v5518 = vlaneseq
      %v5519 = vshrl.u32 %v5518, 7
      %v5520 = vsub.s32 %v5517, %v5519
      %v5521 = vrot.slane %v5499, %v5520
      %v5523 = vunpack.c.l.s4 1966171168
      %v5524 = vunpack.c.0.s8 %v5523
      %v5525 = vlaneseq
      %v5526 = vshrl.u32 %v5525, 7
      %v5527 = vsub.s32 %v5524, %v5526
      %v5528 = vrot.slane %v5500, %v5527
      %v5529 = vcombine.low %v5507, %v5514
      %v5530 = vcombine.low %v5521, %v5528
      %v5532 = vunpack.c.l.s4 1966171168
      %v5533 = vunpack.c.0.s8 %v5532
      %v5534 = vlaneseq
      %v5535 = vshrl.u32 %v5534, 7
      %v5536 = vsub.s32 %v5533, %v5535
      %v5537 = vrot.slane %v5529, %v5536
      %v5539 = vunpack.c.l.s4 1966171168
      %v5540 = vunpack.c.0.s8 %v5539
      %v5541 = vlaneseq
      %v5542 = vshrl.u32 %v5541, 7
      %v5543 = vsub.s32 %v5540, %v5542
      %v5544 = vrot.slane %v5530, %v5543
      %v5545 = vcombine.low %v5537, %v5544
      %v5546 = vcombine.low %v5480, %v5481
      %v5547 = vcombine.low %v5482, %v5483
      %v5548 = vcombine.low %v5484, %v5485
      %v5549 = vcombine.low %v5486, %v5487
      %v5551 = vunpack.c.l.s4 1966171168
      %v5552 = vunpack.c.0.s8 %v5551
      %v5553 = vlaneseq
      %v5554 = vshrl.u32 %v5553, 7
      %v5555 = vsub.s32 %v5552, %v5554
      %v5556 = vrot.slane %v5546, %v5555
      %v5558 = vunpack.c.l.s4 1966171168
      %v5559 = vunpack.c.0.s8 %v5558
      %v5560 = vlaneseq
      %v5561 = vshrl.u32 %v5560, 7
      %v5562 = vsub.s32 %v5559, %v5561
      %v5563 = vrot.slane %v5547, %v5562
      %v5565 = vunpack.c.l.s4 1966171168
      %v5566 = vunpack.c.0.s8 %v5565
      %v5567 = vlaneseq
      %v5568 = vshrl.u32 %v5567, 7
      %v5569 = vsub.s32 %v5566, %v5568
      %v5570 = vrot.slane %v5548, %v5569
      %v5572 = vunpack.c.l.s4 1966171168
      %v5573 = vunpack.c.0.s8 %v5572
      %v5574 = vlaneseq
      %v5575 = vshrl.u32 %v5574, 7
      %v5576 = vsub.s32 %v5573, %v5575
      %v5577 = vrot.slane %v5549, %v5576
      %v5578 = vcombine.low %v5556, %v5563
      %v5579 = vcombine.low %v5570, %v5577
      %v5581 = vunpack.c.l.s4 1966171168
      %v5582 = vunpack.c.0.s8 %v5581
      %v5583 = vlaneseq
      %v5584 = vshrl.u32 %v5583, 7
      %v5585 = vsub.s32 %v5582, %v5584
      %v5586 = vrot.slane %v5578, %v5585
      %v5588 = vunpack.c.l.s4 1966171168
      %v5589 = vunpack.c.0.s8 %v5588
      %v5590 = vlaneseq
      %v5591 = vshrl.u32 %v5590, 7
      %v5592 = vsub.s32 %v5589, %v5591
      %v5593 = vrot.slane %v5579, %v5592
      %v5594 = vcombine.low %v5586, %v5593
      %v5595 = vcombine.low %v5488, %v5489
      %v5596 = vcombine.low %v5490, %v5491
      %v5597 = vcombine.low %v5492, %v5493
      %v5598 = vcombine.low %v5494, %v5495
      %v5600 = vunpack.c.l.s4 1966171168
      %v5601 = vunpack.c.0.s8 %v5600
      %v5602 = vlaneseq
      %v5603 = vshrl.u32 %v5602, 7
      %v5604 = vsub.s32 %v5601, %v5603
      %v5605 = vrot.slane %v5595, %v5604
      %v5607 = vunpack.c.l.s4 1966171168
      %v5608 = vunpack.c.0.s8 %v5607
      %v5609 = vlaneseq
      %v5610 = vshrl.u32 %v5609, 7
      %v5611 = vsub.s32 %v5608, %v5610
      %v5612 = vrot.slane %v5596, %v5611
      %v5614 = vunpack.c.l.s4 1966171168
      %v5615 = vunpack.c.0.s8 %v5614
      %v5616 = vlaneseq
      %v5617 = vshrl.u32 %v5616, 7
      %v5618 = vsub.s32 %v5615, %v5617
      %v5619 = vrot.slane %v5597, %v5618
      %v5621 = vunpack.c.l.s4 1966171168
      %v5622 = vunpack.c.0.s8 %v5621
      %v5623 = vlaneseq
      %v5624 = vshrl.u32 %v5623, 7
      %v5625 = vsub.s32 %v5622, %v5624
      %v5626 = vrot.slane %v5598, %v5625
      %v5627 = vcombine.low %v5605, %v5612
      %v5628 = vcombine.low %v5619, %v5626
      %v5630 = vunpack.c.l.s4 1966171168
      %v5631 = vunpack.c.0.s8 %v5630
      %v5632 = vlaneseq
      %v5633 = vshrl.u32 %v5632, 7
      %v5634 = vsub.s32 %v5631, %v5633
      %v5635 = vrot.slane %v5627, %v5634
      %v5637 = vunpack.c.l.s4 1966171168
      %v5638 = vunpack.c.0.s8 %v5637
      %v5639 = vlaneseq
      %v5640 = vshrl.u32 %v5639, 7
      %v5641 = vsub.s32 %v5638, %v5640
      %v5642 = vrot.slane %v5628, %v5641
      %v5643 = vcombine.low %v5635, %v5642
      %v5645 = vunpack.c.l.s4 1966171168
      %v5646 = vunpack.c.0.s8 %v5645
      %v5647 = vlaneseq
      %v5648 = vshrl.u32 %v5647, 7
      %v5649 = vsub.s32 %v5646, %v5648
      %v5650 = vrot.slane %v5468, %v5649
      %v5652 = vunpack.c.l.s4 1966171168
      %v5653 = vunpack.c.0.s8 %v5652
      %v5654 = vlaneseq
      %v5655 = vshrl.u32 %v5654, 7
      %v5656 = vsub.s32 %v5653, %v5655
      %v5657 = vrot.slane %v5650, %v5656
      %v5660 = vunpack.c.l.b16 %v5470
      %v5661 = vunpack.c.l.b16 %v5471
      %v5662 = vpack.c.b16 %v5661, %v5660
      %v5665 = vsel %vm661, %v5545, 0
      %v5668 = vsel %vm661, %v5594, 0
      %v5671 = vsel %vm661, %v5643, 0
      %v5674 = vsel %vm661, %v5657, 0
      %5676 = vmatprep.subr.bf16.mxu0 0
      %5677 = vmatpush1.bf16.msra.mxu0 0
      %5678 = vmatprep.subr.bf16.mxu0 0
      %5679 = vmatpush1.bf16.msra.mxu0 0
      %5680 = vmatprep.subr.bf16.mxu0 0
      %5681 = vmatpush1.bf16.msra.mxu0 0
      %5682 = vmatprep.subr.bf16.mxu0 0
      %5683 = vmatpush1.bf16.msra.mxu0 0
      %5684 = vmatprep.subr.bf16.mxu0 0
      %5685 = vmatpush1.bf16.msra.mxu0 0
      %5686 = vmatprep.subr.bf16.mxu0 0
      %5687 = vmatpush1.bf16.msra.mxu0 0
      %5688 = vmatprep.subr.bf16.mxu0 0
      %5689 = vmatpush1.bf16.msra.mxu0 0
      %5690 = vmatprep.subr.bf16.mxu0 0
      %5691 = vmatpush1.bf16.msra.mxu0 %v5662
      %5692 = vmatprep.subr.bf16.mxu0 0
      %5693 = vmatpush2.bf16.msra.mxu0 0
      %5694 = vmatprep.subr.bf16.mxu0 0
      %5695 = vmatpush2.bf16.msra.mxu0 0
      %5696 = vmatprep.subr.bf16.mxu0 0
      %5697 = vmatpush2.bf16.msra.mxu0 0
      %5698 = vmatprep.subr.bf16.mxu0 0
      %5699 = vmatpush2.bf16.msra.mxu0 0
      %5700 = vmatprep.subr.bf16.mxu0 0
      %5701 = vmatpush2.bf16.msra.mxu0 0
      %5702 = vmatprep.subr.bf16.mxu0 0
      %5703 = vmatpush2.bf16.msra.mxu0 0
      %5704 = vmatprep.subr.bf16.mxu0 0
      %5705 = vmatpush2.bf16.msra.mxu0 0
      %5706 = vmatprep.subr.bf16.mxu0 0
      %5707 = vmatpush2.bf16.msra.mxu0 0
      %5708 = vmatprep.mubr.bf16.mxu0 0
      %5709 = vmatmul.mubr.bf16.gmra.mxu0 %v5665
      %v5710 = vpop.f32.mrf.mxu0
      %v5711 = vadd.f32 0.0, %v5710
      %v5712 = vpop.f32.mrf.mxu0
      %v5713 = vpop.f32.mrf.mxu0
      %v5714 = vadd.f32 0.0, %v5713
      %v5715 = vpop.f32.mrf.mxu0
      %5716 = vmatprep.mubr.bf16.mxu0 0
      %5717 = vmatmul.mubr.bf16.gmra.mxu0 %v5668
      %v5718 = vpop.f32.mrf.mxu0
      %v5719 = vadd.f32 0.0, %v5718
      %v5720 = vpop.f32.mrf.mxu0
      %v5721 = vpop.f32.mrf.mxu0
      %v5722 = vadd.f32 0.0, %v5721
      %v5723 = vpop.f32.mrf.mxu0
      %5724 = vmatprep.mubr.bf16.mxu0 0
      %5725 = vmatmul.mubr.bf16.gmra.mxu0 %v5671
      %v5726 = vpop.f32.mrf.mxu0
      %v5727 = vadd.f32 0.0, %v5726
      %v5728 = vpop.f32.mrf.mxu0
      %v5729 = vpop.f32.mrf.mxu0
      %v5730 = vadd.f32 0.0, %v5729
      %v5731 = vpop.f32.mrf.mxu0
      %5732 = vmatprep.mubr.bf16.mxu0 0
      %5733 = vmatmul.mubr.bf16.gmra.mxu0 %v5674
      %v5734 = vpop.f32.mrf.mxu0
      %v5735 = vadd.f32 0.0, %v5734
      %v5736 = vpop.f32.mrf.mxu0
      %v5737 = vpop.f32.mrf.mxu0
      %v5738 = vpop.f32.mrf.mxu0
      %5739 = vdwg.mxu0
      %v5740 = vadd.f32 %v5119, %v5711
      %v5741 = vadd.f32 %v5120, %v5714
      %v5742 = vadd.f32 %v5121, %v5719
      %v5743 = vadd.f32 %v5122, %v5722
      %v5744 = vadd.f32 %v5123, %v5727
      %v5745 = vadd.f32 %v5124, %v5730
      %v5746 = vadd.f32 %v5125, %v5735
      %s5747 = sadd.s32 %s222, 2
      %s5748 = smul.u32 %s5747, 2
      %s5749 = smul.addr %s5748, 4
      %s5750 = scalar_lea.vmem %s210, %s5749
      %v5751 = vld [vmem:[%s5750] sm:$0xf]
      %v5752 = vld [vmem:[%s5750 + $0x8] sm:$0xf]
      %v5753 = vld [vmem:[%s5750 + $0x10] sm:$0xf]
      %v5754 = vld [vmem:[%s5750 + $0x18] sm:$0xf]
      %v5755 = vld [vmem:[%s5750 + $0x20] sm:$0xf]
      %v5756 = vld [vmem:[%s5750 + $0x28] sm:$0xf]
      %v5757 = vld [vmem:[%s5750 + $0x30] sm:$0xf]
      %v5766 = vunpack.c.l.s4 1966171168
      %v5767 = vunpack.c.0.s8 %v5766
      %v5768 = vlaneseq
      %v5769 = vshrl.u32 %v5768, 7
      %v5770 = vsub.s32 %v5767, %v5769
      %v5771 = vrot.slane %v5751, %v5770
      %v5772 = vcombine.high %v5771, %v5771
      %v5774 = vunpack.c.l.s4 1966171168
      %v5775 = vunpack.c.0.s8 %v5774
      %v5776 = vlaneseq
      %v5777 = vshrl.u32 %v5776, 7
      %v5778 = vsub.s32 %v5775, %v5777
      %v5779 = vrot.slane %v5771, %v5778
      %v5781 = vunpack.c.l.s4 1966171168
      %v5782 = vunpack.c.0.s8 %v5781
      %v5783 = vlaneseq
      %v5784 = vshrl.u32 %v5783, 7
      %v5785 = vsub.s32 %v5782, %v5784
      %v5786 = vrot.slane %v5772, %v5785
      %v5787 = vcombine.high %v5779, %v5779
      %v5788 = vcombine.high %v5786, %v5786
      %v5790 = vunpack.c.l.s4 1966171168
      %v5791 = vunpack.c.0.s8 %v5790
      %v5792 = vlaneseq
      %v5793 = vshrl.u32 %v5792, 7
      %v5794 = vsub.s32 %v5791, %v5793
      %v5795 = vrot.slane %v5752, %v5794
      %v5796 = vcombine.high %v5795, %v5795
      %v5798 = vunpack.c.l.s4 1966171168
      %v5799 = vunpack.c.0.s8 %v5798
      %v5800 = vlaneseq
      %v5801 = vshrl.u32 %v5800, 7
      %v5802 = vsub.s32 %v5799, %v5801
      %v5803 = vrot.slane %v5795, %v5802
      %v5805 = vunpack.c.l.s4 1966171168
      %v5806 = vunpack.c.0.s8 %v5805
      %v5807 = vlaneseq
      %v5808 = vshrl.u32 %v5807, 7
      %v5809 = vsub.s32 %v5806, %v5808
      %v5810 = vrot.slane %v5796, %v5809
      %v5811 = vcombine.high %v5803, %v5803
      %v5812 = vcombine.high %v5810, %v5810
      %v5814 = vunpack.c.l.s4 1966171168
      %v5815 = vunpack.c.0.s8 %v5814
      %v5816 = vlaneseq
      %v5817 = vshrl.u32 %v5816, 7
      %v5818 = vsub.s32 %v5815, %v5817
      %v5819 = vrot.slane %v5753, %v5818
      %v5820 = vcombine.high %v5819, %v5819
      %v5822 = vunpack.c.l.s4 1966171168
      %v5823 = vunpack.c.0.s8 %v5822
      %v5824 = vlaneseq
      %v5825 = vshrl.u32 %v5824, 7
      %v5826 = vsub.s32 %v5823, %v5825
      %v5827 = vrot.slane %v5819, %v5826
      %v5829 = vunpack.c.l.s4 1966171168
      %v5830 = vunpack.c.0.s8 %v5829
      %v5831 = vlaneseq
      %v5832 = vshrl.u32 %v5831, 7
      %v5833 = vsub.s32 %v5830, %v5832
      %v5834 = vrot.slane %v5820, %v5833
      %v5835 = vcombine.high %v5827, %v5827
      %v5836 = vcombine.high %v5834, %v5834
      %v5838 = vunpack.c.l.s4 1966171168
      %v5839 = vunpack.c.0.s8 %v5838
      %v5840 = vlaneseq
      %v5841 = vshrl.u32 %v5840, 7
      %v5842 = vsub.s32 %v5839, %v5841
      %v5843 = vrot.slane %v5754, %v5842
      %v5844 = vcombine.high %v5843, %v5843
      %v5846 = vunpack.c.l.s4 1966171168
      %v5847 = vunpack.c.0.s8 %v5846
      %v5848 = vlaneseq
      %v5849 = vshrl.u32 %v5848, 7
      %v5850 = vsub.s32 %v5847, %v5849
      %v5851 = vrot.slane %v5843, %v5850
      %v5853 = vunpack.c.l.s4 1966171168
      %v5854 = vunpack.c.0.s8 %v5853
      %v5855 = vlaneseq
      %v5856 = vshrl.u32 %v5855, 7
      %v5857 = vsub.s32 %v5854, %v5856
      %v5858 = vrot.slane %v5844, %v5857
      %v5859 = vcombine.high %v5851, %v5851
      %v5860 = vcombine.high %v5858, %v5858
      %v5862 = vunpack.c.l.s4 1966171168
      %v5863 = vunpack.c.0.s8 %v5862
      %v5864 = vlaneseq
      %v5865 = vshrl.u32 %v5864, 7
      %v5866 = vsub.s32 %v5863, %v5865
      %v5867 = vrot.slane %v5755, %v5866
      %v5868 = vcombine.high %v5867, %v5867
      %v5870 = vunpack.c.l.s4 1966171168
      %v5871 = vunpack.c.0.s8 %v5870
      %v5872 = vlaneseq
      %v5873 = vshrl.u32 %v5872, 7
      %v5874 = vsub.s32 %v5871, %v5873
      %v5875 = vrot.slane %v5867, %v5874
      %v5877 = vunpack.c.l.s4 1966171168
      %v5878 = vunpack.c.0.s8 %v5877
      %v5879 = vlaneseq
      %v5880 = vshrl.u32 %v5879, 7
      %v5881 = vsub.s32 %v5878, %v5880
      %v5882 = vrot.slane %v5868, %v5881
      %v5883 = vcombine.high %v5875, %v5875
      %v5884 = vcombine.high %v5882, %v5882
      %v5886 = vunpack.c.l.s4 1966171168
      %v5887 = vunpack.c.0.s8 %v5886
      %v5888 = vlaneseq
      %v5889 = vshrl.u32 %v5888, 7
      %v5890 = vsub.s32 %v5887, %v5889
      %v5891 = vrot.slane %v5756, %v5890
      %v5892 = vcombine.high %v5891, %v5891
      %v5894 = vunpack.c.l.s4 1966171168
      %v5895 = vunpack.c.0.s8 %v5894
      %v5896 = vlaneseq
      %v5897 = vshrl.u32 %v5896, 7
      %v5898 = vsub.s32 %v5895, %v5897
      %v5899 = vrot.slane %v5891, %v5898
      %v5901 = vunpack.c.l.s4 1966171168
      %v5902 = vunpack.c.0.s8 %v5901
      %v5903 = vlaneseq
      %v5904 = vshrl.u32 %v5903, 7
      %v5905 = vsub.s32 %v5902, %v5904
      %v5906 = vrot.slane %v5892, %v5905
      %v5907 = vcombine.high %v5899, %v5899
      %v5908 = vcombine.high %v5906, %v5906
      %v5910 = vunpack.c.l.s4 1966171168
      %v5911 = vunpack.c.0.s8 %v5910
      %v5912 = vlaneseq
      %v5913 = vshrl.u32 %v5912, 7
      %v5914 = vsub.s32 %v5911, %v5913
      %v5915 = vrot.slane %v5757, %v5914
      %v5916 = vcombine.high %v5915, %v5915
      %v5918 = vunpack.c.l.s4 1966171168
      %v5919 = vunpack.c.0.s8 %v5918
      %v5920 = vlaneseq
      %v5921 = vshrl.u32 %v5920, 7
      %v5922 = vsub.s32 %v5919, %v5921
      %v5923 = vrot.slane %v5915, %v5922
      %v5925 = vunpack.c.l.s4 1966171168
      %v5926 = vunpack.c.0.s8 %v5925
      %v5927 = vlaneseq
      %v5928 = vshrl.u32 %v5927, 7
      %v5929 = vsub.s32 %v5926, %v5928
      %v5930 = vrot.slane %v5916, %v5929
      %v5931 = vcombine.high %v5923, %v5923
      %v5932 = vcombine.high %v5930, %v5930
      %v5933 = vunpack.i.l.s16 %v5779
      %v5934 = vunpack.i.h.s16 %v5779
      %v5935 = vunpack.i.l.s16 %v5786
      %v5936 = vunpack.i.h.s16 %v5786
      %v5937 = vunpack.i.l.s16 %v5787
      %v5938 = vunpack.i.h.s16 %v5787
      %v5939 = vunpack.i.l.s16 %v5788
      %v5940 = vunpack.i.l.s16 %v5803
      %v5941 = vunpack.i.h.s16 %v5803
      %v5942 = vunpack.i.l.s16 %v5810
      %v5943 = vunpack.i.h.s16 %v5810
      %v5944 = vunpack.i.l.s16 %v5811
      %v5945 = vunpack.i.h.s16 %v5811
      %v5946 = vunpack.i.l.s16 %v5812
      %v5947 = vunpack.i.l.s16 %v5827
      %v5948 = vunpack.i.h.s16 %v5827
      %v5949 = vunpack.i.l.s16 %v5834
      %v5950 = vunpack.i.h.s16 %v5834
      %v5951 = vunpack.i.l.s16 %v5835
      %v5952 = vunpack.i.h.s16 %v5835
      %v5953 = vunpack.i.l.s16 %v5836
      %v5954 = vunpack.i.l.s16 %v5851
      %v5955 = vunpack.i.h.s16 %v5851
      %v5956 = vunpack.i.l.s16 %v5858
      %v5957 = vunpack.i.h.s16 %v5858
      %v5958 = vunpack.i.l.s16 %v5859
      %v5959 = vunpack.i.h.s16 %v5859
      %v5960 = vunpack.i.l.s16 %v5860
      %v5961 = vunpack.i.l.s16 %v5875
      %v5962 = vunpack.i.h.s16 %v5875
      %v5963 = vunpack.i.l.s16 %v5882
      %v5964 = vunpack.i.h.s16 %v5882
      %v5965 = vunpack.i.l.s16 %v5883
      %v5966 = vunpack.i.h.s16 %v5883
      %v5967 = vunpack.i.l.s16 %v5884
      %v5968 = vunpack.i.l.s16 %v5899
      %v5969 = vunpack.i.h.s16 %v5899
      %v5970 = vunpack.i.l.s16 %v5906
      %v5971 = vunpack.i.h.s16 %v5906
      %v5972 = vunpack.i.l.s16 %v5907
      %v5973 = vunpack.i.h.s16 %v5907
      %v5974 = vunpack.i.l.s16 %v5908
      %v5975 = vunpack.i.l.s16 %v5923
      %v5976 = vunpack.i.h.s16 %v5923
      %v5977 = vunpack.i.l.s16 %v5930
      %v5978 = vunpack.i.h.s16 %v5930
      %v5979 = vunpack.i.l.s16 %v5931
      %v5980 = vunpack.i.h.s16 %v5931
      %v5981 = vunpack.i.l.s16 %v5932
      %s5982 = scalar_lea.vmem %s2, 48
      %v5983 = vld [vmem:[%s5982] sm:$0xf]
      %v5984 = vld [vmem:[%s5982 + $0x4] sm:$0xf]
      %v5985 = vpack.i.b16 %v5934, %v5933
      %v5986 = vpack.i.b16 %v5936, %v5935
      %v5987 = vpack.i.b16 %v5938, %v5937
      %v5988 = vpack.i.b16 %v5940, %v5939
      %v5989 = vpack.i.b16 %v5942, %v5941
      %v5990 = vpack.i.b16 %v5944, %v5943
      %v5991 = vpack.i.b16 %v5946, %v5945
      %v5992 = vpack.i.b16 %v5948, %v5947
      %v5993 = vpack.i.b16 %v5950, %v5949
      %v5994 = vpack.i.b16 %v5952, %v5951
      %v5995 = vpack.i.b16 %v5954, %v5953
      %v5996 = vpack.i.b16 %v5956, %v5955
      %v5997 = vpack.i.b16 %v5958, %v5957
      %v5998 = vpack.i.b16 %v5960, %v5959
      %v5999 = vpack.i.b16 %v5962, %v5961
      %v6000 = vpack.i.b16 %v5964, %v5963
      %v6001 = vpack.i.b16 %v5966, %v5965
      %v6002 = vpack.i.b16 %v5968, %v5967
      %v6003 = vpack.i.b16 %v5970, %v5969
      %v6004 = vpack.i.b16 %v5972, %v5971
      %v6005 = vpack.i.b16 %v5974, %v5973
      %v6006 = vpack.i.b16 %v5976, %v5975
      %v6007 = vpack.i.b16 %v5978, %v5977
      %v6008 = vpack.i.b16 %v5980, %v5979
      %v6010 = vcombine.low %v5985, %v5986
      %v6011 = vcombine.low %v5987, %v5988
      %v6012 = vcombine.low %v5989, %v5990
      %v6013 = vcombine.low %v5991, %v5992
      %v6015 = vunpack.c.l.s4 1966171168
      %v6016 = vunpack.c.0.s8 %v6015
      %v6017 = vlaneseq
      %v6018 = vshrl.u32 %v6017, 7
      %v6019 = vsub.s32 %v6016, %v6018
      %v6020 = vrot.slane %v6010, %v6019
      %v6022 = vunpack.c.l.s4 1966171168
      %v6023 = vunpack.c.0.s8 %v6022
      %v6024 = vlaneseq
      %v6025 = vshrl.u32 %v6024, 7
      %v6026 = vsub.s32 %v6023, %v6025
      %v6027 = vrot.slane %v6011, %v6026
      %v6029 = vunpack.c.l.s4 1966171168
      %v6030 = vunpack.c.0.s8 %v6029
      %v6031 = vlaneseq
      %v6032 = vshrl.u32 %v6031, 7
      %v6033 = vsub.s32 %v6030, %v6032
      %v6034 = vrot.slane %v6012, %v6033
      %v6036 = vunpack.c.l.s4 1966171168
      %v6037 = vunpack.c.0.s8 %v6036
      %v6038 = vlaneseq
      %v6039 = vshrl.u32 %v6038, 7
      %v6040 = vsub.s32 %v6037, %v6039
      %v6041 = vrot.slane %v6013, %v6040
      %v6042 = vcombine.low %v6020, %v6027
      %v6043 = vcombine.low %v6034, %v6041
      %v6045 = vunpack.c.l.s4 1966171168
      %v6046 = vunpack.c.0.s8 %v6045
      %v6047 = vlaneseq
      %v6048 = vshrl.u32 %v6047, 7
      %v6049 = vsub.s32 %v6046, %v6048
      %v6050 = vrot.slane %v6042, %v6049
      %v6052 = vunpack.c.l.s4 1966171168
      %v6053 = vunpack.c.0.s8 %v6052
      %v6054 = vlaneseq
      %v6055 = vshrl.u32 %v6054, 7
      %v6056 = vsub.s32 %v6053, %v6055
      %v6057 = vrot.slane %v6043, %v6056
      %v6058 = vcombine.low %v6050, %v6057
      %v6059 = vcombine.low %v5993, %v5994
      %v6060 = vcombine.low %v5995, %v5996
      %v6061 = vcombine.low %v5997, %v5998
      %v6062 = vcombine.low %v5999, %v6000
      %v6064 = vunpack.c.l.s4 1966171168
      %v6065 = vunpack.c.0.s8 %v6064
      %v6066 = vlaneseq
      %v6067 = vshrl.u32 %v6066, 7
      %v6068 = vsub.s32 %v6065, %v6067
      %v6069 = vrot.slane %v6059, %v6068
      %v6071 = vunpack.c.l.s4 1966171168
      %v6072 = vunpack.c.0.s8 %v6071
      %v6073 = vlaneseq
      %v6074 = vshrl.u32 %v6073, 7
      %v6075 = vsub.s32 %v6072, %v6074
      %v6076 = vrot.slane %v6060, %v6075
      %v6078 = vunpack.c.l.s4 1966171168
      %v6079 = vunpack.c.0.s8 %v6078
      %v6080 = vlaneseq
      %v6081 = vshrl.u32 %v6080, 7
      %v6082 = vsub.s32 %v6079, %v6081
      %v6083 = vrot.slane %v6061, %v6082
      %v6085 = vunpack.c.l.s4 1966171168
      %v6086 = vunpack.c.0.s8 %v6085
      %v6087 = vlaneseq
      %v6088 = vshrl.u32 %v6087, 7
      %v6089 = vsub.s32 %v6086, %v6088
      %v6090 = vrot.slane %v6062, %v6089
      %v6091 = vcombine.low %v6069, %v6076
      %v6092 = vcombine.low %v6083, %v6090
      %v6094 = vunpack.c.l.s4 1966171168
      %v6095 = vunpack.c.0.s8 %v6094
      %v6096 = vlaneseq
      %v6097 = vshrl.u32 %v6096, 7
      %v6098 = vsub.s32 %v6095, %v6097
      %v6099 = vrot.slane %v6091, %v6098
      %v6101 = vunpack.c.l.s4 1966171168
      %v6102 = vunpack.c.0.s8 %v6101
      %v6103 = vlaneseq
      %v6104 = vshrl.u32 %v6103, 7
      %v6105 = vsub.s32 %v6102, %v6104
      %v6106 = vrot.slane %v6092, %v6105
      %v6107 = vcombine.low %v6099, %v6106
      %v6108 = vcombine.low %v6001, %v6002
      %v6109 = vcombine.low %v6003, %v6004
      %v6110 = vcombine.low %v6005, %v6006
      %v6111 = vcombine.low %v6007, %v6008
      %v6113 = vunpack.c.l.s4 1966171168
      %v6114 = vunpack.c.0.s8 %v6113
      %v6115 = vlaneseq
      %v6116 = vshrl.u32 %v6115, 7
      %v6117 = vsub.s32 %v6114, %v6116
      %v6118 = vrot.slane %v6108, %v6117
      %v6120 = vunpack.c.l.s4 1966171168
      %v6121 = vunpack.c.0.s8 %v6120
      %v6122 = vlaneseq
      %v6123 = vshrl.u32 %v6122, 7
      %v6124 = vsub.s32 %v6121, %v6123
      %v6125 = vrot.slane %v6109, %v6124
      %v6127 = vunpack.c.l.s4 1966171168
      %v6128 = vunpack.c.0.s8 %v6127
      %v6129 = vlaneseq
      %v6130 = vshrl.u32 %v6129, 7
      %v6131 = vsub.s32 %v6128, %v6130
      %v6132 = vrot.slane %v6110, %v6131
      %v6134 = vunpack.c.l.s4 1966171168
      %v6135 = vunpack.c.0.s8 %v6134
      %v6136 = vlaneseq
      %v6137 = vshrl.u32 %v6136, 7
      %v6138 = vsub.s32 %v6135, %v6137
      %v6139 = vrot.slane %v6111, %v6138
      %v6140 = vcombine.low %v6118, %v6125
      %v6141 = vcombine.low %v6132, %v6139
      %v6143 = vunpack.c.l.s4 1966171168
      %v6144 = vunpack.c.0.s8 %v6143
      %v6145 = vlaneseq
      %v6146 = vshrl.u32 %v6145, 7
      %v6147 = vsub.s32 %v6144, %v6146
      %v6148 = vrot.slane %v6140, %v6147
      %v6150 = vunpack.c.l.s4 1966171168
      %v6151 = vunpack.c.0.s8 %v6150
      %v6152 = vlaneseq
      %v6153 = vshrl.u32 %v6152, 7
      %v6154 = vsub.s32 %v6151, %v6153
      %v6155 = vrot.slane %v6141, %v6154
      %v6156 = vcombine.low %v6148, %v6155
      %v6158 = vunpack.c.l.s4 1966171168
      %v6159 = vunpack.c.0.s8 %v6158
      %v6160 = vlaneseq
      %v6161 = vshrl.u32 %v6160, 7
      %v6162 = vsub.s32 %v6159, %v6161
      %v6163 = vrot.slane %v5981, %v6162
      %v6165 = vunpack.c.l.s4 1966171168
      %v6166 = vunpack.c.0.s8 %v6165
      %v6167 = vlaneseq
      %v6168 = vshrl.u32 %v6167, 7
      %v6169 = vsub.s32 %v6166, %v6168
      %v6170 = vrot.slane %v6163, %v6169
      %v6173 = vunpack.c.l.b16 %v5983
      %v6174 = vunpack.c.l.b16 %v5984
      %v6175 = vpack.c.b16 %v6174, %v6173
      %v6178 = vsel %vm661, %v6058, 0
      %v6181 = vsel %vm661, %v6107, 0
      %v6184 = vsel %vm661, %v6156, 0
      %v6187 = vsel %vm661, %v6170, 0
      %6189 = vmatprep.subr.bf16.mxu0 0
      %6190 = vmatpush1.bf16.msra.mxu0 0
      %6191 = vmatprep.subr.bf16.mxu0 0
      %6192 = vmatpush1.bf16.msra.mxu0 0
      %6193 = vmatprep.subr.bf16.mxu0 0
      %6194 = vmatpush1.bf16.msra.mxu0 0
      %6195 = vmatprep.subr.bf16.mxu0 0
      %6196 = vmatpush1.bf16.msra.mxu0 0
      %6197 = vmatprep.subr.bf16.mxu0 0
      %6198 = vmatpush1.bf16.msra.mxu0 0
      %6199 = vmatprep.subr.bf16.mxu0 0
      %6200 = vmatpush1.bf16.msra.mxu0 0
      %6201 = vmatprep.subr.bf16.mxu0 0
      %6202 = vmatpush1.bf16.msra.mxu0 0
      %6203 = vmatprep.subr.bf16.mxu0 0
      %6204 = vmatpush1.bf16.msra.mxu0 %v6175
      %6205 = vmatprep.subr.bf16.mxu0 0
      %6206 = vmatpush2.bf16.msra.mxu0 0
      %6207 = vmatprep.subr.bf16.mxu0 0
      %6208 = vmatpush2.bf16.msra.mxu0 0
      %6209 = vmatprep.subr.bf16.mxu0 0
      %6210 = vmatpush2.bf16.msra.mxu0 0
      %6211 = vmatprep.subr.bf16.mxu0 0
      %6212 = vmatpush2.bf16.msra.mxu0 0
      %6213 = vmatprep.subr.bf16.mxu0 0
      %6214 = vmatpush2.bf16.msra.mxu0 0
      %6215 = vmatprep.subr.bf16.mxu0 0
      %6216 = vmatpush2.bf16.msra.mxu0 0
      %6217 = vmatprep.subr.bf16.mxu0 0
      %6218 = vmatpush2.bf16.msra.mxu0 0
      %6219 = vmatprep.subr.bf16.mxu0 0
      %6220 = vmatpush2.bf16.msra.mxu0 0
      %6221 = vmatprep.mubr.bf16.mxu0 0
      %6222 = vmatmul.mubr.bf16.gmra.mxu0 %v6178
      %v6223 = vpop.f32.mrf.mxu0
      %v6224 = vadd.f32 0.0, %v6223
      %v6225 = vpop.f32.mrf.mxu0
      %v6226 = vpop.f32.mrf.mxu0
      %v6227 = vadd.f32 0.0, %v6226
      %v6228 = vpop.f32.mrf.mxu0
      %6229 = vmatprep.mubr.bf16.mxu0 0
      %6230 = vmatmul.mubr.bf16.gmra.mxu0 %v6181
      %v6231 = vpop.f32.mrf.mxu0
      %v6232 = vadd.f32 0.0, %v6231
      %v6233 = vpop.f32.mrf.mxu0
      %v6234 = vpop.f32.mrf.mxu0
      %v6235 = vadd.f32 0.0, %v6234
      %v6236 = vpop.f32.mrf.mxu0
      %6237 = vmatprep.mubr.bf16.mxu0 0
      %6238 = vmatmul.mubr.bf16.gmra.mxu0 %v6184
      %v6239 = vpop.f32.mrf.mxu0
      %v6240 = vadd.f32 0.0, %v6239
      %v6241 = vpop.f32.mrf.mxu0
      %v6242 = vpop.f32.mrf.mxu0
      %v6243 = vadd.f32 0.0, %v6242
      %v6244 = vpop.f32.mrf.mxu0
      %6245 = vmatprep.mubr.bf16.mxu0 0
      %6246 = vmatmul.mubr.bf16.gmra.mxu0 %v6187
      %v6247 = vpop.f32.mrf.mxu0
      %v6248 = vadd.f32 0.0, %v6247
      %v6249 = vpop.f32.mrf.mxu0
      %v6250 = vpop.f32.mrf.mxu0
      %v6251 = vpop.f32.mrf.mxu0
      %6252 = vdwg.mxu0
      %v6253 = vadd.f32 %v5740, %v6224
      %v6254 = vadd.f32 %v5741, %v6227
      %v6255 = vadd.f32 %v5742, %v6232
      %v6256 = vadd.f32 %v5743, %v6235
      %v6257 = vadd.f32 %v5744, %v6240
      %v6258 = vadd.f32 %v5745, %v6243
      %v6259 = vadd.f32 %v5746, %v6248
      %v6260 = vld [vmem:[%s5750] sm:$0xf]
      %v6261 = vld [vmem:[%s5750 + $0x8] sm:$0xf]
      %v6262 = vld [vmem:[%s5750 + $0x10] sm:$0xf]
      %v6263 = vld [vmem:[%s5750 + $0x18] sm:$0xf]
      %v6264 = vld [vmem:[%s5750 + $0x20] sm:$0xf]
      %v6265 = vld [vmem:[%s5750 + $0x28] sm:$0xf]
      %v6266 = vld [vmem:[%s5750 + $0x30] sm:$0xf]
      %v6275 = vunpack.c.l.s4 1966171168
      %v6276 = vunpack.c.0.s8 %v6275
      %v6277 = vlaneseq
      %v6278 = vshrl.u32 %v6277, 7
      %v6279 = vsub.s32 %v6276, %v6278
      %v6280 = vrot.slane %v6260, %v6279
      %v6281 = vcombine.high %v6280, %v6280
      %v6283 = vunpack.c.l.s4 1966171168
      %v6284 = vunpack.c.0.s8 %v6283
      %v6285 = vlaneseq
      %v6286 = vshrl.u32 %v6285, 7
      %v6287 = vsub.s32 %v6284, %v6286
      %v6288 = vrot.slane %v6280, %v6287
      %v6290 = vunpack.c.l.s4 1966171168
      %v6291 = vunpack.c.0.s8 %v6290
      %v6292 = vlaneseq
      %v6293 = vshrl.u32 %v6292, 7
      %v6294 = vsub.s32 %v6291, %v6293
      %v6295 = vrot.slane %v6281, %v6294
      %v6296 = vcombine.high %v6288, %v6288
      %v6297 = vcombine.high %v6295, %v6295
      %v6299 = vunpack.c.l.s4 1966171168
      %v6300 = vunpack.c.0.s8 %v6299
      %v6301 = vlaneseq
      %v6302 = vshrl.u32 %v6301, 7
      %v6303 = vsub.s32 %v6300, %v6302
      %v6304 = vrot.slane %v6261, %v6303
      %v6305 = vcombine.high %v6304, %v6304
      %v6307 = vunpack.c.l.s4 1966171168
      %v6308 = vunpack.c.0.s8 %v6307
      %v6309 = vlaneseq
      %v6310 = vshrl.u32 %v6309, 7
      %v6311 = vsub.s32 %v6308, %v6310
      %v6312 = vrot.slane %v6304, %v6311
      %v6314 = vunpack.c.l.s4 1966171168
      %v6315 = vunpack.c.0.s8 %v6314
      %v6316 = vlaneseq
      %v6317 = vshrl.u32 %v6316, 7
      %v6318 = vsub.s32 %v6315, %v6317
      %v6319 = vrot.slane %v6305, %v6318
      %v6320 = vcombine.high %v6312, %v6312
      %v6321 = vcombine.high %v6319, %v6319
      %v6323 = vunpack.c.l.s4 1966171168
      %v6324 = vunpack.c.0.s8 %v6323
      %v6325 = vlaneseq
      %v6326 = vshrl.u32 %v6325, 7
      %v6327 = vsub.s32 %v6324, %v6326
      %v6328 = vrot.slane %v6262, %v6327
      %v6329 = vcombine.high %v6328, %v6328
      %v6331 = vunpack.c.l.s4 1966171168
      %v6332 = vunpack.c.0.s8 %v6331
      %v6333 = vlaneseq
      %v6334 = vshrl.u32 %v6333, 7
      %v6335 = vsub.s32 %v6332, %v6334
      %v6336 = vrot.slane %v6328, %v6335
      %v6338 = vunpack.c.l.s4 1966171168
      %v6339 = vunpack.c.0.s8 %v6338
      %v6340 = vlaneseq
      %v6341 = vshrl.u32 %v6340, 7
      %v6342 = vsub.s32 %v6339, %v6341
      %v6343 = vrot.slane %v6329, %v6342
      %v6344 = vcombine.high %v6336, %v6336
      %v6345 = vcombine.high %v6343, %v6343
      %v6347 = vunpack.c.l.s4 1966171168
      %v6348 = vunpack.c.0.s8 %v6347
      %v6349 = vlaneseq
      %v6350 = vshrl.u32 %v6349, 7
      %v6351 = vsub.s32 %v6348, %v6350
      %v6352 = vrot.slane %v6263, %v6351
      %v6353 = vcombine.high %v6352, %v6352
      %v6355 = vunpack.c.l.s4 1966171168
      %v6356 = vunpack.c.0.s8 %v6355
      %v6357 = vlaneseq
      %v6358 = vshrl.u32 %v6357, 7
      %v6359 = vsub.s32 %v6356, %v6358
      %v6360 = vrot.slane %v6352, %v6359
      %v6362 = vunpack.c.l.s4 1966171168
      %v6363 = vunpack.c.0.s8 %v6362
      %v6364 = vlaneseq
      %v6365 = vshrl.u32 %v6364, 7
      %v6366 = vsub.s32 %v6363, %v6365
      %v6367 = vrot.slane %v6353, %v6366
      %v6368 = vcombine.high %v6360, %v6360
      %v6369 = vcombine.high %v6367, %v6367
      %v6371 = vunpack.c.l.s4 1966171168
      %v6372 = vunpack.c.0.s8 %v6371
      %v6373 = vlaneseq
      %v6374 = vshrl.u32 %v6373, 7
      %v6375 = vsub.s32 %v6372, %v6374
      %v6376 = vrot.slane %v6264, %v6375
      %v6377 = vcombine.high %v6376, %v6376
      %v6379 = vunpack.c.l.s4 1966171168
      %v6380 = vunpack.c.0.s8 %v6379
      %v6381 = vlaneseq
      %v6382 = vshrl.u32 %v6381, 7
      %v6383 = vsub.s32 %v6380, %v6382
      %v6384 = vrot.slane %v6376, %v6383
      %v6386 = vunpack.c.l.s4 1966171168
      %v6387 = vunpack.c.0.s8 %v6386
      %v6388 = vlaneseq
      %v6389 = vshrl.u32 %v6388, 7
      %v6390 = vsub.s32 %v6387, %v6389
      %v6391 = vrot.slane %v6377, %v6390
      %v6392 = vcombine.high %v6384, %v6384
      %v6393 = vcombine.high %v6391, %v6391
      %v6395 = vunpack.c.l.s4 1966171168
      %v6396 = vunpack.c.0.s8 %v6395
      %v6397 = vlaneseq
      %v6398 = vshrl.u32 %v6397, 7
      %v6399 = vsub.s32 %v6396, %v6398
      %v6400 = vrot.slane %v6265, %v6399
      %v6401 = vcombine.high %v6400, %v6400
      %v6403 = vunpack.c.l.s4 1966171168
      %v6404 = vunpack.c.0.s8 %v6403
      %v6405 = vlaneseq
      %v6406 = vshrl.u32 %v6405, 7
      %v6407 = vsub.s32 %v6404, %v6406
      %v6408 = vrot.slane %v6400, %v6407
      %v6410 = vunpack.c.l.s4 1966171168
      %v6411 = vunpack.c.0.s8 %v6410
      %v6412 = vlaneseq
      %v6413 = vshrl.u32 %v6412, 7
      %v6414 = vsub.s32 %v6411, %v6413
      %v6415 = vrot.slane %v6401, %v6414
      %v6416 = vcombine.high %v6408, %v6408
      %v6417 = vcombine.high %v6415, %v6415
      %v6419 = vunpack.c.l.s4 1966171168
      %v6420 = vunpack.c.0.s8 %v6419
      %v6421 = vlaneseq
      %v6422 = vshrl.u32 %v6421, 7
      %v6423 = vsub.s32 %v6420, %v6422
      %v6424 = vrot.slane %v6266, %v6423
      %v6425 = vcombine.high %v6424, %v6424
      %v6427 = vunpack.c.l.s4 1966171168
      %v6428 = vunpack.c.0.s8 %v6427
      %v6429 = vlaneseq
      %v6430 = vshrl.u32 %v6429, 7
      %v6431 = vsub.s32 %v6428, %v6430
      %v6432 = vrot.slane %v6424, %v6431
      %v6434 = vunpack.c.l.s4 1966171168
      %v6435 = vunpack.c.0.s8 %v6434
      %v6436 = vlaneseq
      %v6437 = vshrl.u32 %v6436, 7
      %v6438 = vsub.s32 %v6435, %v6437
      %v6439 = vrot.slane %v6425, %v6438
      %v6440 = vcombine.high %v6432, %v6432
      %v6441 = vcombine.high %v6439, %v6439
      %v6442 = vunpack.i.h.s16 %v6288
      %v6443 = vunpack.i.l.s16 %v6295
      %v6444 = vunpack.i.h.s16 %v6295
      %v6445 = vunpack.i.l.s16 %v6296
      %v6446 = vunpack.i.h.s16 %v6296
      %v6447 = vunpack.i.l.s16 %v6297
      %v6448 = vunpack.i.h.s16 %v6297
      %v6449 = vunpack.i.h.s16 %v6312
      %v6450 = vunpack.i.l.s16 %v6319
      %v6451 = vunpack.i.h.s16 %v6319
      %v6452 = vunpack.i.l.s16 %v6320
      %v6453 = vunpack.i.h.s16 %v6320
      %v6454 = vunpack.i.l.s16 %v6321
      %v6455 = vunpack.i.h.s16 %v6321
      %v6456 = vunpack.i.h.s16 %v6336
      %v6457 = vunpack.i.l.s16 %v6343
      %v6458 = vunpack.i.h.s16 %v6343
      %v6459 = vunpack.i.l.s16 %v6344
      %v6460 = vunpack.i.h.s16 %v6344
      %v6461 = vunpack.i.l.s16 %v6345
      %v6462 = vunpack.i.h.s16 %v6345
      %v6463 = vunpack.i.h.s16 %v6360
      %v6464 = vunpack.i.l.s16 %v6367
      %v6465 = vunpack.i.h.s16 %v6367
      %v6466 = vunpack.i.l.s16 %v6368
      %v6467 = vunpack.i.h.s16 %v6368
      %v6468 = vunpack.i.l.s16 %v6369
      %v6469 = vunpack.i.h.s16 %v6369
      %v6470 = vunpack.i.h.s16 %v6384
      %v6471 = vunpack.i.l.s16 %v6391
      %v6472 = vunpack.i.h.s16 %v6391
      %v6473 = vunpack.i.l.s16 %v6392
      %v6474 = vunpack.i.h.s16 %v6392
      %v6475 = vunpack.i.l.s16 %v6393
      %v6476 = vunpack.i.h.s16 %v6393
      %v6477 = vunpack.i.h.s16 %v6408
      %v6478 = vunpack.i.l.s16 %v6415
      %v6479 = vunpack.i.h.s16 %v6415
      %v6480 = vunpack.i.l.s16 %v6416
      %v6481 = vunpack.i.h.s16 %v6416
      %v6482 = vunpack.i.l.s16 %v6417
      %v6483 = vunpack.i.h.s16 %v6417
      %v6484 = vunpack.i.h.s16 %v6432
      %v6485 = vunpack.i.l.s16 %v6439
      %v6486 = vunpack.i.h.s16 %v6439
      %v6487 = vunpack.i.l.s16 %v6440
      %v6488 = vunpack.i.h.s16 %v6440
      %v6489 = vunpack.i.l.s16 %v6441
      %v6490 = vunpack.i.h.s16 %v6441
      %s6491 = scalar_lea.vmem %s2, 56
      %v6492 = vld [vmem:[%s6491] sm:$0xf]
      %v6493 = vld [vmem:[%s6491 + $0x4] sm:$0xf]
      %v6494 = vpack.i.b16 %v6443, %v6442
      %v6495 = vpack.i.b16 %v6445, %v6444
      %v6496 = vpack.i.b16 %v6447, %v6446
      %v6497 = vpack.i.b16 %v6449, %v6448
      %v6498 = vpack.i.b16 %v6451, %v6450
      %v6499 = vpack.i.b16 %v6453, %v6452
      %v6500 = vpack.i.b16 %v6455, %v6454
      %v6501 = vpack.i.b16 %v6457, %v6456
      %v6502 = vpack.i.b16 %v6459, %v6458
      %v6503 = vpack.i.b16 %v6461, %v6460
      %v6504 = vpack.i.b16 %v6463, %v6462
      %v6505 = vpack.i.b16 %v6465, %v6464
      %v6506 = vpack.i.b16 %v6467, %v6466
      %v6507 = vpack.i.b16 %v6469, %v6468
      %v6508 = vpack.i.b16 %v6471, %v6470
      %v6509 = vpack.i.b16 %v6473, %v6472
      %v6510 = vpack.i.b16 %v6475, %v6474
      %v6511 = vpack.i.b16 %v6477, %v6476
      %v6512 = vpack.i.b16 %v6479, %v6478
      %v6513 = vpack.i.b16 %v6481, %v6480
      %v6514 = vpack.i.b16 %v6483, %v6482
      %v6515 = vpack.i.b16 %v6485, %v6484
      %v6516 = vpack.i.b16 %v6487, %v6486
      %v6517 = vpack.i.b16 %v6489, %v6488
      %v6519 = vcombine.low %v6494, %v6495
      %v6520 = vcombine.low %v6496, %v6497
      %v6521 = vcombine.low %v6498, %v6499
      %v6522 = vcombine.low %v6500, %v6501
      %v6524 = vunpack.c.l.s4 1966171168
      %v6525 = vunpack.c.0.s8 %v6524
      %v6526 = vlaneseq
      %v6527 = vshrl.u32 %v6526, 7
      %v6528 = vsub.s32 %v6525, %v6527
      %v6529 = vrot.slane %v6519, %v6528
      %v6531 = vunpack.c.l.s4 1966171168
      %v6532 = vunpack.c.0.s8 %v6531
      %v6533 = vlaneseq
      %v6534 = vshrl.u32 %v6533, 7
      %v6535 = vsub.s32 %v6532, %v6534
      %v6536 = vrot.slane %v6520, %v6535
      %v6538 = vunpack.c.l.s4 1966171168
      %v6539 = vunpack.c.0.s8 %v6538
      %v6540 = vlaneseq
      %v6541 = vshrl.u32 %v6540, 7
      %v6542 = vsub.s32 %v6539, %v6541
      %v6543 = vrot.slane %v6521, %v6542
      %v6545 = vunpack.c.l.s4 1966171168
      %v6546 = vunpack.c.0.s8 %v6545
      %v6547 = vlaneseq
      %v6548 = vshrl.u32 %v6547, 7
      %v6549 = vsub.s32 %v6546, %v6548
      %v6550 = vrot.slane %v6522, %v6549
      %v6551 = vcombine.low %v6529, %v6536
      %v6552 = vcombine.low %v6543, %v6550
      %v6554 = vunpack.c.l.s4 1966171168
      %v6555 = vunpack.c.0.s8 %v6554
      %v6556 = vlaneseq
      %v6557 = vshrl.u32 %v6556, 7
      %v6558 = vsub.s32 %v6555, %v6557
      %v6559 = vrot.slane %v6551, %v6558
      %v6561 = vunpack.c.l.s4 1966171168
      %v6562 = vunpack.c.0.s8 %v6561
      %v6563 = vlaneseq
      %v6564 = vshrl.u32 %v6563, 7
      %v6565 = vsub.s32 %v6562, %v6564
      %v6566 = vrot.slane %v6552, %v6565
      %v6567 = vcombine.low %v6559, %v6566
      %v6568 = vcombine.low %v6502, %v6503
      %v6569 = vcombine.low %v6504, %v6505
      %v6570 = vcombine.low %v6506, %v6507
      %v6571 = vcombine.low %v6508, %v6509
      %v6573 = vunpack.c.l.s4 1966171168
      %v6574 = vunpack.c.0.s8 %v6573
      %v6575 = vlaneseq
      %v6576 = vshrl.u32 %v6575, 7
      %v6577 = vsub.s32 %v6574, %v6576
      %v6578 = vrot.slane %v6568, %v6577
      %v6580 = vunpack.c.l.s4 1966171168
      %v6581 = vunpack.c.0.s8 %v6580
      %v6582 = vlaneseq
      %v6583 = vshrl.u32 %v6582, 7
      %v6584 = vsub.s32 %v6581, %v6583
      %v6585 = vrot.slane %v6569, %v6584
      %v6587 = vunpack.c.l.s4 1966171168
      %v6588 = vunpack.c.0.s8 %v6587
      %v6589 = vlaneseq
      %v6590 = vshrl.u32 %v6589, 7
      %v6591 = vsub.s32 %v6588, %v6590
      %v6592 = vrot.slane %v6570, %v6591
      %v6594 = vunpack.c.l.s4 1966171168
      %v6595 = vunpack.c.0.s8 %v6594
      %v6596 = vlaneseq
      %v6597 = vshrl.u32 %v6596, 7
      %v6598 = vsub.s32 %v6595, %v6597
      %v6599 = vrot.slane %v6571, %v6598
      %v6600 = vcombine.low %v6578, %v6585
      %v6601 = vcombine.low %v6592, %v6599
      %v6603 = vunpack.c.l.s4 1966171168
      %v6604 = vunpack.c.0.s8 %v6603
      %v6605 = vlaneseq
      %v6606 = vshrl.u32 %v6605, 7
      %v6607 = vsub.s32 %v6604, %v6606
      %v6608 = vrot.slane %v6600, %v6607
      %v6610 = vunpack.c.l.s4 1966171168
      %v6611 = vunpack.c.0.s8 %v6610
      %v6612 = vlaneseq
      %v6613 = vshrl.u32 %v6612, 7
      %v6614 = vsub.s32 %v6611, %v6613
      %v6615 = vrot.slane %v6601, %v6614
      %v6616 = vcombine.low %v6608, %v6615
      %v6617 = vcombine.low %v6510, %v6511
      %v6618 = vcombine.low %v6512, %v6513
      %v6619 = vcombine.low %v6514, %v6515
      %v6620 = vcombine.low %v6516, %v6517
      %v6622 = vunpack.c.l.s4 1966171168
      %v6623 = vunpack.c.0.s8 %v6622
      %v6624 = vlaneseq
      %v6625 = vshrl.u32 %v6624, 7
      %v6626 = vsub.s32 %v6623, %v6625
      %v6627 = vrot.slane %v6617, %v6626
      %v6629 = vunpack.c.l.s4 1966171168
      %v6630 = vunpack.c.0.s8 %v6629
      %v6631 = vlaneseq
      %v6632 = vshrl.u32 %v6631, 7
      %v6633 = vsub.s32 %v6630, %v6632
      %v6634 = vrot.slane %v6618, %v6633
      %v6636 = vunpack.c.l.s4 1966171168
      %v6637 = vunpack.c.0.s8 %v6636
      %v6638 = vlaneseq
      %v6639 = vshrl.u32 %v6638, 7
      %v6640 = vsub.s32 %v6637, %v6639
      %v6641 = vrot.slane %v6619, %v6640
      %v6643 = vunpack.c.l.s4 1966171168
      %v6644 = vunpack.c.0.s8 %v6643
      %v6645 = vlaneseq
      %v6646 = vshrl.u32 %v6645, 7
      %v6647 = vsub.s32 %v6644, %v6646
      %v6648 = vrot.slane %v6620, %v6647
      %v6649 = vcombine.low %v6627, %v6634
      %v6650 = vcombine.low %v6641, %v6648
      %v6652 = vunpack.c.l.s4 1966171168
      %v6653 = vunpack.c.0.s8 %v6652
      %v6654 = vlaneseq
      %v6655 = vshrl.u32 %v6654, 7
      %v6656 = vsub.s32 %v6653, %v6655
      %v6657 = vrot.slane %v6649, %v6656
      %v6659 = vunpack.c.l.s4 1966171168
      %v6660 = vunpack.c.0.s8 %v6659
      %v6661 = vlaneseq
      %v6662 = vshrl.u32 %v6661, 7
      %v6663 = vsub.s32 %v6660, %v6662
      %v6664 = vrot.slane %v6650, %v6663
      %v6665 = vcombine.low %v6657, %v6664
      %v6667 = vunpack.c.l.s4 1966171168
      %v6668 = vunpack.c.0.s8 %v6667
      %v6669 = vlaneseq
      %v6670 = vshrl.u32 %v6669, 7
      %v6671 = vsub.s32 %v6668, %v6670
      %v6672 = vrot.slane %v6490, %v6671
      %v6674 = vunpack.c.l.s4 1966171168
      %v6675 = vunpack.c.0.s8 %v6674
      %v6676 = vlaneseq
      %v6677 = vshrl.u32 %v6676, 7
      %v6678 = vsub.s32 %v6675, %v6677
      %v6679 = vrot.slane %v6672, %v6678
      %v6682 = vunpack.c.l.b16 %v6492
      %v6683 = vunpack.c.l.b16 %v6493
      %v6684 = vpack.c.b16 %v6683, %v6682
      %v6687 = vsel %vm661, %v6567, 0
      %v6690 = vsel %vm661, %v6616, 0
      %v6693 = vsel %vm661, %v6665, 0
      %v6696 = vsel %vm661, %v6679, 0
      %6698 = vmatprep.subr.bf16.mxu0 0
      %6699 = vmatpush1.bf16.msra.mxu0 0
      %6700 = vmatprep.subr.bf16.mxu0 0
      %6701 = vmatpush1.bf16.msra.mxu0 0
      %6702 = vmatprep.subr.bf16.mxu0 0
      %6703 = vmatpush1.bf16.msra.mxu0 0
      %6704 = vmatprep.subr.bf16.mxu0 0
      %6705 = vmatpush1.bf16.msra.mxu0 0
      %6706 = vmatprep.subr.bf16.mxu0 0
      %6707 = vmatpush1.bf16.msra.mxu0 0
      %6708 = vmatprep.subr.bf16.mxu0 0
      %6709 = vmatpush1.bf16.msra.mxu0 0
      %6710 = vmatprep.subr.bf16.mxu0 0
      %6711 = vmatpush1.bf16.msra.mxu0 0
      %6712 = vmatprep.subr.bf16.mxu0 0
      %6713 = vmatpush1.bf16.msra.mxu0 %v6684
      %6714 = vmatprep.subr.bf16.mxu0 0
      %6715 = vmatpush2.bf16.msra.mxu0 0
      %6716 = vmatprep.subr.bf16.mxu0 0
      %6717 = vmatpush2.bf16.msra.mxu0 0
      %6718 = vmatprep.subr.bf16.mxu0 0
      %6719 = vmatpush2.bf16.msra.mxu0 0
      %6720 = vmatprep.subr.bf16.mxu0 0
      %6721 = vmatpush2.bf16.msra.mxu0 0
      %6722 = vmatprep.subr.bf16.mxu0 0
      %6723 = vmatpush2.bf16.msra.mxu0 0
      %6724 = vmatprep.subr.bf16.mxu0 0
      %6725 = vmatpush2.bf16.msra.mxu0 0
      %6726 = vmatprep.subr.bf16.mxu0 0
      %6727 = vmatpush2.bf16.msra.mxu0 0
      %6728 = vmatprep.subr.bf16.mxu0 0
      %6729 = vmatpush2.bf16.msra.mxu0 0
      %6730 = vmatprep.mubr.bf16.mxu0 0
      %6731 = vmatmul.mubr.bf16.gmra.mxu0 %v6687
      %v6732 = vpop.f32.mrf.mxu0
      %v6733 = vadd.f32 0.0, %v6732
      %v6734 = vpop.f32.mrf.mxu0
      %v6735 = vpop.f32.mrf.mxu0
      %v6736 = vadd.f32 0.0, %v6735
      %v6737 = vpop.f32.mrf.mxu0
      %6738 = vmatprep.mubr.bf16.mxu0 0
      %6739 = vmatmul.mubr.bf16.gmra.mxu0 %v6690
      %v6740 = vpop.f32.mrf.mxu0
      %v6741 = vadd.f32 0.0, %v6740
      %v6742 = vpop.f32.mrf.mxu0
      %v6743 = vpop.f32.mrf.mxu0
      %v6744 = vadd.f32 0.0, %v6743
      %v6745 = vpop.f32.mrf.mxu0
      %6746 = vmatprep.mubr.bf16.mxu0 0
      %6747 = vmatmul.mubr.bf16.gmra.mxu0 %v6693
      %v6748 = vpop.f32.mrf.mxu0
      %v6749 = vadd.f32 0.0, %v6748
      %v6750 = vpop.f32.mrf.mxu0
      %v6751 = vpop.f32.mrf.mxu0
      %v6752 = vadd.f32 0.0, %v6751
      %v6753 = vpop.f32.mrf.mxu0
      %6754 = vmatprep.mubr.bf16.mxu0 0
      %6755 = vmatmul.mubr.bf16.gmra.mxu0 %v6696
      %v6756 = vpop.f32.mrf.mxu0
      %v6757 = vadd.f32 0.0, %v6756
      %v6758 = vpop.f32.mrf.mxu0
      %v6759 = vpop.f32.mrf.mxu0
      %v6760 = vpop.f32.mrf.mxu0
      %6761 = vdwg.mxu0
      %v6762 = vadd.f32 %v6253, %v6733
      %v6763 = vadd.f32 %v6254, %v6736
      %v6764 = vadd.f32 %v6255, %v6741
      %v6765 = vadd.f32 %v6256, %v6744
      %v6766 = vadd.f32 %v6257, %v6749
      %v6767 = vadd.f32 %v6258, %v6752
      %v6768 = vadd.f32 %v6259, %v6757
      %v6769 = vld [vmem:[%s5750] sm:$0xe]
      %v6770 = vld [vmem:[%s5750 + $0x4] sm:$0x1]
      %v6771 = vld [vmem:[%s5750 + $0x8] sm:$0xe]
      %v6772 = vld [vmem:[%s5750 + $0xc] sm:$0x1]
      %v6773 = vld [vmem:[%s5750 + $0x10] sm:$0xe]
      %v6774 = vld [vmem:[%s5750 + $0x14] sm:$0x1]
      %v6775 = vld [vmem:[%s5750 + $0x18] sm:$0xe]
      %v6776 = vld [vmem:[%s5750 + $0x1c] sm:$0x1]
      %v6777 = vld [vmem:[%s5750 + $0x20] sm:$0xe]
      %v6778 = vld [vmem:[%s5750 + $0x24] sm:$0x1]
      %v6779 = vld [vmem:[%s5750 + $0x28] sm:$0xe]
      %v6780 = vld [vmem:[%s5750 + $0x2c] sm:$0x1]
      %v6781 = vld [vmem:[%s5750 + $0x30] sm:$0xe]
      %v6782 = vld [vmem:[%s5750 + $0x34] sm:$0x1]
      %v6798 = vunpack.c.l.s4 1966171168
      %v6799 = vunpack.c.0.s8 %v6798
      %v6800 = vlaneseq
      %v6801 = vshrl.u32 %v6800, 7
      %v6802 = vsub.s32 %v6799, %v6801
      %v6803 = vrot.slane %v6769, %v6802
      %v6804 = vcombine.high %v6803, %v6803
      %v6806 = vunpack.c.l.s4 1966171168
      %v6807 = vunpack.c.0.s8 %v6806
      %v6808 = vlaneseq
      %v6809 = vshrl.u32 %v6808, 7
      %v6810 = vsub.s32 %v6807, %v6809
      %v6811 = vrot.slane %v6803, %v6810
      %v6813 = vunpack.c.l.s4 1966171168
      %v6814 = vunpack.c.0.s8 %v6813
      %v6815 = vlaneseq
      %v6816 = vshrl.u32 %v6815, 7
      %v6817 = vsub.s32 %v6814, %v6816
      %v6818 = vrot.slane %v6804, %v6817
      %v6819 = vcombine.high %v6811, %v6811
      %v6820 = vcombine.high %v6818, %v6818
      %v6822 = vunpack.c.l.s4 1966171168
      %v6823 = vunpack.c.0.s8 %v6822
      %v6824 = vlaneseq
      %v6825 = vshrl.u32 %v6824, 7
      %v6826 = vsub.s32 %v6823, %v6825
      %v6827 = vrot.slane %v6770, %v6826
      %v6829 = vunpack.c.l.s4 1966171168
      %v6830 = vunpack.c.0.s8 %v6829
      %v6831 = vlaneseq
      %v6832 = vshrl.u32 %v6831, 7
      %v6833 = vsub.s32 %v6830, %v6832
      %v6834 = vrot.slane %v6827, %v6833
      %v6836 = vunpack.c.l.s4 1966171168
      %v6837 = vunpack.c.0.s8 %v6836
      %v6838 = vlaneseq
      %v6839 = vshrl.u32 %v6838, 7
      %v6840 = vsub.s32 %v6837, %v6839
      %v6841 = vrot.slane %v6771, %v6840
      %v6842 = vcombine.high %v6841, %v6841
      %v6844 = vunpack.c.l.s4 1966171168
      %v6845 = vunpack.c.0.s8 %v6844
      %v6846 = vlaneseq
      %v6847 = vshrl.u32 %v6846, 7
      %v6848 = vsub.s32 %v6845, %v6847
      %v6849 = vrot.slane %v6841, %v6848
      %v6851 = vunpack.c.l.s4 1966171168
      %v6852 = vunpack.c.0.s8 %v6851
      %v6853 = vlaneseq
      %v6854 = vshrl.u32 %v6853, 7
      %v6855 = vsub.s32 %v6852, %v6854
      %v6856 = vrot.slane %v6842, %v6855
      %v6857 = vcombine.high %v6849, %v6849
      %v6858 = vcombine.high %v6856, %v6856
      %v6860 = vunpack.c.l.s4 1966171168
      %v6861 = vunpack.c.0.s8 %v6860
      %v6862 = vlaneseq
      %v6863 = vshrl.u32 %v6862, 7
      %v6864 = vsub.s32 %v6861, %v6863
      %v6865 = vrot.slane %v6772, %v6864
      %v6867 = vunpack.c.l.s4 1966171168
      %v6868 = vunpack.c.0.s8 %v6867
      %v6869 = vlaneseq
      %v6870 = vshrl.u32 %v6869, 7
      %v6871 = vsub.s32 %v6868, %v6870
      %v6872 = vrot.slane %v6865, %v6871
      %v6874 = vunpack.c.l.s4 1966171168
      %v6875 = vunpack.c.0.s8 %v6874
      %v6876 = vlaneseq
      %v6877 = vshrl.u32 %v6876, 7
      %v6878 = vsub.s32 %v6875, %v6877
      %v6879 = vrot.slane %v6773, %v6878
      %v6880 = vcombine.high %v6879, %v6879
      %v6882 = vunpack.c.l.s4 1966171168
      %v6883 = vunpack.c.0.s8 %v6882
      %v6884 = vlaneseq
      %v6885 = vshrl.u32 %v6884, 7
      %v6886 = vsub.s32 %v6883, %v6885
      %v6887 = vrot.slane %v6879, %v6886
      %v6889 = vunpack.c.l.s4 1966171168
      %v6890 = vunpack.c.0.s8 %v6889
      %v6891 = vlaneseq
      %v6892 = vshrl.u32 %v6891, 7
      %v6893 = vsub.s32 %v6890, %v6892
      %v6894 = vrot.slane %v6880, %v6893
      %v6895 = vcombine.high %v6887, %v6887
      %v6896 = vcombine.high %v6894, %v6894
      %v6898 = vunpack.c.l.s4 1966171168
      %v6899 = vunpack.c.0.s8 %v6898
      %v6900 = vlaneseq
      %v6901 = vshrl.u32 %v6900, 7
      %v6902 = vsub.s32 %v6899, %v6901
      %v6903 = vrot.slane %v6774, %v6902
      %v6905 = vunpack.c.l.s4 1966171168
      %v6906 = vunpack.c.0.s8 %v6905
      %v6907 = vlaneseq
      %v6908 = vshrl.u32 %v6907, 7
      %v6909 = vsub.s32 %v6906, %v6908
      %v6910 = vrot.slane %v6903, %v6909
      %v6912 = vunpack.c.l.s4 1966171168
      %v6913 = vunpack.c.0.s8 %v6912
      %v6914 = vlaneseq
      %v6915 = vshrl.u32 %v6914, 7
      %v6916 = vsub.s32 %v6913, %v6915
      %v6917 = vrot.slane %v6775, %v6916
      %v6918 = vcombine.high %v6917, %v6917
      %v6920 = vunpack.c.l.s4 1966171168
      %v6921 = vunpack.c.0.s8 %v6920
      %v6922 = vlaneseq
      %v6923 = vshrl.u32 %v6922, 7
      %v6924 = vsub.s32 %v6921, %v6923
      %v6925 = vrot.slane %v6917, %v6924
      %v6927 = vunpack.c.l.s4 1966171168
      %v6928 = vunpack.c.0.s8 %v6927
      %v6929 = vlaneseq
      %v6930 = vshrl.u32 %v6929, 7
      %v6931 = vsub.s32 %v6928, %v6930
      %v6932 = vrot.slane %v6918, %v6931
      %v6933 = vcombine.high %v6925, %v6925
      %v6934 = vcombine.high %v6932, %v6932
      %v6936 = vunpack.c.l.s4 1966171168
      %v6937 = vunpack.c.0.s8 %v6936
      %v6938 = vlaneseq
      %v6939 = vshrl.u32 %v6938, 7
      %v6940 = vsub.s32 %v6937, %v6939
      %v6941 = vrot.slane %v6776, %v6940
      %v6943 = vunpack.c.l.s4 1966171168
      %v6944 = vunpack.c.0.s8 %v6943
      %v6945 = vlaneseq
      %v6946 = vshrl.u32 %v6945, 7
      %v6947 = vsub.s32 %v6944, %v6946
      %v6948 = vrot.slane %v6941, %v6947
      %v6950 = vunpack.c.l.s4 1966171168
      %v6951 = vunpack.c.0.s8 %v6950
      %v6952 = vlaneseq
      %v6953 = vshrl.u32 %v6952, 7
      %v6954 = vsub.s32 %v6951, %v6953
      %v6955 = vrot.slane %v6777, %v6954
      %v6956 = vcombine.high %v6955, %v6955
      %v6958 = vunpack.c.l.s4 1966171168
      %v6959 = vunpack.c.0.s8 %v6958
      %v6960 = vlaneseq
      %v6961 = vshrl.u32 %v6960, 7
      %v6962 = vsub.s32 %v6959, %v6961
      %v6963 = vrot.slane %v6955, %v6962
      %v6965 = vunpack.c.l.s4 1966171168
      %v6966 = vunpack.c.0.s8 %v6965
      %v6967 = vlaneseq
      %v6968 = vshrl.u32 %v6967, 7
      %v6969 = vsub.s32 %v6966, %v6968
      %v6970 = vrot.slane %v6956, %v6969
      %v6971 = vcombine.high %v6963, %v6963
      %v6972 = vcombine.high %v6970, %v6970
      %v6974 = vunpack.c.l.s4 1966171168
      %v6975 = vunpack.c.0.s8 %v6974
      %v6976 = vlaneseq
      %v6977 = vshrl.u32 %v6976, 7
      %v6978 = vsub.s32 %v6975, %v6977
      %v6979 = vrot.slane %v6778, %v6978
      %v6981 = vunpack.c.l.s4 1966171168
      %v6982 = vunpack.c.0.s8 %v6981
      %v6983 = vlaneseq
      %v6984 = vshrl.u32 %v6983, 7
      %v6985 = vsub.s32 %v6982, %v6984
      %v6986 = vrot.slane %v6979, %v6985
      %v6988 = vunpack.c.l.s4 1966171168
      %v6989 = vunpack.c.0.s8 %v6988
      %v6990 = vlaneseq
      %v6991 = vshrl.u32 %v6990, 7
      %v6992 = vsub.s32 %v6989, %v6991
      %v6993 = vrot.slane %v6779, %v6992
      %v6994 = vcombine.high %v6993, %v6993
      %v6996 = vunpack.c.l.s4 1966171168
      %v6997 = vunpack.c.0.s8 %v6996
      %v6998 = vlaneseq
      %v6999 = vshrl.u32 %v6998, 7
      %v7000 = vsub.s32 %v6997, %v6999
      %v7001 = vrot.slane %v6993, %v7000
      %v7003 = vunpack.c.l.s4 1966171168
      %v7004 = vunpack.c.0.s8 %v7003
      %v7005 = vlaneseq
      %v7006 = vshrl.u32 %v7005, 7
      %v7007 = vsub.s32 %v7004, %v7006
      %v7008 = vrot.slane %v6994, %v7007
      %v7009 = vcombine.high %v7001, %v7001
      %v7010 = vcombine.high %v7008, %v7008
      %v7012 = vunpack.c.l.s4 1966171168
      %v7013 = vunpack.c.0.s8 %v7012
      %v7014 = vlaneseq
      %v7015 = vshrl.u32 %v7014, 7
      %v7016 = vsub.s32 %v7013, %v7015
      %v7017 = vrot.slane %v6780, %v7016
      %v7019 = vunpack.c.l.s4 1966171168
      %v7020 = vunpack.c.0.s8 %v7019
      %v7021 = vlaneseq
      %v7022 = vshrl.u32 %v7021, 7
      %v7023 = vsub.s32 %v7020, %v7022
      %v7024 = vrot.slane %v7017, %v7023
      %v7026 = vunpack.c.l.s4 1966171168
      %v7027 = vunpack.c.0.s8 %v7026
      %v7028 = vlaneseq
      %v7029 = vshrl.u32 %v7028, 7
      %v7030 = vsub.s32 %v7027, %v7029
      %v7031 = vrot.slane %v6781, %v7030
      %v7032 = vcombine.high %v7031, %v7031
      %v7034 = vunpack.c.l.s4 1966171168
      %v7035 = vunpack.c.0.s8 %v7034
      %v7036 = vlaneseq
      %v7037 = vshrl.u32 %v7036, 7
      %v7038 = vsub.s32 %v7035, %v7037
      %v7039 = vrot.slane %v7031, %v7038
      %v7041 = vunpack.c.l.s4 1966171168
      %v7042 = vunpack.c.0.s8 %v7041
      %v7043 = vlaneseq
      %v7044 = vshrl.u32 %v7043, 7
      %v7045 = vsub.s32 %v7042, %v7044
      %v7046 = vrot.slane %v7032, %v7045
      %v7047 = vcombine.high %v7039, %v7039
      %v7048 = vcombine.high %v7046, %v7046
      %v7050 = vunpack.c.l.s4 1966171168
      %v7051 = vunpack.c.0.s8 %v7050
      %v7052 = vlaneseq
      %v7053 = vshrl.u32 %v7052, 7
      %v7054 = vsub.s32 %v7051, %v7053
      %v7055 = vrot.slane %v6782, %v7054
      %v7057 = vunpack.c.l.s4 1966171168
      %v7058 = vunpack.c.0.s8 %v7057
      %v7059 = vlaneseq
      %v7060 = vshrl.u32 %v7059, 7
      %v7061 = vsub.s32 %v7058, %v7060
      %v7062 = vrot.slane %v7055, %v7061
      %v7063 = vunpack.i.l.s16 %v6818
      %v7064 = vunpack.i.h.s16 %v6818
      %v7065 = vunpack.i.l.s16 %v6819
      %v7066 = vunpack.i.h.s16 %v6819
      %v7067 = vunpack.i.l.s16 %v6820
      %v7068 = vunpack.i.h.s16 %v6820
      %v7069 = vunpack.i.l.s16 %v6834
      %v7070 = vunpack.i.l.s16 %v6856
      %v7071 = vunpack.i.h.s16 %v6856
      %v7072 = vunpack.i.l.s16 %v6857
      %v7073 = vunpack.i.h.s16 %v6857
      %v7074 = vunpack.i.l.s16 %v6858
      %v7075 = vunpack.i.h.s16 %v6858
      %v7076 = vunpack.i.l.s16 %v6872
      %v7077 = vunpack.i.l.s16 %v6894
      %v7078 = vunpack.i.h.s16 %v6894
      %v7079 = vunpack.i.l.s16 %v6895
      %v7080 = vunpack.i.h.s16 %v6895
      %v7081 = vunpack.i.l.s16 %v6896
      %v7082 = vunpack.i.h.s16 %v6896
      %v7083 = vunpack.i.l.s16 %v6910
      %v7084 = vunpack.i.l.s16 %v6932
      %v7085 = vunpack.i.h.s16 %v6932
      %v7086 = vunpack.i.l.s16 %v6933
      %v7087 = vunpack.i.h.s16 %v6933
      %v7088 = vunpack.i.l.s16 %v6934
      %v7089 = vunpack.i.h.s16 %v6934
      %v7090 = vunpack.i.l.s16 %v6948
      %v7091 = vunpack.i.l.s16 %v6970
      %v7092 = vunpack.i.h.s16 %v6970
      %v7093 = vunpack.i.l.s16 %v6971
      %v7094 = vunpack.i.h.s16 %v6971
      %v7095 = vunpack.i.l.s16 %v6972
      %v7096 = vunpack.i.h.s16 %v6972
      %v7097 = vunpack.i.l.s16 %v6986
      %v7098 = vunpack.i.l.s16 %v7008
      %v7099 = vunpack.i.h.s16 %v7008
      %v7100 = vunpack.i.l.s16 %v7009
      %v7101 = vunpack.i.h.s16 %v7009
      %v7102 = vunpack.i.l.s16 %v7010
      %v7103 = vunpack.i.h.s16 %v7010
      %v7104 = vunpack.i.l.s16 %v7024
      %v7105 = vunpack.i.l.s16 %v7046
      %v7106 = vunpack.i.h.s16 %v7046
      %v7107 = vunpack.i.l.s16 %v7047
      %v7108 = vunpack.i.h.s16 %v7047
      %v7109 = vunpack.i.l.s16 %v7048
      %v7110 = vunpack.i.h.s16 %v7048
      %v7111 = vunpack.i.l.s16 %v7062
      %s7112 = scalar_lea.vmem %s2, 64
      %v7113 = vld [vmem:[%s7112] sm:$0xf]
      %v7114 = vld [vmem:[%s7112 + $0x4] sm:$0xf]
      %v7115 = vpack.i.b16 %v7064, %v7063
      %v7116 = vpack.i.b16 %v7066, %v7065
      %v7117 = vpack.i.b16 %v7068, %v7067
      %v7118 = vpack.i.b16 %v7070, %v7069
      %v7119 = vpack.i.b16 %v7072, %v7071
      %v7120 = vpack.i.b16 %v7074, %v7073
      %v7121 = vpack.i.b16 %v7076, %v7075
      %v7122 = vpack.i.b16 %v7078, %v7077
      %v7123 = vpack.i.b16 %v7080, %v7079
      %v7124 = vpack.i.b16 %v7082, %v7081
      %v7125 = vpack.i.b16 %v7084, %v7083
      %v7126 = vpack.i.b16 %v7086, %v7085
      %v7127 = vpack.i.b16 %v7088, %v7087
      %v7128 = vpack.i.b16 %v7090, %v7089
      %v7129 = vpack.i.b16 %v7092, %v7091
      %v7130 = vpack.i.b16 %v7094, %v7093
      %v7131 = vpack.i.b16 %v7096, %v7095
      %v7132 = vpack.i.b16 %v7098, %v7097
      %v7133 = vpack.i.b16 %v7100, %v7099
      %v7134 = vpack.i.b16 %v7102, %v7101
      %v7135 = vpack.i.b16 %v7104, %v7103
      %v7136 = vpack.i.b16 %v7106, %v7105
      %v7137 = vpack.i.b16 %v7108, %v7107
      %v7138 = vpack.i.b16 %v7110, %v7109
      %v7140 = vcombine.low %v7115, %v7116
      %v7141 = vcombine.low %v7117, %v7118
      %v7142 = vcombine.low %v7119, %v7120
      %v7143 = vcombine.low %v7121, %v7122
      %v7145 = vunpack.c.l.s4 1966171168
      %v7146 = vunpack.c.0.s8 %v7145
      %v7147 = vlaneseq
      %v7148 = vshrl.u32 %v7147, 7
      %v7149 = vsub.s32 %v7146, %v7148
      %v7150 = vrot.slane %v7140, %v7149
      %v7152 = vunpack.c.l.s4 1966171168
      %v7153 = vunpack.c.0.s8 %v7152
      %v7154 = vlaneseq
      %v7155 = vshrl.u32 %v7154, 7
      %v7156 = vsub.s32 %v7153, %v7155
      %v7157 = vrot.slane %v7141, %v7156
      %v7159 = vunpack.c.l.s4 1966171168
      %v7160 = vunpack.c.0.s8 %v7159
      %v7161 = vlaneseq
      %v7162 = vshrl.u32 %v7161, 7
      %v7163 = vsub.s32 %v7160, %v7162
      %v7164 = vrot.slane %v7142, %v7163
      %v7166 = vunpack.c.l.s4 1966171168
      %v7167 = vunpack.c.0.s8 %v7166
      %v7168 = vlaneseq
      %v7169 = vshrl.u32 %v7168, 7
      %v7170 = vsub.s32 %v7167, %v7169
      %v7171 = vrot.slane %v7143, %v7170
      %v7172 = vcombine.low %v7150, %v7157
      %v7173 = vcombine.low %v7164, %v7171
      %v7175 = vunpack.c.l.s4 1966171168
      %v7176 = vunpack.c.0.s8 %v7175
      %v7177 = vlaneseq
      %v7178 = vshrl.u32 %v7177, 7
      %v7179 = vsub.s32 %v7176, %v7178
      %v7180 = vrot.slane %v7172, %v7179
      %v7182 = vunpack.c.l.s4 1966171168
      %v7183 = vunpack.c.0.s8 %v7182
      %v7184 = vlaneseq
      %v7185 = vshrl.u32 %v7184, 7
      %v7186 = vsub.s32 %v7183, %v7185
      %v7187 = vrot.slane %v7173, %v7186
      %v7188 = vcombine.low %v7180, %v7187
      %v7189 = vcombine.low %v7123, %v7124
      %v7190 = vcombine.low %v7125, %v7126
      %v7191 = vcombine.low %v7127, %v7128
      %v7192 = vcombine.low %v7129, %v7130
      %v7194 = vunpack.c.l.s4 1966171168
      %v7195 = vunpack.c.0.s8 %v7194
      %v7196 = vlaneseq
      %v7197 = vshrl.u32 %v7196, 7
      %v7198 = vsub.s32 %v7195, %v7197
      %v7199 = vrot.slane %v7189, %v7198
      %v7201 = vunpack.c.l.s4 1966171168
      %v7202 = vunpack.c.0.s8 %v7201
      %v7203 = vlaneseq
      %v7204 = vshrl.u32 %v7203, 7
      %v7205 = vsub.s32 %v7202, %v7204
      %v7206 = vrot.slane %v7190, %v7205
      %v7208 = vunpack.c.l.s4 1966171168
      %v7209 = vunpack.c.0.s8 %v7208
      %v7210 = vlaneseq
      %v7211 = vshrl.u32 %v7210, 7
      %v7212 = vsub.s32 %v7209, %v7211
      %v7213 = vrot.slane %v7191, %v7212
      %v7215 = vunpack.c.l.s4 1966171168
      %v7216 = vunpack.c.0.s8 %v7215
      %v7217 = vlaneseq
      %v7218 = vshrl.u32 %v7217, 7
      %v7219 = vsub.s32 %v7216, %v7218
      %v7220 = vrot.slane %v7192, %v7219
      %v7221 = vcombine.low %v7199, %v7206
      %v7222 = vcombine.low %v7213, %v7220
      %v7224 = vunpack.c.l.s4 1966171168
      %v7225 = vunpack.c.0.s8 %v7224
      %v7226 = vlaneseq
      %v7227 = vshrl.u32 %v7226, 7
      %v7228 = vsub.s32 %v7225, %v7227
      %v7229 = vrot.slane %v7221, %v7228
      %v7231 = vunpack.c.l.s4 1966171168
      %v7232 = vunpack.c.0.s8 %v7231
      %v7233 = vlaneseq
      %v7234 = vshrl.u32 %v7233, 7
      %v7235 = vsub.s32 %v7232, %v7234
      %v7236 = vrot.slane %v7222, %v7235
      %v7237 = vcombine.low %v7229, %v7236
      %v7238 = vcombine.low %v7131, %v7132
      %v7239 = vcombine.low %v7133, %v7134
      %v7240 = vcombine.low %v7135, %v7136
      %v7241 = vcombine.low %v7137, %v7138
      %v7243 = vunpack.c.l.s4 1966171168
      %v7244 = vunpack.c.0.s8 %v7243
      %v7245 = vlaneseq
      %v7246 = vshrl.u32 %v7245, 7
      %v7247 = vsub.s32 %v7244, %v7246
      %v7248 = vrot.slane %v7238, %v7247
      %v7250 = vunpack.c.l.s4 1966171168
      %v7251 = vunpack.c.0.s8 %v7250
      %v7252 = vlaneseq
      %v7253 = vshrl.u32 %v7252, 7
      %v7254 = vsub.s32 %v7251, %v7253
      %v7255 = vrot.slane %v7239, %v7254
      %v7257 = vunpack.c.l.s4 1966171168
      %v7258 = vunpack.c.0.s8 %v7257
      %v7259 = vlaneseq
      %v7260 = vshrl.u32 %v7259, 7
      %v7261 = vsub.s32 %v7258, %v7260
      %v7262 = vrot.slane %v7240, %v7261
      %v7264 = vunpack.c.l.s4 1966171168
      %v7265 = vunpack.c.0.s8 %v7264
      %v7266 = vlaneseq
      %v7267 = vshrl.u32 %v7266, 7
      %v7268 = vsub.s32 %v7265, %v7267
      %v7269 = vrot.slane %v7241, %v7268
      %v7270 = vcombine.low %v7248, %v7255
      %v7271 = vcombine.low %v7262, %v7269
      %v7273 = vunpack.c.l.s4 1966171168
      %v7274 = vunpack.c.0.s8 %v7273
      %v7275 = vlaneseq
      %v7276 = vshrl.u32 %v7275, 7
      %v7277 = vsub.s32 %v7274, %v7276
      %v7278 = vrot.slane %v7270, %v7277
      %v7280 = vunpack.c.l.s4 1966171168
      %v7281 = vunpack.c.0.s8 %v7280
      %v7282 = vlaneseq
      %v7283 = vshrl.u32 %v7282, 7
      %v7284 = vsub.s32 %v7281, %v7283
      %v7285 = vrot.slane %v7271, %v7284
      %v7286 = vcombine.low %v7278, %v7285
      %v7288 = vunpack.c.l.s4 1966171168
      %v7289 = vunpack.c.0.s8 %v7288
      %v7290 = vlaneseq
      %v7291 = vshrl.u32 %v7290, 7
      %v7292 = vsub.s32 %v7289, %v7291
      %v7293 = vrot.slane %v7111, %v7292
      %v7295 = vunpack.c.l.s4 1966171168
      %v7296 = vunpack.c.0.s8 %v7295
      %v7297 = vlaneseq
      %v7298 = vshrl.u32 %v7297, 7
      %v7299 = vsub.s32 %v7296, %v7298
      %v7300 = vrot.slane %v7293, %v7299
      %v7303 = vunpack.c.l.b16 %v7113
      %v7304 = vunpack.c.l.b16 %v7114
      %v7305 = vpack.c.b16 %v7304, %v7303
      %v7308 = vsel %vm661, %v7188, 0
      %v7311 = vsel %vm661, %v7237, 0
      %v7314 = vsel %vm661, %v7286, 0
      %v7317 = vsel %vm661, %v7300, 0
      %7319 = vmatprep.subr.bf16.mxu0 0
      %7320 = vmatpush1.bf16.msra.mxu0 0
      %7321 = vmatprep.subr.bf16.mxu0 0
      %7322 = vmatpush1.bf16.msra.mxu0 0
      %7323 = vmatprep.subr.bf16.mxu0 0
      %7324 = vmatpush1.bf16.msra.mxu0 0
      %7325 = vmatprep.subr.bf16.mxu0 0
      %7326 = vmatpush1.bf16.msra.mxu0 0
      %7327 = vmatprep.subr.bf16.mxu0 0
      %7328 = vmatpush1.bf16.msra.mxu0 0
      %7329 = vmatprep.subr.bf16.mxu0 0
      %7330 = vmatpush1.bf16.msra.mxu0 0
      %7331 = vmatprep.subr.bf16.mxu0 0
      %7332 = vmatpush1.bf16.msra.mxu0 0
      %7333 = vmatprep.subr.bf16.mxu0 0
      %7334 = vmatpush1.bf16.msra.mxu0 %v7305
      %7335 = vmatprep.subr.bf16.mxu0 0
      %7336 = vmatpush2.bf16.msra.mxu0 0
      %7337 = vmatprep.subr.bf16.mxu0 0
      %7338 = vmatpush2.bf16.msra.mxu0 0
      %7339 = vmatprep.subr.bf16.mxu0 0
      %7340 = vmatpush2.bf16.msra.mxu0 0
      %7341 = vmatprep.subr.bf16.mxu0 0
      %7342 = vmatpush2.bf16.msra.mxu0 0
      %7343 = vmatprep.subr.bf16.mxu0 0
      %7344 = vmatpush2.bf16.msra.mxu0 0
      %7345 = vmatprep.subr.bf16.mxu0 0
      %7346 = vmatpush2.bf16.msra.mxu0 0
      %7347 = vmatprep.subr.bf16.mxu0 0
      %7348 = vmatpush2.bf16.msra.mxu0 0
      %7349 = vmatprep.subr.bf16.mxu0 0
      %7350 = vmatpush2.bf16.msra.mxu0 0
      %7351 = vmatprep.mubr.bf16.mxu0 0
      %7352 = vmatmul.mubr.bf16.gmra.mxu0 %v7308
      %v7353 = vpop.f32.mrf.mxu0
      %v7354 = vadd.f32 0.0, %v7353
      %v7355 = vpop.f32.mrf.mxu0
      %v7356 = vpop.f32.mrf.mxu0
      %v7357 = vadd.f32 0.0, %v7356
      %v7358 = vpop.f32.mrf.mxu0
      %7359 = vmatprep.mubr.bf16.mxu0 0
      %7360 = vmatmul.mubr.bf16.gmra.mxu0 %v7311
      %v7361 = vpop.f32.mrf.mxu0
      %v7362 = vadd.f32 0.0, %v7361
      %v7363 = vpop.f32.mrf.mxu0
      %v7364 = vpop.f32.mrf.mxu0
      %v7365 = vadd.f32 0.0, %v7364
      %v7366 = vpop.f32.mrf.mxu0
      %7367 = vmatprep.mubr.bf16.mxu0 0
      %7368 = vmatmul.mubr.bf16.gmra.mxu0 %v7314
      %v7369 = vpop.f32.mrf.mxu0
      %v7370 = vadd.f32 0.0, %v7369
      %v7371 = vpop.f32.mrf.mxu0
      %v7372 = vpop.f32.mrf.mxu0
      %v7373 = vadd.f32 0.0, %v7372
      %v7374 = vpop.f32.mrf.mxu0
      %7375 = vmatprep.mubr.bf16.mxu0 0
      %7376 = vmatmul.mubr.bf16.gmra.mxu0 %v7317
      %v7377 = vpop.f32.mrf.mxu0
      %v7378 = vadd.f32 0.0, %v7377
      %v7379 = vpop.f32.mrf.mxu0
      %v7380 = vpop.f32.mrf.mxu0
      %v7381 = vpop.f32.mrf.mxu0
      %7382 = vdwg.mxu0
      %v7383 = vadd.f32 %v6762, %v7354
      %v7384 = vadd.f32 %v6763, %v7357
      %v7385 = vadd.f32 %v6764, %v7362
      %v7386 = vadd.f32 %v6765, %v7365
      %v7387 = vadd.f32 %v6766, %v7370
      %v7388 = vadd.f32 %v6767, %v7373
      %v7389 = vadd.f32 %v6768, %v7378
      %v7390 = vld [vmem:[%s3] sm:$0x1]
      %v7392 = vlaneseq
      %v7393 = vshrl.u32 %v7392, 7
      %v7394 = vsub.s32 0, %v7393
      %v7395 = vrot.slane %v7390, %v7394
      %7396 = vrot.lane.b32.xlu0 %v7395, 124
      %v7397 = vpop.permute.xlu0 %7396
      %v7399 = vadd.f32 %v7383, %v7397
      %v7400 = vadd.f32 %v7384, %v7397
      %v7401 = vadd.f32 %v7385, %v7397
      %v7402 = vadd.f32 %v7386, %v7397
      %v7403 = vadd.f32 %v7387, %v7397
      %v7404 = vadd.f32 %v7388, %v7397
      %v7405 = vadd.f32 %v7389, %v7397
      %v7413 = vcombine.high %v7399, %v7399
      %v7415 = vunpack.c.l.s4 1966171168
      %v7416 = vunpack.c.0.s8 %v7415
      %v7417 = vlaneseq
      %v7418 = vshrl.u32 %v7417, 7
      %v7419 = vsub.s32 %v7416, %v7418
      %v7420 = vrot.slane %v7399, %v7419
      %v7422 = vunpack.c.l.s4 1966171168
      %v7423 = vunpack.c.0.s8 %v7422
      %v7424 = vlaneseq
      %v7425 = vshrl.u32 %v7424, 7
      %v7426 = vsub.s32 %v7423, %v7425
      %v7427 = vrot.slane %v7413, %v7426
      %v7428 = vcombine.high %v7420, %v7420
      %v7429 = vcombine.high %v7427, %v7427
      %v7431 = vunpack.c.l.s4 1966171168
      %v7432 = vunpack.c.0.s8 %v7431
      %v7433 = vlaneseq
      %v7434 = vshrl.u32 %v7433, 7
      %v7435 = vsub.s32 %v7432, %v7434
      %v7436 = vrot.slane %v7420, %v7435
      %v7438 = vunpack.c.l.s4 1966171168
      %v7439 = vunpack.c.0.s8 %v7438
      %v7440 = vlaneseq
      %v7441 = vshrl.u32 %v7440, 7
      %v7442 = vsub.s32 %v7439, %v7441
      %v7443 = vrot.slane %v7427, %v7442
      %v7445 = vunpack.c.l.s4 1966171168
      %v7446 = vunpack.c.0.s8 %v7445
      %v7447 = vlaneseq
      %v7448 = vshrl.u32 %v7447, 7
      %v7449 = vsub.s32 %v7446, %v7448
      %v7450 = vrot.slane %v7428, %v7449
      %v7452 = vunpack.c.l.s4 1966171168
      %v7453 = vunpack.c.0.s8 %v7452
      %v7454 = vlaneseq
      %v7455 = vshrl.u32 %v7454, 7
      %v7456 = vsub.s32 %v7453, %v7455
      %v7457 = vrot.slane %v7429, %v7456
      %v7458 = vcombine.high %v7436, %v7436
      %v7459 = vcombine.high %v7443, %v7443
      %v7460 = vcombine.high %v7450, %v7450
      %v7461 = vcombine.high %v7457, %v7457
      %v7462 = vcombine.high %v7400, %v7400
      %v7464 = vunpack.c.l.s4 1966171168
      %v7465 = vunpack.c.0.s8 %v7464
      %v7466 = vlaneseq
      %v7467 = vshrl.u32 %v7466, 7
      %v7468 = vsub.s32 %v7465, %v7467
      %v7469 = vrot.slane %v7400, %v7468
      %v7471 = vunpack.c.l.s4 1966171168
      %v7472 = vunpack.c.0.s8 %v7471
      %v7473 = vlaneseq
      %v7474 = vshrl.u32 %v7473, 7
      %v7475 = vsub.s32 %v7472, %v7474
      %v7476 = vrot.slane %v7462, %v7475
      %v7477 = vcombine.high %v7469, %v7469
      %v7478 = vcombine.high %v7476, %v7476
      %v7480 = vunpack.c.l.s4 1966171168
      %v7481 = vunpack.c.0.s8 %v7480
      %v7482 = vlaneseq
      %v7483 = vshrl.u32 %v7482, 7
      %v7484 = vsub.s32 %v7481, %v7483
      %v7485 = vrot.slane %v7469, %v7484
      %v7487 = vunpack.c.l.s4 1966171168
      %v7488 = vunpack.c.0.s8 %v7487
      %v7489 = vlaneseq
      %v7490 = vshrl.u32 %v7489, 7
      %v7491 = vsub.s32 %v7488, %v7490
      %v7492 = vrot.slane %v7476, %v7491
      %v7494 = vunpack.c.l.s4 1966171168
      %v7495 = vunpack.c.0.s8 %v7494
      %v7496 = vlaneseq
      %v7497 = vshrl.u32 %v7496, 7
      %v7498 = vsub.s32 %v7495, %v7497
      %v7499 = vrot.slane %v7477, %v7498
      %v7501 = vunpack.c.l.s4 1966171168
      %v7502 = vunpack.c.0.s8 %v7501
      %v7503 = vlaneseq
      %v7504 = vshrl.u32 %v7503, 7
      %v7505 = vsub.s32 %v7502, %v7504
      %v7506 = vrot.slane %v7478, %v7505
      %v7507 = vcombine.high %v7485, %v7485
      %v7508 = vcombine.high %v7492, %v7492
      %v7509 = vcombine.high %v7499, %v7499
      %v7510 = vcombine.high %v7506, %v7506
      %v7511 = vcombine.high %v7401, %v7401
      %v7513 = vunpack.c.l.s4 1966171168
      %v7514 = vunpack.c.0.s8 %v7513
      %v7515 = vlaneseq
      %v7516 = vshrl.u32 %v7515, 7
      %v7517 = vsub.s32 %v7514, %v7516
      %v7518 = vrot.slane %v7401, %v7517
      %v7520 = vunpack.c.l.s4 1966171168
      %v7521 = vunpack.c.0.s8 %v7520
      %v7522 = vlaneseq
      %v7523 = vshrl.u32 %v7522, 7
      %v7524 = vsub.s32 %v7521, %v7523
      %v7525 = vrot.slane %v7511, %v7524
      %v7526 = vcombine.high %v7518, %v7518
      %v7527 = vcombine.high %v7525, %v7525
      %v7529 = vunpack.c.l.s4 1966171168
      %v7530 = vunpack.c.0.s8 %v7529
      %v7531 = vlaneseq
      %v7532 = vshrl.u32 %v7531, 7
      %v7533 = vsub.s32 %v7530, %v7532
      %v7534 = vrot.slane %v7518, %v7533
      %v7536 = vunpack.c.l.s4 1966171168
      %v7537 = vunpack.c.0.s8 %v7536
      %v7538 = vlaneseq
      %v7539 = vshrl.u32 %v7538, 7
      %v7540 = vsub.s32 %v7537, %v7539
      %v7541 = vrot.slane %v7525, %v7540
      %v7543 = vunpack.c.l.s4 1966171168
      %v7544 = vunpack.c.0.s8 %v7543
      %v7545 = vlaneseq
      %v7546 = vshrl.u32 %v7545, 7
      %v7547 = vsub.s32 %v7544, %v7546
      %v7548 = vrot.slane %v7526, %v7547
      %v7550 = vunpack.c.l.s4 1966171168
      %v7551 = vunpack.c.0.s8 %v7550
      %v7552 = vlaneseq
      %v7553 = vshrl.u32 %v7552, 7
      %v7554 = vsub.s32 %v7551, %v7553
      %v7555 = vrot.slane %v7527, %v7554
      %v7556 = vcombine.high %v7534, %v7534
      %v7557 = vcombine.high %v7541, %v7541
      %v7558 = vcombine.high %v7548, %v7548
      %v7559 = vcombine.high %v7555, %v7555
      %v7560 = vcombine.high %v7402, %v7402
      %v7562 = vunpack.c.l.s4 1966171168
      %v7563 = vunpack.c.0.s8 %v7562
      %v7564 = vlaneseq
      %v7565 = vshrl.u32 %v7564, 7
      %v7566 = vsub.s32 %v7563, %v7565
      %v7567 = vrot.slane %v7402, %v7566
      %v7569 = vunpack.c.l.s4 1966171168
      %v7570 = vunpack.c.0.s8 %v7569
      %v7571 = vlaneseq
      %v7572 = vshrl.u32 %v7571, 7
      %v7573 = vsub.s32 %v7570, %v7572
      %v7574 = vrot.slane %v7560, %v7573
      %v7575 = vcombine.high %v7567, %v7567
      %v7576 = vcombine.high %v7574, %v7574
      %v7578 = vunpack.c.l.s4 1966171168
      %v7579 = vunpack.c.0.s8 %v7578
      %v7580 = vlaneseq
      %v7581 = vshrl.u32 %v7580, 7
      %v7582 = vsub.s32 %v7579, %v7581
      %v7583 = vrot.slane %v7567, %v7582
      %v7585 = vunpack.c.l.s4 1966171168
      %v7586 = vunpack.c.0.s8 %v7585
      %v7587 = vlaneseq
      %v7588 = vshrl.u32 %v7587, 7
      %v7589 = vsub.s32 %v7586, %v7588
      %v7590 = vrot.slane %v7574, %v7589
      %v7592 = vunpack.c.l.s4 1966171168
      %v7593 = vunpack.c.0.s8 %v7592
      %v7594 = vlaneseq
      %v7595 = vshrl.u32 %v7594, 7
      %v7596 = vsub.s32 %v7593, %v7595
      %v7597 = vrot.slane %v7575, %v7596
      %v7599 = vunpack.c.l.s4 1966171168
      %v7600 = vunpack.c.0.s8 %v7599
      %v7601 = vlaneseq
      %v7602 = vshrl.u32 %v7601, 7
      %v7603 = vsub.s32 %v7600, %v7602
      %v7604 = vrot.slane %v7576, %v7603
      %v7605 = vcombine.high %v7583, %v7583
      %v7606 = vcombine.high %v7590, %v7590
      %v7607 = vcombine.high %v7597, %v7597
      %v7608 = vcombine.high %v7604, %v7604
      %v7609 = vcombine.high %v7403, %v7403
      %v7611 = vunpack.c.l.s4 1966171168
      %v7612 = vunpack.c.0.s8 %v7611
      %v7613 = vlaneseq
      %v7614 = vshrl.u32 %v7613, 7
      %v7615 = vsub.s32 %v7612, %v7614
      %v7616 = vrot.slane %v7403, %v7615
      %v7618 = vunpack.c.l.s4 1966171168
      %v7619 = vunpack.c.0.s8 %v7618
      %v7620 = vlaneseq
      %v7621 = vshrl.u32 %v7620, 7
      %v7622 = vsub.s32 %v7619, %v7621
      %v7623 = vrot.slane %v7609, %v7622
      %v7624 = vcombine.high %v7616, %v7616
      %v7625 = vcombine.high %v7623, %v7623
      %v7627 = vunpack.c.l.s4 1966171168
      %v7628 = vunpack.c.0.s8 %v7627
      %v7629 = vlaneseq
      %v7630 = vshrl.u32 %v7629, 7
      %v7631 = vsub.s32 %v7628, %v7630
      %v7632 = vrot.slane %v7616, %v7631
      %v7634 = vunpack.c.l.s4 1966171168
      %v7635 = vunpack.c.0.s8 %v7634
      %v7636 = vlaneseq
      %v7637 = vshrl.u32 %v7636, 7
      %v7638 = vsub.s32 %v7635, %v7637
      %v7639 = vrot.slane %v7623, %v7638
      %v7641 = vunpack.c.l.s4 1966171168
      %v7642 = vunpack.c.0.s8 %v7641
      %v7643 = vlaneseq
      %v7644 = vshrl.u32 %v7643, 7
      %v7645 = vsub.s32 %v7642, %v7644
      %v7646 = vrot.slane %v7624, %v7645
      %v7648 = vunpack.c.l.s4 1966171168
      %v7649 = vunpack.c.0.s8 %v7648
      %v7650 = vlaneseq
      %v7651 = vshrl.u32 %v7650, 7
      %v7652 = vsub.s32 %v7649, %v7651
      %v7653 = vrot.slane %v7625, %v7652
      %v7654 = vcombine.high %v7632, %v7632
      %v7655 = vcombine.high %v7639, %v7639
      %v7656 = vcombine.high %v7646, %v7646
      %v7657 = vcombine.high %v7653, %v7653
      %v7658 = vcombine.high %v7404, %v7404
      %v7660 = vunpack.c.l.s4 1966171168
      %v7661 = vunpack.c.0.s8 %v7660
      %v7662 = vlaneseq
      %v7663 = vshrl.u32 %v7662, 7
      %v7664 = vsub.s32 %v7661, %v7663
      %v7665 = vrot.slane %v7404, %v7664
      %v7667 = vunpack.c.l.s4 1966171168
      %v7668 = vunpack.c.0.s8 %v7667
      %v7669 = vlaneseq
      %v7670 = vshrl.u32 %v7669, 7
      %v7671 = vsub.s32 %v7668, %v7670
      %v7672 = vrot.slane %v7658, %v7671
      %v7673 = vcombine.high %v7665, %v7665
      %v7674 = vcombine.high %v7672, %v7672
      %v7676 = vunpack.c.l.s4 1966171168
      %v7677 = vunpack.c.0.s8 %v7676
      %v7678 = vlaneseq
      %v7679 = vshrl.u32 %v7678, 7
      %v7680 = vsub.s32 %v7677, %v7679
      %v7681 = vrot.slane %v7665, %v7680
      %v7683 = vunpack.c.l.s4 1966171168
      %v7684 = vunpack.c.0.s8 %v7683
      %v7685 = vlaneseq
      %v7686 = vshrl.u32 %v7685, 7
      %v7687 = vsub.s32 %v7684, %v7686
      %v7688 = vrot.slane %v7672, %v7687
      %v7690 = vunpack.c.l.s4 1966171168
      %v7691 = vunpack.c.0.s8 %v7690
      %v7692 = vlaneseq
      %v7693 = vshrl.u32 %v7692, 7
      %v7694 = vsub.s32 %v7691, %v7693
      %v7695 = vrot.slane %v7673, %v7694
      %v7697 = vunpack.c.l.s4 1966171168
      %v7698 = vunpack.c.0.s8 %v7697
      %v7699 = vlaneseq
      %v7700 = vshrl.u32 %v7699, 7
      %v7701 = vsub.s32 %v7698, %v7700
      %v7702 = vrot.slane %v7674, %v7701
      %v7703 = vcombine.high %v7681, %v7681
      %v7704 = vcombine.high %v7688, %v7688
      %v7705 = vcombine.high %v7695, %v7695
      %v7706 = vcombine.high %v7702, %v7702
      %v7708 = vunpack.c.l.s4 1966171168
      %v7709 = vunpack.c.0.s8 %v7708
      %v7710 = vlaneseq
      %v7711 = vshrl.u32 %v7710, 7
      %v7712 = vsub.s32 %v7709, %v7711
      %v7713 = vrot.slane %v7405, %v7712
      %v7715 = vunpack.c.l.s4 1966171168
      %v7716 = vunpack.c.0.s8 %v7715
      %v7717 = vlaneseq
      %v7718 = vshrl.u32 %v7717, 7
      %v7719 = vsub.s32 %v7716, %v7718
      %v7720 = vrot.slane %v7713, %v7719
      %v7721 = vcombine.low %v7436, %v7450
      %v7722 = vcombine.low %v7458, %v7460
      %v7723 = vcombine.low %v7443, %v7457
      %v7725 = vunpack.c.l.s4 1966171168
      %v7726 = vunpack.c.0.s8 %v7725
      %v7727 = vlaneseq
      %v7728 = vshrl.u32 %v7727, 7
      %v7729 = vsub.s32 %v7726, %v7728
      %v7730 = vrot.slane %v7721, %v7729
      %v7732 = vunpack.c.l.s4 1966171168
      %v7733 = vunpack.c.0.s8 %v7732
      %v7734 = vlaneseq
      %v7735 = vshrl.u32 %v7734, 7
      %v7736 = vsub.s32 %v7733, %v7735
      %v7737 = vrot.slane %v7722, %v7736
      %v7739 = vunpack.c.l.s4 1966171168
      %v7740 = vunpack.c.0.s8 %v7739
      %v7741 = vlaneseq
      %v7742 = vshrl.u32 %v7741, 7
      %v7743 = vsub.s32 %v7740, %v7742
      %v7744 = vrot.slane %v7723, %v7743
      %v7746 = vunpack.c.l.s4 1966171168
      %v7747 = vunpack.c.0.s8 %v7746
      %v7748 = vlaneseq
      %v7749 = vshrl.u32 %v7748, 7
      %v7750 = vsub.s32 %v7747, %v7749
      %v7751 = vrot.slane %v7459, %v7750
      %v7752 = vcombine.low %v7730, %v7737
      %v7753 = vcombine.low %v7744, %v7751
      %v7755 = vunpack.c.l.s4 1966171168
      %v7756 = vunpack.c.0.s8 %v7755
      %v7757 = vlaneseq
      %v7758 = vshrl.u32 %v7757, 7
      %v7759 = vsub.s32 %v7756, %v7758
      %v7760 = vrot.slane %v7752, %v7759
      %v7762 = vunpack.c.l.s4 1966171168
      %v7763 = vunpack.c.0.s8 %v7762
      %v7764 = vlaneseq
      %v7765 = vshrl.u32 %v7764, 7
      %v7766 = vsub.s32 %v7763, %v7765
      %v7767 = vrot.slane %v7753, %v7766
      %v7768 = vcombine.low %v7760, %v7767
      %v7769 = vcombine.low %v7461, %v7485
      %v7770 = vcombine.low %v7499, %v7507
      %v7771 = vcombine.low %v7509, %v7492
      %v7773 = vunpack.c.l.s4 1966171168
      %v7774 = vunpack.c.0.s8 %v7773
      %v7775 = vlaneseq
      %v7776 = vshrl.u32 %v7775, 7
      %v7777 = vsub.s32 %v7774, %v7776
      %v7778 = vrot.slane %v7769, %v7777
      %v7780 = vunpack.c.l.s4 1966171168
      %v7781 = vunpack.c.0.s8 %v7780
      %v7782 = vlaneseq
      %v7783 = vshrl.u32 %v7782, 7
      %v7784 = vsub.s32 %v7781, %v7783
      %v7785 = vrot.slane %v7770, %v7784
      %v7787 = vunpack.c.l.s4 1966171168
      %v7788 = vunpack.c.0.s8 %v7787
      %v7789 = vlaneseq
      %v7790 = vshrl.u32 %v7789, 7
      %v7791 = vsub.s32 %v7788, %v7790
      %v7792 = vrot.slane %v7771, %v7791
      %v7794 = vunpack.c.l.s4 1966171168
      %v7795 = vunpack.c.0.s8 %v7794
      %v7796 = vlaneseq
      %v7797 = vshrl.u32 %v7796, 7
      %v7798 = vsub.s32 %v7795, %v7797
      %v7799 = vrot.slane %v7506, %v7798
      %v7800 = vcombine.low %v7778, %v7785
      %v7801 = vcombine.low %v7792, %v7799
      %v7803 = vunpack.c.l.s4 1966171168
      %v7804 = vunpack.c.0.s8 %v7803
      %v7805 = vlaneseq
      %v7806 = vshrl.u32 %v7805, 7
      %v7807 = vsub.s32 %v7804, %v7806
      %v7808 = vrot.slane %v7800, %v7807
      %v7810 = vunpack.c.l.s4 1966171168
      %v7811 = vunpack.c.0.s8 %v7810
      %v7812 = vlaneseq
      %v7813 = vshrl.u32 %v7812, 7
      %v7814 = vsub.s32 %v7811, %v7813
      %v7815 = vrot.slane %v7801, %v7814
      %v7816 = vcombine.low %v7808, %v7815
      %v7817 = vcombine.low %v7508, %v7510
      %v7818 = vcombine.low %v7534, %v7548
      %v7819 = vcombine.low %v7556, %v7558
      %v7821 = vunpack.c.l.s4 1966171168
      %v7822 = vunpack.c.0.s8 %v7821
      %v7823 = vlaneseq
      %v7824 = vshrl.u32 %v7823, 7
      %v7825 = vsub.s32 %v7822, %v7824
      %v7826 = vrot.slane %v7817, %v7825
      %v7828 = vunpack.c.l.s4 1966171168
      %v7829 = vunpack.c.0.s8 %v7828
      %v7830 = vlaneseq
      %v7831 = vshrl.u32 %v7830, 7
      %v7832 = vsub.s32 %v7829, %v7831
      %v7833 = vrot.slane %v7818, %v7832
      %v7835 = vunpack.c.l.s4 1966171168
      %v7836 = vunpack.c.0.s8 %v7835
      %v7837 = vlaneseq
      %v7838 = vshrl.u32 %v7837, 7
      %v7839 = vsub.s32 %v7836, %v7838
      %v7840 = vrot.slane %v7819, %v7839
      %v7842 = vunpack.c.l.s4 1966171168
      %v7843 = vunpack.c.0.s8 %v7842
      %v7844 = vlaneseq
      %v7845 = vshrl.u32 %v7844, 7
      %v7846 = vsub.s32 %v7843, %v7845
      %v7847 = vrot.slane %v7541, %v7846
      %v7848 = vcombine.low %v7826, %v7833
      %v7849 = vcombine.low %v7840, %v7847
      %v7851 = vunpack.c.l.s4 1966171168
      %v7852 = vunpack.c.0.s8 %v7851
      %v7853 = vlaneseq
      %v7854 = vshrl.u32 %v7853, 7
      %v7855 = vsub.s32 %v7852, %v7854
      %v7856 = vrot.slane %v7848, %v7855
      %v7858 = vunpack.c.l.s4 1966171168
      %v7859 = vunpack.c.0.s8 %v7858
      %v7860 = vlaneseq
      %v7861 = vshrl.u32 %v7860, 7
      %v7862 = vsub.s32 %v7859, %v7861
      %v7863 = vrot.slane %v7849, %v7862
      %v7864 = vcombine.low %v7856, %v7863
      %v7865 = vcombine.low %v7555, %v7557
      %v7866 = vcombine.low %v7559, %v7583
      %v7867 = vcombine.low %v7597, %v7605
      %v7869 = vunpack.c.l.s4 1966171168
      %v7870 = vunpack.c.0.s8 %v7869
      %v7871 = vlaneseq
      %v7872 = vshrl.u32 %v7871, 7
      %v7873 = vsub.s32 %v7870, %v7872
      %v7874 = vrot.slane %v7865, %v7873
      %v7876 = vunpack.c.l.s4 1966171168
      %v7877 = vunpack.c.0.s8 %v7876
      %v7878 = vlaneseq
      %v7879 = vshrl.u32 %v7878, 7
      %v7880 = vsub.s32 %v7877, %v7879
      %v7881 = vrot.slane %v7866, %v7880
      %v7883 = vunpack.c.l.s4 1966171168
      %v7884 = vunpack.c.0.s8 %v7883
      %v7885 = vlaneseq
      %v7886 = vshrl.u32 %v7885, 7
      %v7887 = vsub.s32 %v7884, %v7886
      %v7888 = vrot.slane %v7867, %v7887
      %v7890 = vunpack.c.l.s4 1966171168
      %v7891 = vunpack.c.0.s8 %v7890
      %v7892 = vlaneseq
      %v7893 = vshrl.u32 %v7892, 7
      %v7894 = vsub.s32 %v7891, %v7893
      %v7895 = vrot.slane %v7607, %v7894
      %v7896 = vcombine.low %v7874, %v7881
      %v7897 = vcombine.low %v7888, %v7895
      %v7899 = vunpack.c.l.s4 1966171168
      %v7900 = vunpack.c.0.s8 %v7899
      %v7901 = vlaneseq
      %v7902 = vshrl.u32 %v7901, 7
      %v7903 = vsub.s32 %v7900, %v7902
      %v7904 = vrot.slane %v7896, %v7903
      %v7906 = vunpack.c.l.s4 1966171168
      %v7907 = vunpack.c.0.s8 %v7906
      %v7908 = vlaneseq
      %v7909 = vshrl.u32 %v7908, 7
      %v7910 = vsub.s32 %v7907, %v7909
      %v7911 = vrot.slane %v7897, %v7910
      %v7912 = vcombine.low %v7904, %v7911
      %v7913 = vcombine.low %v7590, %v7604
      %v7914 = vcombine.low %v7606, %v7608
      %v7915 = vcombine.low %v7632, %v7646
      %v7917 = vunpack.c.l.s4 1966171168
      %v7918 = vunpack.c.0.s8 %v7917
      %v7919 = vlaneseq
      %v7920 = vshrl.u32 %v7919, 7
      %v7921 = vsub.s32 %v7918, %v7920
      %v7922 = vrot.slane %v7913, %v7921
      %v7924 = vunpack.c.l.s4 1966171168
      %v7925 = vunpack.c.0.s8 %v7924
      %v7926 = vlaneseq
      %v7927 = vshrl.u32 %v7926, 7
      %v7928 = vsub.s32 %v7925, %v7927
      %v7929 = vrot.slane %v7914, %v7928
      %v7931 = vunpack.c.l.s4 1966171168
      %v7932 = vunpack.c.0.s8 %v7931
      %v7933 = vlaneseq
      %v7934 = vshrl.u32 %v7933, 7
      %v7935 = vsub.s32 %v7932, %v7934
      %v7936 = vrot.slane %v7915, %v7935
      %v7938 = vunpack.c.l.s4 1966171168
      %v7939 = vunpack.c.0.s8 %v7938
      %v7940 = vlaneseq
      %v7941 = vshrl.u32 %v7940, 7
      %v7942 = vsub.s32 %v7939, %v7941
      %v7943 = vrot.slane %v7654, %v7942
      %v7944 = vcombine.low %v7922, %v7929
      %v7945 = vcombine.low %v7936, %v7943
      %v7947 = vunpack.c.l.s4 1966171168
      %v7948 = vunpack.c.0.s8 %v7947
      %v7949 = vlaneseq
      %v7950 = vshrl.u32 %v7949, 7
      %v7951 = vsub.s32 %v7948, %v7950
      %v7952 = vrot.slane %v7944, %v7951
      %v7954 = vunpack.c.l.s4 1966171168
      %v7955 = vunpack.c.0.s8 %v7954
      %v7956 = vlaneseq
      %v7957 = vshrl.u32 %v7956, 7
      %v7958 = vsub.s32 %v7955, %v7957
      %v7959 = vrot.slane %v7945, %v7958
      %v7960 = vcombine.low %v7952, %v7959
      %v7961 = vcombine.low %v7656, %v7639
      %v7962 = vcombine.low %v7653, %v7655
      %v7963 = vcombine.low %v7657, %v7681
      %v7965 = vunpack.c.l.s4 1966171168
      %v7966 = vunpack.c.0.s8 %v7965
      %v7967 = vlaneseq
      %v7968 = vshrl.u32 %v7967, 7
      %v7969 = vsub.s32 %v7966, %v7968
      %v7970 = vrot.slane %v7961, %v7969
      %v7972 = vunpack.c.l.s4 1966171168
      %v7973 = vunpack.c.0.s8 %v7972
      %v7974 = vlaneseq
      %v7975 = vshrl.u32 %v7974, 7
      %v7976 = vsub.s32 %v7973, %v7975
      %v7977 = vrot.slane %v7962, %v7976
      %v7979 = vunpack.c.l.s4 1966171168
      %v7980 = vunpack.c.0.s8 %v7979
      %v7981 = vlaneseq
      %v7982 = vshrl.u32 %v7981, 7
      %v7983 = vsub.s32 %v7980, %v7982
      %v7984 = vrot.slane %v7963, %v7983
      %v7986 = vunpack.c.l.s4 1966171168
      %v7987 = vunpack.c.0.s8 %v7986
      %v7988 = vlaneseq
      %v7989 = vshrl.u32 %v7988, 7
      %v7990 = vsub.s32 %v7987, %v7989
      %v7991 = vrot.slane %v7695, %v7990
      %v7992 = vcombine.low %v7970, %v7977
      %v7993 = vcombine.low %v7984, %v7991
      %v7995 = vunpack.c.l.s4 1966171168
      %v7996 = vunpack.c.0.s8 %v7995
      %v7997 = vlaneseq
      %v7998 = vshrl.u32 %v7997, 7
      %v7999 = vsub.s32 %v7996, %v7998
      %v8000 = vrot.slane %v7992, %v7999
      %v8002 = vunpack.c.l.s4 1966171168
      %v8003 = vunpack.c.0.s8 %v8002
      %v8004 = vlaneseq
      %v8005 = vshrl.u32 %v8004, 7
      %v8006 = vsub.s32 %v8003, %v8005
      %v8007 = vrot.slane %v7993, %v8006
      %v8008 = vcombine.low %v8000, %v8007
      %v8009 = vcombine.low %v7703, %v7705
      %v8010 = vcombine.low %v7688, %v7702
      %v8011 = vcombine.low %v7704, %v7706
      %v8013 = vunpack.c.l.s4 1966171168
      %v8014 = vunpack.c.0.s8 %v8013
      %v8015 = vlaneseq
      %v8016 = vshrl.u32 %v8015, 7
      %v8017 = vsub.s32 %v8014, %v8016
      %v8018 = vrot.slane %v8009, %v8017
      %v8020 = vunpack.c.l.s4 1966171168
      %v8021 = vunpack.c.0.s8 %v8020
      %v8022 = vlaneseq
      %v8023 = vshrl.u32 %v8022, 7
      %v8024 = vsub.s32 %v8021, %v8023
      %v8025 = vrot.slane %v8010, %v8024
      %v8027 = vunpack.c.l.s4 1966171168
      %v8028 = vunpack.c.0.s8 %v8027
      %v8029 = vlaneseq
      %v8030 = vshrl.u32 %v8029, 7
      %v8031 = vsub.s32 %v8028, %v8030
      %v8032 = vrot.slane %v8011, %v8031
      %v8034 = vunpack.c.l.s4 1966171168
      %v8035 = vunpack.c.0.s8 %v8034
      %v8036 = vlaneseq
      %v8037 = vshrl.u32 %v8036, 7
      %v8038 = vsub.s32 %v8035, %v8037
      %v8039 = vrot.slane %v7720, %v8038
      %v8040 = vcombine.low %v8018, %v8025
      %v8041 = vcombine.low %v8032, %v8039
      %v8043 = vunpack.c.l.s4 1966171168
      %v8044 = vunpack.c.0.s8 %v8043
      %v8045 = vlaneseq
      %v8046 = vshrl.u32 %v8045, 7
      %v8047 = vsub.s32 %v8044, %v8046
      %v8048 = vrot.slane %v8040, %v8047
      %v8050 = vunpack.c.l.s4 1966171168
      %v8051 = vunpack.c.0.s8 %v8050
      %v8052 = vlaneseq
      %v8053 = vshrl.u32 %v8052, 7
      %v8054 = vsub.s32 %v8051, %v8053
      %v8055 = vrot.slane %v8041, %v8054
      %v8056 = vcombine.low %v8048, %v8055
      %8057 = vrot.lane.b32.xlu0 %v7768, 4
      %v8058 = vpop.permute.xlu0 %8057
      %8059 = vrot.lane.b32.xlu0 %v7816, 4
      %v8060 = vpop.permute.xlu0 %8059
      %8061 = vrot.lane.b32.xlu0 %v7864, 4
      %v8062 = vpop.permute.xlu0 %8061
      %8063 = vrot.lane.b32.xlu0 %v7912, 4
      %v8064 = vpop.permute.xlu0 %8063
      %8065 = vrot.lane.b32.xlu0 %v7960, 4
      %v8066 = vpop.permute.xlu0 %8065
      %8067 = vrot.lane.b32.xlu0 %v8008, 4
      %v8068 = vpop.permute.xlu0 %8067
      %8069 = vrot.lane.b32.xlu0 %v8056, 4
      %v8070 = vpop.permute.xlu0 %8069
      %vm8078 = vcmask 63520
      %8079 = vst.msk [vmem:[%s219] sm:$0x7f] %vm8078, %v8058
      %8080 = vst.msk [vmem:[%s219 + $0x8] sm:$0x7f] %vm8078, %v8060
      %8081 = vst.msk [vmem:[%s219 + $0x10] sm:$0x7f] %vm8078, %v8062
      %8082 = vst.msk [vmem:[%s219 + $0x18] sm:$0x7f] %vm8078, %v8064
      %8083 = vst.msk [vmem:[%s219 + $0x20] sm:$0x7f] %vm8078, %v8066
      %8084 = vst.msk [vmem:[%s219 + $0x28] sm:$0x7f] %vm8078, %v8068
      %8085 = vst.msk [vmem:[%s219 + $0x30] sm:$0x7f] %vm8078, %v8070
      %s8086 = smul.u32 7, %s20
      %p8087 = scmp.lt.s32.totalorder %s19, 1
      %s8088 = scalar_select %p8087, %s19, 1
      %p8089 = scmp.lt.s32.totalorder %s8086, 6
      %s8090 = scalar_select %p8089, %s8086, 6
      %s8091 = smul.addr %s8088, 7
      %s8092 = sadd.s32 %s8090, %s8091
      %s8093 = smul.addr %s8092, 8
      %s8094 = scalar_lea.vmem %s4, %s8093
      // Predicated region
      $region37: #{tpu_custom_call.1} parent=35 // pred_check
        %p8095 = pneg %p136
      $region38: #{tpu_custom_call.1} parent=35 // pred_check_branch
        %8097 = sbr.rel (%p8095) target = $region40
      $region39: #{tpu_custom_call.1} parent=35 // pred_region
        %s8098 = smul.u32 7, %s20
      $region40: #{tpu_custom_call.1} parent=35 // pred_fallthru
        _
    $region36: #{tpu_custom_call.1} parent=5 // pred_fallthru
      _
    %p8099 = scmp.le.s32.totalorder 2, %s10
    // Predicated region
    $region41: #{tpu_custom_call.1} parent=5 // pred_check
      %p8100 = pneg %p8099
    $region42: #{tpu_custom_call.1} parent=5 // pred_check_branch
      %8102 = sbr.rel (%p8100) target = $region44
    $region43: #{tpu_custom_call.1} parent=5 // pred_region
      %s8103 = ssub.s32 %s10, 2
      // Predicated region
      $region45: #{tpu_custom_call.1} parent=43 // pred_check
        %p8104 = pneg %p142
      $region46: #{tpu_custom_call.1} parent=43 // pred_check_branch
        %8106 = sbr.rel (%p8104) target = $region48
      $region47: #{tpu_custom_call.1} parent=43 // pred_region
        %s8107 = smul.u32 7, %s22
        %p8108 = scmp.lt.s32.totalorder %s21, 1
        %s8109 = scalar_select %p8108, %s21, 1
        %p8110 = scmp.lt.s32.totalorder %s8107, 6
        %s8111 = scalar_select %p8110, %s8107, 6
        %s8112 = smul.addr %s8109, 7
        %s8113 = sadd.s32 %s8111, %s8112
        %s8114 = smul.addr %s8113, 8
        %s8115 = scalar_lea.vmem %s4, %s8114
      $region48: #{tpu_custom_call.1} parent=43 // pred_fallthru
        _
    $region44: #{tpu_custom_call.1} parent=5 // pred_fallthru
      _
  $region6: #{tpu_custom_call.1} parent=0 // loop_footer
    %s14 = sadd.s32 1, %s10
  $region7: #{tpu_custom_call.1} parent=0 // loop_footer_branch
    %9 = sbr.rel target = $region3
  $region8: #{tpu_custom_call.1} parent=0 // loop_exit
    _

</llo_original>
